<compile_context>
chip_gen: v6e
topology: v6e:2x2x1
jax: 0.10.0
libtpu: 0.0.40
codegen_flags: <defaults>
</compile_context>

<pallas_src>
import functools

import jax
import jax.numpy as jnp
from jax import lax
from jax.experimental import pallas as pl
from jax.experimental.pallas import tpu as pltpu

CHAN = 24      # n_channels   (module: chan = 24)
INNER = 64     # n_inner_channels
GROUPS = 8     # num_groups
KSIZE = 3
EPS = 1e-5     # PyTorch GroupNorm default eps


def _deq_kernel(x_ref, w1_ref, w2_ref, masks_ref, a_in_ref, a_out_ref, nrm_ref,
                z_out_ref, zall_ref, z_acc, *, W, HW, num_iter):
    C = z_acc.shape[0]          # n_channels
    Ci = w1_ref.shape[1]        # n_inner_channels

    # Static tap list: k = ky*3+kx, off = flattened spatial offset (dy*W + dx).
    taps = [(ky * 3 + kx, (ky - 1) * W + (kx - 1))
            for ky in range(3) for kx in range(3)]

    def group_norm(v, A, gamma, beta):
        # One-pass group statistics; A already carries the 1/(group_size*HW) factor.
        mean = jnp.dot(A, jnp.sum(v, axis=1, keepdims=True),
                       preferred_element_type=jnp.float32)           # (Cv, 1)
        ex2 = jnp.dot(A, jnp.sum(v * v, axis=1, keepdims=True),
                      preferred_element_type=jnp.float32)            # (Cv, 1)
        var = jnp.maximum(ex2 - mean * mean, 0.0)
        return (v - mean) * (lax.rsqrt(var + EPS) * gamma) + beta

    def f_step(z):
        # y = norm1(relu(conv1(z))) : roll+mask the narrow (C,HW) input per tap.
        c1 = None
        for k, off in taps:
            if off == 0:
                zk = z                                               # centre tap: all-ones mask
            else:
                zk = masks_ref[k] * pltpu.roll(z, shift=(-off) % HW, axis=1)
            p = jnp.dot(w1_ref[k], zk, preferred_element_type=jnp.float32)   # (Ci, HW)
            c1 = p if c1 is None else c1 + p
        y = group_norm(jnp.maximum(c1, 0.0), a_in_ref[...],
                       nrm_ref[:Ci, 0:1], nrm_ref[:Ci, 1:2])

        # conv2(y) : roll+mask the narrow (C,HW) OUTPUT of each tap matmul (the spatial
        # mask is constant over channels, so it commutes with the channel contraction).
        c2 = None
        for k, off in taps:
            p = jnp.dot(w2_ref[k], y, preferred_element_type=jnp.float32)    # (C, HW)
            if off != 0:
                p = masks_ref[k] * pltpu.roll(p, shift=(-off) % HW, axis=1)
            c2 = p if c2 is None else c2 + p

        # z_new = norm3(relu(z + norm2(x + conv2(y))))
        n2 = group_norm(x_ref[0] + c2, a_out_ref[...],
                        nrm_ref[:C, 2:3], nrm_ref[:C, 3:4])
        return group_norm(jnp.maximum(z + n2, 0.0), a_out_ref[...],
                          nrm_ref[:C, 4:5], nrm_ref[:C, 5:6])

    # Solve from z0 = zeros by forward iteration, recording every iterate.
    z_acc[...] = jnp.zeros_like(z_acc)

    @pl.loop(0, num_iter)
    def _(it):
        z_new = f_step(z_acc[...])
        z_acc[...] = z_new
        zall_ref[0, it] = z_new

    # The extra f application the module performs after the (no_grad) solve.
    z_out_ref[0] = f_step(z_acc[...])


def pack_params(conv1_w, conv2_w, g1, b1, g2, b2, g3, b3):
    """Split conv weights per tap ((9, Cout, Cin), tap = ky*3+kx) and pack the six
    per-channel norm vectors into a single (max_C, 6) slab (one tiny DMA)."""
    inner, c = conv1_w.shape[0], conv1_w.shape[1]
    w1 = jnp.transpose(conv1_w, (2, 3, 0, 1)).reshape(9, inner, c)
    w2 = jnp.transpose(conv2_w, (2, 3, 0, 1)).reshape(9, c, inner)
    nrm = jnp.zeros((max(inner, c), 6), jnp.float32)
    nrm = nrm.at[:inner, 0].set(g1).at[:inner, 1].set(b1)
    nrm = nrm.at[:c, 2].set(g2).at[:c, 3].set(b2)
    nrm = nrm.at[:c, 4].set(g3).at[:c, 5].set(b3)
    return w1, w2, nrm


def _make_constants(C, H, W, inner, groups):
    """Host-side: 9 'same'-padding validity masks (pre-broadcast over the 24-row side
    both convs mask) and the two GroupNorm group-average matrices."""
    HW = H * W
    hh = jnp.arange(HW, dtype=jnp.int32) // W
    ww = jnp.arange(HW, dtype=jnp.int32) % W
    m = []
    for ky in range(3):
        for kx in range(3):
            dy, dx = ky - 1, kx - 1
            m.append(((hh + dy >= 0) & (hh + dy < H) &
                      (ww + dx >= 0) & (ww + dx < W)).astype(jnp.float32))
    masks = jnp.tile(jnp.stack(m)[:, None, :], (1, C, 1))            # (9, C, HW)

    def gavg(c):
        cg = c // groups
        r = jnp.arange(c)[:, None] // cg
        q = jnp.arange(c)[None, :] // cg
        return (r == q).astype(jnp.float32) * (1.0 / (cg * HW))

    return masks, gavg(inner), gavg(C)


def deq_fixed_point(x_nchw, params, num_iter=6):
    """DEQFixedPoint forward: solve z* = f(z*, x) from zeros by forward (fixed-point)
    iteration, apply f once more, return (z, zall) — all fused in one Pallas kernel."""
    # TODO(synk): the PyTorch module injects `solver` (e.g. Anderson); we use plain
    # forward iteration with a fixed iteration count.
    w1, w2, nrm = params
    N, C, H, W = x_nchw.shape
    HW = H * W
    inner = w1.shape[1]
    x2 = x_nchw.reshape(N, C, HW)
    masks, A_in, A_out = _make_constants(C, H, W, inner, GROUPS)

    kernel = functools.partial(_deq_kernel, W=W, HW=HW, num_iter=num_iter)
    z_out, zall = pl.pallas_call(
        kernel,
        out_shape=(jax.ShapeDtypeStruct((N, C, HW), jnp.float32),
                   jax.ShapeDtypeStruct((N, num_iter, C, HW), jnp.float32)),
        grid_spec=pltpu.PrefetchScalarGridSpec(
            num_scalar_prefetch=0,
            grid=(N,),
            in_specs=[
                pl.BlockSpec((1, C, HW), lambda b: (b, 0, 0)),       # x: per batch element
                pl.BlockSpec(w1.shape, lambda b: (0, 0, 0)),         # conv1 taps (resident)
                pl.BlockSpec(w2.shape, lambda b: (0, 0, 0)),         # conv2 taps (resident)
                pl.BlockSpec(masks.shape, lambda b: (0, 0, 0)),      # boundary masks (resident)
                pl.BlockSpec(A_in.shape, lambda b: (0, 0)),          # group-avg matrix (INNER)
                pl.BlockSpec(A_out.shape, lambda b: (0, 0)),         # group-avg matrix (C)
                pl.BlockSpec(nrm.shape, lambda b: (0, 0)),           # packed gamma/beta slab
            ],
            out_specs=(
                pl.BlockSpec((1, C, HW), lambda b: (b, 0, 0)),               # z
                pl.BlockSpec((1, num_iter, C, HW), lambda b: (b, 0, 0, 0)),  # zall
            ),
            scratch_shapes=[pltpu.VMEM((C, HW), jnp.float32)],       # z accumulator
        ),
        compiler_params=pltpu.CompilerParams(
            dimension_semantics=("parallel",)),
    )(x2, w1, w2, masks, A_in, A_out, nrm)
    # TODO(synk): backward hook / implicit-gradient solve is training-time autograd
    # machinery; it does not affect forward values and is not implemented here.
    z = z_out.reshape(N, C, H, W)
    zall = jnp.transpose(zall, (1, 0, 2, 3)).reshape(num_iter, N, C, H, W)
    return z, zall


if __name__ == "__main__":
    key = jax.random.PRNGKey(0)
    k1, k2, kx = jax.random.split(key, 3)
    N, H, W = 2, 16, 16

    # deterministic parameter init mirroring the module's __init__
    conv1_w = 0.01 * jax.random.normal(k1, (INNER, CHAN, KSIZE, KSIZE), jnp.float32)
    conv2_w = 0.01 * jax.random.normal(k2, (CHAN, INNER, KSIZE, KSIZE), jnp.float32)
    g1 = jnp.ones((INNER,), jnp.float32); b1 = jnp.zeros((INNER,), jnp.float32)
    g2 = jnp.ones((CHAN,), jnp.float32);  b2 = jnp.zeros((CHAN,), jnp.float32)
    g3 = jnp.ones((CHAN,), jnp.float32);  b3 = jnp.zeros((CHAN,), jnp.float32)
    params = pack_params(conv1_w, conv2_w, g1, b1, g2, b2, g3, b3)

    x = jax.random.normal(kx, (N, CHAN, H, W), jnp.float32)

    fwd = jax.jit(functools.partial(deq_fixed_point, num_iter=6))
    z, zall = fwd(x, params)
    jax.block_until_ready((z, zall))

    assert z.shape == (N, CHAN, H, W)
    assert zall.shape == (6, N, CHAN, H, W)
    assert bool(jnp.all(jnp.isfinite(z))) and bool(jnp.all(jnp.isfinite(zall)))
    print("KERNEL_OK")
</pallas_src>

<mosaic_0001>
module attributes {stable_mosaic.version = 11 : i64} {
  func.func @_deq_kernel(%arg0: i32, %arg1: memref<1x24x256xf32, #tpu.memory_space<vmem>>, %arg2: memref<9x64x24xf32, #tpu.memory_space<vmem>>, %arg3: memref<9x24x64xf32, #tpu.memory_space<vmem>>, %arg4: memref<9x24x256xf32, #tpu.memory_space<vmem>>, %arg5: memref<64x64xf32, #tpu.memory_space<vmem>>, %arg6: memref<24x24xf32, #tpu.memory_space<vmem>>, %arg7: memref<64x6xf32, #tpu.memory_space<vmem>>, %arg8: memref<1x24x256xf32, #tpu.memory_space<vmem>>, %arg9: memref<1x6x24x256xf32, #tpu.memory_space<vmem>>, %arg10: memref<24x256xf32, #tpu.memory_space<vmem>>) attributes {dimension_semantics = [#tpu.dimension_semantics<parallel>], iteration_bounds = array<i64: 2>, scalar_prefetch = 0 : i64, scratch_operands = 1 : i64, tpu.core_type = #tpu.core_type<tc>, window_params = [{transform_indices = @transform_0, window_bounds = array<i64: 1, 24, 256>}, {pipeline_mode = #tpu.pipeline_mode<synchronous>, transform_indices = @transform_1, window_bounds = array<i64: 9, 64, 24>}, {pipeline_mode = #tpu.pipeline_mode<synchronous>, transform_indices = @transform_2, window_bounds = array<i64: 9, 24, 64>}, {pipeline_mode = #tpu.pipeline_mode<synchronous>, transform_indices = @transform_3, window_bounds = array<i64: 9, 24, 256>}, {pipeline_mode = #tpu.pipeline_mode<synchronous>, transform_indices = @transform_4, window_bounds = array<i64: 64, 64>}, {pipeline_mode = #tpu.pipeline_mode<synchronous>, transform_indices = @transform_5, window_bounds = array<i64: 24, 24>}, {pipeline_mode = #tpu.pipeline_mode<synchronous>, transform_indices = @transform_6, window_bounds = array<i64: 64, 6>}, {transform_indices = @transform_7, window_bounds = array<i64: 1, 24, 256>}, {transform_indices = @transform_8, window_bounds = array<i64: 1, 6, 24, 256>}]} {
    %cst = arith.constant 0.000000e+00 : f32
    %0 = vector.broadcast %cst : f32 to vector<24x256xf32>
    %c0 = arith.constant 0 : index
    %c0_0 = arith.constant 0 : index
    %1 = vector.load %arg10[%c0, %c0_0] : memref<24x256xf32, #tpu.memory_space<vmem>>, vector<24x256xf32>
    tpu.vector_store %arg10[%c0, %c0_0], %0 {strides = array<i32>} : memref<24x256xf32, #tpu.memory_space<vmem>>, vector<24x256xf32>,
    %c0_i32 = arith.constant 0 : i32
    %c6_i32 = arith.constant 6 : i32
    %2 = arith.addi %c0_i32, %c6_i32 : i32
    %c1_i32 = arith.constant 1 : i32
    scf.for %arg11 = %c0_i32 to %2 step %c1_i32  : i32 {
      %c1_i32_169 = arith.constant 1 : i32
      %221 = arith.muli %arg11, %c1_i32_169 : i32
      %c0_i32_170 = arith.constant 0 : i32
      %222 = arith.addi %c0_i32_170, %221 : i32
      %c0_171 = arith.constant 0 : index
      %c0_172 = arith.constant 0 : index
      %223 = vector.load %arg10[%c0_171, %c0_172] : memref<24x256xf32, #tpu.memory_space<vmem>>, vector<24x256xf32>
      %c0_173 = arith.constant 0 : index
      %c0_174 = arith.constant 0 : index
      %c0_175 = arith.constant 0 : index
      %224 = vector.load %arg4[%c0_173, %c0_174, %c0_175] : memref<9x24x256xf32, #tpu.memory_space<vmem>>, vector<1x24x256xf32>
      %225 = vector.shape_cast %224 : vector<1x24x256xf32> to vector<24x256xf32>
      %c17_i32_176 = arith.constant 17 : i32
      %226 = tpu.dynamic_rotate %223 by %c17_i32_176 dim 1 : vector<24x256xf32>, i32 -> vector<24x256xf32>
      %227 = arith.mulf %225, %226 : vector<24x256xf32>
      %c0_177 = arith.constant 0 : index
      %c0_178 = arith.constant 0 : index
      %c0_179 = arith.constant 0 : index
      %228 = vector.load %arg2[%c0_177, %c0_178, %c0_179] : memref<9x64x24xf32, #tpu.memory_space<vmem>>, vector<1x64x24xf32>
      %229 = vector.shape_cast %228 : vector<1x64x24xf32> to vector<64x24xf32>
      %cst_180 = arith.constant dense<0.000000e+00> : vector<64x256xf32>
      %230 = tpu.matmul %229, %227, %cst_180 {dimension_numbers = #tpu.dot_dimension_numbers<[1], [0], [0], [1], [0, 0, 1, 1], [], []>} : vector<64x24xf32>, vector<24x256xf32>, vector<64x256xf32> -> vector<64x256xf32>
      %c1_181 = arith.constant 1 : index
      %c0_182 = arith.constant 0 : index
      %c0_183 = arith.constant 0 : index
      %231 = vector.load %arg4[%c1_181, %c0_182, %c0_183] : memref<9x24x256xf32, #tpu.memory_space<vmem>>, vector<1x24x256xf32>
      %232 = vector.shape_cast %231 : vector<1x24x256xf32> to vector<24x256xf32>
      %c16_i32_184 = arith.constant 16 : i32
      %233 = tpu.dynamic_rotate %223 by %c16_i32_184 dim 1 : vector<24x256xf32>, i32 -> vector<24x256xf32>
      %234 = arith.mulf %232, %233 : vector<24x256xf32>
      %c1_185 = arith.constant 1 : index
      %c0_186 = arith.constant 0 : index
      %c0_187 = arith.constant 0 : index
      %235 = vector.load %arg2[%c1_185, %c0_186, %c0_187] : memref<9x64x24xf32, #tpu.memory_space<vmem>>, vector<1x64x24xf32>
      %236 = vector.shape_cast %235 : vector<1x64x24xf32> to vector<64x24xf32>
      %cst_188 = arith.constant dense<0.000000e+00> : vector<64x256xf32>
      %237 = tpu.matmul %236, %234, %cst_188 {dimension_numbers = #tpu.dot_dimension_numbers<[1], [0], [0], [1], [0, 0, 1, 1], [], []>} : vector<64x24xf32>, vector<24x256xf32>, vector<64x256xf32> -> vector<64x256xf32>
      %238 = arith.addf %230, %237 : vector<64x256xf32>
      %c2_189 = arith.constant 2 : index
      %c0_190 = arith.constant 0 : index
      %c0_191 = arith.constant 0 : index
      %239 = vector.load %arg4[%c2_189, %c0_190, %c0_191] : memref<9x24x256xf32, #tpu.memory_space<vmem>>, vector<1x24x256xf32>
      %240 = vector.shape_cast %239 : vector<1x24x256xf32> to vector<24x256xf32>
      %c15_i32_192 = arith.constant 15 : i32
      %241 = tpu.dynamic_rotate %223 by %c15_i32_192 dim 1 : vector<24x256xf32>, i32 -> vector<24x256xf32>
      %242 = arith.mulf %240, %241 : vector<24x256xf32>
      %c2_193 = arith.constant 2 : index
      %c0_194 = arith.constant 0 : index
      %c0_195 = arith.constant 0 : index
      %243 = vector.load %arg2[%c2_193, %c0_194, %c0_195] : memref<9x64x24xf32, #tpu.memory_space<vmem>>, vector<1x64x24xf32>
      %244 = vector.shape_cast %243 : vector<1x64x24xf32> to vector<64x24xf32>
      %cst_196 = arith.constant dense<0.000000e+00> : vector<64x256xf32>
      %245 = tpu.matmul %244, %242, %cst_196 {dimension_numbers = #tpu.dot_dimension_numbers<[1], [0], [0], [1], [0, 0, 1, 1], [], []>} : vector<64x24xf32>, vector<24x256xf32>, vector<64x256xf32> -> vector<64x256xf32>
      %246 = arith.addf %238, %245 : vector<64x256xf32>
      %c3_197 = arith.constant 3 : index
      %c0_198 = arith.constant 0 : index
      %c0_199 = arith.constant 0 : index
      %247 = vector.load %arg4[%c3_197, %c0_198, %c0_199] : memref<9x24x256xf32, #tpu.memory_space<vmem>>, vector<1x24x256xf32>
      %248 = vector.shape_cast %247 : vector<1x24x256xf32> to vector<24x256xf32>
      %c1_i32_200 = arith.constant 1 : i32
      %249 = tpu.dynamic_rotate %223 by %c1_i32_200 dim 1 : vector<24x256xf32>, i32 -> vector<24x256xf32>
      %250 = arith.mulf %248, %249 : vector<24x256xf32>
      %c3_201 = arith.constant 3 : index
      %c0_202 = arith.constant 0 : index
      %c0_203 = arith.constant 0 : index
      %251 = vector.load %arg2[%c3_201, %c0_202, %c0_203] : memref<9x64x24xf32, #tpu.memory_space<vmem>>, vector<1x64x24xf32>
      %252 = vector.shape_cast %251 : vector<1x64x24xf32> to vector<64x24xf32>
      %cst_204 = arith.constant dense<0.000000e+00> : vector<64x256xf32>
      %253 = tpu.matmul %252, %250, %cst_204 {dimension_numbers = #tpu.dot_dimension_numbers<[1], [0], [0], [1], [0, 0, 1, 1], [], []>} : vector<64x24xf32>, vector<24x256xf32>, vector<64x256xf32> -> vector<64x256xf32>
      %254 = arith.addf %246, %253 : vector<64x256xf32>
      %c4_205 = arith.constant 4 : index
      %c0_206 = arith.constant 0 : index
      %c0_207 = arith.constant 0 : index
      %255 = vector.load %arg2[%c4_205, %c0_206, %c0_207] : memref<9x64x24xf32, #tpu.memory_space<vmem>>, vector<1x64x24xf32>
      %256 = vector.shape_cast %255 : vector<1x64x24xf32> to vector<64x24xf32>
      %cst_208 = arith.constant dense<0.000000e+00> : vector<64x256xf32>
      %257 = tpu.matmul %256, %223, %cst_208 {dimension_numbers = #tpu.dot_dimension_numbers<[1], [0], [0], [1], [0, 0, 1, 1], [], []>} : vector<64x24xf32>, vector<24x256xf32>, vector<64x256xf32> -> vector<64x256xf32>
      %258 = arith.addf %254, %257 : vector<64x256xf32>
      %c5_209 = arith.constant 5 : index
      %c0_210 = arith.constant 0 : index
      %c0_211 = arith.constant 0 : index
      %259 = vector.load %arg4[%c5_209, %c0_210, %c0_211] : memref<9x24x256xf32, #tpu.memory_space<vmem>>, vector<1x24x256xf32>
      %260 = vector.shape_cast %259 : vector<1x24x256xf32> to vector<24x256xf32>
      %c255_i32_212 = arith.constant 255 : i32
      %261 = tpu.dynamic_rotate %223 by %c255_i32_212 dim 1 : vector<24x256xf32>, i32 -> vector<24x256xf32>
      %262 = arith.mulf %260, %261 : vector<24x256xf32>
      %c5_213 = arith.constant 5 : index
      %c0_214 = arith.constant 0 : index
      %c0_215 = arith.constant 0 : index
      %263 = vector.load %arg2[%c5_213, %c0_214, %c0_215] : memref<9x64x24xf32, #tpu.memory_space<vmem>>, vector<1x64x24xf32>
      %264 = vector.shape_cast %263 : vector<1x64x24xf32> to vector<64x24xf32>
      %cst_216 = arith.constant dense<0.000000e+00> : vector<64x256xf32>
      %265 = tpu.matmul %264, %262, %cst_216 {dimension_numbers = #tpu.dot_dimension_numbers<[1], [0], [0], [1], [0, 0, 1, 1], [], []>} : vector<64x24xf32>, vector<24x256xf32>, vector<64x256xf32> -> vector<64x256xf32>
      %266 = arith.addf %258, %265 : vector<64x256xf32>
      %c6_217 = arith.constant 6 : index
      %c0_218 = arith.constant 0 : index
      %c0_219 = arith.constant 0 : index
      %267 = vector.load %arg4[%c6_217, %c0_218, %c0_219] : memref<9x24x256xf32, #tpu.memory_space<vmem>>, vector<1x24x256xf32>
      %268 = vector.shape_cast %267 : vector<1x24x256xf32> to vector<24x256xf32>
      %c241_i32_220 = arith.constant 241 : i32
      %269 = tpu.dynamic_rotate %223 by %c241_i32_220 dim 1 : vector<24x256xf32>, i32 -> vector<24x256xf32>
      %270 = arith.mulf %268, %269 : vector<24x256xf32>
      %c6_221 = arith.constant 6 : index
      %c0_222 = arith.constant 0 : index
      %c0_223 = arith.constant 0 : index
      %271 = vector.load %arg2[%c6_221, %c0_222, %c0_223] : memref<9x64x24xf32, #tpu.memory_space<vmem>>, vector<1x64x24xf32>
      %272 = vector.shape_cast %271 : vector<1x64x24xf32> to vector<64x24xf32>
      %cst_224 = arith.constant dense<0.000000e+00> : vector<64x256xf32>
      %273 = tpu.matmul %272, %270, %cst_224 {dimension_numbers = #tpu.dot_dimension_numbers<[1], [0], [0], [1], [0, 0, 1, 1], [], []>} : vector<64x24xf32>, vector<24x256xf32>, vector<64x256xf32> -> vector<64x256xf32>
      %274 = arith.addf %266, %273 : vector<64x256xf32>
      %c7_225 = arith.constant 7 : index
      %c0_226 = arith.constant 0 : index
      %c0_227 = arith.constant 0 : index
      %275 = vector.load %arg4[%c7_225, %c0_226, %c0_227] : memref<9x24x256xf32, #tpu.memory_space<vmem>>, vector<1x24x256xf32>
      %276 = vector.shape_cast %275 : vector<1x24x256xf32> to vector<24x256xf32>
      %c240_i32_228 = arith.constant 240 : i32
      %277 = tpu.dynamic_rotate %223 by %c240_i32_228 dim 1 : vector<24x256xf32>, i32 -> vector<24x256xf32>
      %278 = arith.mulf %276, %277 : vector<24x256xf32>
      %c7_229 = arith.constant 7 : index
      %c0_230 = arith.constant 0 : index
      %c0_231 = arith.constant 0 : index
      %279 = vector.load %arg2[%c7_229, %c0_230, %c0_231] : memref<9x64x24xf32, #tpu.memory_space<vmem>>, vector<1x64x24xf32>
      %280 = vector.shape_cast %279 : vector<1x64x24xf32> to vector<64x24xf32>
      %cst_232 = arith.constant dense<0.000000e+00> : vector<64x256xf32>
      %281 = tpu.matmul %280, %278, %cst_232 {dimension_numbers = #tpu.dot_dimension_numbers<[1], [0], [0], [1], [0, 0, 1, 1], [], []>} : vector<64x24xf32>, vector<24x256xf32>, vector<64x256xf32> -> vector<64x256xf32>
      %282 = arith.addf %274, %281 : vector<64x256xf32>
      %c8_233 = arith.constant 8 : index
      %c0_234 = arith.constant 0 : index
      %c0_235 = arith.constant 0 : index
      %283 = vector.load %arg4[%c8_233, %c0_234, %c0_235] : memref<9x24x256xf32, #tpu.memory_space<vmem>>, vector<1x24x256xf32>
      %284 = vector.shape_cast %283 : vector<1x24x256xf32> to vector<24x256xf32>
      %c239_i32_236 = arith.constant 239 : i32
      %285 = tpu.dynamic_rotate %223 by %c239_i32_236 dim 1 : vector<24x256xf32>, i32 -> vector<24x256xf32>
      %286 = arith.mulf %284, %285 : vector<24x256xf32>
      %c8_237 = arith.constant 8 : index
      %c0_238 = arith.constant 0 : index
      %c0_239 = arith.constant 0 : index
      %287 = vector.load %arg2[%c8_237, %c0_238, %c0_239] : memref<9x64x24xf32, #tpu.memory_space<vmem>>, vector<1x64x24xf32>
      %288 = vector.shape_cast %287 : vector<1x64x24xf32> to vector<64x24xf32>
      %cst_240 = arith.constant dense<0.000000e+00> : vector<64x256xf32>
      %289 = tpu.matmul %288, %286, %cst_240 {dimension_numbers = #tpu.dot_dimension_numbers<[1], [0], [0], [1], [0, 0, 1, 1], [], []>} : vector<64x24xf32>, vector<24x256xf32>, vector<64x256xf32> -> vector<64x256xf32>
      %290 = arith.addf %282, %289 : vector<64x256xf32>
      %cst_241 = arith.constant 0.000000e+00 : f32
      %291 = vector.broadcast %cst_241 : f32 to vector<64x256xf32>
      %292 = arith.maximumf %290, %291 : vector<64x256xf32>
      %c0_242 = arith.constant 0 : index
      %c0_243 = arith.constant 0 : index
      %293 = vector.load %arg5[%c0_242, %c0_243] : memref<64x64xf32, #tpu.memory_space<vmem>>, vector<64x64xf32>
      %c0_244 = arith.constant 0 : index
      %c0_245 = arith.constant 0 : index
      %294 = vector.load %arg7[%c0_244, %c0_245] : memref<64x6xf32, #tpu.memory_space<vmem>>, vector<64x1xf32>
      %c0_246 = arith.constant 0 : index
      %c1_247 = arith.constant 1 : index
      %295 = vector.load %arg7[%c0_246, %c1_247] : memref<64x6xf32, #tpu.memory_space<vmem>>, vector<64x1xf32>
      %cst_248 = arith.constant dense<0.000000e+00> : vector<64xf32>
      %296 = vector.multi_reduction <add>, %292, %cst_248 [1] : vector<64x256xf32> to vector<64xf32>
      %297 = vector.shape_cast %296 : vector<64xf32> to vector<64x1xf32>
      %cst_249 = arith.constant dense<0.000000e+00> : vector<64x1xf32>
      %298 = tpu.matmul %293, %297, %cst_249 {dimension_numbers = #tpu.dot_dimension_numbers<[1], [0], [0], [1], [0, 0, 1, 1], [], []>} : vector<64x64xf32>, vector<64x1xf32>, vector<64x1xf32> -> vector<64x1xf32>
      %299 = arith.mulf %292, %292 : vector<64x256xf32>
      %cst_250 = arith.constant dense<0.000000e+00> : vector<64xf32>
      %300 = vector.multi_reduction <add>, %299, %cst_250 [1] : vector<64x256xf32> to vector<64xf32>
      %301 = vector.shape_cast %300 : vector<64xf32> to vector<64x1xf32>
      %cst_251 = arith.constant dense<0.000000e+00> : vector<64x1xf32>
      %302 = tpu.matmul %293, %301, %cst_251 {dimension_numbers = #tpu.dot_dimension_numbers<[1], [0], [0], [1], [0, 0, 1, 1], [], []>} : vector<64x64xf32>, vector<64x1xf32>, vector<64x1xf32> -> vector<64x1xf32>
      %303 = arith.mulf %298, %298 : vector<64x1xf32>
      %304 = arith.subf %302, %303 : vector<64x1xf32>
      %cst_252 = arith.constant 0.000000e+00 : f32
      %305 = vector.broadcast %cst_252 : f32 to vector<64x1xf32>
      %306 = arith.maximumf %304, %305 : vector<64x1xf32>
      %307 = vector.broadcast %298 : vector<64x1xf32> to vector<64x256xf32>
      %308 = arith.subf %292, %307 : vector<64x256xf32>
      %cst_253 = arith.constant 9.99999974E-6 : f32
      %309 = vector.broadcast %cst_253 : f32 to vector<64x1xf32>
      %310 = arith.addf %306, %309 : vector<64x1xf32>
      %311 = math.rsqrt %310 : vector<64x1xf32>
      %312 = arith.mulf %311, %294 : vector<64x1xf32>
      %313 = vector.broadcast %312 : vector<64x1xf32> to vector<64x256xf32>
      %314 = arith.mulf %308, %313 : vector<64x256xf32>
      %315 = vector.broadcast %295 : vector<64x1xf32> to vector<64x256xf32>
      %316 = arith.addf %314, %315 : vector<64x256xf32>
      %c0_254 = arith.constant 0 : index
      %c0_255 = arith.constant 0 : index
      %c0_256 = arith.constant 0 : index
      %317 = vector.load %arg3[%c0_254, %c0_255, %c0_256] : memref<9x24x64xf32, #tpu.memory_space<vmem>>, vector<1x24x64xf32>
      %318 = vector.shape_cast %317 : vector<1x24x64xf32> to vector<24x64xf32>
      %cst_257 = arith.constant dense<0.000000e+00> : vector<24x256xf32>
      %319 = tpu.matmul %318, %316, %cst_257 {dimension_numbers = #tpu.dot_dimension_numbers<[1], [0], [0], [1], [0, 0, 1, 1], [], []>} : vector<24x64xf32>, vector<64x256xf32>, vector<24x256xf32> -> vector<24x256xf32>
      %c0_258 = arith.constant 0 : index
      %c0_259 = arith.constant 0 : index
      %c0_260 = arith.constant 0 : index
      %320 = vector.load %arg4[%c0_258, %c0_259, %c0_260] : memref<9x24x256xf32, #tpu.memory_space<vmem>>, vector<1x24x256xf32>
      %321 = vector.shape_cast %320 : vector<1x24x256xf32> to vector<24x256xf32>
      %c17_i32_261 = arith.constant 17 : i32
      %322 = tpu.dynamic_rotate %319 by %c17_i32_261 dim 1 : vector<24x256xf32>, i32 -> vector<24x256xf32>
      %323 = arith.mulf %321, %322 : vector<24x256xf32>
      %c1_262 = arith.constant 1 : index
      %c0_263 = arith.constant 0 : index
      %c0_264 = arith.constant 0 : index
      %324 = vector.load %arg3[%c1_262, %c0_263, %c0_264] : memref<9x24x64xf32, #tpu.memory_space<vmem>>, vector<1x24x64xf32>
      %325 = vector.shape_cast %324 : vector<1x24x64xf32> to vector<24x64xf32>
      %cst_265 = arith.constant dense<0.000000e+00> : vector<24x256xf32>
      %326 = tpu.matmul %325, %316, %cst_265 {dimension_numbers = #tpu.dot_dimension_numbers<[1], [0], [0], [1], [0, 0, 1, 1], [], []>} : vector<24x64xf32>, vector<64x256xf32>, vector<24x256xf32> -> vector<24x256xf32>
      %c1_266 = arith.constant 1 : index
      %c0_267 = arith.constant 0 : index
      %c0_268 = arith.constant 0 : index
      %327 = vector.load %arg4[%c1_266, %c0_267, %c0_268] : memref<9x24x256xf32, #tpu.memory_space<vmem>>, vector<1x24x256xf32>
      %328 = vector.shape_cast %327 : vector<1x24x256xf32> to vector<24x256xf32>
      %c16_i32_269 = arith.constant 16 : i32
      %329 = tpu.dynamic_rotate %326 by %c16_i32_269 dim 1 : vector<24x256xf32>, i32 -> vector<24x256xf32>
      %330 = arith.mulf %328, %329 : vector<24x256xf32>
      %331 = arith.addf %323, %330 : vector<24x256xf32>
      %c2_270 = arith.constant 2 : index
      %c0_271 = arith.constant 0 : index
      %c0_272 = arith.constant 0 : index
      %332 = vector.load %arg3[%c2_270, %c0_271, %c0_272] : memref<9x24x64xf32, #tpu.memory_space<vmem>>, vector<1x24x64xf32>
      %333 = vector.shape_cast %332 : vector<1x24x64xf32> to vector<24x64xf32>
      %cst_273 = arith.constant dense<0.000000e+00> : vector<24x256xf32>
      %334 = tpu.matmul %333, %316, %cst_273 {dimension_numbers = #tpu.dot_dimension_numbers<[1], [0], [0], [1], [0, 0, 1, 1], [], []>} : vector<24x64xf32>, vector<64x256xf32>, vector<24x256xf32> -> vector<24x256xf32>
      %c2_274 = arith.constant 2 : index
      %c0_275 = arith.constant 0 : index
      %c0_276 = arith.constant 0 : index
      %335 = vector.load %arg4[%c2_274, %c0_275, %c0_276] : memref<9x24x256xf32, #tpu.memory_space<vmem>>, vector<1x24x256xf32>
      %336 = vector.shape_cast %335 : vector<1x24x256xf32> to vector<24x256xf32>
      %c15_i32_277 = arith.constant 15 : i32
      %337 = tpu.dynamic_rotate %334 by %c15_i32_277 dim 1 : vector<24x256xf32>, i32 -> vector<24x256xf32>
      %338 = arith.mulf %336, %337 : vector<24x256xf32>
      %339 = arith.addf %331, %338 : vector<24x256xf32>
      %c3_278 = arith.constant 3 : index
      %c0_279 = arith.constant 0 : index
      %c0_280 = arith.constant 0 : index
      %340 = vector.load %arg3[%c3_278, %c0_279, %c0_280] : memref<9x24x64xf32, #tpu.memory_space<vmem>>, vector<1x24x64xf32>
      %341 = vector.shape_cast %340 : vector<1x24x64xf32> to vector<24x64xf32>
      %cst_281 = arith.constant dense<0.000000e+00> : vector<24x256xf32>
      %342 = tpu.matmul %341, %316, %cst_281 {dimension_numbers = #tpu.dot_dimension_numbers<[1], [0], [0], [1], [0, 0, 1, 1], [], []>} : vector<24x64xf32>, vector<64x256xf32>, vector<24x256xf32> -> vector<24x256xf32>
      %c3_282 = arith.constant 3 : index
      %c0_283 = arith.constant 0 : index
      %c0_284 = arith.constant 0 : index
      %343 = vector.load %arg4[%c3_282, %c0_283, %c0_284] : memref<9x24x256xf32, #tpu.memory_space<vmem>>, vector<1x24x256xf32>
      %344 = vector.shape_cast %343 : vector<1x24x256xf32> to vector<24x256xf32>
      %c1_i32_285 = arith.constant 1 : i32
      %345 = tpu.dynamic_rotate %342 by %c1_i32_285 dim 1 : vector<24x256xf32>, i32 -> vector<24x256xf32>
      %346 = arith.mulf %344, %345 : vector<24x256xf32>
      %347 = arith.addf %339, %346 : vector<24x256xf32>
      %c4_286 = arith.constant 4 : index
      %c0_287 = arith.constant 0 : index
      %c0_288 = arith.constant 0 : index
      %348 = vector.load %arg3[%c4_286, %c0_287, %c0_288] : memref<9x24x64xf32, #tpu.memory_space<vmem>>, vector<1x24x64xf32>
      %349 = vector.shape_cast %348 : vector<1x24x64xf32> to vector<24x64xf32>
      %cst_289 = arith.constant dense<0.000000e+00> : vector<24x256xf32>
      %350 = tpu.matmul %349, %316, %cst_289 {dimension_numbers = #tpu.dot_dimension_numbers<[1], [0], [0], [1], [0, 0, 1, 1], [], []>} : vector<24x64xf32>, vector<64x256xf32>, vector<24x256xf32> -> vector<24x256xf32>
      %351 = arith.addf %347, %350 : vector<24x256xf32>
      %c5_290 = arith.constant 5 : index
      %c0_291 = arith.constant 0 : index
      %c0_292 = arith.constant 0 : index
      %352 = vector.load %arg3[%c5_290, %c0_291, %c0_292] : memref<9x24x64xf32, #tpu.memory_space<vmem>>, vector<1x24x64xf32>
      %353 = vector.shape_cast %352 : vector<1x24x64xf32> to vector<24x64xf32>
      %cst_293 = arith.constant dense<0.000000e+00> : vector<24x256xf32>
      %354 = tpu.matmul %353, %316, %cst_293 {dimension_numbers = #tpu.dot_dimension_numbers<[1], [0], [0], [1], [0, 0, 1, 1], [], []>} : vector<24x64xf32>, vector<64x256xf32>, vector<24x256xf32> -> vector<24x256xf32>
      %c5_294 = arith.constant 5 : index
      %c0_295 = arith.constant 0 : index
      %c0_296 = arith.constant 0 : index
      %355 = vector.load %arg4[%c5_294, %c0_295, %c0_296] : memref<9x24x256xf32, #tpu.memory_space<vmem>>, vector<1x24x256xf32>
      %356 = vector.shape_cast %355 : vector<1x24x256xf32> to vector<24x256xf32>
      %c255_i32_297 = arith.constant 255 : i32
      %357 = tpu.dynamic_rotate %354 by %c255_i32_297 dim 1 : vector<24x256xf32>, i32 -> vector<24x256xf32>
      %358 = arith.mulf %356, %357 : vector<24x256xf32>
      %359 = arith.addf %351, %358 : vector<24x256xf32>
      %c6_298 = arith.constant 6 : index
      %c0_299 = arith.constant 0 : index
      %c0_300 = arith.constant 0 : index
      %360 = vector.load %arg3[%c6_298, %c0_299, %c0_300] : memref<9x24x64xf32, #tpu.memory_space<vmem>>, vector<1x24x64xf32>
      %361 = vector.shape_cast %360 : vector<1x24x64xf32> to vector<24x64xf32>
      %cst_301 = arith.constant dense<0.000000e+00> : vector<24x256xf32>
      %362 = tpu.matmul %361, %316, %cst_301 {dimension_numbers = #tpu.dot_dimension_numbers<[1], [0], [0], [1], [0, 0, 1, 1], [], []>} : vector<24x64xf32>, vector<64x256xf32>, vector<24x256xf32> -> vector<24x256xf32>
      %c6_302 = arith.constant 6 : index
      %c0_303 = arith.constant 0 : index
      %c0_304 = arith.constant 0 : index
      %363 = vector.load %arg4[%c6_302, %c0_303, %c0_304] : memref<9x24x256xf32, #tpu.memory_space<vmem>>, vector<1x24x256xf32>
      %364 = vector.shape_cast %363 : vector<1x24x256xf32> to vector<24x256xf32>
      %c241_i32_305 = arith.constant 241 : i32
      %365 = tpu.dynamic_rotate %362 by %c241_i32_305 dim 1 : vector<24x256xf32>, i32 -> vector<24x256xf32>
      %366 = arith.mulf %364, %365 : vector<24x256xf32>
      %367 = arith.addf %359, %366 : vector<24x256xf32>
      %c7_306 = arith.constant 7 : index
      %c0_307 = arith.constant 0 : index
      %c0_308 = arith.constant 0 : index
      %368 = vector.load %arg3[%c7_306, %c0_307, %c0_308] : memref<9x24x64xf32, #tpu.memory_space<vmem>>, vector<1x24x64xf32>
      %369 = vector.shape_cast %368 : vector<1x24x64xf32> to vector<24x64xf32>
      %cst_309 = arith.constant dense<0.000000e+00> : vector<24x256xf32>
      %370 = tpu.matmul %369, %316, %cst_309 {dimension_numbers = #tpu.dot_dimension_numbers<[1], [0], [0], [1], [0, 0, 1, 1], [], []>} : vector<24x64xf32>, vector<64x256xf32>, vector<24x256xf32> -> vector<24x256xf32>
      %c7_310 = arith.constant 7 : index
      %c0_311 = arith.constant 0 : index
      %c0_312 = arith.constant 0 : index
      %371 = vector.load %arg4[%c7_310, %c0_311, %c0_312] : memref<9x24x256xf32, #tpu.memory_space<vmem>>, vector<1x24x256xf32>
      %372 = vector.shape_cast %371 : vector<1x24x256xf32> to vector<24x256xf32>
      %c240_i32_313 = arith.constant 240 : i32
      %373 = tpu.dynamic_rotate %370 by %c240_i32_313 dim 1 : vector<24x256xf32>, i32 -> vector<24x256xf32>
      %374 = arith.mulf %372, %373 : vector<24x256xf32>
      %375 = arith.addf %367, %374 : vector<24x256xf32>
      %c8_314 = arith.constant 8 : index
      %c0_315 = arith.constant 0 : index
      %c0_316 = arith.constant 0 : index
      %376 = vector.load %arg3[%c8_314, %c0_315, %c0_316] : memref<9x24x64xf32, #tpu.memory_space<vmem>>, vector<1x24x64xf32>
      %377 = vector.shape_cast %376 : vector<1x24x64xf32> to vector<24x64xf32>
      %cst_317 = arith.constant dense<0.000000e+00> : vector<24x256xf32>
      %378 = tpu.matmul %377, %316, %cst_317 {dimension_numbers = #tpu.dot_dimension_numbers<[1], [0], [0], [1], [0, 0, 1, 1], [], []>} : vector<24x64xf32>, vector<64x256xf32>, vector<24x256xf32> -> vector<24x256xf32>
      %c8_318 = arith.constant 8 : index
      %c0_319 = arith.constant 0 : index
      %c0_320 = arith.constant 0 : index
      %379 = vector.load %arg4[%c8_318, %c0_319, %c0_320] : memref<9x24x256xf32, #tpu.memory_space<vmem>>, vector<1x24x256xf32>
      %380 = vector.shape_cast %379 : vector<1x24x256xf32> to vector<24x256xf32>
      %c239_i32_321 = arith.constant 239 : i32
      %381 = tpu.dynamic_rotate %378 by %c239_i32_321 dim 1 : vector<24x256xf32>, i32 -> vector<24x256xf32>
      %382 = arith.mulf %380, %381 : vector<24x256xf32>
      %383 = arith.addf %375, %382 : vector<24x256xf32>
      %c0_322 = arith.constant 0 : index
      %c0_323 = arith.constant 0 : index
      %c0_324 = arith.constant 0 : index
      %384 = vector.load %arg1[%c0_322, %c0_323, %c0_324] : memref<1x24x256xf32, #tpu.memory_space<vmem>>, vector<1x24x256xf32>
      %385 = vector.shape_cast %384 : vector<1x24x256xf32> to vector<24x256xf32>
      %386 = arith.addf %385, %383 : vector<24x256xf32>
      %c0_325 = arith.constant 0 : index
      %c0_326 = arith.constant 0 : index
      %387 = vector.load %arg6[%c0_325, %c0_326] : memref<24x24xf32, #tpu.memory_space<vmem>>, vector<24x24xf32>
      %c0_327 = arith.constant 0 : index
      %c2_328 = arith.constant 2 : index
      %388 = vector.load %arg7[%c0_327, %c2_328] : memref<64x6xf32, #tpu.memory_space<vmem>>, vector<24x1xf32>
      %c0_329 = arith.constant 0 : index
      %c3_330 = arith.constant 3 : index
      %389 = vector.load %arg7[%c0_329, %c3_330] : memref<64x6xf32, #tpu.memory_space<vmem>>, vector<24x1xf32>
      %cst_331 = arith.constant dense<0.000000e+00> : vector<24xf32>
      %390 = vector.multi_reduction <add>, %386, %cst_331 [1] : vector<24x256xf32> to vector<24xf32>
      %391 = vector.shape_cast %390 : vector<24xf32> to vector<24x1xf32>
      %cst_332 = arith.constant dense<0.000000e+00> : vector<24x1xf32>
      %392 = tpu.matmul %387, %391, %cst_332 {dimension_numbers = #tpu.dot_dimension_numbers<[1], [0], [0], [1], [0, 0, 1, 1], [], []>} : vector<24x24xf32>, vector<24x1xf32>, vector<24x1xf32> -> vector<24x1xf32>
      %393 = arith.mulf %386, %386 : vector<24x256xf32>
      %cst_333 = arith.constant dense<0.000000e+00> : vector<24xf32>
      %394 = vector.multi_reduction <add>, %393, %cst_333 [1] : vector<24x256xf32> to vector<24xf32>
      %395 = vector.shape_cast %394 : vector<24xf32> to vector<24x1xf32>
      %cst_334 = arith.constant dense<0.000000e+00> : vector<24x1xf32>
      %396 = tpu.matmul %387, %395, %cst_334 {dimension_numbers = #tpu.dot_dimension_numbers<[1], [0], [0], [1], [0, 0, 1, 1], [], []>} : vector<24x24xf32>, vector<24x1xf32>, vector<24x1xf32> -> vector<24x1xf32>
      %397 = arith.mulf %392, %392 : vector<24x1xf32>
      %398 = arith.subf %396, %397 : vector<24x1xf32>
      %cst_335 = arith.constant 0.000000e+00 : f32
      %399 = vector.broadcast %cst_335 : f32 to vector<24x1xf32>
      %400 = arith.maximumf %398, %399 : vector<24x1xf32>
      %401 = vector.broadcast %392 : vector<24x1xf32> to vector<24x256xf32>
      %402 = arith.subf %386, %401 : vector<24x256xf32>
      %cst_336 = arith.constant 9.99999974E-6 : f32
      %403 = vector.broadcast %cst_336 : f32 to vector<24x1xf32>
      %404 = arith.addf %400, %403 : vector<24x1xf32>
      %405 = math.rsqrt %404 : vector<24x1xf32>
      %406 = arith.mulf %405, %388 : vector<24x1xf32>
      %407 = vector.broadcast %406 : vector<24x1xf32> to vector<24x256xf32>
      %408 = arith.mulf %402, %407 : vector<24x256xf32>
      %409 = vector.broadcast %389 : vector<24x1xf32> to vector<24x256xf32>
      %410 = arith.addf %408, %409 : vector<24x256xf32>
      %411 = arith.addf %223, %410 : vector<24x256xf32>
      %cst_337 = arith.constant 0.000000e+00 : f32
      %412 = vector.broadcast %cst_337 : f32 to vector<24x256xf32>
      %413 = arith.maximumf %411, %412 : vector<24x256xf32>
      %c0_338 = arith.constant 0 : index
      %c0_339 = arith.constant 0 : index
      %414 = vector.load %arg6[%c0_338, %c0_339] : memref<24x24xf32, #tpu.memory_space<vmem>>, vector<24x24xf32>
      %c0_340 = arith.constant 0 : index
      %c4_341 = arith.constant 4 : index
      %415 = vector.load %arg7[%c0_340, %c4_341] : memref<64x6xf32, #tpu.memory_space<vmem>>, vector<24x1xf32>
      %c0_342 = arith.constant 0 : index
      %c5_343 = arith.constant 5 : index
      %416 = vector.load %arg7[%c0_342, %c5_343] : memref<64x6xf32, #tpu.memory_space<vmem>>, vector<24x1xf32>
      %cst_344 = arith.constant dense<0.000000e+00> : vector<24xf32>
      %417 = vector.multi_reduction <add>, %413, %cst_344 [1] : vector<24x256xf32> to vector<24xf32>
      %418 = vector.shape_cast %417 : vector<24xf32> to vector<24x1xf32>
      %cst_345 = arith.constant dense<0.000000e+00> : vector<24x1xf32>
      %419 = tpu.matmul %414, %418, %cst_345 {dimension_numbers = #tpu.dot_dimension_numbers<[1], [0], [0], [1], [0, 0, 1, 1], [], []>} : vector<24x24xf32>, vector<24x1xf32>, vector<24x1xf32> -> vector<24x1xf32>
      %420 = arith.mulf %413, %413 : vector<24x256xf32>
      %cst_346 = arith.constant dense<0.000000e+00> : vector<24xf32>
      %421 = vector.multi_reduction <add>, %420, %cst_346 [1] : vector<24x256xf32> to vector<24xf32>
      %422 = vector.shape_cast %421 : vector<24xf32> to vector<24x1xf32>
      %cst_347 = arith.constant dense<0.000000e+00> : vector<24x1xf32>
      %423 = tpu.matmul %414, %422, %cst_347 {dimension_numbers = #tpu.dot_dimension_numbers<[1], [0], [0], [1], [0, 0, 1, 1], [], []>} : vector<24x24xf32>, vector<24x1xf32>, vector<24x1xf32> -> vector<24x1xf32>
      %424 = arith.mulf %419, %419 : vector<24x1xf32>
      %425 = arith.subf %423, %424 : vector<24x1xf32>
      %cst_348 = arith.constant 0.000000e+00 : f32
      %426 = vector.broadcast %cst_348 : f32 to vector<24x1xf32>
      %427 = arith.maximumf %425, %426 : vector<24x1xf32>
      %428 = vector.broadcast %419 : vector<24x1xf32> to vector<24x256xf32>
      %429 = arith.subf %413, %428 : vector<24x256xf32>
      %cst_349 = arith.constant 9.99999974E-6 : f32
      %430 = vector.broadcast %cst_349 : f32 to vector<24x1xf32>
      %431 = arith.addf %427, %430 : vector<24x1xf32>
      %432 = math.rsqrt %431 : vector<24x1xf32>
      %433 = arith.mulf %432, %415 : vector<24x1xf32>
      %434 = vector.broadcast %433 : vector<24x1xf32> to vector<24x256xf32>
      %435 = arith.mulf %429, %434 : vector<24x256xf32>
      %436 = vector.broadcast %416 : vector<24x1xf32> to vector<24x256xf32>
      %437 = arith.addf %435, %436 : vector<24x256xf32>
      %c0_350 = arith.constant 0 : index
      %c0_351 = arith.constant 0 : index
      %438 = vector.load %arg10[%c0_350, %c0_351] : memref<24x256xf32, #tpu.memory_space<vmem>>, vector<24x256xf32>
      tpu.vector_store %arg10[%c0_350, %c0_351], %437 {strides = array<i32>} : memref<24x256xf32, #tpu.memory_space<vmem>>, vector<24x256xf32>,
      %c0_352 = arith.constant 0 : index
      %439 = arith.index_cast %222 : i32 to index
      %c0_353 = arith.constant 0 : index
      %c0_354 = arith.constant 0 : index
      %440 = vector.load %arg9[%c0_352, %439, %c0_353, %c0_354] : memref<1x6x24x256xf32, #tpu.memory_space<vmem>>, vector<1x1x24x256xf32>
      %441 = vector.shape_cast %440 : vector<1x1x24x256xf32> to vector<24x256xf32>
      %442 = vector.shape_cast %437 : vector<24x256xf32> to vector<1x1x24x256xf32>
      tpu.vector_store %arg9[%c0_352, %439, %c0_353, %c0_354], %442 {strides = array<i32>} : memref<1x6x24x256xf32, #tpu.memory_space<vmem>>, vector<1x1x24x256xf32>,
    }
    %c6_i32_1 = arith.constant 6 : i32
    %c0_2 = arith.constant 0 : index
    %c0_3 = arith.constant 0 : index
    %3 = vector.load %arg10[%c0_2, %c0_3] : memref<24x256xf32, #tpu.memory_space<vmem>>, vector<24x256xf32>
    %c0_4 = arith.constant 0 : index
    %c0_5 = arith.constant 0 : index
    %c0_6 = arith.constant 0 : index
    %4 = vector.load %arg4[%c0_4, %c0_5, %c0_6] : memref<9x24x256xf32, #tpu.memory_space<vmem>>, vector<1x24x256xf32>
    %5 = vector.shape_cast %4 : vector<1x24x256xf32> to vector<24x256xf32>
    %c17_i32 = arith.constant 17 : i32
    %6 = tpu.dynamic_rotate %3 by %c17_i32 dim 1 : vector<24x256xf32>, i32 -> vector<24x256xf32>
    %7 = arith.mulf %5, %6 : vector<24x256xf32>
    %c0_7 = arith.constant 0 : index
    %c0_8 = arith.constant 0 : index
    %c0_9 = arith.constant 0 : index
    %8 = vector.load %arg2[%c0_7, %c0_8, %c0_9] : memref<9x64x24xf32, #tpu.memory_space<vmem>>, vector<1x64x24xf32>
    %9 = vector.shape_cast %8 : vector<1x64x24xf32> to vector<64x24xf32>
    %cst_10 = arith.constant dense<0.000000e+00> : vector<64x256xf32>
    %10 = tpu.matmul %9, %7, %cst_10 {dimension_numbers = #tpu.dot_dimension_numbers<[1], [0], [0], [1], [0, 0, 1, 1], [], []>} : vector<64x24xf32>, vector<24x256xf32>, vector<64x256xf32> -> vector<64x256xf32>
    %c1 = arith.constant 1 : index
    %c0_11 = arith.constant 0 : index
    %c0_12 = arith.constant 0 : index
    %11 = vector.load %arg4[%c1, %c0_11, %c0_12] : memref<9x24x256xf32, #tpu.memory_space<vmem>>, vector<1x24x256xf32>
    %12 = vector.shape_cast %11 : vector<1x24x256xf32> to vector<24x256xf32>
    %c16_i32 = arith.constant 16 : i32
    %13 = tpu.dynamic_rotate %3 by %c16_i32 dim 1 : vector<24x256xf32>, i32 -> vector<24x256xf32>
    %14 = arith.mulf %12, %13 : vector<24x256xf32>
    %c1_13 = arith.constant 1 : index
    %c0_14 = arith.constant 0 : index
    %c0_15 = arith.constant 0 : index
    %15 = vector.load %arg2[%c1_13, %c0_14, %c0_15] : memref<9x64x24xf32, #tpu.memory_space<vmem>>, vector<1x64x24xf32>
    %16 = vector.shape_cast %15 : vector<1x64x24xf32> to vector<64x24xf32>
    %cst_16 = arith.constant dense<0.000000e+00> : vector<64x256xf32>
    %17 = tpu.matmul %16, %14, %cst_16 {dimension_numbers = #tpu.dot_dimension_numbers<[1], [0], [0], [1], [0, 0, 1, 1], [], []>} : vector<64x24xf32>, vector<24x256xf32>, vector<64x256xf32> -> vector<64x256xf32>
    %18 = arith.addf %10, %17 : vector<64x256xf32>
    %c2 = arith.constant 2 : index
    %c0_17 = arith.constant 0 : index
    %c0_18 = arith.constant 0 : index
    %19 = vector.load %arg4[%c2, %c0_17, %c0_18] : memref<9x24x256xf32, #tpu.memory_space<vmem>>, vector<1x24x256xf32>
    %20 = vector.shape_cast %19 : vector<1x24x256xf32> to vector<24x256xf32>
    %c15_i32 = arith.constant 15 : i32
    %21 = tpu.dynamic_rotate %3 by %c15_i32 dim 1 : vector<24x256xf32>, i32 -> vector<24x256xf32>
    %22 = arith.mulf %20, %21 : vector<24x256xf32>
    %c2_19 = arith.constant 2 : index
    %c0_20 = arith.constant 0 : index
    %c0_21 = arith.constant 0 : index
    %23 = vector.load %arg2[%c2_19, %c0_20, %c0_21] : memref<9x64x24xf32, #tpu.memory_space<vmem>>, vector<1x64x24xf32>
    %24 = vector.shape_cast %23 : vector<1x64x24xf32> to vector<64x24xf32>
    %cst_22 = arith.constant dense<0.000000e+00> : vector<64x256xf32>
    %25 = tpu.matmul %24, %22, %cst_22 {dimension_numbers = #tpu.dot_dimension_numbers<[1], [0], [0], [1], [0, 0, 1, 1], [], []>} : vector<64x24xf32>, vector<24x256xf32>, vector<64x256xf32> -> vector<64x256xf32>
    %26 = arith.addf %18, %25 : vector<64x256xf32>
    %c3 = arith.constant 3 : index
    %c0_23 = arith.constant 0 : index
    %c0_24 = arith.constant 0 : index
    %27 = vector.load %arg4[%c3, %c0_23, %c0_24] : memref<9x24x256xf32, #tpu.memory_space<vmem>>, vector<1x24x256xf32>
    %28 = vector.shape_cast %27 : vector<1x24x256xf32> to vector<24x256xf32>
    %c1_i32_25 = arith.constant 1 : i32
    %29 = tpu.dynamic_rotate %3 by %c1_i32_25 dim 1 : vector<24x256xf32>, i32 -> vector<24x256xf32>
    %30 = arith.mulf %28, %29 : vector<24x256xf32>
    %c3_26 = arith.constant 3 : index
    %c0_27 = arith.constant 0 : index
    %c0_28 = arith.constant 0 : index
    %31 = vector.load %arg2[%c3_26, %c0_27, %c0_28] : memref<9x64x24xf32, #tpu.memory_space<vmem>>, vector<1x64x24xf32>
    %32 = vector.shape_cast %31 : vector<1x64x24xf32> to vector<64x24xf32>
    %cst_29 = arith.constant dense<0.000000e+00> : vector<64x256xf32>
    %33 = tpu.matmul %32, %30, %cst_29 {dimension_numbers = #tpu.dot_dimension_numbers<[1], [0], [0], [1], [0, 0, 1, 1], [], []>} : vector<64x24xf32>, vector<24x256xf32>, vector<64x256xf32> -> vector<64x256xf32>
    %34 = arith.addf %26, %33 : vector<64x256xf32>
    %c4 = arith.constant 4 : index
    %c0_30 = arith.constant 0 : index
    %c0_31 = arith.constant 0 : index
    %35 = vector.load %arg2[%c4, %c0_30, %c0_31] : memref<9x64x24xf32, #tpu.memory_space<vmem>>, vector<1x64x24xf32>
    %36 = vector.shape_cast %35 : vector<1x64x24xf32> to vector<64x24xf32>
    %cst_32 = arith.constant dense<0.000000e+00> : vector<64x256xf32>
    %37 = tpu.matmul %36, %3, %cst_32 {dimension_numbers = #tpu.dot_dimension_numbers<[1], [0], [0], [1], [0, 0, 1, 1], [], []>} : vector<64x24xf32>, vector<24x256xf32>, vector<64x256xf32> -> vector<64x256xf32>
    %38 = arith.addf %34, %37 : vector<64x256xf32>
    %c5 = arith.constant 5 : index
    %c0_33 = arith.constant 0 : index
    %c0_34 = arith.constant 0 : index
    %39 = vector.load %arg4[%c5, %c0_33, %c0_34] : memref<9x24x256xf32, #tpu.memory_space<vmem>>, vector<1x24x256xf32>
    %40 = vector.shape_cast %39 : vector<1x24x256xf32> to vector<24x256xf32>
    %c255_i32 = arith.constant 255 : i32
    %41 = tpu.dynamic_rotate %3 by %c255_i32 dim 1 : vector<24x256xf32>, i32 -> vector<24x256xf32>
    %42 = arith.mulf %40, %41 : vector<24x256xf32>
    %c5_35 = arith.constant 5 : index
    %c0_36 = arith.constant 0 : index
    %c0_37 = arith.constant 0 : index
    %43 = vector.load %arg2[%c5_35, %c0_36, %c0_37] : memref<9x64x24xf32, #tpu.memory_space<vmem>>, vector<1x64x24xf32>
    %44 = vector.shape_cast %43 : vector<1x64x24xf32> to vector<64x24xf32>
    %cst_38 = arith.constant dense<0.000000e+00> : vector<64x256xf32>
    %45 = tpu.matmul %44, %42, %cst_38 {dimension_numbers = #tpu.dot_dimension_numbers<[1], [0], [0], [1], [0, 0, 1, 1], [], []>} : vector<64x24xf32>, vector<24x256xf32>, vector<64x256xf32> -> vector<64x256xf32>
    %46 = arith.addf %38, %45 : vector<64x256xf32>
    %c6 = arith.constant 6 : index
    %c0_39 = arith.constant 0 : index
    %c0_40 = arith.constant 0 : index
    %47 = vector.load %arg4[%c6, %c0_39, %c0_40] : memref<9x24x256xf32, #tpu.memory_space<vmem>>, vector<1x24x256xf32>
    %48 = vector.shape_cast %47 : vector<1x24x256xf32> to vector<24x256xf32>
    %c241_i32 = arith.constant 241 : i32
    %49 = tpu.dynamic_rotate %3 by %c241_i32 dim 1 : vector<24x256xf32>, i32 -> vector<24x256xf32>
    %50 = arith.mulf %48, %49 : vector<24x256xf32>
    %c6_41 = arith.constant 6 : index
    %c0_42 = arith.constant 0 : index
    %c0_43 = arith.constant 0 : index
    %51 = vector.load %arg2[%c6_41, %c0_42, %c0_43] : memref<9x64x24xf32, #tpu.memory_space<vmem>>, vector<1x64x24xf32>
    %52 = vector.shape_cast %51 : vector<1x64x24xf32> to vector<64x24xf32>
    %cst_44 = arith.constant dense<0.000000e+00> : vector<64x256xf32>
    %53 = tpu.matmul %52, %50, %cst_44 {dimension_numbers = #tpu.dot_dimension_numbers<[1], [0], [0], [1], [0, 0, 1, 1], [], []>} : vector<64x24xf32>, vector<24x256xf32>, vector<64x256xf32> -> vector<64x256xf32>
    %54 = arith.addf %46, %53 : vector<64x256xf32>
    %c7 = arith.constant 7 : index
    %c0_45 = arith.constant 0 : index
    %c0_46 = arith.constant 0 : index
    %55 = vector.load %arg4[%c7, %c0_45, %c0_46] : memref<9x24x256xf32, #tpu.memory_space<vmem>>, vector<1x24x256xf32>
    %56 = vector.shape_cast %55 : vector<1x24x256xf32> to vector<24x256xf32>
    %c240_i32 = arith.constant 240 : i32
    %57 = tpu.dynamic_rotate %3 by %c240_i32 dim 1 : vector<24x256xf32>, i32 -> vector<24x256xf32>
    %58 = arith.mulf %56, %57 : vector<24x256xf32>
    %c7_47 = arith.constant 7 : index
    %c0_48 = arith.constant 0 : index
    %c0_49 = arith.constant 0 : index
    %59 = vector.load %arg2[%c7_47, %c0_48, %c0_49] : memref<9x64x24xf32, #tpu.memory_space<vmem>>, vector<1x64x24xf32>
    %60 = vector.shape_cast %59 : vector<1x64x24xf32> to vector<64x24xf32>
    %cst_50 = arith.constant dense<0.000000e+00> : vector<64x256xf32>
    %61 = tpu.matmul %60, %58, %cst_50 {dimension_numbers = #tpu.dot_dimension_numbers<[1], [0], [0], [1], [0, 0, 1, 1], [], []>} : vector<64x24xf32>, vector<24x256xf32>, vector<64x256xf32> -> vector<64x256xf32>
    %62 = arith.addf %54, %61 : vector<64x256xf32>
    %c8 = arith.constant 8 : index
    %c0_51 = arith.constant 0 : index
    %c0_52 = arith.constant 0 : index
    %63 = vector.load %arg4[%c8, %c0_51, %c0_52] : memref<9x24x256xf32, #tpu.memory_space<vmem>>, vector<1x24x256xf32>
    %64 = vector.shape_cast %63 : vector<1x24x256xf32> to vector<24x256xf32>
    %c239_i32 = arith.constant 239 : i32
    %65 = tpu.dynamic_rotate %3 by %c239_i32 dim 1 : vector<24x256xf32>, i32 -> vector<24x256xf32>
    %66 = arith.mulf %64, %65 : vector<24x256xf32>
    %c8_53 = arith.constant 8 : index
    %c0_54 = arith.constant 0 : index
    %c0_55 = arith.constant 0 : index
    %67 = vector.load %arg2[%c8_53, %c0_54, %c0_55] : memref<9x64x24xf32, #tpu.memory_space<vmem>>, vector<1x64x24xf32>
    %68 = vector.shape_cast %67 : vector<1x64x24xf32> to vector<64x24xf32>
    %cst_56 = arith.constant dense<0.000000e+00> : vector<64x256xf32>
    %69 = tpu.matmul %68, %66, %cst_56 {dimension_numbers = #tpu.dot_dimension_numbers<[1], [0], [0], [1], [0, 0, 1, 1], [], []>} : vector<64x24xf32>, vector<24x256xf32>, vector<64x256xf32> -> vector<64x256xf32>
    %70 = arith.addf %62, %69 : vector<64x256xf32>
    %cst_57 = arith.constant 0.000000e+00 : f32
    %71 = vector.broadcast %cst_57 : f32 to vector<64x256xf32>
    %72 = arith.maximumf %70, %71 : vector<64x256xf32>
    %c0_58 = arith.constant 0 : index
    %c0_59 = arith.constant 0 : index
    %73 = vector.load %arg5[%c0_58, %c0_59] : memref<64x64xf32, #tpu.memory_space<vmem>>, vector<64x64xf32>
    %c0_60 = arith.constant 0 : index
    %c0_61 = arith.constant 0 : index
    %74 = vector.load %arg7[%c0_60, %c0_61] : memref<64x6xf32, #tpu.memory_space<vmem>>, vector<64x1xf32>
    %c0_62 = arith.constant 0 : index
    %c1_63 = arith.constant 1 : index
    %75 = vector.load %arg7[%c0_62, %c1_63] : memref<64x6xf32, #tpu.memory_space<vmem>>, vector<64x1xf32>
    %cst_64 = arith.constant dense<0.000000e+00> : vector<64xf32>
    %76 = vector.multi_reduction <add>, %72, %cst_64 [1] : vector<64x256xf32> to vector<64xf32>
    %77 = vector.shape_cast %76 : vector<64xf32> to vector<64x1xf32>
    %cst_65 = arith.constant dense<0.000000e+00> : vector<64x1xf32>
    %78 = tpu.matmul %73, %77, %cst_65 {dimension_numbers = #tpu.dot_dimension_numbers<[1], [0], [0], [1], [0, 0, 1, 1], [], []>} : vector<64x64xf32>, vector<64x1xf32>, vector<64x1xf32> -> vector<64x1xf32>
    %79 = arith.mulf %72, %72 : vector<64x256xf32>
    %cst_66 = arith.constant dense<0.000000e+00> : vector<64xf32>
    %80 = vector.multi_reduction <add>, %79, %cst_66 [1] : vector<64x256xf32> to vector<64xf32>
    %81 = vector.shape_cast %80 : vector<64xf32> to vector<64x1xf32>
    %cst_67 = arith.constant dense<0.000000e+00> : vector<64x1xf32>
    %82 = tpu.matmul %73, %81, %cst_67 {dimension_numbers = #tpu.dot_dimension_numbers<[1], [0], [0], [1], [0, 0, 1, 1], [], []>} : vector<64x64xf32>, vector<64x1xf32>, vector<64x1xf32> -> vector<64x1xf32>
    %83 = arith.mulf %78, %78 : vector<64x1xf32>
    %84 = arith.subf %82, %83 : vector<64x1xf32>
    %cst_68 = arith.constant 0.000000e+00 : f32
    %85 = vector.broadcast %cst_68 : f32 to vector<64x1xf32>
    %86 = arith.maximumf %84, %85 : vector<64x1xf32>
    %87 = vector.broadcast %78 : vector<64x1xf32> to vector<64x256xf32>
    %88 = arith.subf %72, %87 : vector<64x256xf32>
    %cst_69 = arith.constant 9.99999974E-6 : f32
    %89 = vector.broadcast %cst_69 : f32 to vector<64x1xf32>
    %90 = arith.addf %86, %89 : vector<64x1xf32>
    %91 = math.rsqrt %90 : vector<64x1xf32>
    %92 = arith.mulf %91, %74 : vector<64x1xf32>
    %93 = vector.broadcast %92 : vector<64x1xf32> to vector<64x256xf32>
    %94 = arith.mulf %88, %93 : vector<64x256xf32>
    %95 = vector.broadcast %75 : vector<64x1xf32> to vector<64x256xf32>
    %96 = arith.addf %94, %95 : vector<64x256xf32>
    %c0_70 = arith.constant 0 : index
    %c0_71 = arith.constant 0 : index
    %c0_72 = arith.constant 0 : index
    %97 = vector.load %arg3[%c0_70, %c0_71, %c0_72] : memref<9x24x64xf32, #tpu.memory_space<vmem>>, vector<1x24x64xf32>
    %98 = vector.shape_cast %97 : vector<1x24x64xf32> to vector<24x64xf32>
    %cst_73 = arith.constant dense<0.000000e+00> : vector<24x256xf32>
    %99 = tpu.matmul %98, %96, %cst_73 {dimension_numbers = #tpu.dot_dimension_numbers<[1], [0], [0], [1], [0, 0, 1, 1], [], []>} : vector<24x64xf32>, vector<64x256xf32>, vector<24x256xf32> -> vector<24x256xf32>
    %c0_74 = arith.constant 0 : index
    %c0_75 = arith.constant 0 : index
    %c0_76 = arith.constant 0 : index
    %100 = vector.load %arg4[%c0_74, %c0_75, %c0_76] : memref<9x24x256xf32, #tpu.memory_space<vmem>>, vector<1x24x256xf32>
    %101 = vector.shape_cast %100 : vector<1x24x256xf32> to vector<24x256xf32>
    %c17_i32_77 = arith.constant 17 : i32
    %102 = tpu.dynamic_rotate %99 by %c17_i32_77 dim 1 : vector<24x256xf32>, i32 -> vector<24x256xf32>
    %103 = arith.mulf %101, %102 : vector<24x256xf32>
    %c1_78 = arith.constant 1 : index
    %c0_79 = arith.constant 0 : index
    %c0_80 = arith.constant 0 : index
    %104 = vector.load %arg3[%c1_78, %c0_79, %c0_80] : memref<9x24x64xf32, #tpu.memory_space<vmem>>, vector<1x24x64xf32>
    %105 = vector.shape_cast %104 : vector<1x24x64xf32> to vector<24x64xf32>
    %cst_81 = arith.constant dense<0.000000e+00> : vector<24x256xf32>
    %106 = tpu.matmul %105, %96, %cst_81 {dimension_numbers = #tpu.dot_dimension_numbers<[1], [0], [0], [1], [0, 0, 1, 1], [], []>} : vector<24x64xf32>, vector<64x256xf32>, vector<24x256xf32> -> vector<24x256xf32>
    %c1_82 = arith.constant 1 : index
    %c0_83 = arith.constant 0 : index
    %c0_84 = arith.constant 0 : index
    %107 = vector.load %arg4[%c1_82, %c0_83, %c0_84] : memref<9x24x256xf32, #tpu.memory_space<vmem>>, vector<1x24x256xf32>
    %108 = vector.shape_cast %107 : vector<1x24x256xf32> to vector<24x256xf32>
    %c16_i32_85 = arith.constant 16 : i32
    %109 = tpu.dynamic_rotate %106 by %c16_i32_85 dim 1 : vector<24x256xf32>, i32 -> vector<24x256xf32>
    %110 = arith.mulf %108, %109 : vector<24x256xf32>
    %111 = arith.addf %103, %110 : vector<24x256xf32>
    %c2_86 = arith.constant 2 : index
    %c0_87 = arith.constant 0 : index
    %c0_88 = arith.constant 0 : index
    %112 = vector.load %arg3[%c2_86, %c0_87, %c0_88] : memref<9x24x64xf32, #tpu.memory_space<vmem>>, vector<1x24x64xf32>
    %113 = vector.shape_cast %112 : vector<1x24x64xf32> to vector<24x64xf32>
    %cst_89 = arith.constant dense<0.000000e+00> : vector<24x256xf32>
    %114 = tpu.matmul %113, %96, %cst_89 {dimension_numbers = #tpu.dot_dimension_numbers<[1], [0], [0], [1], [0, 0, 1, 1], [], []>} : vector<24x64xf32>, vector<64x256xf32>, vector<24x256xf32> -> vector<24x256xf32>
    %c2_90 = arith.constant 2 : index
    %c0_91 = arith.constant 0 : index
    %c0_92 = arith.constant 0 : index
    %115 = vector.load %arg4[%c2_90, %c0_91, %c0_92] : memref<9x24x256xf32, #tpu.memory_space<vmem>>, vector<1x24x256xf32>
    %116 = vector.shape_cast %115 : vector<1x24x256xf32> to vector<24x256xf32>
    %c15_i32_93 = arith.constant 15 : i32
    %117 = tpu.dynamic_rotate %114 by %c15_i32_93 dim 1 : vector<24x256xf32>, i32 -> vector<24x256xf32>
    %118 = arith.mulf %116, %117 : vector<24x256xf32>
    %119 = arith.addf %111, %118 : vector<24x256xf32>
    %c3_94 = arith.constant 3 : index
    %c0_95 = arith.constant 0 : index
    %c0_96 = arith.constant 0 : index
    %120 = vector.load %arg3[%c3_94, %c0_95, %c0_96] : memref<9x24x64xf32, #tpu.memory_space<vmem>>, vector<1x24x64xf32>
    %121 = vector.shape_cast %120 : vector<1x24x64xf32> to vector<24x64xf32>
    %cst_97 = arith.constant dense<0.000000e+00> : vector<24x256xf32>
    %122 = tpu.matmul %121, %96, %cst_97 {dimension_numbers = #tpu.dot_dimension_numbers<[1], [0], [0], [1], [0, 0, 1, 1], [], []>} : vector<24x64xf32>, vector<64x256xf32>, vector<24x256xf32> -> vector<24x256xf32>
    %c3_98 = arith.constant 3 : index
    %c0_99 = arith.constant 0 : index
    %c0_100 = arith.constant 0 : index
    %123 = vector.load %arg4[%c3_98, %c0_99, %c0_100] : memref<9x24x256xf32, #tpu.memory_space<vmem>>, vector<1x24x256xf32>
    %124 = vector.shape_cast %123 : vector<1x24x256xf32> to vector<24x256xf32>
    %c1_i32_101 = arith.constant 1 : i32
    %125 = tpu.dynamic_rotate %122 by %c1_i32_101 dim 1 : vector<24x256xf32>, i32 -> vector<24x256xf32>
    %126 = arith.mulf %124, %125 : vector<24x256xf32>
    %127 = arith.addf %119, %126 : vector<24x256xf32>
    %c4_102 = arith.constant 4 : index
    %c0_103 = arith.constant 0 : index
    %c0_104 = arith.constant 0 : index
    %128 = vector.load %arg3[%c4_102, %c0_103, %c0_104] : memref<9x24x64xf32, #tpu.memory_space<vmem>>, vector<1x24x64xf32>
    %129 = vector.shape_cast %128 : vector<1x24x64xf32> to vector<24x64xf32>
    %cst_105 = arith.constant dense<0.000000e+00> : vector<24x256xf32>
    %130 = tpu.matmul %129, %96, %cst_105 {dimension_numbers = #tpu.dot_dimension_numbers<[1], [0], [0], [1], [0, 0, 1, 1], [], []>} : vector<24x64xf32>, vector<64x256xf32>, vector<24x256xf32> -> vector<24x256xf32>
    %131 = arith.addf %127, %130 : vector<24x256xf32>
    %c5_106 = arith.constant 5 : index
    %c0_107 = arith.constant 0 : index
    %c0_108 = arith.constant 0 : index
    %132 = vector.load %arg3[%c5_106, %c0_107, %c0_108] : memref<9x24x64xf32, #tpu.memory_space<vmem>>, vector<1x24x64xf32>
    %133 = vector.shape_cast %132 : vector<1x24x64xf32> to vector<24x64xf32>
    %cst_109 = arith.constant dense<0.000000e+00> : vector<24x256xf32>
    %134 = tpu.matmul %133, %96, %cst_109 {dimension_numbers = #tpu.dot_dimension_numbers<[1], [0], [0], [1], [0, 0, 1, 1], [], []>} : vector<24x64xf32>, vector<64x256xf32>, vector<24x256xf32> -> vector<24x256xf32>
    %c5_110 = arith.constant 5 : index
    %c0_111 = arith.constant 0 : index
    %c0_112 = arith.constant 0 : index
    %135 = vector.load %arg4[%c5_110, %c0_111, %c0_112] : memref<9x24x256xf32, #tpu.memory_space<vmem>>, vector<1x24x256xf32>
    %136 = vector.shape_cast %135 : vector<1x24x256xf32> to vector<24x256xf32>
    %c255_i32_113 = arith.constant 255 : i32
    %137 = tpu.dynamic_rotate %134 by %c255_i32_113 dim 1 : vector<24x256xf32>, i32 -> vector<24x256xf32>
    %138 = arith.mulf %136, %137 : vector<24x256xf32>
    %139 = arith.addf %131, %138 : vector<24x256xf32>
    %c6_114 = arith.constant 6 : index
    %c0_115 = arith.constant 0 : index
    %c0_116 = arith.constant 0 : index
    %140 = vector.load %arg3[%c6_114, %c0_115, %c0_116] : memref<9x24x64xf32, #tpu.memory_space<vmem>>, vector<1x24x64xf32>
    %141 = vector.shape_cast %140 : vector<1x24x64xf32> to vector<24x64xf32>
    %cst_117 = arith.constant dense<0.000000e+00> : vector<24x256xf32>
    %142 = tpu.matmul %141, %96, %cst_117 {dimension_numbers = #tpu.dot_dimension_numbers<[1], [0], [0], [1], [0, 0, 1, 1], [], []>} : vector<24x64xf32>, vector<64x256xf32>, vector<24x256xf32> -> vector<24x256xf32>
    %c6_118 = arith.constant 6 : index
    %c0_119 = arith.constant 0 : index
    %c0_120 = arith.constant 0 : index
    %143 = vector.load %arg4[%c6_118, %c0_119, %c0_120] : memref<9x24x256xf32, #tpu.memory_space<vmem>>, vector<1x24x256xf32>
    %144 = vector.shape_cast %143 : vector<1x24x256xf32> to vector<24x256xf32>
    %c241_i32_121 = arith.constant 241 : i32
    %145 = tpu.dynamic_rotate %142 by %c241_i32_121 dim 1 : vector<24x256xf32>, i32 -> vector<24x256xf32>
    %146 = arith.mulf %144, %145 : vector<24x256xf32>
    %147 = arith.addf %139, %146 : vector<24x256xf32>
    %c7_122 = arith.constant 7 : index
    %c0_123 = arith.constant 0 : index
    %c0_124 = arith.constant 0 : index
    %148 = vector.load %arg3[%c7_122, %c0_123, %c0_124] : memref<9x24x64xf32, #tpu.memory_space<vmem>>, vector<1x24x64xf32>
    %149 = vector.shape_cast %148 : vector<1x24x64xf32> to vector<24x64xf32>
    %cst_125 = arith.constant dense<0.000000e+00> : vector<24x256xf32>
    %150 = tpu.matmul %149, %96, %cst_125 {dimension_numbers = #tpu.dot_dimension_numbers<[1], [0], [0], [1], [0, 0, 1, 1], [], []>} : vector<24x64xf32>, vector<64x256xf32>, vector<24x256xf32> -> vector<24x256xf32>
    %c7_126 = arith.constant 7 : index
    %c0_127 = arith.constant 0 : index
    %c0_128 = arith.constant 0 : index
    %151 = vector.load %arg4[%c7_126, %c0_127, %c0_128] : memref<9x24x256xf32, #tpu.memory_space<vmem>>, vector<1x24x256xf32>
    %152 = vector.shape_cast %151 : vector<1x24x256xf32> to vector<24x256xf32>
    %c240_i32_129 = arith.constant 240 : i32
    %153 = tpu.dynamic_rotate %150 by %c240_i32_129 dim 1 : vector<24x256xf32>, i32 -> vector<24x256xf32>
    %154 = arith.mulf %152, %153 : vector<24x256xf32>
    %155 = arith.addf %147, %154 : vector<24x256xf32>
    %c8_130 = arith.constant 8 : index
    %c0_131 = arith.constant 0 : index
    %c0_132 = arith.constant 0 : index
    %156 = vector.load %arg3[%c8_130, %c0_131, %c0_132] : memref<9x24x64xf32, #tpu.memory_space<vmem>>, vector<1x24x64xf32>
    %157 = vector.shape_cast %156 : vector<1x24x64xf32> to vector<24x64xf32>
    %cst_133 = arith.constant dense<0.000000e+00> : vector<24x256xf32>
    %158 = tpu.matmul %157, %96, %cst_133 {dimension_numbers = #tpu.dot_dimension_numbers<[1], [0], [0], [1], [0, 0, 1, 1], [], []>} : vector<24x64xf32>, vector<64x256xf32>, vector<24x256xf32> -> vector<24x256xf32>
    %c8_134 = arith.constant 8 : index
    %c0_135 = arith.constant 0 : index
    %c0_136 = arith.constant 0 : index
    %159 = vector.load %arg4[%c8_134, %c0_135, %c0_136] : memref<9x24x256xf32, #tpu.memory_space<vmem>>, vector<1x24x256xf32>
    %160 = vector.shape_cast %159 : vector<1x24x256xf32> to vector<24x256xf32>
    %c239_i32_137 = arith.constant 239 : i32
    %161 = tpu.dynamic_rotate %158 by %c239_i32_137 dim 1 : vector<24x256xf32>, i32 -> vector<24x256xf32>
    %162 = arith.mulf %160, %161 : vector<24x256xf32>
    %163 = arith.addf %155, %162 : vector<24x256xf32>
    %c0_138 = arith.constant 0 : index
    %c0_139 = arith.constant 0 : index
    %c0_140 = arith.constant 0 : index
    %164 = vector.load %arg1[%c0_138, %c0_139, %c0_140] : memref<1x24x256xf32, #tpu.memory_space<vmem>>, vector<1x24x256xf32>
    %165 = vector.shape_cast %164 : vector<1x24x256xf32> to vector<24x256xf32>
    %166 = arith.addf %165, %163 : vector<24x256xf32>
    %c0_141 = arith.constant 0 : index
    %c0_142 = arith.constant 0 : index
    %167 = vector.load %arg6[%c0_141, %c0_142] : memref<24x24xf32, #tpu.memory_space<vmem>>, vector<24x24xf32>
    %c0_143 = arith.constant 0 : index
    %c2_144 = arith.constant 2 : index
    %168 = vector.load %arg7[%c0_143, %c2_144] : memref<64x6xf32, #tpu.memory_space<vmem>>, vector<24x1xf32>
    %c0_145 = arith.constant 0 : index
    %c3_146 = arith.constant 3 : index
    %169 = vector.load %arg7[%c0_145, %c3_146] : memref<64x6xf32, #tpu.memory_space<vmem>>, vector<24x1xf32>
    %cst_147 = arith.constant dense<0.000000e+00> : vector<24xf32>
    %170 = vector.multi_reduction <add>, %166, %cst_147 [1] : vector<24x256xf32> to vector<24xf32>
    %171 = vector.shape_cast %170 : vector<24xf32> to vector<24x1xf32>
    %cst_148 = arith.constant dense<0.000000e+00> : vector<24x1xf32>
    %172 = tpu.matmul %167, %171, %cst_148 {dimension_numbers = #tpu.dot_dimension_numbers<[1], [0], [0], [1], [0, 0, 1, 1], [], []>} : vector<24x24xf32>, vector<24x1xf32>, vector<24x1xf32> -> vector<24x1xf32>
    %173 = arith.mulf %166, %166 : vector<24x256xf32>
    %cst_149 = arith.constant dense<0.000000e+00> : vector<24xf32>
    %174 = vector.multi_reduction <add>, %173, %cst_149 [1] : vector<24x256xf32> to vector<24xf32>
    %175 = vector.shape_cast %174 : vector<24xf32> to vector<24x1xf32>
    %cst_150 = arith.constant dense<0.000000e+00> : vector<24x1xf32>
    %176 = tpu.matmul %167, %175, %cst_150 {dimension_numbers = #tpu.dot_dimension_numbers<[1], [0], [0], [1], [0, 0, 1, 1], [], []>} : vector<24x24xf32>, vector<24x1xf32>, vector<24x1xf32> -> vector<24x1xf32>
    %177 = arith.mulf %172, %172 : vector<24x1xf32>
    %178 = arith.subf %176, %177 : vector<24x1xf32>
    %cst_151 = arith.constant 0.000000e+00 : f32
    %179 = vector.broadcast %cst_151 : f32 to vector<24x1xf32>
    %180 = arith.maximumf %178, %179 : vector<24x1xf32>
    %181 = vector.broadcast %172 : vector<24x1xf32> to vector<24x256xf32>
    %182 = arith.subf %166, %181 : vector<24x256xf32>
    %cst_152 = arith.constant 9.99999974E-6 : f32
    %183 = vector.broadcast %cst_152 : f32 to vector<24x1xf32>
    %184 = arith.addf %180, %183 : vector<24x1xf32>
    %185 = math.rsqrt %184 : vector<24x1xf32>
    %186 = arith.mulf %185, %168 : vector<24x1xf32>
    %187 = vector.broadcast %186 : vector<24x1xf32> to vector<24x256xf32>
    %188 = arith.mulf %182, %187 : vector<24x256xf32>
    %189 = vector.broadcast %169 : vector<24x1xf32> to vector<24x256xf32>
    %190 = arith.addf %188, %189 : vector<24x256xf32>
    %191 = arith.addf %3, %190 : vector<24x256xf32>
    %cst_153 = arith.constant 0.000000e+00 : f32
    %192 = vector.broadcast %cst_153 : f32 to vector<24x256xf32>
    %193 = arith.maximumf %191, %192 : vector<24x256xf32>
    %c0_154 = arith.constant 0 : index
    %c0_155 = arith.constant 0 : index
    %194 = vector.load %arg6[%c0_154, %c0_155] : memref<24x24xf32, #tpu.memory_space<vmem>>, vector<24x24xf32>
    %c0_156 = arith.constant 0 : index
    %c4_157 = arith.constant 4 : index
    %195 = vector.load %arg7[%c0_156, %c4_157] : memref<64x6xf32, #tpu.memory_space<vmem>>, vector<24x1xf32>
    %c0_158 = arith.constant 0 : index
    %c5_159 = arith.constant 5 : index
    %196 = vector.load %arg7[%c0_158, %c5_159] : memref<64x6xf32, #tpu.memory_space<vmem>>, vector<24x1xf32>
    %cst_160 = arith.constant dense<0.000000e+00> : vector<24xf32>
    %197 = vector.multi_reduction <add>, %193, %cst_160 [1] : vector<24x256xf32> to vector<24xf32>
    %198 = vector.shape_cast %197 : vector<24xf32> to vector<24x1xf32>
    %cst_161 = arith.constant dense<0.000000e+00> : vector<24x1xf32>
    %199 = tpu.matmul %194, %198, %cst_161 {dimension_numbers = #tpu.dot_dimension_numbers<[1], [0], [0], [1], [0, 0, 1, 1], [], []>} : vector<24x24xf32>, vector<24x1xf32>, vector<24x1xf32> -> vector<24x1xf32>
    %200 = arith.mulf %193, %193 : vector<24x256xf32>
    %cst_162 = arith.constant dense<0.000000e+00> : vector<24xf32>
    %201 = vector.multi_reduction <add>, %200, %cst_162 [1] : vector<24x256xf32> to vector<24xf32>
    %202 = vector.shape_cast %201 : vector<24xf32> to vector<24x1xf32>
    %cst_163 = arith.constant dense<0.000000e+00> : vector<24x1xf32>
    %203 = tpu.matmul %194, %202, %cst_163 {dimension_numbers = #tpu.dot_dimension_numbers<[1], [0], [0], [1], [0, 0, 1, 1], [], []>} : vector<24x24xf32>, vector<24x1xf32>, vector<24x1xf32> -> vector<24x1xf32>
    %204 = arith.mulf %199, %199 : vector<24x1xf32>
    %205 = arith.subf %203, %204 : vector<24x1xf32>
    %cst_164 = arith.constant 0.000000e+00 : f32
    %206 = vector.broadcast %cst_164 : f32 to vector<24x1xf32>
    %207 = arith.maximumf %205, %206 : vector<24x1xf32>
    %208 = vector.broadcast %199 : vector<24x1xf32> to vector<24x256xf32>
    %209 = arith.subf %193, %208 : vector<24x256xf32>
    %cst_165 = arith.constant 9.99999974E-6 : f32
    %210 = vector.broadcast %cst_165 : f32 to vector<24x1xf32>
    %211 = arith.addf %207, %210 : vector<24x1xf32>
    %212 = math.rsqrt %211 : vector<24x1xf32>
    %213 = arith.mulf %212, %195 : vector<24x1xf32>
    %214 = vector.broadcast %213 : vector<24x1xf32> to vector<24x256xf32>
    %215 = arith.mulf %209, %214 : vector<24x256xf32>
    %216 = vector.broadcast %196 : vector<24x1xf32> to vector<24x256xf32>
    %217 = arith.addf %215, %216 : vector<24x256xf32>
    %c0_166 = arith.constant 0 : index
    %c0_167 = arith.constant 0 : index
    %c0_168 = arith.constant 0 : index
    %218 = vector.load %arg8[%c0_166, %c0_167, %c0_168] : memref<1x24x256xf32, #tpu.memory_space<vmem>>, vector<1x24x256xf32>
    %219 = vector.shape_cast %218 : vector<1x24x256xf32> to vector<24x256xf32>
    %220 = vector.shape_cast %217 : vector<24x256xf32> to vector<1x24x256xf32>
    tpu.vector_store %arg8[%c0_166, %c0_167, %c0_168], %220 {strides = array<i32>} : memref<1x24x256xf32, #tpu.memory_space<vmem>>, vector<1x24x256xf32>,
    return
  }
  func.func @transform_0(%arg0: i32) -> (i32, i32, i32) {
    %c0_i32 = arith.constant 0 : i32
    %c0_i32_0 = arith.constant 0 : i32
    %c0_i32_1 = arith.constant 0 : i32
    return %arg0, %c0_i32, %c0_i32_0 : i32, i32, i32
  }
  func.func @transform_1(%arg0: i32) -> (i32, i32, i32) {
    %c0_i32 = arith.constant 0 : i32
    %c0_i32_0 = arith.constant 0 : i32
    %c0_i32_1 = arith.constant 0 : i32
    %c0_i32_2 = arith.constant 0 : i32
    return %c0_i32, %c0_i32_0, %c0_i32_1 : i32, i32, i32
  }
  func.func @transform_2(%arg0: i32) -> (i32, i32, i32) {
    %c0_i32 = arith.constant 0 : i32
    %c0_i32_0 = arith.constant 0 : i32
    %c0_i32_1 = arith.constant 0 : i32
    %c0_i32_2 = arith.constant 0 : i32
    return %c0_i32, %c0_i32_0, %c0_i32_1 : i32, i32, i32
  }
  func.func @transform_3(%arg0: i32) -> (i32, i32, i32) {
    %c0_i32 = arith.constant 0 : i32
    %c0_i32_0 = arith.constant 0 : i32
    %c0_i32_1 = arith.constant 0 : i32
    %c0_i32_2 = arith.constant 0 : i32
    return %c0_i32, %c0_i32_0, %c0_i32_1 : i32, i32, i32
  }
  func.func @transform_4(%arg0: i32) -> (i32, i32) {
    %c0_i32 = arith.constant 0 : i32
    %c0_i32_0 = arith.constant 0 : i32
    %c0_i32_1 = arith.constant 0 : i32
    return %c0_i32, %c0_i32_0 : i32, i32
  }
  func.func @transform_5(%arg0: i32) -> (i32, i32) {
    %c0_i32 = arith.constant 0 : i32
    %c0_i32_0 = arith.constant 0 : i32
    %c0_i32_1 = arith.constant 0 : i32
    return %c0_i32, %c0_i32_0 : i32, i32
  }
  func.func @transform_6(%arg0: i32) -> (i32, i32) {
    %c0_i32 = arith.constant 0 : i32
    %c0_i32_0 = arith.constant 0 : i32
    %c0_i32_1 = arith.constant 0 : i32
    return %c0_i32, %c0_i32_0 : i32, i32
  }
  func.func @transform_7(%arg0: i32) -> (i32, i32, i32) {
    %c0_i32 = arith.constant 0 : i32
    %c0_i32_0 = arith.constant 0 : i32
    %c0_i32_1 = arith.constant 0 : i32
    return %arg0, %c0_i32, %c0_i32_0 : i32, i32, i32
  }
  func.func @transform_8(%arg0: i32) -> (i32, i32, i32, i32) {
    %c0_i32 = arith.constant 0 : i32
    %c0_i32_0 = arith.constant 0 : i32
    %c0_i32_1 = arith.constant 0 : i32
    %c0_i32_2 = arith.constant 0 : i32
    return %arg0, %c0_i32, %c0_i32_0, %c0_i32_1 : i32, i32, i32, i32
  }
}

</mosaic_0001>

<llo_original>
// kernel: deq_fixed_point.1
$region0: #{deq_fixed_point.1}
  #allocation0 [shape = 'u32[]', space=smem, size = 0x4, offset = 0x4, fixed_abs, tag = 'smem constant byte address 0x4 - core index']
  #allocation1 [shape = 'u32[144,128]{1,0:T(1,128)}', space=vmem, size = 0x12000, scoped, tag = 'internal scratch']
  #allocation2 [shape = 'f32[24,256]{1,0:T(8,128)}', space=vmem, size = 0x6000, scoped, tag = 'scratch operand']
  %s0 = inlined_call_operand.vmem [shape: f32[2,24,256], index: 0, kind: input, shape index: {}]
  %s1 = inlined_call_operand.vmem [shape: f32[9,64,24], index: 1, kind: input, shape index: {}]
  %s2 = inlined_call_operand.hbm [shape: f32[9,24,64], index: 2, kind: input, shape index: {}]
  %s3 = inlined_call_operand.vmem [shape: f32[9,24,256], index: 3, kind: input, shape index: {}]
  %s4 = inlined_call_operand.vmem [shape: f32[64,64], index: 4, kind: input, shape index: {}]
  %s5 = inlined_call_operand.vmem [shape: f32[24,24], index: 5, kind: input, shape index: {}]
  %s6 = inlined_call_operand.vmem [shape: f32[64,6], index: 6, kind: input, shape index: {}]
  %s7 = inlined_call_operand.vmem [shape: f32[2,24,256], index: 7, kind: output, shape index: {0}]
  %s8 = inlined_call_operand.vmem [shape: f32[2,6,24,256], index: 8, kind: output, shape index: {1}]
  %9 = xla_tuple %s7, %s8
  %s10 = sld [smem:[#allocation0]]
  $region80: #{deq_fixed_point.1} parent=0
    _
  %s12 = ssub.s32 1, %s10
  %s13 = scalar_select 0, %s12, %s10
  $region1: #{deq_fixed_point.1} parent=0
    #allocation3 [shape = 'u8[110592]{0}', space=vmem, size = 0x1b000, scoped, tag = 'input window, operand 2, single buffered']
    #allocation4 [shape = 's32[2]{0}', space=sflag, size = 0x8, scoped, tag = 'scoped memory for deq_fixed_point.1']
    %14 = vsyncpa [#allocation4], 0
    loop: start=0, step=1, limit=4
    $region2: #{deq_fixed_point.1} parent=1 // loop_pre_header
      _
    $region3: #{deq_fixed_point.1} parent=1 // loop_header
      %s16 = sphi 0, %s20
      %p17 = scmp.ge.s32.totalorder %s16, 4
      %s26 = sphi 0, %s28
      %s29 = sphi 0, %s26
      %s30 = sphi 0, %s29
      %s46 = sphi 0, %s30
      %s50 = sphi 0, %s50
      %s52 = sphi 0, %s50
      %s53 = sphi 0, %s52
      %s67 = sphi 0, %s53
      %s71 = sphi 0, %s71
      %s73 = sphi 0, %s71
      %s74 = sphi 0, %s73
      %s88 = sphi 0, %s74
      %s92 = sphi 0, %s92
      %s94 = sphi 0, %s92
      %s95 = sphi 0, %s94
      %s109 = sphi 0, %s95
      %s113 = sphi 0, %s113
      %s115 = sphi 0, %s113
      %s116 = sphi 0, %s115
      %s130 = sphi 0, %s116
      %s134 = sphi 0, %s134
      %s136 = sphi 0, %s134
      %s137 = sphi 0, %s136
      %s151 = sphi 0, %s137
      %s155 = sphi 0, %s155
      %s157 = sphi 0, %s155
      %s158 = sphi 0, %s157
      %s172 = sphi 0, %s158
      %s178 = sphi 0, %s180
      %s181 = sphi 0, %s178
      %s182 = sphi 0, %s181
      %s198 = sphi 0, %s182
      %s204 = sphi 0, %s206
      %s207 = sphi 0, %s204
      %s208 = sphi 0, %s207
      %s224 = sphi 0, %s208
    $region4: #{deq_fixed_point.1} parent=1 // loop_header_branch
      %19 = sbr.rel (%p17) target = $region8
    $region5: #{deq_fixed_point.1} parent=1 // loop_body
      %s21 = ssub.s32 %s16, 1
      %s22 = ssub.s32 %s16, 2
      %s23 = sadd.s32 %s16, 1
      %s24 = ssub.s32 %s16, %s23
      %p25 = scmp.eq.s32.totalorder %s24, 0
      %s27 = sadd.s32 %s26, 1
      %s28 = scalar_select %p25, %s26, %s27
      %p31 = pneg %p25
      %p32 = scmp.eq.s32.totalorder %s16, 1
      %p33 = por %p31, %p32
      %p34 = scmp.ne.s32.totalorder %s26, %s29
      %p35 = scmp.eq.s32.totalorder %s16, 0
      %p36 = por %p34, %p35
      %p37 = scmp.ne.s32.totalorder %s26, %s29
      %p38 = scmp.eq.s32.totalorder %s21, 1
      %p39 = por %p37, %p38
      %p40 = scmp.ne.s32.totalorder %s29, %s30
      %p41 = scmp.eq.s32.totalorder %s21, 0
      %p42 = por %p40, %p41
      %p43 = scmp.ne.s32.totalorder %s29, %s30
      %p44 = scmp.eq.s32.totalorder %s22, 1
      %p45 = por %p43, %p44
      %p47 = scmp.ne.s32.totalorder %s30, %s46
      %p48 = scmp.eq.s32.totalorder %s22, 0
      %p49 = por %p47, %p48
      %s51 = sadd.s32 %s50, 1
      %p54 = scmp.eq.s32.totalorder %s16, 1
      %p55 = scmp.ne.s32.totalorder %s50, %s52
      %p56 = scmp.eq.s32.totalorder %s16, 0
      %p57 = por %p55, %p56
      %p58 = scmp.ne.s32.totalorder %s50, %s52
      %p59 = scmp.eq.s32.totalorder %s21, 1
      %p60 = por %p58, %p59
      %p61 = scmp.ne.s32.totalorder %s52, %s53
      %p62 = scmp.eq.s32.totalorder %s21, 0
      %p63 = por %p61, %p62
      %p64 = scmp.ne.s32.totalorder %s52, %s53
      %p65 = scmp.eq.s32.totalorder %s22, 1
      %p66 = por %p64, %p65
      %p68 = scmp.ne.s32.totalorder %s53, %s67
      %p69 = scmp.eq.s32.totalorder %s22, 0
      %p70 = por %p68, %p69
      %s72 = sadd.s32 %s71, 1
      %p75 = scmp.eq.s32.totalorder %s16, 1
      %p76 = scmp.ne.s32.totalorder %s71, %s73
      %p77 = scmp.eq.s32.totalorder %s16, 0
      %p78 = por %p76, %p77
      %p79 = scmp.ne.s32.totalorder %s71, %s73
      %p80 = scmp.eq.s32.totalorder %s21, 1
      %p81 = por %p79, %p80
      %p82 = scmp.ne.s32.totalorder %s73, %s74
      %p83 = scmp.eq.s32.totalorder %s21, 0
      %p84 = por %p82, %p83
      %p85 = scmp.ne.s32.totalorder %s73, %s74
      %p86 = scmp.eq.s32.totalorder %s22, 1
      %p87 = por %p85, %p86
      %p89 = scmp.ne.s32.totalorder %s74, %s88
      %p90 = scmp.eq.s32.totalorder %s22, 0
      %p91 = por %p89, %p90
      %s93 = sadd.s32 %s92, 1
      %p96 = scmp.eq.s32.totalorder %s16, 1
      %p97 = scmp.ne.s32.totalorder %s92, %s94
      %p98 = scmp.eq.s32.totalorder %s16, 0
      %p99 = por %p97, %p98
      %p100 = scmp.ne.s32.totalorder %s92, %s94
      %p101 = scmp.eq.s32.totalorder %s21, 1
      %p102 = por %p100, %p101
      %p103 = scmp.ne.s32.totalorder %s94, %s95
      %p104 = scmp.eq.s32.totalorder %s21, 0
      %p105 = por %p103, %p104
      %p106 = scmp.ne.s32.totalorder %s94, %s95
      %p107 = scmp.eq.s32.totalorder %s22, 1
      %p108 = por %p106, %p107
      %p110 = scmp.ne.s32.totalorder %s95, %s109
      %p111 = scmp.eq.s32.totalorder %s22, 0
      %p112 = por %p110, %p111
      %s114 = sadd.s32 %s113, 1
      %p117 = scmp.eq.s32.totalorder %s16, 1
      %p118 = scmp.ne.s32.totalorder %s113, %s115
      %p119 = scmp.eq.s32.totalorder %s16, 0
      %p120 = por %p118, %p119
      %p121 = scmp.ne.s32.totalorder %s113, %s115
      %p122 = scmp.eq.s32.totalorder %s21, 1
      %p123 = por %p121, %p122
      %p124 = scmp.ne.s32.totalorder %s115, %s116
      %p125 = scmp.eq.s32.totalorder %s21, 0
      %p126 = por %p124, %p125
      %p127 = scmp.ne.s32.totalorder %s115, %s116
      %p128 = scmp.eq.s32.totalorder %s22, 1
      %p129 = por %p127, %p128
      %p131 = scmp.ne.s32.totalorder %s116, %s130
      %p132 = scmp.eq.s32.totalorder %s22, 0
      %p133 = por %p131, %p132
      %s135 = sadd.s32 %s134, 1
      %p138 = scmp.eq.s32.totalorder %s16, 1
      %p139 = scmp.ne.s32.totalorder %s134, %s136
      %p140 = scmp.eq.s32.totalorder %s16, 0
      %p141 = por %p139, %p140
      %p142 = scmp.ne.s32.totalorder %s134, %s136
      %p143 = scmp.eq.s32.totalorder %s21, 1
      %p144 = por %p142, %p143
      %p145 = scmp.ne.s32.totalorder %s136, %s137
      %p146 = scmp.eq.s32.totalorder %s21, 0
      %p147 = por %p145, %p146
      %p148 = scmp.ne.s32.totalorder %s136, %s137
      %p149 = scmp.eq.s32.totalorder %s22, 1
      %p150 = por %p148, %p149
      %p152 = scmp.ne.s32.totalorder %s137, %s151
      %p153 = scmp.eq.s32.totalorder %s22, 0
      %p154 = por %p152, %p153
      %s156 = sadd.s32 %s155, 1
      %p159 = scmp.eq.s32.totalorder %s16, 1
      %p160 = scmp.ne.s32.totalorder %s155, %s157
      %p161 = scmp.eq.s32.totalorder %s16, 0
      %p162 = por %p160, %p161
      %p163 = scmp.ne.s32.totalorder %s155, %s157
      %p164 = scmp.eq.s32.totalorder %s21, 1
      %p165 = por %p163, %p164
      %p166 = scmp.ne.s32.totalorder %s157, %s158
      %p167 = scmp.eq.s32.totalorder %s21, 0
      %p168 = por %p166, %p167
      %p169 = scmp.ne.s32.totalorder %s157, %s158
      %p170 = scmp.eq.s32.totalorder %s22, 1
      %p171 = por %p169, %p170
      %p173 = scmp.ne.s32.totalorder %s158, %s172
      %p174 = scmp.eq.s32.totalorder %s22, 0
      %p175 = por %p173, %p174
      %s176 = ssub.s32 %s16, %s23
      %p177 = scmp.eq.s32.totalorder %s176, 0
      %s179 = sadd.s32 %s178, 1
      %s180 = scalar_select %p177, %s178, %s179
      %p183 = pneg %p177
      %p184 = scmp.eq.s32.totalorder %s16, 1
      %p185 = por %p183, %p184
      %p186 = scmp.ne.s32.totalorder %s178, %s181
      %p187 = scmp.eq.s32.totalorder %s16, 0
      %p188 = por %p186, %p187
      %p189 = scmp.ne.s32.totalorder %s178, %s181
      %p190 = scmp.eq.s32.totalorder %s21, 1
      %p191 = por %p189, %p190
      %p192 = scmp.ne.s32.totalorder %s181, %s182
      %p193 = scmp.eq.s32.totalorder %s21, 0
      %p194 = por %p192, %p193
      %p195 = scmp.ne.s32.totalorder %s181, %s182
      %p196 = scmp.eq.s32.totalorder %s22, 1
      %p197 = por %p195, %p196
      %p199 = scmp.ne.s32.totalorder %s182, %s198
      %p200 = scmp.eq.s32.totalorder %s22, 0
      %p201 = por %p199, %p200
      %s202 = ssub.s32 %s16, %s23
      %p203 = scmp.eq.s32.totalorder %s202, 0
      %s205 = sadd.s32 %s204, 1
      %s206 = scalar_select %p203, %s204, %s205
      %p209 = pneg %p203
      %p210 = scmp.eq.s32.totalorder %s16, 1
      %p211 = por %p209, %p210
      %p212 = scmp.ne.s32.totalorder %s204, %s207
      %p213 = scmp.eq.s32.totalorder %s16, 0
      %p214 = por %p212, %p213
      %p215 = scmp.ne.s32.totalorder %s204, %s207
      %p216 = scmp.eq.s32.totalorder %s21, 1
      %p217 = por %p215, %p216
      %p218 = scmp.ne.s32.totalorder %s207, %s208
      %p219 = scmp.eq.s32.totalorder %s21, 0
      %p220 = por %p218, %p219
      %p221 = scmp.ne.s32.totalorder %s207, %s208
      %p222 = scmp.eq.s32.totalorder %s22, 1
      %p223 = por %p221, %p222
      %p225 = scmp.ne.s32.totalorder %s208, %s224
      %p226 = scmp.eq.s32.totalorder %s22, 0
      %p227 = por %p225, %p226
      %p228 = scmp.le.s32.totalorder 1, %s16
      %p229 = scmp.lt.s32.totalorder %s16, 3
      %p230 = pnand %p228, %p229
      %p231 = pneg %p230
      // Predicated region
      $region9: #{deq_fixed_point.1} parent=5 // pred_check
        _
      $region10: #{deq_fixed_point.1} parent=5 // pred_check_branch
        %233 = sbr.rel (%p230) target = $region12
      $region11: #{deq_fixed_point.1} parent=5 // pred_region
        %s234 = ssub.s32 %s16, 1
        // Predicated region
        $region13: #{deq_fixed_point.1} parent=11 // pred_check
          %p235 = pneg %p63
        $region14: #{deq_fixed_point.1} parent=11 // pred_check_branch
          %237 = sbr.rel (%p235) target = $region16
        $region15: #{deq_fixed_point.1} parent=11 // pred_region
          _
        $region16: #{deq_fixed_point.1} parent=11 // pred_fallthru
          _
        // Predicated region
        $region17: #{deq_fixed_point.1} parent=11 // pred_check
          %p238 = pneg %p84
        $region18: #{deq_fixed_point.1} parent=11 // pred_check_branch
          %240 = sbr.rel (%p238) target = $region20
        $region19: #{deq_fixed_point.1} parent=11 // pred_region
          %s242 = ssub.s32 3456, 3456
          %243 = vsyncadd [#allocation4], %s242
          %s244 = sshll.u32 [#allocation3], 4
          %s245 = int_to_ptr.vmem [resolvable:$true] %s244
          %250 = dma.hbm_to_vmem [thread:$0]  %s2, 3456, %s245, [#allocation4], 128, 128, 8
        $region20: #{deq_fixed_point.1} parent=11 // pred_fallthru
          _
        // Predicated region
        $region21: #{deq_fixed_point.1} parent=11 // pred_check
          %p251 = pneg %p105
        $region22: #{deq_fixed_point.1} parent=11 // pred_check_branch
          %253 = sbr.rel (%p251) target = $region24
        $region23: #{deq_fixed_point.1} parent=11 // pred_region
          _
        $region24: #{deq_fixed_point.1} parent=11 // pred_fallthru
          _
        // Predicated region
        $region25: #{deq_fixed_point.1} parent=11 // pred_check
          %p254 = pneg %p126
        $region26: #{deq_fixed_point.1} parent=11 // pred_check_branch
          %256 = sbr.rel (%p254) target = $region28
        $region27: #{deq_fixed_point.1} parent=11 // pred_region
          _
        $region28: #{deq_fixed_point.1} parent=11 // pred_fallthru
          _
        // Predicated region
        $region29: #{deq_fixed_point.1} parent=11 // pred_check
          %p257 = pneg %p147
        $region30: #{deq_fixed_point.1} parent=11 // pred_check_branch
          %259 = sbr.rel (%p257) target = $region32
        $region31: #{deq_fixed_point.1} parent=11 // pred_region
          _
        $region32: #{deq_fixed_point.1} parent=11 // pred_fallthru
          _
        // Predicated region
        $region33: #{deq_fixed_point.1} parent=11 // pred_check
          %p260 = pneg %p168
        $region34: #{deq_fixed_point.1} parent=11 // pred_check_branch
          %262 = sbr.rel (%p260) target = $region36
        $region35: #{deq_fixed_point.1} parent=11 // pred_region
          _
        $region36: #{deq_fixed_point.1} parent=11 // pred_fallthru
          _
      $region12: #{deq_fixed_point.1} parent=5 // pred_fallthru
        _
      %p263 = scmp.lt.s32.totalorder %s16, 2
      // Predicated region
      $region37: #{deq_fixed_point.1} parent=5 // pred_check
        %p264 = pneg %p263
      $region38: #{deq_fixed_point.1} parent=5 // pred_check_branch
        %266 = sbr.rel (%p264) target = $region40
      $region39: #{deq_fixed_point.1} parent=5 // pred_region
        // Predicated region
        $region41: #{deq_fixed_point.1} parent=39 // pred_check
          %p267 = pneg %p36
        $region42: #{deq_fixed_point.1} parent=39 // pred_check_branch
          %269 = sbr.rel (%p267) target = $region44
        $region43: #{deq_fixed_point.1} parent=39 // pred_region
          %p270 = scmp.lt.s32.totalorder %s16, 1
          %s271 = scalar_select %p270, %s16, 1
          %s272 = smul.addr %s271, 6
          %s273 = smul.addr %s272, 8
          %s274 = scalar_lea.vmem %s0, %s273
        $region44: #{deq_fixed_point.1} parent=39 // pred_fallthru
          _
      $region40: #{deq_fixed_point.1} parent=5 // pred_fallthru
        _
      %p275 = scmp.le.s32.totalorder 1, %s16
      %p276 = scmp.lt.s32.totalorder %s16, 3
      %p277 = pnand %p275, %p276
      %p278 = pneg %p277
      // Predicated region
      $region45: #{deq_fixed_point.1} parent=5 // pred_check
        _
      $region46: #{deq_fixed_point.1} parent=5 // pred_check_branch
        %280 = sbr.rel (%p277) target = $region48
      $region47: #{deq_fixed_point.1} parent=5 // pred_region
        %s281 = ssub.s32 %s16, 1
        // Predicated region
        $region49: #{deq_fixed_point.1} parent=47 // pred_check
          %p282 = pneg %p84
        $region50: #{deq_fixed_point.1} parent=47 // pred_check_branch
          %284 = sbr.rel (%p282) target = $region52
        $region51: #{deq_fixed_point.1} parent=47 // pred_region
          %285 = dma.done [#allocation4], 3456
        $region52: #{deq_fixed_point.1} parent=47 // pred_fallthru
          _
        %p286 = scmp.lt.s32.totalorder %s21, 1
        %s287 = scalar_select %p286, %s21, 1
        %s288 = smul.addr %s287, 6
        %s289 = smul.addr %s288, 8
        %s290 = scalar_lea.vmem %s0, %s289
        %p291 = pneg %p42
        %p292 = pneg %p39
        %p293 = pneg %p63
        %p294 = pneg %p60
        %p295 = pneg %p84
        %p296 = pneg %p81
        %p297 = pneg %p105
        %p298 = pneg %p102
        %p299 = pneg %p126
        %p300 = pneg %p123
        %p301 = pneg %p147
        %p302 = pneg %p144
        %p303 = pneg %p168
        %p304 = pneg %p165
        %p305 = pneg %p194
        %p306 = pneg %p191
        %p307 = scmp.lt.s32.totalorder %s21, 1
        %s308 = scalar_select %p307, %s21, 1
        %s309 = smul.addr %s308, 6
        %s310 = smul.addr %s309, 8
        %s311 = scalar_lea.vmem %s7, %s310
        %p312 = pneg %p220
        %p313 = pneg %p217
        %p314 = scmp.lt.s32.totalorder %s21, 1
        %s315 = scalar_select %p314, %s21, 1
        %s316 = smul.addr %s315, 36
        %s317 = smul.addr %s316, 8
        %s318 = scalar_lea.vmem %s8, %s317
        %p319 = scmp.lt.s32.totalorder %s21, 1
        %s320 = scalar_select %p319, %s21, 1
        %s321 = smul.addr %s320, 6
        %s322 = smul.addr %s321, 8
        %s323 = scalar_lea.vmem %s0, %s322
        %p324 = scmp.lt.s32.totalorder %s21, 1
        %s325 = scalar_select %p324, %s21, 1
        %s326 = smul.addr %s325, 6
        %s327 = smul.addr %s326, 8
        %s328 = scalar_lea.vmem %s7, %s327
        %p329 = scmp.lt.s32.totalorder %s21, 1
        %s330 = scalar_select %p329, %s21, 1
        %s331 = smul.addr %s330, 36
        %s332 = smul.addr %s331, 8
        %s333 = scalar_lea.vmem %s8, %s332
        %334 = vst [vmem:[#allocation2] sm:$0xff] 0.0
        %335 = vst [vmem:[#allocation2 + $0x8] sm:$0xff] 0.0
        %336 = vst [vmem:[#allocation2 + $0x10] sm:$0xff] 0.0
        %337 = vst [vmem:[#allocation2 + $0x18] sm:$0xff] 0.0
        %338 = vst [vmem:[#allocation2 + $0x20] sm:$0xff] 0.0
        %339 = vst [vmem:[#allocation2 + $0x28] sm:$0xff] 0.0
        loop: start=0, step=1, limit=6
        $region53: #{deq_fixed_point.1} parent=47 // loop_pre_header
          _
        $region54: #{deq_fixed_point.1} parent=47 // loop_header
          %s341 = sphi 0, %s345
          %p342 = scmp.ge.s32.totalorder %s341, 6
        $region55: #{deq_fixed_point.1} parent=47 // loop_header_branch
          %344 = sbr.rel (%p342) target = $region59
        $region56: #{deq_fixed_point.1} parent=47 // loop_body
          %v346 = vld [vmem:[#allocation2] sm:$0xff]
          %v347 = vld [vmem:[#allocation2 + $0x8] sm:$0xff]
          %v348 = vld [vmem:[#allocation2 + $0x10] sm:$0xff]
          %v349 = vld [vmem:[#allocation2 + $0x18] sm:$0xff]
          %v350 = vld [vmem:[#allocation2 + $0x20] sm:$0xff]
          %v351 = vld [vmem:[#allocation2 + $0x28] sm:$0xff]
          %v352 = vld [vmem:[%s3] sm:$0xff]
          %v353 = vld [vmem:[%s3 + $0x8] sm:$0xff]
          %v354 = vld [vmem:[%s3 + $0x10] sm:$0xff]
          %v355 = vld [vmem:[%s3 + $0x18] sm:$0xff]
          %v356 = vld [vmem:[%s3 + $0x20] sm:$0xff]
          %v357 = vld [vmem:[%s3 + $0x28] sm:$0xff]
          %358 = vrot.lane.b32.xlu0 %v346, 17
          %v359 = vpop.permute.xlu0 %358
          %360 = vrot.lane.b32.xlu0 %v348, 17
          %v361 = vpop.permute.xlu0 %360
          %362 = vrot.lane.b32.xlu0 %v350, 17
          %v363 = vpop.permute.xlu0 %362
          %364 = vrot.lane.b32.xlu0 %v347, 17
          %v365 = vpop.permute.xlu0 %364
          %366 = vrot.lane.b32.xlu0 %v349, 17
          %v367 = vpop.permute.xlu0 %366
          %368 = vrot.lane.b32.xlu0 %v351, 17
          %v369 = vpop.permute.xlu0 %368
          %v370 = vlaneseq
          %v371 = vand.u32 %v370, 127
          %vm372 = vcmp.lt.s32.totalorder %v371, 17
          %v373 = vsel %vm372, %v359, %v365
          %v374 = vsel %vm372, %v361, %v367
          %v375 = vsel %vm372, %v363, %v369
          %v376 = vsel %vm372, %v365, %v359
          %v377 = vsel %vm372, %v367, %v361
          %v378 = vsel %vm372, %v369, %v363
          %v379 = vmul.f32 %v352, %v376
          %v380 = vmul.f32 %v353, %v373
          %v381 = vmul.f32 %v354, %v377
          %v382 = vmul.f32 %v355, %v374
          %v383 = vmul.f32 %v356, %v378
          %v384 = vmul.f32 %v357, %v375
          %v385 = vld [vmem:[%s1] sm:$0xff]
          %v386 = vld [vmem:[%s1 + $0x8] sm:$0xff]
          %v387 = vld [vmem:[%s1 + $0x10] sm:$0xff]
          %v388 = vld [vmem:[%s1 + $0x18] sm:$0xff]
          %v389 = vld [vmem:[%s1 + $0x20] sm:$0xff]
          %v390 = vld [vmem:[%s1 + $0x28] sm:$0xff]
          %v391 = vld [vmem:[%s1 + $0x30] sm:$0xff]
          %v392 = vld [vmem:[%s1 + $0x38] sm:$0xff]
          %s393 = scalar_lea.vmem %s3, 48
          %v394 = vld [vmem:[%s393] sm:$0xff]
          %v395 = vld [vmem:[%s393 + $0x8] sm:$0xff]
          %v396 = vld [vmem:[%s393 + $0x10] sm:$0xff]
          %v397 = vld [vmem:[%s393 + $0x18] sm:$0xff]
          %v398 = vld [vmem:[%s393 + $0x20] sm:$0xff]
          %v399 = vld [vmem:[%s393 + $0x28] sm:$0xff]
          %400 = vrot.lane.b32.xlu0 %v346, 16
          %v401 = vpop.permute.xlu0 %400
          %402 = vrot.lane.b32.xlu0 %v348, 16
          %v403 = vpop.permute.xlu0 %402
          %404 = vrot.lane.b32.xlu0 %v350, 16
          %v405 = vpop.permute.xlu0 %404
          %406 = vrot.lane.b32.xlu0 %v347, 16
          %v407 = vpop.permute.xlu0 %406
          %408 = vrot.lane.b32.xlu0 %v349, 16
          %v409 = vpop.permute.xlu0 %408
          %410 = vrot.lane.b32.xlu0 %v351, 16
          %v411 = vpop.permute.xlu0 %410
          %vm412 = vcmp.lt.s32.totalorder %v371, 16
          %v413 = vsel %vm412, %v401, %v407
          %v414 = vsel %vm412, %v403, %v409
          %v415 = vsel %vm412, %v405, %v411
          %v416 = vsel %vm412, %v407, %v401
          %v417 = vsel %vm412, %v409, %v403
          %v418 = vsel %vm412, %v411, %v405
          %v419 = vmul.f32 %v394, %v416
          %v420 = vmul.f32 %v395, %v413
          %v421 = vmul.f32 %v396, %v417
          %v422 = vmul.f32 %v397, %v414
          %v423 = vmul.f32 %v398, %v418
          %v424 = vmul.f32 %v399, %v415
          %s425 = scalar_lea.vmem %s1, 64
          %v426 = vld [vmem:[%s425] sm:$0xff]
          %v427 = vld [vmem:[%s425 + $0x8] sm:$0xff]
          %v428 = vld [vmem:[%s425 + $0x10] sm:$0xff]
          %v429 = vld [vmem:[%s425 + $0x18] sm:$0xff]
          %v430 = vld [vmem:[%s425 + $0x20] sm:$0xff]
          %v431 = vld [vmem:[%s425 + $0x28] sm:$0xff]
          %v432 = vld [vmem:[%s425 + $0x30] sm:$0xff]
          %v433 = vld [vmem:[%s425 + $0x38] sm:$0xff]
          %vm434 = vcmask 195584
          %v436 = vsel %vm434, %v426, 0
          %v439 = vsel %vm434, %v427, 0
          %v442 = vsel %vm434, %v428, 0
          %v445 = vsel %vm434, %v429, 0
          %v448 = vsel %vm434, %v430, 0
          %v451 = vsel %vm434, %v431, 0
          %v454 = vsel %vm434, %v432, 0
          %v457 = vsel %vm434, %v433, 0
          %459 = vmatprep.subr.mxu0 0.0
          %460 = vmatpush1.msra.mxu0 0.0
          %461 = vmatprep.subr.mxu0 0.0
          %462 = vmatpush1.msra.mxu0 0.0
          %463 = vmatprep.subr.mxu0 0.0
          %464 = vmatpush1.msra.mxu0 0.0
          %465 = vmatprep.subr.mxu0 0.0
          %466 = vmatpush1.msra.mxu0 0.0
          %467 = vmatprep.subr.mxu0 0.0
          %468 = vmatpush1.msra.mxu0 0.0
          %469 = vmatprep.subr.mxu0 0.0
          %470 = vmatpush1.msra.mxu0 0.0
          %471 = vmatprep.subr.mxu0 0.0
          %472 = vmatpush1.msra.mxu0 0.0
          %473 = vmatprep.subr.mxu0 0.0
          %474 = vmatpush1.msra.mxu0 0.0
          %475 = vmatprep.subr.mxu0 0.0
          %476 = vmatpush1.msra.mxu0 0.0
          %477 = vmatprep.subr.mxu0 0.0
          %478 = vmatpush1.msra.mxu0 0.0
          %479 = vmatprep.subr.mxu0 0.0
          %480 = vmatpush1.msra.mxu0 0.0
          %481 = vmatprep.subr.mxu0 0.0
          %482 = vmatpush1.msra.mxu0 0.0
          %483 = vmatprep.subr.mxu0 0.0
          %484 = vmatpush1.msra.mxu0 0.0
          %485 = vmatprep.subr.mxu0 %v424
          %486 = vmatpush1.msra.mxu0 %v423
          %487 = vmatprep.subr.mxu0 %v422
          %488 = vmatpush1.msra.mxu0 %v421
          %489 = vmatprep.subr.mxu0 %v420
          %490 = vmatpush1.msra.mxu0 %v419
          %491 = vmatprep.subr.mxu0 0.0
          %492 = vmatpush2.msra.mxu0 0.0
          %493 = vmatprep.subr.mxu0 0.0
          %494 = vmatpush2.msra.mxu0 0.0
          %495 = vmatprep.subr.mxu0 0.0
          %496 = vmatpush2.msra.mxu0 0.0
          %497 = vmatprep.subr.mxu0 0.0
          %498 = vmatpush2.msra.mxu0 0.0
          %499 = vmatprep.subr.mxu0 0.0
          %500 = vmatpush2.msra.mxu0 0.0
          %501 = vmatprep.subr.mxu0 0.0
          %502 = vmatpush2.msra.mxu0 0.0
          %503 = vmatprep.subr.mxu0 0.0
          %504 = vmatpush2.msra.mxu0 0.0
          %505 = vmatprep.subr.mxu0 0.0
          %506 = vmatpush2.msra.mxu0 0.0
          %507 = vmatprep.subr.mxu0 0.0
          %508 = vmatpush2.msra.mxu0 0.0
          %509 = vmatprep.subr.mxu0 0.0
          %510 = vmatpush2.msra.mxu0 0.0
          %511 = vmatprep.subr.mxu0 0.0
          %512 = vmatpush2.msra.mxu0 0.0
          %513 = vmatprep.subr.mxu0 0.0
          %514 = vmatpush2.msra.mxu0 0.0
          %515 = vmatprep.subr.mxu0 0.0
          %516 = vmatpush2.msra.mxu0 0.0
          %517 = vmatprep.subr.mxu0 0.0
          %518 = vmatpush2.msra.mxu0 0.0
          %519 = vmatprep.subr.mxu0 0.0
          %520 = vmatpush2.msra.mxu0 0.0
          %521 = vmatprep.subr.mxu0 0.0
          %522 = vmatpush2.msra.mxu0 0.0
          %523 = vmatprep.mubr.f32.mxu0 0.0
          %524 = vmatmul.mubr.f32.gmra.mxu0 %v436
          %v525 = vpop.f32.mrf.mxu0
          %v526 = vadd.f32 0.0, %v525
          %v527 = vpop.f32.mrf.mxu0
          %v528 = vadd.f32 0.0, %v527
          %529 = vmatprep.mubr.f32.mxu0 0.0
          %530 = vmatmul.mubr.f32.gmra.mxu0 %v439
          %v531 = vpop.f32.mrf.mxu0
          %v532 = vadd.f32 0.0, %v531
          %v533 = vpop.f32.mrf.mxu0
          %v534 = vadd.f32 0.0, %v533
          %535 = vmatprep.mubr.f32.mxu0 0.0
          %536 = vmatmul.mubr.f32.gmra.mxu0 %v442
          %v537 = vpop.f32.mrf.mxu0
          %v538 = vadd.f32 0.0, %v537
          %v539 = vpop.f32.mrf.mxu0
          %v540 = vadd.f32 0.0, %v539
          %541 = vmatprep.mubr.f32.mxu0 0.0
          %542 = vmatmul.mubr.f32.gmra.mxu0 %v445
          %v543 = vpop.f32.mrf.mxu0
          %v544 = vadd.f32 0.0, %v543
          %v545 = vpop.f32.mrf.mxu0
          %v546 = vadd.f32 0.0, %v545
          %547 = vmatprep.mubr.f32.mxu0 0.0
          %548 = vmatmul.mubr.f32.gmra.mxu0 %v448
          %v549 = vpop.f32.mrf.mxu0
          %v550 = vadd.f32 0.0, %v549
          %v551 = vpop.f32.mrf.mxu0
          %v552 = vadd.f32 0.0, %v551
          %553 = vmatprep.mubr.f32.mxu0 0.0
          %554 = vmatmul.mubr.f32.gmra.mxu0 %v451
          %v555 = vpop.f32.mrf.mxu0
          %v556 = vadd.f32 0.0, %v555
          %v557 = vpop.f32.mrf.mxu0
          %v558 = vadd.f32 0.0, %v557
          %559 = vmatprep.mubr.f32.mxu0 0.0
          %560 = vmatmul.mubr.f32.gmra.mxu0 %v454
          %v561 = vpop.f32.mrf.mxu0
          %v562 = vadd.f32 0.0, %v561
          %v563 = vpop.f32.mrf.mxu0
          %v564 = vadd.f32 0.0, %v563
          %565 = vmatprep.mubr.f32.mxu0 0.0
          %566 = vmatmul.mubr.f32.gmra.mxu0 %v457
          %v567 = vpop.f32.mrf.mxu0
          %v568 = vadd.f32 0.0, %v567
          %v569 = vpop.f32.mrf.mxu0
          %v570 = vadd.f32 0.0, %v569
          %571 = vdwg.mxu0
          %v573 = vsel %vm434, %v385, 0
          %v576 = vsel %vm434, %v386, 0
          %v579 = vsel %vm434, %v387, 0
          %v582 = vsel %vm434, %v388, 0
          %v585 = vsel %vm434, %v389, 0
          %v588 = vsel %vm434, %v390, 0
          %v591 = vsel %vm434, %v391, 0
          %v594 = vsel %vm434, %v392, 0
          %596 = vmatprep.subr.mxu0 0.0
          %597 = vmatpush1.msra.mxu0 0.0
          %598 = vmatprep.subr.mxu0 0.0
          %599 = vmatpush1.msra.mxu0 0.0
          %600 = vmatprep.subr.mxu0 0.0
          %601 = vmatpush1.msra.mxu0 0.0
          %602 = vmatprep.subr.mxu0 0.0
          %603 = vmatpush1.msra.mxu0 0.0
          %604 = vmatprep.subr.mxu0 0.0
          %605 = vmatpush1.msra.mxu0 0.0
          %606 = vmatprep.subr.mxu0 0.0
          %607 = vmatpush1.msra.mxu0 0.0
          %608 = vmatprep.subr.mxu0 0.0
          %609 = vmatpush1.msra.mxu0 0.0
          %610 = vmatprep.subr.mxu0 0.0
          %611 = vmatpush1.msra.mxu0 0.0
          %612 = vmatprep.subr.mxu0 0.0
          %613 = vmatpush1.msra.mxu0 0.0
          %614 = vmatprep.subr.mxu0 0.0
          %615 = vmatpush1.msra.mxu0 0.0
          %616 = vmatprep.subr.mxu0 0.0
          %617 = vmatpush1.msra.mxu0 0.0
          %618 = vmatprep.subr.mxu0 0.0
          %619 = vmatpush1.msra.mxu0 0.0
          %620 = vmatprep.subr.mxu0 0.0
          %621 = vmatpush1.msra.mxu0 0.0
          %622 = vmatprep.subr.mxu0 %v384
          %623 = vmatpush1.msra.mxu0 %v383
          %624 = vmatprep.subr.mxu0 %v382
          %625 = vmatpush1.msra.mxu0 %v381
          %626 = vmatprep.subr.mxu0 %v380
          %627 = vmatpush1.msra.mxu0 %v379
          %628 = vmatprep.subr.mxu0 0.0
          %629 = vmatpush2.msra.mxu0 0.0
          %630 = vmatprep.subr.mxu0 0.0
          %631 = vmatpush2.msra.mxu0 0.0
          %632 = vmatprep.subr.mxu0 0.0
          %633 = vmatpush2.msra.mxu0 0.0
          %634 = vmatprep.subr.mxu0 0.0
          %635 = vmatpush2.msra.mxu0 0.0
          %636 = vmatprep.subr.mxu0 0.0
          %637 = vmatpush2.msra.mxu0 0.0
          %638 = vmatprep.subr.mxu0 0.0
          %639 = vmatpush2.msra.mxu0 0.0
          %640 = vmatprep.subr.mxu0 0.0
          %641 = vmatpush2.msra.mxu0 0.0
          %642 = vmatprep.subr.mxu0 0.0
          %643 = vmatpush2.msra.mxu0 0.0
          %644 = vmatprep.subr.mxu0 0.0
          %645 = vmatpush2.msra.mxu0 0.0
          %646 = vmatprep.subr.mxu0 0.0
          %647 = vmatpush2.msra.mxu0 0.0
          %648 = vmatprep.subr.mxu0 0.0
          %649 = vmatpush2.msra.mxu0 0.0
          %650 = vmatprep.subr.mxu0 0.0
          %651 = vmatpush2.msra.mxu0 0.0
          %652 = vmatprep.subr.mxu0 0.0
          %653 = vmatpush2.msra.mxu0 0.0
          %654 = vmatprep.subr.mxu0 0.0
          %655 = vmatpush2.msra.mxu0 0.0
          %656 = vmatprep.subr.mxu0 0.0
          %657 = vmatpush2.msra.mxu0 0.0
          %658 = vmatprep.subr.mxu0 0.0
          %659 = vmatpush2.msra.mxu0 0.0
          %660 = vmatprep.mubr.f32.mxu0 0.0
          %661 = vmatmul.mubr.f32.gmra.mxu0 %v573
          %v662 = vpop.f32.mrf.mxu0
          %v663 = vadd.f32 %v526, %v662
          %v664 = vpop.f32.mrf.mxu0
          %v665 = vadd.f32 %v528, %v664
          %666 = vmatprep.mubr.f32.mxu0 0.0
          %667 = vmatmul.mubr.f32.gmra.mxu0 %v576
          %v668 = vpop.f32.mrf.mxu0
          %v669 = vadd.f32 %v532, %v668
          %v670 = vpop.f32.mrf.mxu0
          %v671 = vadd.f32 %v534, %v670
          %672 = vmatprep.mubr.f32.mxu0 0.0
          %673 = vmatmul.mubr.f32.gmra.mxu0 %v579
          %v674 = vpop.f32.mrf.mxu0
          %v675 = vadd.f32 %v538, %v674
          %v676 = vpop.f32.mrf.mxu0
          %v677 = vadd.f32 %v540, %v676
          %678 = vmatprep.mubr.f32.mxu0 0.0
          %679 = vmatmul.mubr.f32.gmra.mxu0 %v582
          %v680 = vpop.f32.mrf.mxu0
          %v681 = vadd.f32 %v544, %v680
          %v682 = vpop.f32.mrf.mxu0
          %v683 = vadd.f32 %v546, %v682
          %684 = vmatprep.mubr.f32.mxu0 0.0
          %685 = vmatmul.mubr.f32.gmra.mxu0 %v585
          %v686 = vpop.f32.mrf.mxu0
          %v687 = vadd.f32 %v550, %v686
          %v688 = vpop.f32.mrf.mxu0
          %v689 = vadd.f32 %v552, %v688
          %690 = vmatprep.mubr.f32.mxu0 0.0
          %691 = vmatmul.mubr.f32.gmra.mxu0 %v588
          %v692 = vpop.f32.mrf.mxu0
          %v693 = vadd.f32 %v556, %v692
          %v694 = vpop.f32.mrf.mxu0
          %v695 = vadd.f32 %v558, %v694
          %696 = vmatprep.mubr.f32.mxu0 0.0
          %697 = vmatmul.mubr.f32.gmra.mxu0 %v591
          %v698 = vpop.f32.mrf.mxu0
          %v699 = vadd.f32 %v562, %v698
          %v700 = vpop.f32.mrf.mxu0
          %v701 = vadd.f32 %v564, %v700
          %702 = vmatprep.mubr.f32.mxu0 0.0
          %703 = vmatmul.mubr.f32.gmra.mxu0 %v594
          %v704 = vpop.f32.mrf.mxu0
          %v705 = vadd.f32 %v568, %v704
          %v706 = vpop.f32.mrf.mxu0
          %v707 = vadd.f32 %v570, %v706
          %708 = vdwg.mxu0
          %s709 = scalar_lea.vmem %s3, 96
          %v710 = vld [vmem:[%s709] sm:$0xff]
          %v711 = vld [vmem:[%s709 + $0x8] sm:$0xff]
          %v712 = vld [vmem:[%s709 + $0x10] sm:$0xff]
          %v713 = vld [vmem:[%s709 + $0x18] sm:$0xff]
          %v714 = vld [vmem:[%s709 + $0x20] sm:$0xff]
          %v715 = vld [vmem:[%s709 + $0x28] sm:$0xff]
          %716 = vrot.lane.b32.xlu0 %v346, 15
          %v717 = vpop.permute.xlu0 %716
          %718 = vrot.lane.b32.xlu0 %v348, 15
          %v719 = vpop.permute.xlu0 %718
          %720 = vrot.lane.b32.xlu0 %v350, 15
          %v721 = vpop.permute.xlu0 %720
          %722 = vrot.lane.b32.xlu0 %v347, 15
          %v723 = vpop.permute.xlu0 %722
          %724 = vrot.lane.b32.xlu0 %v349, 15
          %v725 = vpop.permute.xlu0 %724
          %726 = vrot.lane.b32.xlu0 %v351, 15
          %v727 = vpop.permute.xlu0 %726
          %vm728 = vcmp.lt.s32.totalorder %v371, 15
          %v729 = vsel %vm728, %v717, %v723
          %v730 = vsel %vm728, %v719, %v725
          %v731 = vsel %vm728, %v721, %v727
          %v732 = vsel %vm728, %v723, %v717
          %v733 = vsel %vm728, %v725, %v719
          %v734 = vsel %vm728, %v727, %v721
          %v735 = vmul.f32 %v710, %v732
          %v736 = vmul.f32 %v711, %v729
          %v737 = vmul.f32 %v712, %v733
          %v738 = vmul.f32 %v713, %v730
          %v739 = vmul.f32 %v714, %v734
          %v740 = vmul.f32 %v715, %v731
          %s741 = scalar_lea.vmem %s1, 128
          %v742 = vld [vmem:[%s741] sm:$0xff]
          %v743 = vld [vmem:[%s741 + $0x8] sm:$0xff]
          %v744 = vld [vmem:[%s741 + $0x10] sm:$0xff]
          %v745 = vld [vmem:[%s741 + $0x18] sm:$0xff]
          %v746 = vld [vmem:[%s741 + $0x20] sm:$0xff]
          %v747 = vld [vmem:[%s741 + $0x28] sm:$0xff]
          %v748 = vld [vmem:[%s741 + $0x30] sm:$0xff]
          %v749 = vld [vmem:[%s741 + $0x38] sm:$0xff]
          %v751 = vsel %vm434, %v742, 0
          %v754 = vsel %vm434, %v743, 0
          %v757 = vsel %vm434, %v744, 0
          %v760 = vsel %vm434, %v745, 0
          %v763 = vsel %vm434, %v746, 0
          %v766 = vsel %vm434, %v747, 0
          %v769 = vsel %vm434, %v748, 0
          %v772 = vsel %vm434, %v749, 0
          %774 = vmatprep.subr.mxu0 0.0
          %775 = vmatpush1.msra.mxu0 0.0
          %776 = vmatprep.subr.mxu0 0.0
          %777 = vmatpush1.msra.mxu0 0.0
          %778 = vmatprep.subr.mxu0 0.0
          %779 = vmatpush1.msra.mxu0 0.0
          %780 = vmatprep.subr.mxu0 0.0
          %781 = vmatpush1.msra.mxu0 0.0
          %782 = vmatprep.subr.mxu0 0.0
          %783 = vmatpush1.msra.mxu0 0.0
          %784 = vmatprep.subr.mxu0 0.0
          %785 = vmatpush1.msra.mxu0 0.0
          %786 = vmatprep.subr.mxu0 0.0
          %787 = vmatpush1.msra.mxu0 0.0
          %788 = vmatprep.subr.mxu0 0.0
          %789 = vmatpush1.msra.mxu0 0.0
          %790 = vmatprep.subr.mxu0 0.0
          %791 = vmatpush1.msra.mxu0 0.0
          %792 = vmatprep.subr.mxu0 0.0
          %793 = vmatpush1.msra.mxu0 0.0
          %794 = vmatprep.subr.mxu0 0.0
          %795 = vmatpush1.msra.mxu0 0.0
          %796 = vmatprep.subr.mxu0 0.0
          %797 = vmatpush1.msra.mxu0 0.0
          %798 = vmatprep.subr.mxu0 0.0
          %799 = vmatpush1.msra.mxu0 0.0
          %800 = vmatprep.subr.mxu0 %v740
          %801 = vmatpush1.msra.mxu0 %v739
          %802 = vmatprep.subr.mxu0 %v738
          %803 = vmatpush1.msra.mxu0 %v737
          %804 = vmatprep.subr.mxu0 %v736
          %805 = vmatpush1.msra.mxu0 %v735
          %806 = vmatprep.subr.mxu0 0.0
          %807 = vmatpush2.msra.mxu0 0.0
          %808 = vmatprep.subr.mxu0 0.0
          %809 = vmatpush2.msra.mxu0 0.0
          %810 = vmatprep.subr.mxu0 0.0
          %811 = vmatpush2.msra.mxu0 0.0
          %812 = vmatprep.subr.mxu0 0.0
          %813 = vmatpush2.msra.mxu0 0.0
          %814 = vmatprep.subr.mxu0 0.0
          %815 = vmatpush2.msra.mxu0 0.0
          %816 = vmatprep.subr.mxu0 0.0
          %817 = vmatpush2.msra.mxu0 0.0
          %818 = vmatprep.subr.mxu0 0.0
          %819 = vmatpush2.msra.mxu0 0.0
          %820 = vmatprep.subr.mxu0 0.0
          %821 = vmatpush2.msra.mxu0 0.0
          %822 = vmatprep.subr.mxu0 0.0
          %823 = vmatpush2.msra.mxu0 0.0
          %824 = vmatprep.subr.mxu0 0.0
          %825 = vmatpush2.msra.mxu0 0.0
          %826 = vmatprep.subr.mxu0 0.0
          %827 = vmatpush2.msra.mxu0 0.0
          %828 = vmatprep.subr.mxu0 0.0
          %829 = vmatpush2.msra.mxu0 0.0
          %830 = vmatprep.subr.mxu0 0.0
          %831 = vmatpush2.msra.mxu0 0.0
          %832 = vmatprep.subr.mxu0 0.0
          %833 = vmatpush2.msra.mxu0 0.0
          %834 = vmatprep.subr.mxu0 0.0
          %835 = vmatpush2.msra.mxu0 0.0
          %836 = vmatprep.subr.mxu0 0.0
          %837 = vmatpush2.msra.mxu0 0.0
          %838 = vmatprep.mubr.f32.mxu0 0.0
          %839 = vmatmul.mubr.f32.gmra.mxu0 %v751
          %v840 = vpop.f32.mrf.mxu0
          %v841 = vadd.f32 0.0, %v840
          %v842 = vpop.f32.mrf.mxu0
          %v843 = vadd.f32 0.0, %v842
          %844 = vmatprep.mubr.f32.mxu0 0.0
          %845 = vmatmul.mubr.f32.gmra.mxu0 %v754
          %v846 = vpop.f32.mrf.mxu0
          %v847 = vadd.f32 0.0, %v846
          %v848 = vpop.f32.mrf.mxu0
          %v849 = vadd.f32 0.0, %v848
          %850 = vmatprep.mubr.f32.mxu0 0.0
          %851 = vmatmul.mubr.f32.gmra.mxu0 %v757
          %v852 = vpop.f32.mrf.mxu0
          %v853 = vadd.f32 0.0, %v852
          %v854 = vpop.f32.mrf.mxu0
          %v855 = vadd.f32 0.0, %v854
          %856 = vmatprep.mubr.f32.mxu0 0.0
          %857 = vmatmul.mubr.f32.gmra.mxu0 %v760
          %v858 = vpop.f32.mrf.mxu0
          %v859 = vadd.f32 0.0, %v858
          %v860 = vpop.f32.mrf.mxu0
          %v861 = vadd.f32 0.0, %v860
          %862 = vmatprep.mubr.f32.mxu0 0.0
          %863 = vmatmul.mubr.f32.gmra.mxu0 %v763
          %v864 = vpop.f32.mrf.mxu0
          %v865 = vadd.f32 0.0, %v864
          %v866 = vpop.f32.mrf.mxu0
          %v867 = vadd.f32 0.0, %v866
          %868 = vmatprep.mubr.f32.mxu0 0.0
          %869 = vmatmul.mubr.f32.gmra.mxu0 %v766
          %v870 = vpop.f32.mrf.mxu0
          %v871 = vadd.f32 0.0, %v870
          %v872 = vpop.f32.mrf.mxu0
          %v873 = vadd.f32 0.0, %v872
          %874 = vmatprep.mubr.f32.mxu0 0.0
          %875 = vmatmul.mubr.f32.gmra.mxu0 %v769
          %v876 = vpop.f32.mrf.mxu0
          %v877 = vadd.f32 0.0, %v876
          %v878 = vpop.f32.mrf.mxu0
          %v879 = vadd.f32 0.0, %v878
          %880 = vmatprep.mubr.f32.mxu0 0.0
          %881 = vmatmul.mubr.f32.gmra.mxu0 %v772
          %v882 = vpop.f32.mrf.mxu0
          %v883 = vadd.f32 0.0, %v882
          %v884 = vpop.f32.mrf.mxu0
          %v885 = vadd.f32 0.0, %v884
          %886 = vdwg.mxu0
          %v887 = vadd.f32 %v663, %v841
          %v888 = vadd.f32 %v665, %v843
          %v889 = vadd.f32 %v669, %v847
          %v890 = vadd.f32 %v671, %v849
          %v891 = vadd.f32 %v675, %v853
          %v892 = vadd.f32 %v677, %v855
          %v893 = vadd.f32 %v681, %v859
          %v894 = vadd.f32 %v683, %v861
          %v895 = vadd.f32 %v687, %v865
          %v896 = vadd.f32 %v689, %v867
          %v897 = vadd.f32 %v693, %v871
          %v898 = vadd.f32 %v695, %v873
          %v899 = vadd.f32 %v699, %v877
          %v900 = vadd.f32 %v701, %v879
          %v901 = vadd.f32 %v705, %v883
          %v902 = vadd.f32 %v707, %v885
          %s903 = scalar_lea.vmem %s3, 144
          %v904 = vld [vmem:[%s903] sm:$0xff]
          %v905 = vld [vmem:[%s903 + $0x8] sm:$0xff]
          %v906 = vld [vmem:[%s903 + $0x10] sm:$0xff]
          %v907 = vld [vmem:[%s903 + $0x18] sm:$0xff]
          %v908 = vld [vmem:[%s903 + $0x20] sm:$0xff]
          %v909 = vld [vmem:[%s903 + $0x28] sm:$0xff]
          %910 = vrot.lane.b32.xlu0 %v346, 1
          %v911 = vpop.permute.xlu0 %910
          %912 = vrot.lane.b32.xlu0 %v348, 1
          %v913 = vpop.permute.xlu0 %912
          %914 = vrot.lane.b32.xlu0 %v350, 1
          %v915 = vpop.permute.xlu0 %914
          %916 = vrot.lane.b32.xlu0 %v347, 1
          %v917 = vpop.permute.xlu0 %916
          %918 = vrot.lane.b32.xlu0 %v349, 1
          %v919 = vpop.permute.xlu0 %918
          %920 = vrot.lane.b32.xlu0 %v351, 1
          %v921 = vpop.permute.xlu0 %920
          %vm922 = vcmp.lt.s32.totalorder %v371, 1
          %v923 = vsel %vm922, %v911, %v917
          %v924 = vsel %vm922, %v913, %v919
          %v925 = vsel %vm922, %v915, %v921
          %v926 = vsel %vm922, %v917, %v911
          %v927 = vsel %vm922, %v919, %v913
          %v928 = vsel %vm922, %v921, %v915
          %v929 = vmul.f32 %v904, %v926
          %v930 = vmul.f32 %v905, %v923
          %v931 = vmul.f32 %v906, %v927
          %v932 = vmul.f32 %v907, %v924
          %v933 = vmul.f32 %v908, %v928
          %v934 = vmul.f32 %v909, %v925
          %s935 = scalar_lea.vmem %s1, 192
          %v936 = vld [vmem:[%s935] sm:$0xff]
          %v937 = vld [vmem:[%s935 + $0x8] sm:$0xff]
          %v938 = vld [vmem:[%s935 + $0x10] sm:$0xff]
          %v939 = vld [vmem:[%s935 + $0x18] sm:$0xff]
          %v940 = vld [vmem:[%s935 + $0x20] sm:$0xff]
          %v941 = vld [vmem:[%s935 + $0x28] sm:$0xff]
          %v942 = vld [vmem:[%s935 + $0x30] sm:$0xff]
          %v943 = vld [vmem:[%s935 + $0x38] sm:$0xff]
          %v945 = vsel %vm434, %v936, 0
          %v948 = vsel %vm434, %v937, 0
          %v951 = vsel %vm434, %v938, 0
          %v954 = vsel %vm434, %v939, 0
          %v957 = vsel %vm434, %v940, 0
          %v960 = vsel %vm434, %v941, 0
          %v963 = vsel %vm434, %v942, 0
          %v966 = vsel %vm434, %v943, 0
          %968 = vmatprep.subr.mxu0 0.0
          %969 = vmatpush1.msra.mxu0 0.0
          %970 = vmatprep.subr.mxu0 0.0
          %971 = vmatpush1.msra.mxu0 0.0
          %972 = vmatprep.subr.mxu0 0.0
          %973 = vmatpush1.msra.mxu0 0.0
          %974 = vmatprep.subr.mxu0 0.0
          %975 = vmatpush1.msra.mxu0 0.0
          %976 = vmatprep.subr.mxu0 0.0
          %977 = vmatpush1.msra.mxu0 0.0
          %978 = vmatprep.subr.mxu0 0.0
          %979 = vmatpush1.msra.mxu0 0.0
          %980 = vmatprep.subr.mxu0 0.0
          %981 = vmatpush1.msra.mxu0 0.0
          %982 = vmatprep.subr.mxu0 0.0
          %983 = vmatpush1.msra.mxu0 0.0
          %984 = vmatprep.subr.mxu0 0.0
          %985 = vmatpush1.msra.mxu0 0.0
          %986 = vmatprep.subr.mxu0 0.0
          %987 = vmatpush1.msra.mxu0 0.0
          %988 = vmatprep.subr.mxu0 0.0
          %989 = vmatpush1.msra.mxu0 0.0
          %990 = vmatprep.subr.mxu0 0.0
          %991 = vmatpush1.msra.mxu0 0.0
          %992 = vmatprep.subr.mxu0 0.0
          %993 = vmatpush1.msra.mxu0 0.0
          %994 = vmatprep.subr.mxu0 %v934
          %995 = vmatpush1.msra.mxu0 %v933
          %996 = vmatprep.subr.mxu0 %v932
          %997 = vmatpush1.msra.mxu0 %v931
          %998 = vmatprep.subr.mxu0 %v930
          %999 = vmatpush1.msra.mxu0 %v929
          %1000 = vmatprep.subr.mxu0 0.0
          %1001 = vmatpush2.msra.mxu0 0.0
          %1002 = vmatprep.subr.mxu0 0.0
          %1003 = vmatpush2.msra.mxu0 0.0
          %1004 = vmatprep.subr.mxu0 0.0
          %1005 = vmatpush2.msra.mxu0 0.0
          %1006 = vmatprep.subr.mxu0 0.0
          %1007 = vmatpush2.msra.mxu0 0.0
          %1008 = vmatprep.subr.mxu0 0.0
          %1009 = vmatpush2.msra.mxu0 0.0
          %1010 = vmatprep.subr.mxu0 0.0
          %1011 = vmatpush2.msra.mxu0 0.0
          %1012 = vmatprep.subr.mxu0 0.0
          %1013 = vmatpush2.msra.mxu0 0.0
          %1014 = vmatprep.subr.mxu0 0.0
          %1015 = vmatpush2.msra.mxu0 0.0
          %1016 = vmatprep.subr.mxu0 0.0
          %1017 = vmatpush2.msra.mxu0 0.0
          %1018 = vmatprep.subr.mxu0 0.0
          %1019 = vmatpush2.msra.mxu0 0.0
          %1020 = vmatprep.subr.mxu0 0.0
          %1021 = vmatpush2.msra.mxu0 0.0
          %1022 = vmatprep.subr.mxu0 0.0
          %1023 = vmatpush2.msra.mxu0 0.0
          %1024 = vmatprep.subr.mxu0 0.0
          %1025 = vmatpush2.msra.mxu0 0.0
          %1026 = vmatprep.subr.mxu0 0.0
          %1027 = vmatpush2.msra.mxu0 0.0
          %1028 = vmatprep.subr.mxu0 0.0
          %1029 = vmatpush2.msra.mxu0 0.0
          %1030 = vmatprep.subr.mxu0 0.0
          %1031 = vmatpush2.msra.mxu0 0.0
          %1032 = vmatprep.mubr.f32.mxu0 0.0
          %1033 = vmatmul.mubr.f32.gmra.mxu0 %v945
          %v1034 = vpop.f32.mrf.mxu0
          %v1035 = vadd.f32 0.0, %v1034
          %v1036 = vpop.f32.mrf.mxu0
          %v1037 = vadd.f32 0.0, %v1036
          %1038 = vmatprep.mubr.f32.mxu0 0.0
          %1039 = vmatmul.mubr.f32.gmra.mxu0 %v948
          %v1040 = vpop.f32.mrf.mxu0
          %v1041 = vadd.f32 0.0, %v1040
          %v1042 = vpop.f32.mrf.mxu0
          %v1043 = vadd.f32 0.0, %v1042
          %1044 = vmatprep.mubr.f32.mxu0 0.0
          %1045 = vmatmul.mubr.f32.gmra.mxu0 %v951
          %v1046 = vpop.f32.mrf.mxu0
          %v1047 = vadd.f32 0.0, %v1046
          %v1048 = vpop.f32.mrf.mxu0
          %v1049 = vadd.f32 0.0, %v1048
          %1050 = vmatprep.mubr.f32.mxu0 0.0
          %1051 = vmatmul.mubr.f32.gmra.mxu0 %v954
          %v1052 = vpop.f32.mrf.mxu0
          %v1053 = vadd.f32 0.0, %v1052
          %v1054 = vpop.f32.mrf.mxu0
          %v1055 = vadd.f32 0.0, %v1054
          %1056 = vmatprep.mubr.f32.mxu0 0.0
          %1057 = vmatmul.mubr.f32.gmra.mxu0 %v957
          %v1058 = vpop.f32.mrf.mxu0
          %v1059 = vadd.f32 0.0, %v1058
          %v1060 = vpop.f32.mrf.mxu0
          %v1061 = vadd.f32 0.0, %v1060
          %1062 = vmatprep.mubr.f32.mxu0 0.0
          %1063 = vmatmul.mubr.f32.gmra.mxu0 %v960
          %v1064 = vpop.f32.mrf.mxu0
          %v1065 = vadd.f32 0.0, %v1064
          %v1066 = vpop.f32.mrf.mxu0
          %v1067 = vadd.f32 0.0, %v1066
          %1068 = vmatprep.mubr.f32.mxu0 0.0
          %1069 = vmatmul.mubr.f32.gmra.mxu0 %v963
          %v1070 = vpop.f32.mrf.mxu0
          %v1071 = vadd.f32 0.0, %v1070
          %v1072 = vpop.f32.mrf.mxu0
          %v1073 = vadd.f32 0.0, %v1072
          %1074 = vmatprep.mubr.f32.mxu0 0.0
          %1075 = vmatmul.mubr.f32.gmra.mxu0 %v966
          %v1076 = vpop.f32.mrf.mxu0
          %v1077 = vadd.f32 0.0, %v1076
          %v1078 = vpop.f32.mrf.mxu0
          %v1079 = vadd.f32 0.0, %v1078
          %1080 = vdwg.mxu0
          %v1081 = vadd.f32 %v887, %v1035
          %v1082 = vadd.f32 %v888, %v1037
          %v1083 = vadd.f32 %v889, %v1041
          %v1084 = vadd.f32 %v890, %v1043
          %v1085 = vadd.f32 %v891, %v1047
          %v1086 = vadd.f32 %v892, %v1049
          %v1087 = vadd.f32 %v893, %v1053
          %v1088 = vadd.f32 %v894, %v1055
          %v1089 = vadd.f32 %v895, %v1059
          %v1090 = vadd.f32 %v896, %v1061
          %v1091 = vadd.f32 %v897, %v1065
          %v1092 = vadd.f32 %v898, %v1067
          %v1093 = vadd.f32 %v899, %v1071
          %v1094 = vadd.f32 %v900, %v1073
          %v1095 = vadd.f32 %v901, %v1077
          %v1096 = vadd.f32 %v902, %v1079
          %s1097 = scalar_lea.vmem %s1, 256
          %v1098 = vld [vmem:[%s1097] sm:$0xff]
          %v1099 = vld [vmem:[%s1097 + $0x8] sm:$0xff]
          %v1100 = vld [vmem:[%s1097 + $0x10] sm:$0xff]
          %v1101 = vld [vmem:[%s1097 + $0x18] sm:$0xff]
          %v1102 = vld [vmem:[%s1097 + $0x20] sm:$0xff]
          %v1103 = vld [vmem:[%s1097 + $0x28] sm:$0xff]
          %v1104 = vld [vmem:[%s1097 + $0x30] sm:$0xff]
          %v1105 = vld [vmem:[%s1097 + $0x38] sm:$0xff]
          %v1107 = vsel %vm434, %v1098, 0
          %v1110 = vsel %vm434, %v1099, 0
          %v1113 = vsel %vm434, %v1100, 0
          %v1116 = vsel %vm434, %v1101, 0
          %v1119 = vsel %vm434, %v1102, 0
          %v1122 = vsel %vm434, %v1103, 0
          %v1125 = vsel %vm434, %v1104, 0
          %v1128 = vsel %vm434, %v1105, 0
          %1130 = vmatprep.subr.mxu0 0.0
          %1131 = vmatpush1.msra.mxu0 0.0
          %1132 = vmatprep.subr.mxu0 0.0
          %1133 = vmatpush1.msra.mxu0 0.0
          %1134 = vmatprep.subr.mxu0 0.0
          %1135 = vmatpush1.msra.mxu0 0.0
          %1136 = vmatprep.subr.mxu0 0.0
          %1137 = vmatpush1.msra.mxu0 0.0
          %1138 = vmatprep.subr.mxu0 0.0
          %1139 = vmatpush1.msra.mxu0 0.0
          %1140 = vmatprep.subr.mxu0 0.0
          %1141 = vmatpush1.msra.mxu0 0.0
          %1142 = vmatprep.subr.mxu0 0.0
          %1143 = vmatpush1.msra.mxu0 0.0
          %1144 = vmatprep.subr.mxu0 0.0
          %1145 = vmatpush1.msra.mxu0 0.0
          %1146 = vmatprep.subr.mxu0 0.0
          %1147 = vmatpush1.msra.mxu0 0.0
          %1148 = vmatprep.subr.mxu0 0.0
          %1149 = vmatpush1.msra.mxu0 0.0
          %1150 = vmatprep.subr.mxu0 0.0
          %1151 = vmatpush1.msra.mxu0 0.0
          %1152 = vmatprep.subr.mxu0 0.0
          %1153 = vmatpush1.msra.mxu0 0.0
          %1154 = vmatprep.subr.mxu0 0.0
          %1155 = vmatpush1.msra.mxu0 0.0
          %1156 = vmatprep.subr.mxu0 %v351
          %1157 = vmatpush1.msra.mxu0 %v350
          %1158 = vmatprep.subr.mxu0 %v349
          %1159 = vmatpush1.msra.mxu0 %v348
          %1160 = vmatprep.subr.mxu0 %v347
          %1161 = vmatpush1.msra.mxu0 %v346
          %1162 = vmatprep.subr.mxu0 0.0
          %1163 = vmatpush2.msra.mxu0 0.0
          %1164 = vmatprep.subr.mxu0 0.0
          %1165 = vmatpush2.msra.mxu0 0.0
          %1166 = vmatprep.subr.mxu0 0.0
          %1167 = vmatpush2.msra.mxu0 0.0
          %1168 = vmatprep.subr.mxu0 0.0
          %1169 = vmatpush2.msra.mxu0 0.0
          %1170 = vmatprep.subr.mxu0 0.0
          %1171 = vmatpush2.msra.mxu0 0.0
          %1172 = vmatprep.subr.mxu0 0.0
          %1173 = vmatpush2.msra.mxu0 0.0
          %1174 = vmatprep.subr.mxu0 0.0
          %1175 = vmatpush2.msra.mxu0 0.0
          %1176 = vmatprep.subr.mxu0 0.0
          %1177 = vmatpush2.msra.mxu0 0.0
          %1178 = vmatprep.subr.mxu0 0.0
          %1179 = vmatpush2.msra.mxu0 0.0
          %1180 = vmatprep.subr.mxu0 0.0
          %1181 = vmatpush2.msra.mxu0 0.0
          %1182 = vmatprep.subr.mxu0 0.0
          %1183 = vmatpush2.msra.mxu0 0.0
          %1184 = vmatprep.subr.mxu0 0.0
          %1185 = vmatpush2.msra.mxu0 0.0
          %1186 = vmatprep.subr.mxu0 0.0
          %1187 = vmatpush2.msra.mxu0 0.0
          %1188 = vmatprep.subr.mxu0 0.0
          %1189 = vmatpush2.msra.mxu0 0.0
          %1190 = vmatprep.subr.mxu0 0.0
          %1191 = vmatpush2.msra.mxu0 0.0
          %1192 = vmatprep.subr.mxu0 0.0
          %1193 = vmatpush2.msra.mxu0 0.0
          %1194 = vmatprep.mubr.f32.mxu0 0.0
          %1195 = vmatmul.mubr.f32.gmra.mxu0 %v1107
          %v1196 = vpop.f32.mrf.mxu0
          %v1197 = vadd.f32 0.0, %v1196
          %v1198 = vpop.f32.mrf.mxu0
          %v1199 = vadd.f32 0.0, %v1198
          %1200 = vmatprep.mubr.f32.mxu0 0.0
          %1201 = vmatmul.mubr.f32.gmra.mxu0 %v1110
          %v1202 = vpop.f32.mrf.mxu0
          %v1203 = vadd.f32 0.0, %v1202
          %v1204 = vpop.f32.mrf.mxu0
          %v1205 = vadd.f32 0.0, %v1204
          %1206 = vmatprep.mubr.f32.mxu0 0.0
          %1207 = vmatmul.mubr.f32.gmra.mxu0 %v1113
          %v1208 = vpop.f32.mrf.mxu0
          %v1209 = vadd.f32 0.0, %v1208
          %v1210 = vpop.f32.mrf.mxu0
          %v1211 = vadd.f32 0.0, %v1210
          %1212 = vmatprep.mubr.f32.mxu0 0.0
          %1213 = vmatmul.mubr.f32.gmra.mxu0 %v1116
          %v1214 = vpop.f32.mrf.mxu0
          %v1215 = vadd.f32 0.0, %v1214
          %v1216 = vpop.f32.mrf.mxu0
          %v1217 = vadd.f32 0.0, %v1216
          %1218 = vmatprep.mubr.f32.mxu0 0.0
          %1219 = vmatmul.mubr.f32.gmra.mxu0 %v1119
          %v1220 = vpop.f32.mrf.mxu0
          %v1221 = vadd.f32 0.0, %v1220
          %v1222 = vpop.f32.mrf.mxu0
          %v1223 = vadd.f32 0.0, %v1222
          %1224 = vmatprep.mubr.f32.mxu0 0.0
          %1225 = vmatmul.mubr.f32.gmra.mxu0 %v1122
          %v1226 = vpop.f32.mrf.mxu0
          %v1227 = vadd.f32 0.0, %v1226
          %v1228 = vpop.f32.mrf.mxu0
          %v1229 = vadd.f32 0.0, %v1228
          %1230 = vmatprep.mubr.f32.mxu0 0.0
          %1231 = vmatmul.mubr.f32.gmra.mxu0 %v1125
          %v1232 = vpop.f32.mrf.mxu0
          %v1233 = vadd.f32 0.0, %v1232
          %v1234 = vpop.f32.mrf.mxu0
          %v1235 = vadd.f32 0.0, %v1234
          %1236 = vmatprep.mubr.f32.mxu0 0.0
          %1237 = vmatmul.mubr.f32.gmra.mxu0 %v1128
          %v1238 = vpop.f32.mrf.mxu0
          %v1239 = vadd.f32 0.0, %v1238
          %v1240 = vpop.f32.mrf.mxu0
          %v1241 = vadd.f32 0.0, %v1240
          %1242 = vdwg.mxu0
          %v1243 = vadd.f32 %v1081, %v1197
          %v1244 = vadd.f32 %v1082, %v1199
          %v1245 = vadd.f32 %v1083, %v1203
          %v1246 = vadd.f32 %v1084, %v1205
          %v1247 = vadd.f32 %v1085, %v1209
          %v1248 = vadd.f32 %v1086, %v1211
          %v1249 = vadd.f32 %v1087, %v1215
          %v1250 = vadd.f32 %v1088, %v1217
          %v1251 = vadd.f32 %v1089, %v1221
          %v1252 = vadd.f32 %v1090, %v1223
          %v1253 = vadd.f32 %v1091, %v1227
          %v1254 = vadd.f32 %v1092, %v1229
          %v1255 = vadd.f32 %v1093, %v1233
          %v1256 = vadd.f32 %v1094, %v1235
          %v1257 = vadd.f32 %v1095, %v1239
          %v1258 = vadd.f32 %v1096, %v1241
          %s1259 = scalar_lea.vmem %s3, 240
          %v1260 = vld [vmem:[%s1259] sm:$0xff]
          %v1261 = vld [vmem:[%s1259 + $0x8] sm:$0xff]
          %v1262 = vld [vmem:[%s1259 + $0x10] sm:$0xff]
          %v1263 = vld [vmem:[%s1259 + $0x18] sm:$0xff]
          %v1264 = vld [vmem:[%s1259 + $0x20] sm:$0xff]
          %v1265 = vld [vmem:[%s1259 + $0x28] sm:$0xff]
          %1266 = vrot.lane.b32.xlu0 %v346, 127
          %v1267 = vpop.permute.xlu0 %1266
          %1268 = vrot.lane.b32.xlu0 %v348, 127
          %v1269 = vpop.permute.xlu0 %1268
          %1270 = vrot.lane.b32.xlu0 %v350, 127
          %v1271 = vpop.permute.xlu0 %1270
          %1272 = vrot.lane.b32.xlu0 %v347, 127
          %v1273 = vpop.permute.xlu0 %1272
          %1274 = vrot.lane.b32.xlu0 %v349, 127
          %v1275 = vpop.permute.xlu0 %1274
          %1276 = vrot.lane.b32.xlu0 %v351, 127
          %v1277 = vpop.permute.xlu0 %1276
          %vm1278 = vcmp.lt.s32.totalorder %v371, 127
          %v1279 = vsel %vm1278, %v1267, %v1273
          %v1280 = vsel %vm1278, %v1269, %v1275
          %v1281 = vsel %vm1278, %v1271, %v1277
          %v1282 = vsel %vm1278, %v1273, %v1267
          %v1283 = vsel %vm1278, %v1275, %v1269
          %v1284 = vsel %vm1278, %v1277, %v1271
          %v1285 = vmul.f32 %v1260, %v1279
          %v1286 = vmul.f32 %v1261, %v1282
          %v1287 = vmul.f32 %v1262, %v1280
          %v1288 = vmul.f32 %v1263, %v1283
          %v1289 = vmul.f32 %v1264, %v1281
          %v1290 = vmul.f32 %v1265, %v1284
          %s1291 = scalar_lea.vmem %s1, 320
          %v1292 = vld [vmem:[%s1291] sm:$0xff]
          %v1293 = vld [vmem:[%s1291 + $0x8] sm:$0xff]
          %v1294 = vld [vmem:[%s1291 + $0x10] sm:$0xff]
          %v1295 = vld [vmem:[%s1291 + $0x18] sm:$0xff]
          %v1296 = vld [vmem:[%s1291 + $0x20] sm:$0xff]
          %v1297 = vld [vmem:[%s1291 + $0x28] sm:$0xff]
          %v1298 = vld [vmem:[%s1291 + $0x30] sm:$0xff]
          %v1299 = vld [vmem:[%s1291 + $0x38] sm:$0xff]
          %v1301 = vsel %vm434, %v1292, 0
          %v1304 = vsel %vm434, %v1293, 0
          %v1307 = vsel %vm434, %v1294, 0
          %v1310 = vsel %vm434, %v1295, 0
          %v1313 = vsel %vm434, %v1296, 0
          %v1316 = vsel %vm434, %v1297, 0
          %v1319 = vsel %vm434, %v1298, 0
          %v1322 = vsel %vm434, %v1299, 0
          %1324 = vmatprep.subr.mxu0 0.0
          %1325 = vmatpush1.msra.mxu0 0.0
          %1326 = vmatprep.subr.mxu0 0.0
          %1327 = vmatpush1.msra.mxu0 0.0
          %1328 = vmatprep.subr.mxu0 0.0
          %1329 = vmatpush1.msra.mxu0 0.0
          %1330 = vmatprep.subr.mxu0 0.0
          %1331 = vmatpush1.msra.mxu0 0.0
          %1332 = vmatprep.subr.mxu0 0.0
          %1333 = vmatpush1.msra.mxu0 0.0
          %1334 = vmatprep.subr.mxu0 0.0
          %1335 = vmatpush1.msra.mxu0 0.0
          %1336 = vmatprep.subr.mxu0 0.0
          %1337 = vmatpush1.msra.mxu0 0.0
          %1338 = vmatprep.subr.mxu0 0.0
          %1339 = vmatpush1.msra.mxu0 0.0
          %1340 = vmatprep.subr.mxu0 0.0
          %1341 = vmatpush1.msra.mxu0 0.0
          %1342 = vmatprep.subr.mxu0 0.0
          %1343 = vmatpush1.msra.mxu0 0.0
          %1344 = vmatprep.subr.mxu0 0.0
          %1345 = vmatpush1.msra.mxu0 0.0
          %1346 = vmatprep.subr.mxu0 0.0
          %1347 = vmatpush1.msra.mxu0 0.0
          %1348 = vmatprep.subr.mxu0 0.0
          %1349 = vmatpush1.msra.mxu0 0.0
          %1350 = vmatprep.subr.mxu0 %v1290
          %1351 = vmatpush1.msra.mxu0 %v1289
          %1352 = vmatprep.subr.mxu0 %v1288
          %1353 = vmatpush1.msra.mxu0 %v1287
          %1354 = vmatprep.subr.mxu0 %v1286
          %1355 = vmatpush1.msra.mxu0 %v1285
          %1356 = vmatprep.subr.mxu0 0.0
          %1357 = vmatpush2.msra.mxu0 0.0
          %1358 = vmatprep.subr.mxu0 0.0
          %1359 = vmatpush2.msra.mxu0 0.0
          %1360 = vmatprep.subr.mxu0 0.0
          %1361 = vmatpush2.msra.mxu0 0.0
          %1362 = vmatprep.subr.mxu0 0.0
          %1363 = vmatpush2.msra.mxu0 0.0
          %1364 = vmatprep.subr.mxu0 0.0
          %1365 = vmatpush2.msra.mxu0 0.0
          %1366 = vmatprep.subr.mxu0 0.0
          %1367 = vmatpush2.msra.mxu0 0.0
          %1368 = vmatprep.subr.mxu0 0.0
          %1369 = vmatpush2.msra.mxu0 0.0
          %1370 = vmatprep.subr.mxu0 0.0
          %1371 = vmatpush2.msra.mxu0 0.0
          %1372 = vmatprep.subr.mxu0 0.0
          %1373 = vmatpush2.msra.mxu0 0.0
          %1374 = vmatprep.subr.mxu0 0.0
          %1375 = vmatpush2.msra.mxu0 0.0
          %1376 = vmatprep.subr.mxu0 0.0
          %1377 = vmatpush2.msra.mxu0 0.0
          %1378 = vmatprep.subr.mxu0 0.0
          %1379 = vmatpush2.msra.mxu0 0.0
          %1380 = vmatprep.subr.mxu0 0.0
          %1381 = vmatpush2.msra.mxu0 0.0
          %1382 = vmatprep.subr.mxu0 0.0
          %1383 = vmatpush2.msra.mxu0 0.0
          %1384 = vmatprep.subr.mxu0 0.0
          %1385 = vmatpush2.msra.mxu0 0.0
          %1386 = vmatprep.subr.mxu0 0.0
          %1387 = vmatpush2.msra.mxu0 0.0
          %1388 = vmatprep.mubr.f32.mxu0 0.0
          %1389 = vmatmul.mubr.f32.gmra.mxu0 %v1301
          %v1390 = vpop.f32.mrf.mxu0
          %v1391 = vadd.f32 0.0, %v1390
          %v1392 = vpop.f32.mrf.mxu0
          %v1393 = vadd.f32 0.0, %v1392
          %1394 = vmatprep.mubr.f32.mxu0 0.0
          %1395 = vmatmul.mubr.f32.gmra.mxu0 %v1304
          %v1396 = vpop.f32.mrf.mxu0
          %v1397 = vadd.f32 0.0, %v1396
          %v1398 = vpop.f32.mrf.mxu0
          %v1399 = vadd.f32 0.0, %v1398
          %1400 = vmatprep.mubr.f32.mxu0 0.0
          %1401 = vmatmul.mubr.f32.gmra.mxu0 %v1307
          %v1402 = vpop.f32.mrf.mxu0
          %v1403 = vadd.f32 0.0, %v1402
          %v1404 = vpop.f32.mrf.mxu0
          %v1405 = vadd.f32 0.0, %v1404
          %1406 = vmatprep.mubr.f32.mxu0 0.0
          %1407 = vmatmul.mubr.f32.gmra.mxu0 %v1310
          %v1408 = vpop.f32.mrf.mxu0
          %v1409 = vadd.f32 0.0, %v1408
          %v1410 = vpop.f32.mrf.mxu0
          %v1411 = vadd.f32 0.0, %v1410
          %1412 = vmatprep.mubr.f32.mxu0 0.0
          %1413 = vmatmul.mubr.f32.gmra.mxu0 %v1313
          %v1414 = vpop.f32.mrf.mxu0
          %v1415 = vadd.f32 0.0, %v1414
          %v1416 = vpop.f32.mrf.mxu0
          %v1417 = vadd.f32 0.0, %v1416
          %1418 = vmatprep.mubr.f32.mxu0 0.0
          %1419 = vmatmul.mubr.f32.gmra.mxu0 %v1316
          %v1420 = vpop.f32.mrf.mxu0
          %v1421 = vadd.f32 0.0, %v1420
          %v1422 = vpop.f32.mrf.mxu0
          %v1423 = vadd.f32 0.0, %v1422
          %1424 = vmatprep.mubr.f32.mxu0 0.0
          %1425 = vmatmul.mubr.f32.gmra.mxu0 %v1319
          %v1426 = vpop.f32.mrf.mxu0
          %v1427 = vadd.f32 0.0, %v1426
          %v1428 = vpop.f32.mrf.mxu0
          %v1429 = vadd.f32 0.0, %v1428
          %1430 = vmatprep.mubr.f32.mxu0 0.0
          %1431 = vmatmul.mubr.f32.gmra.mxu0 %v1322
          %v1432 = vpop.f32.mrf.mxu0
          %v1433 = vadd.f32 0.0, %v1432
          %v1434 = vpop.f32.mrf.mxu0
          %v1435 = vadd.f32 0.0, %v1434
          %1436 = vdwg.mxu0
          %v1437 = vadd.f32 %v1243, %v1391
          %v1438 = vadd.f32 %v1244, %v1393
          %v1439 = vadd.f32 %v1245, %v1397
          %v1440 = vadd.f32 %v1246, %v1399
          %v1441 = vadd.f32 %v1247, %v1403
          %v1442 = vadd.f32 %v1248, %v1405
          %v1443 = vadd.f32 %v1249, %v1409
          %v1444 = vadd.f32 %v1250, %v1411
          %v1445 = vadd.f32 %v1251, %v1415
          %v1446 = vadd.f32 %v1252, %v1417
          %v1447 = vadd.f32 %v1253, %v1421
          %v1448 = vadd.f32 %v1254, %v1423
          %v1449 = vadd.f32 %v1255, %v1427
          %v1450 = vadd.f32 %v1256, %v1429
          %v1451 = vadd.f32 %v1257, %v1433
          %v1452 = vadd.f32 %v1258, %v1435
          %s1453 = scalar_lea.vmem %s3, 288
          %v1454 = vld [vmem:[%s1453] sm:$0xff]
          %v1455 = vld [vmem:[%s1453 + $0x8] sm:$0xff]
          %v1456 = vld [vmem:[%s1453 + $0x10] sm:$0xff]
          %v1457 = vld [vmem:[%s1453 + $0x18] sm:$0xff]
          %v1458 = vld [vmem:[%s1453 + $0x20] sm:$0xff]
          %v1459 = vld [vmem:[%s1453 + $0x28] sm:$0xff]
          %1460 = vrot.lane.b32.xlu0 %v346, 113
          %v1461 = vpop.permute.xlu0 %1460
          %1462 = vrot.lane.b32.xlu0 %v348, 113
          %v1463 = vpop.permute.xlu0 %1462
          %1464 = vrot.lane.b32.xlu0 %v350, 113
          %v1465 = vpop.permute.xlu0 %1464
          %1466 = vrot.lane.b32.xlu0 %v347, 113
          %v1467 = vpop.permute.xlu0 %1466
          %1468 = vrot.lane.b32.xlu0 %v349, 113
          %v1469 = vpop.permute.xlu0 %1468
          %1470 = vrot.lane.b32.xlu0 %v351, 113
          %v1471 = vpop.permute.xlu0 %1470
          %vm1472 = vcmp.lt.s32.totalorder %v371, 113
          %v1473 = vsel %vm1472, %v1461, %v1467
          %v1474 = vsel %vm1472, %v1463, %v1469
          %v1475 = vsel %vm1472, %v1465, %v1471
          %v1476 = vsel %vm1472, %v1467, %v1461
          %v1477 = vsel %vm1472, %v1469, %v1463
          %v1478 = vsel %vm1472, %v1471, %v1465
          %v1479 = vmul.f32 %v1454, %v1473
          %v1480 = vmul.f32 %v1455, %v1476
          %v1481 = vmul.f32 %v1456, %v1474
          %v1482 = vmul.f32 %v1457, %v1477
          %v1483 = vmul.f32 %v1458, %v1475
          %v1484 = vmul.f32 %v1459, %v1478
          %s1485 = scalar_lea.vmem %s1, 384
          %v1486 = vld [vmem:[%s1485] sm:$0xff]
          %v1487 = vld [vmem:[%s1485 + $0x8] sm:$0xff]
          %v1488 = vld [vmem:[%s1485 + $0x10] sm:$0xff]
          %v1489 = vld [vmem:[%s1485 + $0x18] sm:$0xff]
          %v1490 = vld [vmem:[%s1485 + $0x20] sm:$0xff]
          %v1491 = vld [vmem:[%s1485 + $0x28] sm:$0xff]
          %v1492 = vld [vmem:[%s1485 + $0x30] sm:$0xff]
          %v1493 = vld [vmem:[%s1485 + $0x38] sm:$0xff]
          %v1495 = vsel %vm434, %v1486, 0
          %v1498 = vsel %vm434, %v1487, 0
          %v1501 = vsel %vm434, %v1488, 0
          %v1504 = vsel %vm434, %v1489, 0
          %v1507 = vsel %vm434, %v1490, 0
          %v1510 = vsel %vm434, %v1491, 0
          %v1513 = vsel %vm434, %v1492, 0
          %v1516 = vsel %vm434, %v1493, 0
          %1518 = vmatprep.subr.mxu0 0.0
          %1519 = vmatpush1.msra.mxu0 0.0
          %1520 = vmatprep.subr.mxu0 0.0
          %1521 = vmatpush1.msra.mxu0 0.0
          %1522 = vmatprep.subr.mxu0 0.0
          %1523 = vmatpush1.msra.mxu0 0.0
          %1524 = vmatprep.subr.mxu0 0.0
          %1525 = vmatpush1.msra.mxu0 0.0
          %1526 = vmatprep.subr.mxu0 0.0
          %1527 = vmatpush1.msra.mxu0 0.0
          %1528 = vmatprep.subr.mxu0 0.0
          %1529 = vmatpush1.msra.mxu0 0.0
          %1530 = vmatprep.subr.mxu0 0.0
          %1531 = vmatpush1.msra.mxu0 0.0
          %1532 = vmatprep.subr.mxu0 0.0
          %1533 = vmatpush1.msra.mxu0 0.0
          %1534 = vmatprep.subr.mxu0 0.0
          %1535 = vmatpush1.msra.mxu0 0.0
          %1536 = vmatprep.subr.mxu0 0.0
          %1537 = vmatpush1.msra.mxu0 0.0
          %1538 = vmatprep.subr.mxu0 0.0
          %1539 = vmatpush1.msra.mxu0 0.0
          %1540 = vmatprep.subr.mxu0 0.0
          %1541 = vmatpush1.msra.mxu0 0.0
          %1542 = vmatprep.subr.mxu0 0.0
          %1543 = vmatpush1.msra.mxu0 0.0
          %1544 = vmatprep.subr.mxu0 %v1484
          %1545 = vmatpush1.msra.mxu0 %v1483
          %1546 = vmatprep.subr.mxu0 %v1482
          %1547 = vmatpush1.msra.mxu0 %v1481
          %1548 = vmatprep.subr.mxu0 %v1480
          %1549 = vmatpush1.msra.mxu0 %v1479
          %1550 = vmatprep.subr.mxu0 0.0
          %1551 = vmatpush2.msra.mxu0 0.0
          %1552 = vmatprep.subr.mxu0 0.0
          %1553 = vmatpush2.msra.mxu0 0.0
          %1554 = vmatprep.subr.mxu0 0.0
          %1555 = vmatpush2.msra.mxu0 0.0
          %1556 = vmatprep.subr.mxu0 0.0
          %1557 = vmatpush2.msra.mxu0 0.0
          %1558 = vmatprep.subr.mxu0 0.0
          %1559 = vmatpush2.msra.mxu0 0.0
          %1560 = vmatprep.subr.mxu0 0.0
          %1561 = vmatpush2.msra.mxu0 0.0
          %1562 = vmatprep.subr.mxu0 0.0
          %1563 = vmatpush2.msra.mxu0 0.0
          %1564 = vmatprep.subr.mxu0 0.0
          %1565 = vmatpush2.msra.mxu0 0.0
          %1566 = vmatprep.subr.mxu0 0.0
          %1567 = vmatpush2.msra.mxu0 0.0
          %1568 = vmatprep.subr.mxu0 0.0
          %1569 = vmatpush2.msra.mxu0 0.0
          %1570 = vmatprep.subr.mxu0 0.0
          %1571 = vmatpush2.msra.mxu0 0.0
          %1572 = vmatprep.subr.mxu0 0.0
          %1573 = vmatpush2.msra.mxu0 0.0
          %1574 = vmatprep.subr.mxu0 0.0
          %1575 = vmatpush2.msra.mxu0 0.0
          %1576 = vmatprep.subr.mxu0 0.0
          %1577 = vmatpush2.msra.mxu0 0.0
          %1578 = vmatprep.subr.mxu0 0.0
          %1579 = vmatpush2.msra.mxu0 0.0
          %1580 = vmatprep.subr.mxu0 0.0
          %1581 = vmatpush2.msra.mxu0 0.0
          %1582 = vmatprep.mubr.f32.mxu0 0.0
          %1583 = vmatmul.mubr.f32.gmra.mxu0 %v1495
          %v1584 = vpop.f32.mrf.mxu0
          %v1585 = vadd.f32 0.0, %v1584
          %v1586 = vpop.f32.mrf.mxu0
          %v1587 = vadd.f32 0.0, %v1586
          %1588 = vmatprep.mubr.f32.mxu0 0.0
          %1589 = vmatmul.mubr.f32.gmra.mxu0 %v1498
          %v1590 = vpop.f32.mrf.mxu0
          %v1591 = vadd.f32 0.0, %v1590
          %v1592 = vpop.f32.mrf.mxu0
          %v1593 = vadd.f32 0.0, %v1592
          %1594 = vmatprep.mubr.f32.mxu0 0.0
          %1595 = vmatmul.mubr.f32.gmra.mxu0 %v1501
          %v1596 = vpop.f32.mrf.mxu0
          %v1597 = vadd.f32 0.0, %v1596
          %v1598 = vpop.f32.mrf.mxu0
          %v1599 = vadd.f32 0.0, %v1598
          %1600 = vmatprep.mubr.f32.mxu0 0.0
          %1601 = vmatmul.mubr.f32.gmra.mxu0 %v1504
          %v1602 = vpop.f32.mrf.mxu0
          %v1603 = vadd.f32 0.0, %v1602
          %v1604 = vpop.f32.mrf.mxu0
          %v1605 = vadd.f32 0.0, %v1604
          %1606 = vmatprep.mubr.f32.mxu0 0.0
          %1607 = vmatmul.mubr.f32.gmra.mxu0 %v1507
          %v1608 = vpop.f32.mrf.mxu0
          %v1609 = vadd.f32 0.0, %v1608
          %v1610 = vpop.f32.mrf.mxu0
          %v1611 = vadd.f32 0.0, %v1610
          %1612 = vmatprep.mubr.f32.mxu0 0.0
          %1613 = vmatmul.mubr.f32.gmra.mxu0 %v1510
          %v1614 = vpop.f32.mrf.mxu0
          %v1615 = vadd.f32 0.0, %v1614
          %v1616 = vpop.f32.mrf.mxu0
          %v1617 = vadd.f32 0.0, %v1616
          %1618 = vmatprep.mubr.f32.mxu0 0.0
          %1619 = vmatmul.mubr.f32.gmra.mxu0 %v1513
          %v1620 = vpop.f32.mrf.mxu0
          %v1621 = vadd.f32 0.0, %v1620
          %v1622 = vpop.f32.mrf.mxu0
          %v1623 = vadd.f32 0.0, %v1622
          %1624 = vmatprep.mubr.f32.mxu0 0.0
          %1625 = vmatmul.mubr.f32.gmra.mxu0 %v1516
          %v1626 = vpop.f32.mrf.mxu0
          %v1627 = vadd.f32 0.0, %v1626
          %v1628 = vpop.f32.mrf.mxu0
          %v1629 = vadd.f32 0.0, %v1628
          %1630 = vdwg.mxu0
          %v1631 = vadd.f32 %v1437, %v1585
          %v1632 = vadd.f32 %v1438, %v1587
          %v1633 = vadd.f32 %v1439, %v1591
          %v1634 = vadd.f32 %v1440, %v1593
          %v1635 = vadd.f32 %v1441, %v1597
          %v1636 = vadd.f32 %v1442, %v1599
          %v1637 = vadd.f32 %v1443, %v1603
          %v1638 = vadd.f32 %v1444, %v1605
          %v1639 = vadd.f32 %v1445, %v1609
          %v1640 = vadd.f32 %v1446, %v1611
          %v1641 = vadd.f32 %v1447, %v1615
          %v1642 = vadd.f32 %v1448, %v1617
          %v1643 = vadd.f32 %v1449, %v1621
          %v1644 = vadd.f32 %v1450, %v1623
          %v1645 = vadd.f32 %v1451, %v1627
          %v1646 = vadd.f32 %v1452, %v1629
          %s1647 = scalar_lea.vmem %s3, 336
          %v1648 = vld [vmem:[%s1647] sm:$0xff]
          %v1649 = vld [vmem:[%s1647 + $0x8] sm:$0xff]
          %v1650 = vld [vmem:[%s1647 + $0x10] sm:$0xff]
          %v1651 = vld [vmem:[%s1647 + $0x18] sm:$0xff]
          %v1652 = vld [vmem:[%s1647 + $0x20] sm:$0xff]
          %v1653 = vld [vmem:[%s1647 + $0x28] sm:$0xff]
          %1654 = vrot.lane.b32.xlu0 %v346, 112
          %v1655 = vpop.permute.xlu0 %1654
          %1656 = vrot.lane.b32.xlu0 %v348, 112
          %v1657 = vpop.permute.xlu0 %1656
          %1658 = vrot.lane.b32.xlu0 %v350, 112
          %v1659 = vpop.permute.xlu0 %1658
          %1660 = vrot.lane.b32.xlu0 %v347, 112
          %v1661 = vpop.permute.xlu0 %1660
          %1662 = vrot.lane.b32.xlu0 %v349, 112
          %v1663 = vpop.permute.xlu0 %1662
          %1664 = vrot.lane.b32.xlu0 %v351, 112
          %v1665 = vpop.permute.xlu0 %1664
          %vm1666 = vcmp.lt.s32.totalorder %v371, 112
          %v1667 = vsel %vm1666, %v1655, %v1661
          %v1668 = vsel %vm1666, %v1657, %v1663
          %v1669 = vsel %vm1666, %v1659, %v1665
          %v1670 = vsel %vm1666, %v1661, %v1655
          %v1671 = vsel %vm1666, %v1663, %v1657
          %v1672 = vsel %vm1666, %v1665, %v1659
          %v1673 = vmul.f32 %v1648, %v1667
          %v1674 = vmul.f32 %v1649, %v1670
          %v1675 = vmul.f32 %v1650, %v1668
          %v1676 = vmul.f32 %v1651, %v1671
          %v1677 = vmul.f32 %v1652, %v1669
          %v1678 = vmul.f32 %v1653, %v1672
          %s1679 = scalar_lea.vmem %s1, 448
          %v1680 = vld [vmem:[%s1679] sm:$0xff]
          %v1681 = vld [vmem:[%s1679 + $0x8] sm:$0xff]
          %v1682 = vld [vmem:[%s1679 + $0x10] sm:$0xff]
          %v1683 = vld [vmem:[%s1679 + $0x18] sm:$0xff]
          %v1684 = vld [vmem:[%s1679 + $0x20] sm:$0xff]
          %v1685 = vld [vmem:[%s1679 + $0x28] sm:$0xff]
          %v1686 = vld [vmem:[%s1679 + $0x30] sm:$0xff]
          %v1687 = vld [vmem:[%s1679 + $0x38] sm:$0xff]
          %v1689 = vsel %vm434, %v1680, 0
          %v1692 = vsel %vm434, %v1681, 0
          %v1695 = vsel %vm434, %v1682, 0
          %v1698 = vsel %vm434, %v1683, 0
          %v1701 = vsel %vm434, %v1684, 0
          %v1704 = vsel %vm434, %v1685, 0
          %v1707 = vsel %vm434, %v1686, 0
          %v1710 = vsel %vm434, %v1687, 0
          %1712 = vmatprep.subr.mxu0 0.0
          %1713 = vmatpush1.msra.mxu0 0.0
          %1714 = vmatprep.subr.mxu0 0.0
          %1715 = vmatpush1.msra.mxu0 0.0
          %1716 = vmatprep.subr.mxu0 0.0
          %1717 = vmatpush1.msra.mxu0 0.0
          %1718 = vmatprep.subr.mxu0 0.0
          %1719 = vmatpush1.msra.mxu0 0.0
          %1720 = vmatprep.subr.mxu0 0.0
          %1721 = vmatpush1.msra.mxu0 0.0
          %1722 = vmatprep.subr.mxu0 0.0
          %1723 = vmatpush1.msra.mxu0 0.0
          %1724 = vmatprep.subr.mxu0 0.0
          %1725 = vmatpush1.msra.mxu0 0.0
          %1726 = vmatprep.subr.mxu0 0.0
          %1727 = vmatpush1.msra.mxu0 0.0
          %1728 = vmatprep.subr.mxu0 0.0
          %1729 = vmatpush1.msra.mxu0 0.0
          %1730 = vmatprep.subr.mxu0 0.0
          %1731 = vmatpush1.msra.mxu0 0.0
          %1732 = vmatprep.subr.mxu0 0.0
          %1733 = vmatpush1.msra.mxu0 0.0
          %1734 = vmatprep.subr.mxu0 0.0
          %1735 = vmatpush1.msra.mxu0 0.0
          %1736 = vmatprep.subr.mxu0 0.0
          %1737 = vmatpush1.msra.mxu0 0.0
          %1738 = vmatprep.subr.mxu0 %v1678
          %1739 = vmatpush1.msra.mxu0 %v1677
          %1740 = vmatprep.subr.mxu0 %v1676
          %1741 = vmatpush1.msra.mxu0 %v1675
          %1742 = vmatprep.subr.mxu0 %v1674
          %1743 = vmatpush1.msra.mxu0 %v1673
          %1744 = vmatprep.subr.mxu0 0.0
          %1745 = vmatpush2.msra.mxu0 0.0
          %1746 = vmatprep.subr.mxu0 0.0
          %1747 = vmatpush2.msra.mxu0 0.0
          %1748 = vmatprep.subr.mxu0 0.0
          %1749 = vmatpush2.msra.mxu0 0.0
          %1750 = vmatprep.subr.mxu0 0.0
          %1751 = vmatpush2.msra.mxu0 0.0
          %1752 = vmatprep.subr.mxu0 0.0
          %1753 = vmatpush2.msra.mxu0 0.0
          %1754 = vmatprep.subr.mxu0 0.0
          %1755 = vmatpush2.msra.mxu0 0.0
          %1756 = vmatprep.subr.mxu0 0.0
          %1757 = vmatpush2.msra.mxu0 0.0
          %1758 = vmatprep.subr.mxu0 0.0
          %1759 = vmatpush2.msra.mxu0 0.0
          %1760 = vmatprep.subr.mxu0 0.0
          %1761 = vmatpush2.msra.mxu0 0.0
          %1762 = vmatprep.subr.mxu0 0.0
          %1763 = vmatpush2.msra.mxu0 0.0
          %1764 = vmatprep.subr.mxu0 0.0
          %1765 = vmatpush2.msra.mxu0 0.0
          %1766 = vmatprep.subr.mxu0 0.0
          %1767 = vmatpush2.msra.mxu0 0.0
          %1768 = vmatprep.subr.mxu0 0.0
          %1769 = vmatpush2.msra.mxu0 0.0
          %1770 = vmatprep.subr.mxu0 0.0
          %1771 = vmatpush2.msra.mxu0 0.0
          %1772 = vmatprep.subr.mxu0 0.0
          %1773 = vmatpush2.msra.mxu0 0.0
          %1774 = vmatprep.subr.mxu0 0.0
          %1775 = vmatpush2.msra.mxu0 0.0
          %1776 = vmatprep.mubr.f32.mxu0 0.0
          %1777 = vmatmul.mubr.f32.gmra.mxu0 %v1689
          %v1778 = vpop.f32.mrf.mxu0
          %v1779 = vadd.f32 0.0, %v1778
          %v1780 = vpop.f32.mrf.mxu0
          %v1781 = vadd.f32 0.0, %v1780
          %1782 = vmatprep.mubr.f32.mxu0 0.0
          %1783 = vmatmul.mubr.f32.gmra.mxu0 %v1692
          %v1784 = vpop.f32.mrf.mxu0
          %v1785 = vadd.f32 0.0, %v1784
          %v1786 = vpop.f32.mrf.mxu0
          %v1787 = vadd.f32 0.0, %v1786
          %1788 = vmatprep.mubr.f32.mxu0 0.0
          %1789 = vmatmul.mubr.f32.gmra.mxu0 %v1695
          %v1790 = vpop.f32.mrf.mxu0
          %v1791 = vadd.f32 0.0, %v1790
          %v1792 = vpop.f32.mrf.mxu0
          %v1793 = vadd.f32 0.0, %v1792
          %1794 = vmatprep.mubr.f32.mxu0 0.0
          %1795 = vmatmul.mubr.f32.gmra.mxu0 %v1698
          %v1796 = vpop.f32.mrf.mxu0
          %v1797 = vadd.f32 0.0, %v1796
          %v1798 = vpop.f32.mrf.mxu0
          %v1799 = vadd.f32 0.0, %v1798
          %1800 = vmatprep.mubr.f32.mxu0 0.0
          %1801 = vmatmul.mubr.f32.gmra.mxu0 %v1701
          %v1802 = vpop.f32.mrf.mxu0
          %v1803 = vadd.f32 0.0, %v1802
          %v1804 = vpop.f32.mrf.mxu0
          %v1805 = vadd.f32 0.0, %v1804
          %1806 = vmatprep.mubr.f32.mxu0 0.0
          %1807 = vmatmul.mubr.f32.gmra.mxu0 %v1704
          %v1808 = vpop.f32.mrf.mxu0
          %v1809 = vadd.f32 0.0, %v1808
          %v1810 = vpop.f32.mrf.mxu0
          %v1811 = vadd.f32 0.0, %v1810
          %1812 = vmatprep.mubr.f32.mxu0 0.0
          %1813 = vmatmul.mubr.f32.gmra.mxu0 %v1707
          %v1814 = vpop.f32.mrf.mxu0
          %v1815 = vadd.f32 0.0, %v1814
          %v1816 = vpop.f32.mrf.mxu0
          %v1817 = vadd.f32 0.0, %v1816
          %1818 = vmatprep.mubr.f32.mxu0 0.0
          %1819 = vmatmul.mubr.f32.gmra.mxu0 %v1710
          %v1820 = vpop.f32.mrf.mxu0
          %v1821 = vadd.f32 0.0, %v1820
          %v1822 = vpop.f32.mrf.mxu0
          %v1823 = vadd.f32 0.0, %v1822
          %1824 = vdwg.mxu0
          %v1825 = vadd.f32 %v1631, %v1779
          %v1826 = vadd.f32 %v1632, %v1781
          %v1827 = vadd.f32 %v1633, %v1785
          %v1828 = vadd.f32 %v1634, %v1787
          %v1829 = vadd.f32 %v1635, %v1791
          %v1830 = vadd.f32 %v1636, %v1793
          %v1831 = vadd.f32 %v1637, %v1797
          %v1832 = vadd.f32 %v1638, %v1799
          %v1833 = vadd.f32 %v1639, %v1803
          %v1834 = vadd.f32 %v1640, %v1805
          %v1835 = vadd.f32 %v1641, %v1809
          %v1836 = vadd.f32 %v1642, %v1811
          %v1837 = vadd.f32 %v1643, %v1815
          %v1838 = vadd.f32 %v1644, %v1817
          %v1839 = vadd.f32 %v1645, %v1821
          %v1840 = vadd.f32 %v1646, %v1823
          %s1841 = scalar_lea.vmem %s3, 384
          %v1842 = vld [vmem:[%s1841] sm:$0xff]
          %v1843 = vld [vmem:[%s1841 + $0x8] sm:$0xff]
          %v1844 = vld [vmem:[%s1841 + $0x10] sm:$0xff]
          %v1845 = vld [vmem:[%s1841 + $0x18] sm:$0xff]
          %v1846 = vld [vmem:[%s1841 + $0x20] sm:$0xff]
          %v1847 = vld [vmem:[%s1841 + $0x28] sm:$0xff]
          %1848 = vrot.lane.b32.xlu0 %v346, 111
          %v1849 = vpop.permute.xlu0 %1848
          %1850 = vrot.lane.b32.xlu0 %v348, 111
          %v1851 = vpop.permute.xlu0 %1850
          %1852 = vrot.lane.b32.xlu0 %v350, 111
          %v1853 = vpop.permute.xlu0 %1852
          %1854 = vrot.lane.b32.xlu0 %v347, 111
          %v1855 = vpop.permute.xlu0 %1854
          %1856 = vrot.lane.b32.xlu0 %v349, 111
          %v1857 = vpop.permute.xlu0 %1856
          %1858 = vrot.lane.b32.xlu0 %v351, 111
          %v1859 = vpop.permute.xlu0 %1858
          %vm1860 = vcmp.lt.s32.totalorder %v371, 111
          %v1861 = vsel %vm1860, %v1849, %v1855
          %v1862 = vsel %vm1860, %v1851, %v1857
          %v1863 = vsel %vm1860, %v1853, %v1859
          %v1864 = vsel %vm1860, %v1855, %v1849
          %v1865 = vsel %vm1860, %v1857, %v1851
          %v1866 = vsel %vm1860, %v1859, %v1853
          %v1867 = vmul.f32 %v1842, %v1861
          %v1868 = vmul.f32 %v1843, %v1864
          %v1869 = vmul.f32 %v1844, %v1862
          %v1870 = vmul.f32 %v1845, %v1865
          %v1871 = vmul.f32 %v1846, %v1863
          %v1872 = vmul.f32 %v1847, %v1866
          %s1873 = scalar_lea.vmem %s1, 512
          %v1874 = vld [vmem:[%s1873] sm:$0xff]
          %v1875 = vld [vmem:[%s1873 + $0x8] sm:$0xff]
          %v1876 = vld [vmem:[%s1873 + $0x10] sm:$0xff]
          %v1877 = vld [vmem:[%s1873 + $0x18] sm:$0xff]
          %v1878 = vld [vmem:[%s1873 + $0x20] sm:$0xff]
          %v1879 = vld [vmem:[%s1873 + $0x28] sm:$0xff]
          %v1880 = vld [vmem:[%s1873 + $0x30] sm:$0xff]
          %v1881 = vld [vmem:[%s1873 + $0x38] sm:$0xff]
          %v1883 = vsel %vm434, %v1874, 0
          %v1886 = vsel %vm434, %v1875, 0
          %v1889 = vsel %vm434, %v1876, 0
          %v1892 = vsel %vm434, %v1877, 0
          %v1895 = vsel %vm434, %v1878, 0
          %v1898 = vsel %vm434, %v1879, 0
          %v1901 = vsel %vm434, %v1880, 0
          %v1904 = vsel %vm434, %v1881, 0
          %1906 = vmatprep.subr.mxu0 0.0
          %1907 = vmatpush1.msra.mxu0 0.0
          %1908 = vmatprep.subr.mxu0 0.0
          %1909 = vmatpush1.msra.mxu0 0.0
          %1910 = vmatprep.subr.mxu0 0.0
          %1911 = vmatpush1.msra.mxu0 0.0
          %1912 = vmatprep.subr.mxu0 0.0
          %1913 = vmatpush1.msra.mxu0 0.0
          %1914 = vmatprep.subr.mxu0 0.0
          %1915 = vmatpush1.msra.mxu0 0.0
          %1916 = vmatprep.subr.mxu0 0.0
          %1917 = vmatpush1.msra.mxu0 0.0
          %1918 = vmatprep.subr.mxu0 0.0
          %1919 = vmatpush1.msra.mxu0 0.0
          %1920 = vmatprep.subr.mxu0 0.0
          %1921 = vmatpush1.msra.mxu0 0.0
          %1922 = vmatprep.subr.mxu0 0.0
          %1923 = vmatpush1.msra.mxu0 0.0
          %1924 = vmatprep.subr.mxu0 0.0
          %1925 = vmatpush1.msra.mxu0 0.0
          %1926 = vmatprep.subr.mxu0 0.0
          %1927 = vmatpush1.msra.mxu0 0.0
          %1928 = vmatprep.subr.mxu0 0.0
          %1929 = vmatpush1.msra.mxu0 0.0
          %1930 = vmatprep.subr.mxu0 0.0
          %1931 = vmatpush1.msra.mxu0 0.0
          %1932 = vmatprep.subr.mxu0 %v1872
          %1933 = vmatpush1.msra.mxu0 %v1871
          %1934 = vmatprep.subr.mxu0 %v1870
          %1935 = vmatpush1.msra.mxu0 %v1869
          %1936 = vmatprep.subr.mxu0 %v1868
          %1937 = vmatpush1.msra.mxu0 %v1867
          %1938 = vmatprep.subr.mxu0 0.0
          %1939 = vmatpush2.msra.mxu0 0.0
          %1940 = vmatprep.subr.mxu0 0.0
          %1941 = vmatpush2.msra.mxu0 0.0
          %1942 = vmatprep.subr.mxu0 0.0
          %1943 = vmatpush2.msra.mxu0 0.0
          %1944 = vmatprep.subr.mxu0 0.0
          %1945 = vmatpush2.msra.mxu0 0.0
          %1946 = vmatprep.subr.mxu0 0.0
          %1947 = vmatpush2.msra.mxu0 0.0
          %1948 = vmatprep.subr.mxu0 0.0
          %1949 = vmatpush2.msra.mxu0 0.0
          %1950 = vmatprep.subr.mxu0 0.0
          %1951 = vmatpush2.msra.mxu0 0.0
          %1952 = vmatprep.subr.mxu0 0.0
          %1953 = vmatpush2.msra.mxu0 0.0
          %1954 = vmatprep.subr.mxu0 0.0
          %1955 = vmatpush2.msra.mxu0 0.0
          %1956 = vmatprep.subr.mxu0 0.0
          %1957 = vmatpush2.msra.mxu0 0.0
          %1958 = vmatprep.subr.mxu0 0.0
          %1959 = vmatpush2.msra.mxu0 0.0
          %1960 = vmatprep.subr.mxu0 0.0
          %1961 = vmatpush2.msra.mxu0 0.0
          %1962 = vmatprep.subr.mxu0 0.0
          %1963 = vmatpush2.msra.mxu0 0.0
          %1964 = vmatprep.subr.mxu0 0.0
          %1965 = vmatpush2.msra.mxu0 0.0
          %1966 = vmatprep.subr.mxu0 0.0
          %1967 = vmatpush2.msra.mxu0 0.0
          %1968 = vmatprep.subr.mxu0 0.0
          %1969 = vmatpush2.msra.mxu0 0.0
          %1970 = vmatprep.mubr.f32.mxu0 0.0
          %1971 = vmatmul.mubr.f32.gmra.mxu0 %v1883
          %v1972 = vpop.f32.mrf.mxu0
          %v1973 = vadd.f32 0.0, %v1972
          %v1974 = vpop.f32.mrf.mxu0
          %v1975 = vadd.f32 0.0, %v1974
          %1976 = vmatprep.mubr.f32.mxu0 0.0
          %1977 = vmatmul.mubr.f32.gmra.mxu0 %v1886
          %v1978 = vpop.f32.mrf.mxu0
          %v1979 = vadd.f32 0.0, %v1978
          %v1980 = vpop.f32.mrf.mxu0
          %v1981 = vadd.f32 0.0, %v1980
          %1982 = vmatprep.mubr.f32.mxu0 0.0
          %1983 = vmatmul.mubr.f32.gmra.mxu0 %v1889
          %v1984 = vpop.f32.mrf.mxu0
          %v1985 = vadd.f32 0.0, %v1984
          %v1986 = vpop.f32.mrf.mxu0
          %v1987 = vadd.f32 0.0, %v1986
          %1988 = vmatprep.mubr.f32.mxu0 0.0
          %1989 = vmatmul.mubr.f32.gmra.mxu0 %v1892
          %v1990 = vpop.f32.mrf.mxu0
          %v1991 = vadd.f32 0.0, %v1990
          %v1992 = vpop.f32.mrf.mxu0
          %v1993 = vadd.f32 0.0, %v1992
          %1994 = vmatprep.mubr.f32.mxu0 0.0
          %1995 = vmatmul.mubr.f32.gmra.mxu0 %v1895
          %v1996 = vpop.f32.mrf.mxu0
          %v1997 = vadd.f32 0.0, %v1996
          %v1998 = vpop.f32.mrf.mxu0
          %v1999 = vadd.f32 0.0, %v1998
          %2000 = vmatprep.mubr.f32.mxu0 0.0
          %2001 = vmatmul.mubr.f32.gmra.mxu0 %v1898
          %v2002 = vpop.f32.mrf.mxu0
          %v2003 = vadd.f32 0.0, %v2002
          %v2004 = vpop.f32.mrf.mxu0
          %v2005 = vadd.f32 0.0, %v2004
          %2006 = vmatprep.mubr.f32.mxu0 0.0
          %2007 = vmatmul.mubr.f32.gmra.mxu0 %v1901
          %v2008 = vpop.f32.mrf.mxu0
          %v2009 = vadd.f32 0.0, %v2008
          %v2010 = vpop.f32.mrf.mxu0
          %v2011 = vadd.f32 0.0, %v2010
          %2012 = vmatprep.mubr.f32.mxu0 0.0
          %2013 = vmatmul.mubr.f32.gmra.mxu0 %v1904
          %v2014 = vpop.f32.mrf.mxu0
          %v2015 = vadd.f32 0.0, %v2014
          %v2016 = vpop.f32.mrf.mxu0
          %v2017 = vadd.f32 0.0, %v2016
          %2018 = vdwg.mxu0
          %v2019 = vadd.f32 %v1825, %v1973
          %v2020 = vadd.f32 %v1826, %v1975
          %v2021 = vadd.f32 %v1827, %v1979
          %v2022 = vadd.f32 %v1828, %v1981
          %v2023 = vadd.f32 %v1829, %v1985
          %v2024 = vadd.f32 %v1830, %v1987
          %v2025 = vadd.f32 %v1831, %v1991
          %v2026 = vadd.f32 %v1832, %v1993
          %v2027 = vadd.f32 %v1833, %v1997
          %v2028 = vadd.f32 %v1834, %v1999
          %v2029 = vadd.f32 %v1835, %v2003
          %v2030 = vadd.f32 %v1836, %v2005
          %v2031 = vadd.f32 %v1837, %v2009
          %v2032 = vadd.f32 %v1838, %v2011
          %v2033 = vadd.f32 %v1839, %v2015
          %v2034 = vadd.f32 %v1840, %v2017
          %v2035 = vmax.f32 %v2019, 0.0
          %v2036 = vmax.f32 %v2020, 0.0
          %v2037 = vmax.f32 %v2021, 0.0
          %v2038 = vmax.f32 %v2022, 0.0
          %v2039 = vmax.f32 %v2023, 0.0
          %v2040 = vmax.f32 %v2024, 0.0
          %v2041 = vmax.f32 %v2025, 0.0
          %v2042 = vmax.f32 %v2026, 0.0
          %v2043 = vmax.f32 %v2027, 0.0
          %v2044 = vmax.f32 %v2028, 0.0
          %v2045 = vmax.f32 %v2029, 0.0
          %v2046 = vmax.f32 %v2030, 0.0
          %v2047 = vmax.f32 %v2031, 0.0
          %v2048 = vmax.f32 %v2032, 0.0
          %v2049 = vmax.f32 %v2033, 0.0
          %v2050 = vmax.f32 %v2034, 0.0
          %v2051 = vld [vmem:[%s4] sm:$0xff]
          %v2052 = vld [vmem:[%s4 + $0x8] sm:$0xff]
          %v2053 = vld [vmem:[%s4 + $0x10] sm:$0xff]
          %v2054 = vld [vmem:[%s4 + $0x18] sm:$0xff]
          %v2055 = vld [vmem:[%s4 + $0x20] sm:$0xff]
          %v2056 = vld [vmem:[%s4 + $0x28] sm:$0xff]
          %v2057 = vld [vmem:[%s4 + $0x30] sm:$0xff]
          %v2058 = vld [vmem:[%s4 + $0x38] sm:$0xff]
          %v2059 = vld [vmem:[%s6] sm:$0xff]
          %v2060 = vld [vmem:[%s6 + $0x8] sm:$0xff]
          %v2061 = vld [vmem:[%s6 + $0x10] sm:$0xff]
          %v2062 = vld [vmem:[%s6 + $0x18] sm:$0xff]
          %v2063 = vld [vmem:[%s6 + $0x20] sm:$0xff]
          %v2064 = vld [vmem:[%s6 + $0x28] sm:$0xff]
          %v2065 = vld [vmem:[%s6 + $0x30] sm:$0xff]
          %v2066 = vld [vmem:[%s6 + $0x38] sm:$0xff]
          %v2067 = vadd.f32 %v2035, %v2036
          %2068 = vadd.xlane.f32.xlu0 %v2067
          %v2069 = vpop.xlane.xlu0 %2068
          %v2070 = vadd.f32 %v2037, %v2038
          %2071 = vadd.xlane.f32.xlu0 %v2070
          %v2072 = vpop.xlane.xlu0 %2071
          %v2073 = vadd.f32 %v2039, %v2040
          %2074 = vadd.xlane.f32.xlu0 %v2073
          %v2075 = vpop.xlane.xlu0 %2074
          %v2076 = vadd.f32 %v2041, %v2042
          %2077 = vadd.xlane.f32.xlu0 %v2076
          %v2078 = vpop.xlane.xlu0 %2077
          %v2079 = vadd.f32 %v2043, %v2044
          %2080 = vadd.xlane.f32.xlu0 %v2079
          %v2081 = vpop.xlane.xlu0 %2080
          %v2082 = vadd.f32 %v2045, %v2046
          %2083 = vadd.xlane.f32.xlu0 %v2082
          %v2084 = vpop.xlane.xlu0 %2083
          %v2085 = vadd.f32 %v2047, %v2048
          %2086 = vadd.xlane.f32.xlu0 %v2085
          %v2087 = vpop.xlane.xlu0 %2086
          %v2088 = vadd.f32 %v2049, %v2050
          %2089 = vadd.xlane.f32.xlu0 %v2088
          %v2090 = vpop.xlane.xlu0 %2089
          %vm2091 = vcmask 523264
          %v2093 = vsel %vm2091, %v2051, 0
          %v2096 = vsel %vm2091, %v2052, 0
          %v2099 = vsel %vm2091, %v2053, 0
          %v2102 = vsel %vm2091, %v2054, 0
          %v2105 = vsel %vm2091, %v2055, 0
          %v2108 = vsel %vm2091, %v2056, 0
          %v2111 = vsel %vm2091, %v2057, 0
          %v2114 = vsel %vm2091, %v2058, 0
          %2116 = vmatprep.subr.mxu0 0.0
          %2117 = vmatpush1.msra.mxu0 0.0
          %2118 = vmatprep.subr.mxu0 0.0
          %2119 = vmatpush1.msra.mxu0 0.0
          %2120 = vmatprep.subr.mxu0 0.0
          %2121 = vmatpush1.msra.mxu0 0.0
          %2122 = vmatprep.subr.mxu0 0.0
          %2123 = vmatpush1.msra.mxu0 0.0
          %2124 = vmatprep.subr.mxu0 0.0
          %2125 = vmatpush1.msra.mxu0 0.0
          %2126 = vmatprep.subr.mxu0 0.0
          %2127 = vmatpush1.msra.mxu0 0.0
          %2128 = vmatprep.subr.mxu0 0.0
          %2129 = vmatpush1.msra.mxu0 0.0
          %2130 = vmatprep.subr.mxu0 0.0
          %2131 = vmatpush1.msra.mxu0 0.0
          %2132 = vmatprep.subr.mxu0 0.0
          %2133 = vmatpush1.msra.mxu0 %v2090
          %2134 = vmatprep.subr.mxu0 0.0
          %2135 = vmatpush1.msra.mxu0 %v2087
          %2136 = vmatprep.subr.mxu0 0.0
          %2137 = vmatpush1.msra.mxu0 %v2084
          %2138 = vmatprep.subr.mxu0 0.0
          %2139 = vmatpush1.msra.mxu0 %v2081
          %2140 = vmatprep.subr.mxu0 0.0
          %2141 = vmatpush1.msra.mxu0 %v2078
          %2142 = vmatprep.subr.mxu0 0.0
          %2143 = vmatpush1.msra.mxu0 %v2075
          %2144 = vmatprep.subr.mxu0 0.0
          %2145 = vmatpush1.msra.mxu0 %v2072
          %2146 = vmatprep.subr.mxu0 0.0
          %2147 = vmatpush1.msra.mxu0 %v2069
          %2148 = vmatprep.subr.mxu0 0.0
          %2149 = vmatpush2.msra.mxu0 0.0
          %2150 = vmatprep.subr.mxu0 0.0
          %2151 = vmatpush2.msra.mxu0 0.0
          %2152 = vmatprep.subr.mxu0 0.0
          %2153 = vmatpush2.msra.mxu0 0.0
          %2154 = vmatprep.subr.mxu0 0.0
          %2155 = vmatpush2.msra.mxu0 0.0
          %2156 = vmatprep.subr.mxu0 0.0
          %2157 = vmatpush2.msra.mxu0 0.0
          %2158 = vmatprep.subr.mxu0 0.0
          %2159 = vmatpush2.msra.mxu0 0.0
          %2160 = vmatprep.subr.mxu0 0.0
          %2161 = vmatpush2.msra.mxu0 0.0
          %2162 = vmatprep.subr.mxu0 0.0
          %2163 = vmatpush2.msra.mxu0 0.0
          %2164 = vmatprep.subr.mxu0 0.0
          %2165 = vmatpush2.msra.mxu0 0.0
          %2166 = vmatprep.subr.mxu0 0.0
          %2167 = vmatpush2.msra.mxu0 0.0
          %2168 = vmatprep.subr.mxu0 0.0
          %2169 = vmatpush2.msra.mxu0 0.0
          %2170 = vmatprep.subr.mxu0 0.0
          %2171 = vmatpush2.msra.mxu0 0.0
          %2172 = vmatprep.subr.mxu0 0.0
          %2173 = vmatpush2.msra.mxu0 0.0
          %2174 = vmatprep.subr.mxu0 0.0
          %2175 = vmatpush2.msra.mxu0 0.0
          %2176 = vmatprep.subr.mxu0 0.0
          %2177 = vmatpush2.msra.mxu0 0.0
          %2178 = vmatprep.subr.mxu0 0.0
          %2179 = vmatpush2.msra.mxu0 0.0
          %2180 = vmatprep.mubr.f32.mxu0 0.0
          %2181 = vmatmul.mubr.f32.gmra.mxu0 %v2093
          %v2182 = vpop.f32.mrf.mxu0
          %v2183 = vadd.f32 0.0, %v2182
          %v2184 = vpop.f32.mrf.mxu0
          %2185 = vmatprep.mubr.f32.mxu0 0.0
          %2186 = vmatmul.mubr.f32.gmra.mxu0 %v2096
          %v2187 = vpop.f32.mrf.mxu0
          %v2188 = vadd.f32 0.0, %v2187
          %v2189 = vpop.f32.mrf.mxu0
          %2190 = vmatprep.mubr.f32.mxu0 0.0
          %2191 = vmatmul.mubr.f32.gmra.mxu0 %v2099
          %v2192 = vpop.f32.mrf.mxu0
          %v2193 = vadd.f32 0.0, %v2192
          %v2194 = vpop.f32.mrf.mxu0
          %2195 = vmatprep.mubr.f32.mxu0 0.0
          %2196 = vmatmul.mubr.f32.gmra.mxu0 %v2102
          %v2197 = vpop.f32.mrf.mxu0
          %v2198 = vadd.f32 0.0, %v2197
          %v2199 = vpop.f32.mrf.mxu0
          %2200 = vmatprep.mubr.f32.mxu0 0.0
          %2201 = vmatmul.mubr.f32.gmra.mxu0 %v2105
          %v2202 = vpop.f32.mrf.mxu0
          %v2203 = vadd.f32 0.0, %v2202
          %v2204 = vpop.f32.mrf.mxu0
          %2205 = vmatprep.mubr.f32.mxu0 0.0
          %2206 = vmatmul.mubr.f32.gmra.mxu0 %v2108
          %v2207 = vpop.f32.mrf.mxu0
          %v2208 = vadd.f32 0.0, %v2207
          %v2209 = vpop.f32.mrf.mxu0
          %2210 = vmatprep.mubr.f32.mxu0 0.0
          %2211 = vmatmul.mubr.f32.gmra.mxu0 %v2111
          %v2212 = vpop.f32.mrf.mxu0
          %v2213 = vadd.f32 0.0, %v2212
          %v2214 = vpop.f32.mrf.mxu0
          %2215 = vmatprep.mubr.f32.mxu0 0.0
          %2216 = vmatmul.mubr.f32.gmra.mxu0 %v2114
          %v2217 = vpop.f32.mrf.mxu0
          %v2218 = vadd.f32 0.0, %v2217
          %v2219 = vpop.f32.mrf.mxu0
          %2220 = vdwg.mxu0
          %v2221 = vmul.f32 %v2035, %v2035
          %v2222 = vmul.f32 %v2036, %v2036
          %v2223 = vmul.f32 %v2037, %v2037
          %v2224 = vmul.f32 %v2038, %v2038
          %v2225 = vmul.f32 %v2039, %v2039
          %v2226 = vmul.f32 %v2040, %v2040
          %v2227 = vmul.f32 %v2041, %v2041
          %v2228 = vmul.f32 %v2042, %v2042
          %v2229 = vmul.f32 %v2043, %v2043
          %v2230 = vmul.f32 %v2044, %v2044
          %v2231 = vmul.f32 %v2045, %v2045
          %v2232 = vmul.f32 %v2046, %v2046
          %v2233 = vmul.f32 %v2047, %v2047
          %v2234 = vmul.f32 %v2048, %v2048
          %v2235 = vmul.f32 %v2049, %v2049
          %v2236 = vmul.f32 %v2050, %v2050
          %v2237 = vadd.f32 %v2221, %v2222
          %2238 = vadd.xlane.f32.xlu0 %v2237
          %v2239 = vpop.xlane.xlu0 %2238
          %v2240 = vadd.f32 %v2223, %v2224
          %2241 = vadd.xlane.f32.xlu0 %v2240
          %v2242 = vpop.xlane.xlu0 %2241
          %v2243 = vadd.f32 %v2225, %v2226
          %2244 = vadd.xlane.f32.xlu0 %v2243
          %v2245 = vpop.xlane.xlu0 %2244
          %v2246 = vadd.f32 %v2227, %v2228
          %2247 = vadd.xlane.f32.xlu0 %v2246
          %v2248 = vpop.xlane.xlu0 %2247
          %v2249 = vadd.f32 %v2229, %v2230
          %2250 = vadd.xlane.f32.xlu0 %v2249
          %v2251 = vpop.xlane.xlu0 %2250
          %v2252 = vadd.f32 %v2231, %v2232
          %2253 = vadd.xlane.f32.xlu0 %v2252
          %v2254 = vpop.xlane.xlu0 %2253
          %v2255 = vadd.f32 %v2233, %v2234
          %2256 = vadd.xlane.f32.xlu0 %v2255
          %v2257 = vpop.xlane.xlu0 %2256
          %v2258 = vadd.f32 %v2235, %v2236
          %2259 = vadd.xlane.f32.xlu0 %v2258
          %v2260 = vpop.xlane.xlu0 %2259
          %2261 = vmatprep.subr.mxu0 0.0
          %2262 = vmatpush1.msra.mxu0 0.0
          %2263 = vmatprep.subr.mxu0 0.0
          %2264 = vmatpush1.msra.mxu0 0.0
          %2265 = vmatprep.subr.mxu0 0.0
          %2266 = vmatpush1.msra.mxu0 0.0
          %2267 = vmatprep.subr.mxu0 0.0
          %2268 = vmatpush1.msra.mxu0 0.0
          %2269 = vmatprep.subr.mxu0 0.0
          %2270 = vmatpush1.msra.mxu0 0.0
          %2271 = vmatprep.subr.mxu0 0.0
          %2272 = vmatpush1.msra.mxu0 0.0
          %2273 = vmatprep.subr.mxu0 0.0
          %2274 = vmatpush1.msra.mxu0 0.0
          %2275 = vmatprep.subr.mxu0 0.0
          %2276 = vmatpush1.msra.mxu0 0.0
          %2277 = vmatprep.subr.mxu0 0.0
          %2278 = vmatpush1.msra.mxu0 %v2260
          %2279 = vmatprep.subr.mxu0 0.0
          %2280 = vmatpush1.msra.mxu0 %v2257
          %2281 = vmatprep.subr.mxu0 0.0
          %2282 = vmatpush1.msra.mxu0 %v2254
          %2283 = vmatprep.subr.mxu0 0.0
          %2284 = vmatpush1.msra.mxu0 %v2251
          %2285 = vmatprep.subr.mxu0 0.0
          %2286 = vmatpush1.msra.mxu0 %v2248
          %2287 = vmatprep.subr.mxu0 0.0
          %2288 = vmatpush1.msra.mxu0 %v2245
          %2289 = vmatprep.subr.mxu0 0.0
          %2290 = vmatpush1.msra.mxu0 %v2242
          %2291 = vmatprep.subr.mxu0 0.0
          %2292 = vmatpush1.msra.mxu0 %v2239
          %2293 = vmatprep.subr.mxu0 0.0
          %2294 = vmatpush2.msra.mxu0 0.0
          %2295 = vmatprep.subr.mxu0 0.0
          %2296 = vmatpush2.msra.mxu0 0.0
          %2297 = vmatprep.subr.mxu0 0.0
          %2298 = vmatpush2.msra.mxu0 0.0
          %2299 = vmatprep.subr.mxu0 0.0
          %2300 = vmatpush2.msra.mxu0 0.0
          %2301 = vmatprep.subr.mxu0 0.0
          %2302 = vmatpush2.msra.mxu0 0.0
          %2303 = vmatprep.subr.mxu0 0.0
          %2304 = vmatpush2.msra.mxu0 0.0
          %2305 = vmatprep.subr.mxu0 0.0
          %2306 = vmatpush2.msra.mxu0 0.0
          %2307 = vmatprep.subr.mxu0 0.0
          %2308 = vmatpush2.msra.mxu0 0.0
          %2309 = vmatprep.subr.mxu0 0.0
          %2310 = vmatpush2.msra.mxu0 0.0
          %2311 = vmatprep.subr.mxu0 0.0
          %2312 = vmatpush2.msra.mxu0 0.0
          %2313 = vmatprep.subr.mxu0 0.0
          %2314 = vmatpush2.msra.mxu0 0.0
          %2315 = vmatprep.subr.mxu0 0.0
          %2316 = vmatpush2.msra.mxu0 0.0
          %2317 = vmatprep.subr.mxu0 0.0
          %2318 = vmatpush2.msra.mxu0 0.0
          %2319 = vmatprep.subr.mxu0 0.0
          %2320 = vmatpush2.msra.mxu0 0.0
          %2321 = vmatprep.subr.mxu0 0.0
          %2322 = vmatpush2.msra.mxu0 0.0
          %2323 = vmatprep.subr.mxu0 0.0
          %2324 = vmatpush2.msra.mxu0 0.0
          %2325 = vmatprep.mubr.f32.mxu0 0.0
          %2326 = vmatmul.mubr.f32.gmra.mxu0 %v2093
          %v2327 = vpop.f32.mrf.mxu0
          %v2328 = vadd.f32 0.0, %v2327
          %v2329 = vpop.f32.mrf.mxu0
          %2330 = vmatprep.mubr.f32.mxu0 0.0
          %2331 = vmatmul.mubr.f32.gmra.mxu0 %v2096
          %v2332 = vpop.f32.mrf.mxu0
          %v2333 = vadd.f32 0.0, %v2332
          %v2334 = vpop.f32.mrf.mxu0
          %2335 = vmatprep.mubr.f32.mxu0 0.0
          %2336 = vmatmul.mubr.f32.gmra.mxu0 %v2099
          %v2337 = vpop.f32.mrf.mxu0
          %v2338 = vadd.f32 0.0, %v2337
          %v2339 = vpop.f32.mrf.mxu0
          %2340 = vmatprep.mubr.f32.mxu0 0.0
          %2341 = vmatmul.mubr.f32.gmra.mxu0 %v2102
          %v2342 = vpop.f32.mrf.mxu0
          %v2343 = vadd.f32 0.0, %v2342
          %v2344 = vpop.f32.mrf.mxu0
          %2345 = vmatprep.mubr.f32.mxu0 0.0
          %2346 = vmatmul.mubr.f32.gmra.mxu0 %v2105
          %v2347 = vpop.f32.mrf.mxu0
          %v2348 = vadd.f32 0.0, %v2347
          %v2349 = vpop.f32.mrf.mxu0
          %2350 = vmatprep.mubr.f32.mxu0 0.0
          %2351 = vmatmul.mubr.f32.gmra.mxu0 %v2108
          %v2352 = vpop.f32.mrf.mxu0
          %v2353 = vadd.f32 0.0, %v2352
          %v2354 = vpop.f32.mrf.mxu0
          %2355 = vmatprep.mubr.f32.mxu0 0.0
          %2356 = vmatmul.mubr.f32.gmra.mxu0 %v2111
          %v2357 = vpop.f32.mrf.mxu0
          %v2358 = vadd.f32 0.0, %v2357
          %v2359 = vpop.f32.mrf.mxu0
          %2360 = vmatprep.mubr.f32.mxu0 0.0
          %2361 = vmatmul.mubr.f32.gmra.mxu0 %v2114
          %v2362 = vpop.f32.mrf.mxu0
          %v2363 = vadd.f32 0.0, %v2362
          %v2364 = vpop.f32.mrf.mxu0
          %2365 = vdwg.mxu0
          %v2366 = vmul.f32 %v2183, %v2183
          %v2367 = vmul.f32 %v2188, %v2188
          %v2368 = vmul.f32 %v2193, %v2193
          %v2369 = vmul.f32 %v2198, %v2198
          %v2370 = vmul.f32 %v2203, %v2203
          %v2371 = vmul.f32 %v2208, %v2208
          %v2372 = vmul.f32 %v2213, %v2213
          %v2373 = vmul.f32 %v2218, %v2218
          %v2374 = vsub.f32 %v2328, %v2366
          %v2375 = vsub.f32 %v2333, %v2367
          %v2376 = vsub.f32 %v2338, %v2368
          %v2377 = vsub.f32 %v2343, %v2369
          %v2378 = vsub.f32 %v2348, %v2370
          %v2379 = vsub.f32 %v2353, %v2371
          %v2380 = vsub.f32 %v2358, %v2372
          %v2381 = vsub.f32 %v2363, %v2373
          %v2382 = vmax.f32 %v2374, 0.0
          %v2383 = vmax.f32 %v2375, 0.0
          %v2384 = vmax.f32 %v2376, 0.0
          %v2385 = vmax.f32 %v2377, 0.0
          %v2386 = vmax.f32 %v2378, 0.0
          %v2387 = vmax.f32 %v2379, 0.0
          %v2388 = vmax.f32 %v2380, 0.0
          %v2389 = vmax.f32 %v2381, 0.0
          %2391 = vset.pattern.permute.xlu0 0
          %2392 = vperm.xlu0 %2391, %v2183
          %v2393 = vpop.permute.xlu0 %2392
          %2396 = vset.pattern.permute.xlu0 0
          %2397 = vperm.xlu0 %2396, %v2188
          %v2398 = vpop.permute.xlu0 %2397
          %2401 = vset.pattern.permute.xlu0 0
          %2402 = vperm.xlu0 %2401, %v2193
          %v2403 = vpop.permute.xlu0 %2402
          %2406 = vset.pattern.permute.xlu0 0
          %2407 = vperm.xlu0 %2406, %v2198
          %v2408 = vpop.permute.xlu0 %2407
          %2411 = vset.pattern.permute.xlu0 0
          %2412 = vperm.xlu0 %2411, %v2203
          %v2413 = vpop.permute.xlu0 %2412
          %2416 = vset.pattern.permute.xlu0 0
          %2417 = vperm.xlu0 %2416, %v2208
          %v2418 = vpop.permute.xlu0 %2417
          %2421 = vset.pattern.permute.xlu0 0
          %2422 = vperm.xlu0 %2421, %v2213
          %v2423 = vpop.permute.xlu0 %2422
          %2426 = vset.pattern.permute.xlu0 0
          %2427 = vperm.xlu0 %2426, %v2218
          %v2428 = vpop.permute.xlu0 %2427
          %v2430 = vsub.f32 %v2035, %v2393
          %v2431 = vsub.f32 %v2036, %v2393
          %v2432 = vsub.f32 %v2037, %v2398
          %v2433 = vsub.f32 %v2038, %v2398
          %v2434 = vsub.f32 %v2039, %v2403
          %v2435 = vsub.f32 %v2040, %v2403
          %v2436 = vsub.f32 %v2041, %v2408
          %v2437 = vsub.f32 %v2042, %v2408
          %v2438 = vsub.f32 %v2043, %v2413
          %v2439 = vsub.f32 %v2044, %v2413
          %v2440 = vsub.f32 %v2045, %v2418
          %v2441 = vsub.f32 %v2046, %v2418
          %v2442 = vsub.f32 %v2047, %v2423
          %v2443 = vsub.f32 %v2048, %v2423
          %v2444 = vsub.f32 %v2049, %v2428
          %v2445 = vsub.f32 %v2050, %v2428
          %v2446 = vadd.f32 %v2382, 1e-05
          %v2447 = vadd.f32 %v2383, 1e-05
          %v2448 = vadd.f32 %v2384, 1e-05
          %v2449 = vadd.f32 %v2385, 1e-05
          %v2450 = vadd.f32 %v2386, 1e-05
          %v2451 = vadd.f32 %v2387, 1e-05
          %v2452 = vadd.f32 %v2388, 1e-05
          %v2453 = vadd.f32 %v2389, 1e-05
          %v2454 = vrsqrt.pop %v2446
          %v2455 = vrsqrt.pop %v2447
          %v2456 = vrsqrt.pop %v2448
          %v2457 = vrsqrt.pop %v2449
          %v2458 = vrsqrt.pop %v2450
          %v2459 = vrsqrt.pop %v2451
          %v2460 = vrsqrt.pop %v2452
          %v2461 = vrsqrt.pop %v2453
          %v2462 = vmul.f32 %v2454, %v2059
          %v2463 = vmul.f32 %v2455, %v2060
          %v2464 = vmul.f32 %v2456, %v2061
          %v2465 = vmul.f32 %v2457, %v2062
          %v2466 = vmul.f32 %v2458, %v2063
          %v2467 = vmul.f32 %v2459, %v2064
          %v2468 = vmul.f32 %v2460, %v2065
          %v2469 = vmul.f32 %v2461, %v2066
          %2471 = vset.pattern.permute.xlu0 0
          %2472 = vperm.xlu0 %2471, %v2462
          %v2473 = vpop.permute.xlu0 %2472
          %2476 = vset.pattern.permute.xlu0 0
          %2477 = vperm.xlu0 %2476, %v2463
          %v2478 = vpop.permute.xlu0 %2477
          %2481 = vset.pattern.permute.xlu0 0
          %2482 = vperm.xlu0 %2481, %v2464
          %v2483 = vpop.permute.xlu0 %2482
          %2486 = vset.pattern.permute.xlu0 0
          %2487 = vperm.xlu0 %2486, %v2465
          %v2488 = vpop.permute.xlu0 %2487
          %2491 = vset.pattern.permute.xlu0 0
          %2492 = vperm.xlu0 %2491, %v2466
          %v2493 = vpop.permute.xlu0 %2492
          %2496 = vset.pattern.permute.xlu0 0
          %2497 = vperm.xlu0 %2496, %v2467
          %v2498 = vpop.permute.xlu0 %2497
          %2501 = vset.pattern.permute.xlu0 0
          %2502 = vperm.xlu0 %2501, %v2468
          %v2503 = vpop.permute.xlu0 %2502
          %2506 = vset.pattern.permute.xlu0 0
          %2507 = vperm.xlu0 %2506, %v2469
          %v2508 = vpop.permute.xlu0 %2507
          %v2510 = vmul.f32 %v2430, %v2473
          %v2511 = vmul.f32 %v2431, %v2473
          %v2512 = vmul.f32 %v2432, %v2478
          %v2513 = vmul.f32 %v2433, %v2478
          %v2514 = vmul.f32 %v2434, %v2483
          %v2515 = vmul.f32 %v2435, %v2483
          %v2516 = vmul.f32 %v2436, %v2488
          %v2517 = vmul.f32 %v2437, %v2488
          %v2518 = vmul.f32 %v2438, %v2493
          %v2519 = vmul.f32 %v2439, %v2493
          %v2520 = vmul.f32 %v2440, %v2498
          %v2521 = vmul.f32 %v2441, %v2498
          %v2522 = vmul.f32 %v2442, %v2503
          %v2523 = vmul.f32 %v2443, %v2503
          %v2524 = vmul.f32 %v2444, %v2508
          %v2525 = vmul.f32 %v2445, %v2508
          %2527 = vset.pattern.permute.xlu0 1
          %2528 = vperm.xlu0 %2527, %v2059
          %v2529 = vpop.permute.xlu0 %2528
          %2532 = vset.pattern.permute.xlu0 1
          %2533 = vperm.xlu0 %2532, %v2060
          %v2534 = vpop.permute.xlu0 %2533
          %2537 = vset.pattern.permute.xlu0 1
          %2538 = vperm.xlu0 %2537, %v2061
          %v2539 = vpop.permute.xlu0 %2538
          %2542 = vset.pattern.permute.xlu0 1
          %2543 = vperm.xlu0 %2542, %v2062
          %v2544 = vpop.permute.xlu0 %2543
          %2547 = vset.pattern.permute.xlu0 1
          %2548 = vperm.xlu0 %2547, %v2063
          %v2549 = vpop.permute.xlu0 %2548
          %2552 = vset.pattern.permute.xlu0 1
          %2553 = vperm.xlu0 %2552, %v2064
          %v2554 = vpop.permute.xlu0 %2553
          %2557 = vset.pattern.permute.xlu0 1
          %2558 = vperm.xlu0 %2557, %v2065
          %v2559 = vpop.permute.xlu0 %2558
          %2562 = vset.pattern.permute.xlu0 1
          %2563 = vperm.xlu0 %2562, %v2066
          %v2564 = vpop.permute.xlu0 %2563
          %v2566 = vadd.f32 %v2510, %v2529
          %v2567 = vadd.f32 %v2511, %v2529
          %v2568 = vadd.f32 %v2512, %v2534
          %v2569 = vadd.f32 %v2513, %v2534
          %v2570 = vadd.f32 %v2514, %v2539
          %v2571 = vadd.f32 %v2515, %v2539
          %v2572 = vadd.f32 %v2516, %v2544
          %v2573 = vadd.f32 %v2517, %v2544
          %v2574 = vadd.f32 %v2518, %v2549
          %v2575 = vadd.f32 %v2519, %v2549
          %v2576 = vadd.f32 %v2520, %v2554
          %v2577 = vadd.f32 %v2521, %v2554
          %v2578 = vadd.f32 %v2522, %v2559
          %v2579 = vadd.f32 %v2523, %v2559
          %v2580 = vadd.f32 %v2524, %v2564
          %v2581 = vadd.f32 %v2525, %v2564
          %v2582 = vld [vmem:[#allocation3] sm:$0xff]
          %v2583 = vld [vmem:[#allocation3 + $0x8] sm:$0xff]
          %v2584 = vld [vmem:[#allocation3 + $0x10] sm:$0xff]
          %v2586 = vsel %vm2091, %v2582, 0
          %v2589 = vsel %vm2091, %v2583, 0
          %v2592 = vsel %vm2091, %v2584, 0
          %2594 = vmatprep.subr.mxu0 0.0
          %2595 = vmatpush1.msra.mxu0 0.0
          %2596 = vmatprep.subr.mxu0 0.0
          %2597 = vmatpush1.msra.mxu0 0.0
          %2598 = vmatprep.subr.mxu0 0.0
          %2599 = vmatpush1.msra.mxu0 0.0
          %2600 = vmatprep.subr.mxu0 0.0
          %2601 = vmatpush1.msra.mxu0 0.0
          %2602 = vmatprep.subr.mxu0 0.0
          %2603 = vmatpush1.msra.mxu0 0.0
          %2604 = vmatprep.subr.mxu0 0.0
          %2605 = vmatpush1.msra.mxu0 0.0
          %2606 = vmatprep.subr.mxu0 0.0
          %2607 = vmatpush1.msra.mxu0 0.0
          %2608 = vmatprep.subr.mxu0 0.0
          %2609 = vmatpush1.msra.mxu0 0.0
          %2610 = vmatprep.subr.mxu0 %v2581
          %2611 = vmatpush1.msra.mxu0 %v2580
          %2612 = vmatprep.subr.mxu0 %v2579
          %2613 = vmatpush1.msra.mxu0 %v2578
          %2614 = vmatprep.subr.mxu0 %v2577
          %2615 = vmatpush1.msra.mxu0 %v2576
          %2616 = vmatprep.subr.mxu0 %v2575
          %2617 = vmatpush1.msra.mxu0 %v2574
          %2618 = vmatprep.subr.mxu0 %v2573
          %2619 = vmatpush1.msra.mxu0 %v2572
          %2620 = vmatprep.subr.mxu0 %v2571
          %2621 = vmatpush1.msra.mxu0 %v2570
          %2622 = vmatprep.subr.mxu0 %v2569
          %2623 = vmatpush1.msra.mxu0 %v2568
          %2624 = vmatprep.subr.mxu0 %v2567
          %2625 = vmatpush1.msra.mxu0 %v2566
          %2626 = vmatprep.subr.mxu0 0.0
          %2627 = vmatpush2.msra.mxu0 0.0
          %2628 = vmatprep.subr.mxu0 0.0
          %2629 = vmatpush2.msra.mxu0 0.0
          %2630 = vmatprep.subr.mxu0 0.0
          %2631 = vmatpush2.msra.mxu0 0.0
          %2632 = vmatprep.subr.mxu0 0.0
          %2633 = vmatpush2.msra.mxu0 0.0
          %2634 = vmatprep.subr.mxu0 0.0
          %2635 = vmatpush2.msra.mxu0 0.0
          %2636 = vmatprep.subr.mxu0 0.0
          %2637 = vmatpush2.msra.mxu0 0.0
          %2638 = vmatprep.subr.mxu0 0.0
          %2639 = vmatpush2.msra.mxu0 0.0
          %2640 = vmatprep.subr.mxu0 0.0
          %2641 = vmatpush2.msra.mxu0 0.0
          %2642 = vmatprep.subr.mxu0 0.0
          %2643 = vmatpush2.msra.mxu0 0.0
          %2644 = vmatprep.subr.mxu0 0.0
          %2645 = vmatpush2.msra.mxu0 0.0
          %2646 = vmatprep.subr.mxu0 0.0
          %2647 = vmatpush2.msra.mxu0 0.0
          %2648 = vmatprep.subr.mxu0 0.0
          %2649 = vmatpush2.msra.mxu0 0.0
          %2650 = vmatprep.subr.mxu0 0.0
          %2651 = vmatpush2.msra.mxu0 0.0
          %2652 = vmatprep.subr.mxu0 0.0
          %2653 = vmatpush2.msra.mxu0 0.0
          %2654 = vmatprep.subr.mxu0 0.0
          %2655 = vmatpush2.msra.mxu0 0.0
          %2656 = vmatprep.subr.mxu0 0.0
          %2657 = vmatpush2.msra.mxu0 0.0
          %2658 = vmatprep.mubr.f32.mxu0 0.0
          %2659 = vmatmul.mubr.f32.gmra.mxu0 %v2586
          %v2660 = vpop.f32.mrf.mxu0
          %v2661 = vadd.f32 0.0, %v2660
          %v2662 = vpop.f32.mrf.mxu0
          %v2663 = vadd.f32 0.0, %v2662
          %2664 = vmatprep.mubr.f32.mxu0 0.0
          %2665 = vmatmul.mubr.f32.gmra.mxu0 %v2589
          %v2666 = vpop.f32.mrf.mxu0
          %v2667 = vadd.f32 0.0, %v2666
          %v2668 = vpop.f32.mrf.mxu0
          %v2669 = vadd.f32 0.0, %v2668
          %2670 = vmatprep.mubr.f32.mxu0 0.0
          %2671 = vmatmul.mubr.f32.gmra.mxu0 %v2592
          %v2672 = vpop.f32.mrf.mxu0
          %v2673 = vadd.f32 0.0, %v2672
          %v2674 = vpop.f32.mrf.mxu0
          %v2675 = vadd.f32 0.0, %v2674
          %2676 = vdwg.mxu0
          %2677 = vrot.lane.b32.xlu0 %v2661, 17
          %v2678 = vpop.permute.xlu0 %2677
          %2679 = vrot.lane.b32.xlu0 %v2667, 17
          %v2680 = vpop.permute.xlu0 %2679
          %2681 = vrot.lane.b32.xlu0 %v2673, 17
          %v2682 = vpop.permute.xlu0 %2681
          %2683 = vrot.lane.b32.xlu0 %v2663, 17
          %v2684 = vpop.permute.xlu0 %2683
          %2685 = vrot.lane.b32.xlu0 %v2669, 17
          %v2686 = vpop.permute.xlu0 %2685
          %2687 = vrot.lane.b32.xlu0 %v2675, 17
          %v2688 = vpop.permute.xlu0 %2687
          %v2689 = vsel %vm372, %v2678, %v2684
          %v2690 = vsel %vm372, %v2680, %v2686
          %v2691 = vsel %vm372, %v2682, %v2688
          %v2692 = vsel %vm372, %v2684, %v2678
          %v2693 = vsel %vm372, %v2686, %v2680
          %v2694 = vsel %vm372, %v2688, %v2682
          %v2695 = vmul.f32 %v352, %v2692
          %v2696 = vmul.f32 %v353, %v2689
          %v2697 = vmul.f32 %v354, %v2693
          %v2698 = vmul.f32 %v355, %v2690
          %v2699 = vmul.f32 %v356, %v2694
          %v2700 = vmul.f32 %v357, %v2691
          %s2701 = scalar_lea.vmem [#allocation3], 24
          %v2702 = vld [vmem:[%s2701] sm:$0xff]
          %v2703 = vld [vmem:[%s2701 + $0x8] sm:$0xff]
          %v2704 = vld [vmem:[%s2701 + $0x10] sm:$0xff]
          %v2706 = vsel %vm2091, %v2702, 0
          %v2709 = vsel %vm2091, %v2703, 0
          %v2712 = vsel %vm2091, %v2704, 0
          %2714 = vmatprep.subr.mxu0 0.0
          %2715 = vmatpush1.msra.mxu0 0.0
          %2716 = vmatprep.subr.mxu0 0.0
          %2717 = vmatpush1.msra.mxu0 0.0
          %2718 = vmatprep.subr.mxu0 0.0
          %2719 = vmatpush1.msra.mxu0 0.0
          %2720 = vmatprep.subr.mxu0 0.0
          %2721 = vmatpush1.msra.mxu0 0.0
          %2722 = vmatprep.subr.mxu0 0.0
          %2723 = vmatpush1.msra.mxu0 0.0
          %2724 = vmatprep.subr.mxu0 0.0
          %2725 = vmatpush1.msra.mxu0 0.0
          %2726 = vmatprep.subr.mxu0 0.0
          %2727 = vmatpush1.msra.mxu0 0.0
          %2728 = vmatprep.subr.mxu0 0.0
          %2729 = vmatpush1.msra.mxu0 0.0
          %2730 = vmatprep.subr.mxu0 %v2581
          %2731 = vmatpush1.msra.mxu0 %v2580
          %2732 = vmatprep.subr.mxu0 %v2579
          %2733 = vmatpush1.msra.mxu0 %v2578
          %2734 = vmatprep.subr.mxu0 %v2577
          %2735 = vmatpush1.msra.mxu0 %v2576
          %2736 = vmatprep.subr.mxu0 %v2575
          %2737 = vmatpush1.msra.mxu0 %v2574
          %2738 = vmatprep.subr.mxu0 %v2573
          %2739 = vmatpush1.msra.mxu0 %v2572
          %2740 = vmatprep.subr.mxu0 %v2571
          %2741 = vmatpush1.msra.mxu0 %v2570
          %2742 = vmatprep.subr.mxu0 %v2569
          %2743 = vmatpush1.msra.mxu0 %v2568
          %2744 = vmatprep.subr.mxu0 %v2567
          %2745 = vmatpush1.msra.mxu0 %v2566
          %2746 = vmatprep.subr.mxu0 0.0
          %2747 = vmatpush2.msra.mxu0 0.0
          %2748 = vmatprep.subr.mxu0 0.0
          %2749 = vmatpush2.msra.mxu0 0.0
          %2750 = vmatprep.subr.mxu0 0.0
          %2751 = vmatpush2.msra.mxu0 0.0
          %2752 = vmatprep.subr.mxu0 0.0
          %2753 = vmatpush2.msra.mxu0 0.0
          %2754 = vmatprep.subr.mxu0 0.0
          %2755 = vmatpush2.msra.mxu0 0.0
          %2756 = vmatprep.subr.mxu0 0.0
          %2757 = vmatpush2.msra.mxu0 0.0
          %2758 = vmatprep.subr.mxu0 0.0
          %2759 = vmatpush2.msra.mxu0 0.0
          %2760 = vmatprep.subr.mxu0 0.0
          %2761 = vmatpush2.msra.mxu0 0.0
          %2762 = vmatprep.subr.mxu0 0.0
          %2763 = vmatpush2.msra.mxu0 0.0
          %2764 = vmatprep.subr.mxu0 0.0
          %2765 = vmatpush2.msra.mxu0 0.0
          %2766 = vmatprep.subr.mxu0 0.0
          %2767 = vmatpush2.msra.mxu0 0.0
          %2768 = vmatprep.subr.mxu0 0.0
          %2769 = vmatpush2.msra.mxu0 0.0
          %2770 = vmatprep.subr.mxu0 0.0
          %2771 = vmatpush2.msra.mxu0 0.0
          %2772 = vmatprep.subr.mxu0 0.0
          %2773 = vmatpush2.msra.mxu0 0.0
          %2774 = vmatprep.subr.mxu0 0.0
          %2775 = vmatpush2.msra.mxu0 0.0
          %2776 = vmatprep.subr.mxu0 0.0
          %2777 = vmatpush2.msra.mxu0 0.0
          %2778 = vmatprep.mubr.f32.mxu0 0.0
          %2779 = vmatmul.mubr.f32.gmra.mxu0 %v2706
          %v2780 = vpop.f32.mrf.mxu0
          %v2781 = vadd.f32 0.0, %v2780
          %v2782 = vpop.f32.mrf.mxu0
          %v2783 = vadd.f32 0.0, %v2782
          %2784 = vmatprep.mubr.f32.mxu0 0.0
          %2785 = vmatmul.mubr.f32.gmra.mxu0 %v2709
          %v2786 = vpop.f32.mrf.mxu0
          %v2787 = vadd.f32 0.0, %v2786
          %v2788 = vpop.f32.mrf.mxu0
          %v2789 = vadd.f32 0.0, %v2788
          %2790 = vmatprep.mubr.f32.mxu0 0.0
          %2791 = vmatmul.mubr.f32.gmra.mxu0 %v2712
          %v2792 = vpop.f32.mrf.mxu0
          %v2793 = vadd.f32 0.0, %v2792
          %v2794 = vpop.f32.mrf.mxu0
          %v2795 = vadd.f32 0.0, %v2794
          %2796 = vdwg.mxu0
          %2797 = vrot.lane.b32.xlu0 %v2781, 16
          %v2798 = vpop.permute.xlu0 %2797
          %2799 = vrot.lane.b32.xlu0 %v2787, 16
          %v2800 = vpop.permute.xlu0 %2799
          %2801 = vrot.lane.b32.xlu0 %v2793, 16
          %v2802 = vpop.permute.xlu0 %2801
          %2803 = vrot.lane.b32.xlu0 %v2783, 16
          %v2804 = vpop.permute.xlu0 %2803
          %2805 = vrot.lane.b32.xlu0 %v2789, 16
          %v2806 = vpop.permute.xlu0 %2805
          %2807 = vrot.lane.b32.xlu0 %v2795, 16
          %v2808 = vpop.permute.xlu0 %2807
          %v2809 = vsel %vm412, %v2798, %v2804
          %v2810 = vsel %vm412, %v2800, %v2806
          %v2811 = vsel %vm412, %v2802, %v2808
          %v2812 = vsel %vm412, %v2804, %v2798
          %v2813 = vsel %vm412, %v2806, %v2800
          %v2814 = vsel %vm412, %v2808, %v2802
          %v2815 = vmul.f32 %v394, %v2812
          %v2816 = vmul.f32 %v395, %v2809
          %v2817 = vmul.f32 %v396, %v2813
          %v2818 = vmul.f32 %v397, %v2810
          %v2819 = vmul.f32 %v398, %v2814
          %v2820 = vmul.f32 %v399, %v2811
          %v2821 = vadd.f32 %v2695, %v2815
          %v2822 = vadd.f32 %v2696, %v2816
          %v2823 = vadd.f32 %v2697, %v2817
          %v2824 = vadd.f32 %v2698, %v2818
          %v2825 = vadd.f32 %v2699, %v2819
          %v2826 = vadd.f32 %v2700, %v2820
          %s2827 = scalar_lea.vmem [#allocation3], 48
          %v2828 = vld [vmem:[%s2827] sm:$0xff]
          %v2829 = vld [vmem:[%s2827 + $0x8] sm:$0xff]
          %v2830 = vld [vmem:[%s2827 + $0x10] sm:$0xff]
          %v2832 = vsel %vm2091, %v2828, 0
          %v2835 = vsel %vm2091, %v2829, 0
          %v2838 = vsel %vm2091, %v2830, 0
          %2840 = vmatprep.subr.mxu0 0.0
          %2841 = vmatpush1.msra.mxu0 0.0
          %2842 = vmatprep.subr.mxu0 0.0
          %2843 = vmatpush1.msra.mxu0 0.0
          %2844 = vmatprep.subr.mxu0 0.0
          %2845 = vmatpush1.msra.mxu0 0.0
          %2846 = vmatprep.subr.mxu0 0.0
          %2847 = vmatpush1.msra.mxu0 0.0
          %2848 = vmatprep.subr.mxu0 0.0
          %2849 = vmatpush1.msra.mxu0 0.0
          %2850 = vmatprep.subr.mxu0 0.0
          %2851 = vmatpush1.msra.mxu0 0.0
          %2852 = vmatprep.subr.mxu0 0.0
          %2853 = vmatpush1.msra.mxu0 0.0
          %2854 = vmatprep.subr.mxu0 0.0
          %2855 = vmatpush1.msra.mxu0 0.0
          %2856 = vmatprep.subr.mxu0 %v2581
          %2857 = vmatpush1.msra.mxu0 %v2580
          %2858 = vmatprep.subr.mxu0 %v2579
          %2859 = vmatpush1.msra.mxu0 %v2578
          %2860 = vmatprep.subr.mxu0 %v2577
          %2861 = vmatpush1.msra.mxu0 %v2576
          %2862 = vmatprep.subr.mxu0 %v2575
          %2863 = vmatpush1.msra.mxu0 %v2574
          %2864 = vmatprep.subr.mxu0 %v2573
          %2865 = vmatpush1.msra.mxu0 %v2572
          %2866 = vmatprep.subr.mxu0 %v2571
          %2867 = vmatpush1.msra.mxu0 %v2570
          %2868 = vmatprep.subr.mxu0 %v2569
          %2869 = vmatpush1.msra.mxu0 %v2568
          %2870 = vmatprep.subr.mxu0 %v2567
          %2871 = vmatpush1.msra.mxu0 %v2566
          %2872 = vmatprep.subr.mxu0 0.0
          %2873 = vmatpush2.msra.mxu0 0.0
          %2874 = vmatprep.subr.mxu0 0.0
          %2875 = vmatpush2.msra.mxu0 0.0
          %2876 = vmatprep.subr.mxu0 0.0
          %2877 = vmatpush2.msra.mxu0 0.0
          %2878 = vmatprep.subr.mxu0 0.0
          %2879 = vmatpush2.msra.mxu0 0.0
          %2880 = vmatprep.subr.mxu0 0.0
          %2881 = vmatpush2.msra.mxu0 0.0
          %2882 = vmatprep.subr.mxu0 0.0
          %2883 = vmatpush2.msra.mxu0 0.0
          %2884 = vmatprep.subr.mxu0 0.0
          %2885 = vmatpush2.msra.mxu0 0.0
          %2886 = vmatprep.subr.mxu0 0.0
          %2887 = vmatpush2.msra.mxu0 0.0
          %2888 = vmatprep.subr.mxu0 0.0
          %2889 = vmatpush2.msra.mxu0 0.0
          %2890 = vmatprep.subr.mxu0 0.0
          %2891 = vmatpush2.msra.mxu0 0.0
          %2892 = vmatprep.subr.mxu0 0.0
          %2893 = vmatpush2.msra.mxu0 0.0
          %2894 = vmatprep.subr.mxu0 0.0
          %2895 = vmatpush2.msra.mxu0 0.0
          %2896 = vmatprep.subr.mxu0 0.0
          %2897 = vmatpush2.msra.mxu0 0.0
          %2898 = vmatprep.subr.mxu0 0.0
          %2899 = vmatpush2.msra.mxu0 0.0
          %2900 = vmatprep.subr.mxu0 0.0
          %2901 = vmatpush2.msra.mxu0 0.0
          %2902 = vmatprep.subr.mxu0 0.0
          %2903 = vmatpush2.msra.mxu0 0.0
          %2904 = vmatprep.mubr.f32.mxu0 0.0
          %2905 = vmatmul.mubr.f32.gmra.mxu0 %v2832
          %v2906 = vpop.f32.mrf.mxu0
          %v2907 = vadd.f32 0.0, %v2906
          %v2908 = vpop.f32.mrf.mxu0
          %v2909 = vadd.f32 0.0, %v2908
          %2910 = vmatprep.mubr.f32.mxu0 0.0
          %2911 = vmatmul.mubr.f32.gmra.mxu0 %v2835
          %v2912 = vpop.f32.mrf.mxu0
          %v2913 = vadd.f32 0.0, %v2912
          %v2914 = vpop.f32.mrf.mxu0
          %v2915 = vadd.f32 0.0, %v2914
          %2916 = vmatprep.mubr.f32.mxu0 0.0
          %2917 = vmatmul.mubr.f32.gmra.mxu0 %v2838
          %v2918 = vpop.f32.mrf.mxu0
          %v2919 = vadd.f32 0.0, %v2918
          %v2920 = vpop.f32.mrf.mxu0
          %v2921 = vadd.f32 0.0, %v2920
          %2922 = vdwg.mxu0
          %2923 = vrot.lane.b32.xlu0 %v2907, 15
          %v2924 = vpop.permute.xlu0 %2923
          %2925 = vrot.lane.b32.xlu0 %v2913, 15
          %v2926 = vpop.permute.xlu0 %2925
          %2927 = vrot.lane.b32.xlu0 %v2919, 15
          %v2928 = vpop.permute.xlu0 %2927
          %2929 = vrot.lane.b32.xlu0 %v2909, 15
          %v2930 = vpop.permute.xlu0 %2929
          %2931 = vrot.lane.b32.xlu0 %v2915, 15
          %v2932 = vpop.permute.xlu0 %2931
          %2933 = vrot.lane.b32.xlu0 %v2921, 15
          %v2934 = vpop.permute.xlu0 %2933
          %v2935 = vsel %vm728, %v2924, %v2930
          %v2936 = vsel %vm728, %v2926, %v2932
          %v2937 = vsel %vm728, %v2928, %v2934
          %v2938 = vsel %vm728, %v2930, %v2924
          %v2939 = vsel %vm728, %v2932, %v2926
          %v2940 = vsel %vm728, %v2934, %v2928
          %v2941 = vmul.f32 %v710, %v2938
          %v2942 = vmul.f32 %v711, %v2935
          %v2943 = vmul.f32 %v712, %v2939
          %v2944 = vmul.f32 %v713, %v2936
          %v2945 = vmul.f32 %v714, %v2940
          %v2946 = vmul.f32 %v715, %v2937
          %v2947 = vadd.f32 %v2821, %v2941
          %v2948 = vadd.f32 %v2822, %v2942
          %v2949 = vadd.f32 %v2823, %v2943
          %v2950 = vadd.f32 %v2824, %v2944
          %v2951 = vadd.f32 %v2825, %v2945
          %v2952 = vadd.f32 %v2826, %v2946
          %s2953 = scalar_lea.vmem [#allocation3], 72
          %v2954 = vld [vmem:[%s2953] sm:$0xff]
          %v2955 = vld [vmem:[%s2953 + $0x8] sm:$0xff]
          %v2956 = vld [vmem:[%s2953 + $0x10] sm:$0xff]
          %v2958 = vsel %vm2091, %v2954, 0
          %v2961 = vsel %vm2091, %v2955, 0
          %v2964 = vsel %vm2091, %v2956, 0
          %2966 = vmatprep.subr.mxu0 0.0
          %2967 = vmatpush1.msra.mxu0 0.0
          %2968 = vmatprep.subr.mxu0 0.0
          %2969 = vmatpush1.msra.mxu0 0.0
          %2970 = vmatprep.subr.mxu0 0.0
          %2971 = vmatpush1.msra.mxu0 0.0
          %2972 = vmatprep.subr.mxu0 0.0
          %2973 = vmatpush1.msra.mxu0 0.0
          %2974 = vmatprep.subr.mxu0 0.0
          %2975 = vmatpush1.msra.mxu0 0.0
          %2976 = vmatprep.subr.mxu0 0.0
          %2977 = vmatpush1.msra.mxu0 0.0
          %2978 = vmatprep.subr.mxu0 0.0
          %2979 = vmatpush1.msra.mxu0 0.0
          %2980 = vmatprep.subr.mxu0 0.0
          %2981 = vmatpush1.msra.mxu0 0.0
          %2982 = vmatprep.subr.mxu0 %v2581
          %2983 = vmatpush1.msra.mxu0 %v2580
          %2984 = vmatprep.subr.mxu0 %v2579
          %2985 = vmatpush1.msra.mxu0 %v2578
          %2986 = vmatprep.subr.mxu0 %v2577
          %2987 = vmatpush1.msra.mxu0 %v2576
          %2988 = vmatprep.subr.mxu0 %v2575
          %2989 = vmatpush1.msra.mxu0 %v2574
          %2990 = vmatprep.subr.mxu0 %v2573
          %2991 = vmatpush1.msra.mxu0 %v2572
          %2992 = vmatprep.subr.mxu0 %v2571
          %2993 = vmatpush1.msra.mxu0 %v2570
          %2994 = vmatprep.subr.mxu0 %v2569
          %2995 = vmatpush1.msra.mxu0 %v2568
          %2996 = vmatprep.subr.mxu0 %v2567
          %2997 = vmatpush1.msra.mxu0 %v2566
          %2998 = vmatprep.subr.mxu0 0.0
          %2999 = vmatpush2.msra.mxu0 0.0
          %3000 = vmatprep.subr.mxu0 0.0
          %3001 = vmatpush2.msra.mxu0 0.0
          %3002 = vmatprep.subr.mxu0 0.0
          %3003 = vmatpush2.msra.mxu0 0.0
          %3004 = vmatprep.subr.mxu0 0.0
          %3005 = vmatpush2.msra.mxu0 0.0
          %3006 = vmatprep.subr.mxu0 0.0
          %3007 = vmatpush2.msra.mxu0 0.0
          %3008 = vmatprep.subr.mxu0 0.0
          %3009 = vmatpush2.msra.mxu0 0.0
          %3010 = vmatprep.subr.mxu0 0.0
          %3011 = vmatpush2.msra.mxu0 0.0
          %3012 = vmatprep.subr.mxu0 0.0
          %3013 = vmatpush2.msra.mxu0 0.0
          %3014 = vmatprep.subr.mxu0 0.0
          %3015 = vmatpush2.msra.mxu0 0.0
          %3016 = vmatprep.subr.mxu0 0.0
          %3017 = vmatpush2.msra.mxu0 0.0
          %3018 = vmatprep.subr.mxu0 0.0
          %3019 = vmatpush2.msra.mxu0 0.0
          %3020 = vmatprep.subr.mxu0 0.0
          %3021 = vmatpush2.msra.mxu0 0.0
          %3022 = vmatprep.subr.mxu0 0.0
          %3023 = vmatpush2.msra.mxu0 0.0
          %3024 = vmatprep.subr.mxu0 0.0
          %3025 = vmatpush2.msra.mxu0 0.0
          %3026 = vmatprep.subr.mxu0 0.0
          %3027 = vmatpush2.msra.mxu0 0.0
          %3028 = vmatprep.subr.mxu0 0.0
          %3029 = vmatpush2.msra.mxu0 0.0
          %3030 = vmatprep.mubr.f32.mxu0 0.0
          %3031 = vmatmul.mubr.f32.gmra.mxu0 %v2958
          %v3032 = vpop.f32.mrf.mxu0
          %v3033 = vadd.f32 0.0, %v3032
          %v3034 = vpop.f32.mrf.mxu0
          %v3035 = vadd.f32 0.0, %v3034
          %3036 = vmatprep.mubr.f32.mxu0 0.0
          %3037 = vmatmul.mubr.f32.gmra.mxu0 %v2961
          %v3038 = vpop.f32.mrf.mxu0
          %v3039 = vadd.f32 0.0, %v3038
          %v3040 = vpop.f32.mrf.mxu0
          %v3041 = vadd.f32 0.0, %v3040
          %3042 = vmatprep.mubr.f32.mxu0 0.0
          %3043 = vmatmul.mubr.f32.gmra.mxu0 %v2964
          %v3044 = vpop.f32.mrf.mxu0
          %v3045 = vadd.f32 0.0, %v3044
          %v3046 = vpop.f32.mrf.mxu0
          %v3047 = vadd.f32 0.0, %v3046
          %3048 = vdwg.mxu0
          %3049 = vrot.lane.b32.xlu0 %v3033, 1
          %v3050 = vpop.permute.xlu0 %3049
          %3051 = vrot.lane.b32.xlu0 %v3039, 1
          %v3052 = vpop.permute.xlu0 %3051
          %3053 = vrot.lane.b32.xlu0 %v3045, 1
          %v3054 = vpop.permute.xlu0 %3053
          %3055 = vrot.lane.b32.xlu0 %v3035, 1
          %v3056 = vpop.permute.xlu0 %3055
          %3057 = vrot.lane.b32.xlu0 %v3041, 1
          %v3058 = vpop.permute.xlu0 %3057
          %3059 = vrot.lane.b32.xlu0 %v3047, 1
          %v3060 = vpop.permute.xlu0 %3059
          %v3061 = vsel %vm922, %v3050, %v3056
          %v3062 = vsel %vm922, %v3052, %v3058
          %v3063 = vsel %vm922, %v3054, %v3060
          %v3064 = vsel %vm922, %v3056, %v3050
          %v3065 = vsel %vm922, %v3058, %v3052
          %v3066 = vsel %vm922, %v3060, %v3054
          %v3067 = vmul.f32 %v904, %v3064
          %v3068 = vmul.f32 %v905, %v3061
          %v3069 = vmul.f32 %v906, %v3065
          %v3070 = vmul.f32 %v907, %v3062
          %v3071 = vmul.f32 %v908, %v3066
          %v3072 = vmul.f32 %v909, %v3063
          %v3073 = vadd.f32 %v2947, %v3067
          %v3074 = vadd.f32 %v2948, %v3068
          %v3075 = vadd.f32 %v2949, %v3069
          %v3076 = vadd.f32 %v2950, %v3070
          %v3077 = vadd.f32 %v2951, %v3071
          %v3078 = vadd.f32 %v2952, %v3072
          %s3079 = scalar_lea.vmem [#allocation3], 96
          %v3080 = vld [vmem:[%s3079] sm:$0xff]
          %v3081 = vld [vmem:[%s3079 + $0x8] sm:$0xff]
          %v3082 = vld [vmem:[%s3079 + $0x10] sm:$0xff]
          %v3084 = vsel %vm2091, %v3080, 0
          %v3087 = vsel %vm2091, %v3081, 0
          %v3090 = vsel %vm2091, %v3082, 0
          %3092 = vmatprep.subr.mxu0 0.0
          %3093 = vmatpush1.msra.mxu0 0.0
          %3094 = vmatprep.subr.mxu0 0.0
          %3095 = vmatpush1.msra.mxu0 0.0
          %3096 = vmatprep.subr.mxu0 0.0
          %3097 = vmatpush1.msra.mxu0 0.0
          %3098 = vmatprep.subr.mxu0 0.0
          %3099 = vmatpush1.msra.mxu0 0.0
          %3100 = vmatprep.subr.mxu0 0.0
          %3101 = vmatpush1.msra.mxu0 0.0
          %3102 = vmatprep.subr.mxu0 0.0
          %3103 = vmatpush1.msra.mxu0 0.0
          %3104 = vmatprep.subr.mxu0 0.0
          %3105 = vmatpush1.msra.mxu0 0.0
          %3106 = vmatprep.subr.mxu0 0.0
          %3107 = vmatpush1.msra.mxu0 0.0
          %3108 = vmatprep.subr.mxu0 %v2581
          %3109 = vmatpush1.msra.mxu0 %v2580
          %3110 = vmatprep.subr.mxu0 %v2579
          %3111 = vmatpush1.msra.mxu0 %v2578
          %3112 = vmatprep.subr.mxu0 %v2577
          %3113 = vmatpush1.msra.mxu0 %v2576
          %3114 = vmatprep.subr.mxu0 %v2575
          %3115 = vmatpush1.msra.mxu0 %v2574
          %3116 = vmatprep.subr.mxu0 %v2573
          %3117 = vmatpush1.msra.mxu0 %v2572
          %3118 = vmatprep.subr.mxu0 %v2571
          %3119 = vmatpush1.msra.mxu0 %v2570
          %3120 = vmatprep.subr.mxu0 %v2569
          %3121 = vmatpush1.msra.mxu0 %v2568
          %3122 = vmatprep.subr.mxu0 %v2567
          %3123 = vmatpush1.msra.mxu0 %v2566
          %3124 = vmatprep.subr.mxu0 0.0
          %3125 = vmatpush2.msra.mxu0 0.0
          %3126 = vmatprep.subr.mxu0 0.0
          %3127 = vmatpush2.msra.mxu0 0.0
          %3128 = vmatprep.subr.mxu0 0.0
          %3129 = vmatpush2.msra.mxu0 0.0
          %3130 = vmatprep.subr.mxu0 0.0
          %3131 = vmatpush2.msra.mxu0 0.0
          %3132 = vmatprep.subr.mxu0 0.0
          %3133 = vmatpush2.msra.mxu0 0.0
          %3134 = vmatprep.subr.mxu0 0.0
          %3135 = vmatpush2.msra.mxu0 0.0
          %3136 = vmatprep.subr.mxu0 0.0
          %3137 = vmatpush2.msra.mxu0 0.0
          %3138 = vmatprep.subr.mxu0 0.0
          %3139 = vmatpush2.msra.mxu0 0.0
          %3140 = vmatprep.subr.mxu0 0.0
          %3141 = vmatpush2.msra.mxu0 0.0
          %3142 = vmatprep.subr.mxu0 0.0
          %3143 = vmatpush2.msra.mxu0 0.0
          %3144 = vmatprep.subr.mxu0 0.0
          %3145 = vmatpush2.msra.mxu0 0.0
          %3146 = vmatprep.subr.mxu0 0.0
          %3147 = vmatpush2.msra.mxu0 0.0
          %3148 = vmatprep.subr.mxu0 0.0
          %3149 = vmatpush2.msra.mxu0 0.0
          %3150 = vmatprep.subr.mxu0 0.0
          %3151 = vmatpush2.msra.mxu0 0.0
          %3152 = vmatprep.subr.mxu0 0.0
          %3153 = vmatpush2.msra.mxu0 0.0
          %3154 = vmatprep.subr.mxu0 0.0
          %3155 = vmatpush2.msra.mxu0 0.0
          %3156 = vmatprep.mubr.f32.mxu0 0.0
          %3157 = vmatmul.mubr.f32.gmra.mxu0 %v3084
          %v3158 = vpop.f32.mrf.mxu0
          %v3159 = vadd.f32 0.0, %v3158
          %v3160 = vpop.f32.mrf.mxu0
          %v3161 = vadd.f32 0.0, %v3160
          %3162 = vmatprep.mubr.f32.mxu0 0.0
          %3163 = vmatmul.mubr.f32.gmra.mxu0 %v3087
          %v3164 = vpop.f32.mrf.mxu0
          %v3165 = vadd.f32 0.0, %v3164
          %v3166 = vpop.f32.mrf.mxu0
          %v3167 = vadd.f32 0.0, %v3166
          %3168 = vmatprep.mubr.f32.mxu0 0.0
          %3169 = vmatmul.mubr.f32.gmra.mxu0 %v3090
          %v3170 = vpop.f32.mrf.mxu0
          %v3171 = vadd.f32 0.0, %v3170
          %v3172 = vpop.f32.mrf.mxu0
          %v3173 = vadd.f32 0.0, %v3172
          %3174 = vdwg.mxu0
          %v3175 = vadd.f32 %v3073, %v3159
          %v3176 = vadd.f32 %v3074, %v3161
          %v3177 = vadd.f32 %v3075, %v3165
          %v3178 = vadd.f32 %v3076, %v3167
          %v3179 = vadd.f32 %v3077, %v3171
          %v3180 = vadd.f32 %v3078, %v3173
          %s3181 = scalar_lea.vmem [#allocation3], 120
          %v3182 = vld [vmem:[%s3181] sm:$0xff]
          %v3183 = vld [vmem:[%s3181 + $0x8] sm:$0xff]
          %v3184 = vld [vmem:[%s3181 + $0x10] sm:$0xff]
          %v3186 = vsel %vm2091, %v3182, 0
          %v3189 = vsel %vm2091, %v3183, 0
          %v3192 = vsel %vm2091, %v3184, 0
          %3194 = vmatprep.subr.mxu0 0.0
          %3195 = vmatpush1.msra.mxu0 0.0
          %3196 = vmatprep.subr.mxu0 0.0
          %3197 = vmatpush1.msra.mxu0 0.0
          %3198 = vmatprep.subr.mxu0 0.0
          %3199 = vmatpush1.msra.mxu0 0.0
          %3200 = vmatprep.subr.mxu0 0.0
          %3201 = vmatpush1.msra.mxu0 0.0
          %3202 = vmatprep.subr.mxu0 0.0
          %3203 = vmatpush1.msra.mxu0 0.0
          %3204 = vmatprep.subr.mxu0 0.0
          %3205 = vmatpush1.msra.mxu0 0.0
          %3206 = vmatprep.subr.mxu0 0.0
          %3207 = vmatpush1.msra.mxu0 0.0
          %3208 = vmatprep.subr.mxu0 0.0
          %3209 = vmatpush1.msra.mxu0 0.0
          %3210 = vmatprep.subr.mxu0 %v2581
          %3211 = vmatpush1.msra.mxu0 %v2580
          %3212 = vmatprep.subr.mxu0 %v2579
          %3213 = vmatpush1.msra.mxu0 %v2578
          %3214 = vmatprep.subr.mxu0 %v2577
          %3215 = vmatpush1.msra.mxu0 %v2576
          %3216 = vmatprep.subr.mxu0 %v2575
          %3217 = vmatpush1.msra.mxu0 %v2574
          %3218 = vmatprep.subr.mxu0 %v2573
          %3219 = vmatpush1.msra.mxu0 %v2572
          %3220 = vmatprep.subr.mxu0 %v2571
          %3221 = vmatpush1.msra.mxu0 %v2570
          %3222 = vmatprep.subr.mxu0 %v2569
          %3223 = vmatpush1.msra.mxu0 %v2568
          %3224 = vmatprep.subr.mxu0 %v2567
          %3225 = vmatpush1.msra.mxu0 %v2566
          %3226 = vmatprep.subr.mxu0 0.0
          %3227 = vmatpush2.msra.mxu0 0.0
          %3228 = vmatprep.subr.mxu0 0.0
          %3229 = vmatpush2.msra.mxu0 0.0
          %3230 = vmatprep.subr.mxu0 0.0
          %3231 = vmatpush2.msra.mxu0 0.0
          %3232 = vmatprep.subr.mxu0 0.0
          %3233 = vmatpush2.msra.mxu0 0.0
          %3234 = vmatprep.subr.mxu0 0.0
          %3235 = vmatpush2.msra.mxu0 0.0
          %3236 = vmatprep.subr.mxu0 0.0
          %3237 = vmatpush2.msra.mxu0 0.0
          %3238 = vmatprep.subr.mxu0 0.0
          %3239 = vmatpush2.msra.mxu0 0.0
          %3240 = vmatprep.subr.mxu0 0.0
          %3241 = vmatpush2.msra.mxu0 0.0
          %3242 = vmatprep.subr.mxu0 0.0
          %3243 = vmatpush2.msra.mxu0 0.0
          %3244 = vmatprep.subr.mxu0 0.0
          %3245 = vmatpush2.msra.mxu0 0.0
          %3246 = vmatprep.subr.mxu0 0.0
          %3247 = vmatpush2.msra.mxu0 0.0
          %3248 = vmatprep.subr.mxu0 0.0
          %3249 = vmatpush2.msra.mxu0 0.0
          %3250 = vmatprep.subr.mxu0 0.0
          %3251 = vmatpush2.msra.mxu0 0.0
          %3252 = vmatprep.subr.mxu0 0.0
          %3253 = vmatpush2.msra.mxu0 0.0
          %3254 = vmatprep.subr.mxu0 0.0
          %3255 = vmatpush2.msra.mxu0 0.0
          %3256 = vmatprep.subr.mxu0 0.0
          %3257 = vmatpush2.msra.mxu0 0.0
          %3258 = vmatprep.mubr.f32.mxu0 0.0
          %3259 = vmatmul.mubr.f32.gmra.mxu0 %v3186
          %v3260 = vpop.f32.mrf.mxu0
          %v3261 = vadd.f32 0.0, %v3260
          %v3262 = vpop.f32.mrf.mxu0
          %v3263 = vadd.f32 0.0, %v3262
          %3264 = vmatprep.mubr.f32.mxu0 0.0
          %3265 = vmatmul.mubr.f32.gmra.mxu0 %v3189
          %v3266 = vpop.f32.mrf.mxu0
          %v3267 = vadd.f32 0.0, %v3266
          %v3268 = vpop.f32.mrf.mxu0
          %v3269 = vadd.f32 0.0, %v3268
          %3270 = vmatprep.mubr.f32.mxu0 0.0
          %3271 = vmatmul.mubr.f32.gmra.mxu0 %v3192
          %v3272 = vpop.f32.mrf.mxu0
          %v3273 = vadd.f32 0.0, %v3272
          %v3274 = vpop.f32.mrf.mxu0
          %v3275 = vadd.f32 0.0, %v3274
          %3276 = vdwg.mxu0
          %3277 = vrot.lane.b32.xlu0 %v3261, 127
          %v3278 = vpop.permute.xlu0 %3277
          %3279 = vrot.lane.b32.xlu0 %v3267, 127
          %v3280 = vpop.permute.xlu0 %3279
          %3281 = vrot.lane.b32.xlu0 %v3273, 127
          %v3282 = vpop.permute.xlu0 %3281
          %3283 = vrot.lane.b32.xlu0 %v3263, 127
          %v3284 = vpop.permute.xlu0 %3283
          %3285 = vrot.lane.b32.xlu0 %v3269, 127
          %v3286 = vpop.permute.xlu0 %3285
          %3287 = vrot.lane.b32.xlu0 %v3275, 127
          %v3288 = vpop.permute.xlu0 %3287
          %v3289 = vsel %vm1278, %v3278, %v3284
          %v3290 = vsel %vm1278, %v3280, %v3286
          %v3291 = vsel %vm1278, %v3282, %v3288
          %v3292 = vsel %vm1278, %v3284, %v3278
          %v3293 = vsel %vm1278, %v3286, %v3280
          %v3294 = vsel %vm1278, %v3288, %v3282
          %v3295 = vmul.f32 %v1260, %v3289
          %v3296 = vmul.f32 %v1261, %v3292
          %v3297 = vmul.f32 %v1262, %v3290
          %v3298 = vmul.f32 %v1263, %v3293
          %v3299 = vmul.f32 %v1264, %v3291
          %v3300 = vmul.f32 %v1265, %v3294
          %v3301 = vadd.f32 %v3175, %v3295
          %v3302 = vadd.f32 %v3176, %v3296
          %v3303 = vadd.f32 %v3177, %v3297
          %v3304 = vadd.f32 %v3178, %v3298
          %v3305 = vadd.f32 %v3179, %v3299
          %v3306 = vadd.f32 %v3180, %v3300
          %s3307 = scalar_lea.vmem [#allocation3], 144
          %v3308 = vld [vmem:[%s3307] sm:$0xff]
          %v3309 = vld [vmem:[%s3307 + $0x8] sm:$0xff]
          %v3310 = vld [vmem:[%s3307 + $0x10] sm:$0xff]
          %v3312 = vsel %vm2091, %v3308, 0
          %v3315 = vsel %vm2091, %v3309, 0
          %v3318 = vsel %vm2091, %v3310, 0
          %3320 = vmatprep.subr.mxu0 0.0
          %3321 = vmatpush1.msra.mxu0 0.0
          %3322 = vmatprep.subr.mxu0 0.0
          %3323 = vmatpush1.msra.mxu0 0.0
          %3324 = vmatprep.subr.mxu0 0.0
          %3325 = vmatpush1.msra.mxu0 0.0
          %3326 = vmatprep.subr.mxu0 0.0
          %3327 = vmatpush1.msra.mxu0 0.0
          %3328 = vmatprep.subr.mxu0 0.0
          %3329 = vmatpush1.msra.mxu0 0.0
          %3330 = vmatprep.subr.mxu0 0.0
          %3331 = vmatpush1.msra.mxu0 0.0
          %3332 = vmatprep.subr.mxu0 0.0
          %3333 = vmatpush1.msra.mxu0 0.0
          %3334 = vmatprep.subr.mxu0 0.0
          %3335 = vmatpush1.msra.mxu0 0.0
          %3336 = vmatprep.subr.mxu0 %v2581
          %3337 = vmatpush1.msra.mxu0 %v2580
          %3338 = vmatprep.subr.mxu0 %v2579
          %3339 = vmatpush1.msra.mxu0 %v2578
          %3340 = vmatprep.subr.mxu0 %v2577
          %3341 = vmatpush1.msra.mxu0 %v2576
          %3342 = vmatprep.subr.mxu0 %v2575
          %3343 = vmatpush1.msra.mxu0 %v2574
          %3344 = vmatprep.subr.mxu0 %v2573
          %3345 = vmatpush1.msra.mxu0 %v2572
          %3346 = vmatprep.subr.mxu0 %v2571
          %3347 = vmatpush1.msra.mxu0 %v2570
          %3348 = vmatprep.subr.mxu0 %v2569
          %3349 = vmatpush1.msra.mxu0 %v2568
          %3350 = vmatprep.subr.mxu0 %v2567
          %3351 = vmatpush1.msra.mxu0 %v2566
          %3352 = vmatprep.subr.mxu0 0.0
          %3353 = vmatpush2.msra.mxu0 0.0
          %3354 = vmatprep.subr.mxu0 0.0
          %3355 = vmatpush2.msra.mxu0 0.0
          %3356 = vmatprep.subr.mxu0 0.0
          %3357 = vmatpush2.msra.mxu0 0.0
          %3358 = vmatprep.subr.mxu0 0.0
          %3359 = vmatpush2.msra.mxu0 0.0
          %3360 = vmatprep.subr.mxu0 0.0
          %3361 = vmatpush2.msra.mxu0 0.0
          %3362 = vmatprep.subr.mxu0 0.0
          %3363 = vmatpush2.msra.mxu0 0.0
          %3364 = vmatprep.subr.mxu0 0.0
          %3365 = vmatpush2.msra.mxu0 0.0
          %3366 = vmatprep.subr.mxu0 0.0
          %3367 = vmatpush2.msra.mxu0 0.0
          %3368 = vmatprep.subr.mxu0 0.0
          %3369 = vmatpush2.msra.mxu0 0.0
          %3370 = vmatprep.subr.mxu0 0.0
          %3371 = vmatpush2.msra.mxu0 0.0
          %3372 = vmatprep.subr.mxu0 0.0
          %3373 = vmatpush2.msra.mxu0 0.0
          %3374 = vmatprep.subr.mxu0 0.0
          %3375 = vmatpush2.msra.mxu0 0.0
          %3376 = vmatprep.subr.mxu0 0.0
          %3377 = vmatpush2.msra.mxu0 0.0
          %3378 = vmatprep.subr.mxu0 0.0
          %3379 = vmatpush2.msra.mxu0 0.0
          %3380 = vmatprep.subr.mxu0 0.0
          %3381 = vmatpush2.msra.mxu0 0.0
          %3382 = vmatprep.subr.mxu0 0.0
          %3383 = vmatpush2.msra.mxu0 0.0
          %3384 = vmatprep.mubr.f32.mxu0 0.0
          %3385 = vmatmul.mubr.f32.gmra.mxu0 %v3312
          %v3386 = vpop.f32.mrf.mxu0
          %v3387 = vadd.f32 0.0, %v3386
          %v3388 = vpop.f32.mrf.mxu0
          %v3389 = vadd.f32 0.0, %v3388
          %3390 = vmatprep.mubr.f32.mxu0 0.0
          %3391 = vmatmul.mubr.f32.gmra.mxu0 %v3315
          %v3392 = vpop.f32.mrf.mxu0
          %v3393 = vadd.f32 0.0, %v3392
          %v3394 = vpop.f32.mrf.mxu0
          %v3395 = vadd.f32 0.0, %v3394
          %3396 = vmatprep.mubr.f32.mxu0 0.0
          %3397 = vmatmul.mubr.f32.gmra.mxu0 %v3318
          %v3398 = vpop.f32.mrf.mxu0
          %v3399 = vadd.f32 0.0, %v3398
          %v3400 = vpop.f32.mrf.mxu0
          %v3401 = vadd.f32 0.0, %v3400
          %3402 = vdwg.mxu0
          %3403 = vrot.lane.b32.xlu0 %v3387, 113
          %v3404 = vpop.permute.xlu0 %3403
          %3405 = vrot.lane.b32.xlu0 %v3393, 113
          %v3406 = vpop.permute.xlu0 %3405
          %3407 = vrot.lane.b32.xlu0 %v3399, 113
          %v3408 = vpop.permute.xlu0 %3407
          %3409 = vrot.lane.b32.xlu0 %v3389, 113
          %v3410 = vpop.permute.xlu0 %3409
          %3411 = vrot.lane.b32.xlu0 %v3395, 113
          %v3412 = vpop.permute.xlu0 %3411
          %3413 = vrot.lane.b32.xlu0 %v3401, 113
          %v3414 = vpop.permute.xlu0 %3413
          %v3415 = vsel %vm1472, %v3404, %v3410
          %v3416 = vsel %vm1472, %v3406, %v3412
          %v3417 = vsel %vm1472, %v3408, %v3414
          %v3418 = vsel %vm1472, %v3410, %v3404
          %v3419 = vsel %vm1472, %v3412, %v3406
          %v3420 = vsel %vm1472, %v3414, %v3408
          %v3421 = vmul.f32 %v1454, %v3415
          %v3422 = vmul.f32 %v1455, %v3418
          %v3423 = vmul.f32 %v1456, %v3416
          %v3424 = vmul.f32 %v1457, %v3419
          %v3425 = vmul.f32 %v1458, %v3417
          %v3426 = vmul.f32 %v1459, %v3420
          %v3427 = vadd.f32 %v3301, %v3421
          %v3428 = vadd.f32 %v3302, %v3422
          %v3429 = vadd.f32 %v3303, %v3423
          %v3430 = vadd.f32 %v3304, %v3424
          %v3431 = vadd.f32 %v3305, %v3425
          %v3432 = vadd.f32 %v3306, %v3426
          %s3433 = scalar_lea.vmem [#allocation3], 168
          %v3434 = vld [vmem:[%s3433] sm:$0xff]
          %v3435 = vld [vmem:[%s3433 + $0x8] sm:$0xff]
          %v3436 = vld [vmem:[%s3433 + $0x10] sm:$0xff]
          %v3438 = vsel %vm2091, %v3434, 0
          %v3441 = vsel %vm2091, %v3435, 0
          %v3444 = vsel %vm2091, %v3436, 0
          %3446 = vmatprep.subr.mxu0 0.0
          %3447 = vmatpush1.msra.mxu0 0.0
          %3448 = vmatprep.subr.mxu0 0.0
          %3449 = vmatpush1.msra.mxu0 0.0
          %3450 = vmatprep.subr.mxu0 0.0
          %3451 = vmatpush1.msra.mxu0 0.0
          %3452 = vmatprep.subr.mxu0 0.0
          %3453 = vmatpush1.msra.mxu0 0.0
          %3454 = vmatprep.subr.mxu0 0.0
          %3455 = vmatpush1.msra.mxu0 0.0
          %3456 = vmatprep.subr.mxu0 0.0
          %3457 = vmatpush1.msra.mxu0 0.0
          %3458 = vmatprep.subr.mxu0 0.0
          %3459 = vmatpush1.msra.mxu0 0.0
          %3460 = vmatprep.subr.mxu0 0.0
          %3461 = vmatpush1.msra.mxu0 0.0
          %3462 = vmatprep.subr.mxu0 %v2581
          %3463 = vmatpush1.msra.mxu0 %v2580
          %3464 = vmatprep.subr.mxu0 %v2579
          %3465 = vmatpush1.msra.mxu0 %v2578
          %3466 = vmatprep.subr.mxu0 %v2577
          %3467 = vmatpush1.msra.mxu0 %v2576
          %3468 = vmatprep.subr.mxu0 %v2575
          %3469 = vmatpush1.msra.mxu0 %v2574
          %3470 = vmatprep.subr.mxu0 %v2573
          %3471 = vmatpush1.msra.mxu0 %v2572
          %3472 = vmatprep.subr.mxu0 %v2571
          %3473 = vmatpush1.msra.mxu0 %v2570
          %3474 = vmatprep.subr.mxu0 %v2569
          %3475 = vmatpush1.msra.mxu0 %v2568
          %3476 = vmatprep.subr.mxu0 %v2567
          %3477 = vmatpush1.msra.mxu0 %v2566
          %3478 = vmatprep.subr.mxu0 0.0
          %3479 = vmatpush2.msra.mxu0 0.0
          %3480 = vmatprep.subr.mxu0 0.0
          %3481 = vmatpush2.msra.mxu0 0.0
          %3482 = vmatprep.subr.mxu0 0.0
          %3483 = vmatpush2.msra.mxu0 0.0
          %3484 = vmatprep.subr.mxu0 0.0
          %3485 = vmatpush2.msra.mxu0 0.0
          %3486 = vmatprep.subr.mxu0 0.0
          %3487 = vmatpush2.msra.mxu0 0.0
          %3488 = vmatprep.subr.mxu0 0.0
          %3489 = vmatpush2.msra.mxu0 0.0
          %3490 = vmatprep.subr.mxu0 0.0
          %3491 = vmatpush2.msra.mxu0 0.0
          %3492 = vmatprep.subr.mxu0 0.0
          %3493 = vmatpush2.msra.mxu0 0.0
          %3494 = vmatprep.subr.mxu0 0.0
          %3495 = vmatpush2.msra.mxu0 0.0
          %3496 = vmatprep.subr.mxu0 0.0
          %3497 = vmatpush2.msra.mxu0 0.0
          %3498 = vmatprep.subr.mxu0 0.0
          %3499 = vmatpush2.msra.mxu0 0.0
          %3500 = vmatprep.subr.mxu0 0.0
          %3501 = vmatpush2.msra.mxu0 0.0
          %3502 = vmatprep.subr.mxu0 0.0
          %3503 = vmatpush2.msra.mxu0 0.0
          %3504 = vmatprep.subr.mxu0 0.0
          %3505 = vmatpush2.msra.mxu0 0.0
          %3506 = vmatprep.subr.mxu0 0.0
          %3507 = vmatpush2.msra.mxu0 0.0
          %3508 = vmatprep.subr.mxu0 0.0
          %3509 = vmatpush2.msra.mxu0 0.0
          %3510 = vmatprep.mubr.f32.mxu0 0.0
          %3511 = vmatmul.mubr.f32.gmra.mxu0 %v3438
          %v3512 = vpop.f32.mrf.mxu0
          %v3513 = vadd.f32 0.0, %v3512
          %v3514 = vpop.f32.mrf.mxu0
          %v3515 = vadd.f32 0.0, %v3514
          %3516 = vmatprep.mubr.f32.mxu0 0.0
          %3517 = vmatmul.mubr.f32.gmra.mxu0 %v3441
          %v3518 = vpop.f32.mrf.mxu0
          %v3519 = vadd.f32 0.0, %v3518
          %v3520 = vpop.f32.mrf.mxu0
          %v3521 = vadd.f32 0.0, %v3520
          %3522 = vmatprep.mubr.f32.mxu0 0.0
          %3523 = vmatmul.mubr.f32.gmra.mxu0 %v3444
          %v3524 = vpop.f32.mrf.mxu0
          %v3525 = vadd.f32 0.0, %v3524
          %v3526 = vpop.f32.mrf.mxu0
          %v3527 = vadd.f32 0.0, %v3526
          %3528 = vdwg.mxu0
          %3529 = vrot.lane.b32.xlu0 %v3513, 112
          %v3530 = vpop.permute.xlu0 %3529
          %3531 = vrot.lane.b32.xlu0 %v3519, 112
          %v3532 = vpop.permute.xlu0 %3531
          %3533 = vrot.lane.b32.xlu0 %v3525, 112
          %v3534 = vpop.permute.xlu0 %3533
          %3535 = vrot.lane.b32.xlu0 %v3515, 112
          %v3536 = vpop.permute.xlu0 %3535
          %3537 = vrot.lane.b32.xlu0 %v3521, 112
          %v3538 = vpop.permute.xlu0 %3537
          %3539 = vrot.lane.b32.xlu0 %v3527, 112
          %v3540 = vpop.permute.xlu0 %3539
          %v3541 = vsel %vm1666, %v3530, %v3536
          %v3542 = vsel %vm1666, %v3532, %v3538
          %v3543 = vsel %vm1666, %v3534, %v3540
          %v3544 = vsel %vm1666, %v3536, %v3530
          %v3545 = vsel %vm1666, %v3538, %v3532
          %v3546 = vsel %vm1666, %v3540, %v3534
          %v3547 = vmul.f32 %v1648, %v3541
          %v3548 = vmul.f32 %v1649, %v3544
          %v3549 = vmul.f32 %v1650, %v3542
          %v3550 = vmul.f32 %v1651, %v3545
          %v3551 = vmul.f32 %v1652, %v3543
          %v3552 = vmul.f32 %v1653, %v3546
          %v3553 = vadd.f32 %v3427, %v3547
          %v3554 = vadd.f32 %v3428, %v3548
          %v3555 = vadd.f32 %v3429, %v3549
          %v3556 = vadd.f32 %v3430, %v3550
          %v3557 = vadd.f32 %v3431, %v3551
          %v3558 = vadd.f32 %v3432, %v3552
          %s3559 = scalar_lea.vmem [#allocation3], 192
          %v3560 = vld [vmem:[%s3559] sm:$0xff]
          %v3561 = vld [vmem:[%s3559 + $0x8] sm:$0xff]
          %v3562 = vld [vmem:[%s3559 + $0x10] sm:$0xff]
          %v3564 = vsel %vm2091, %v3560, 0
          %v3567 = vsel %vm2091, %v3561, 0
          %v3570 = vsel %vm2091, %v3562, 0
          %3572 = vmatprep.subr.mxu0 0.0
          %3573 = vmatpush1.msra.mxu0 0.0
          %3574 = vmatprep.subr.mxu0 0.0
          %3575 = vmatpush1.msra.mxu0 0.0
          %3576 = vmatprep.subr.mxu0 0.0
          %3577 = vmatpush1.msra.mxu0 0.0
          %3578 = vmatprep.subr.mxu0 0.0
          %3579 = vmatpush1.msra.mxu0 0.0
          %3580 = vmatprep.subr.mxu0 0.0
          %3581 = vmatpush1.msra.mxu0 0.0
          %3582 = vmatprep.subr.mxu0 0.0
          %3583 = vmatpush1.msra.mxu0 0.0
          %3584 = vmatprep.subr.mxu0 0.0
          %3585 = vmatpush1.msra.mxu0 0.0
          %3586 = vmatprep.subr.mxu0 0.0
          %3587 = vmatpush1.msra.mxu0 0.0
          %3588 = vmatprep.subr.mxu0 %v2581
          %3589 = vmatpush1.msra.mxu0 %v2580
          %3590 = vmatprep.subr.mxu0 %v2579
          %3591 = vmatpush1.msra.mxu0 %v2578
          %3592 = vmatprep.subr.mxu0 %v2577
          %3593 = vmatpush1.msra.mxu0 %v2576
          %3594 = vmatprep.subr.mxu0 %v2575
          %3595 = vmatpush1.msra.mxu0 %v2574
          %3596 = vmatprep.subr.mxu0 %v2573
          %3597 = vmatpush1.msra.mxu0 %v2572
          %3598 = vmatprep.subr.mxu0 %v2571
          %3599 = vmatpush1.msra.mxu0 %v2570
          %3600 = vmatprep.subr.mxu0 %v2569
          %3601 = vmatpush1.msra.mxu0 %v2568
          %3602 = vmatprep.subr.mxu0 %v2567
          %3603 = vmatpush1.msra.mxu0 %v2566
          %3604 = vmatprep.subr.mxu0 0.0
          %3605 = vmatpush2.msra.mxu0 0.0
          %3606 = vmatprep.subr.mxu0 0.0
          %3607 = vmatpush2.msra.mxu0 0.0
          %3608 = vmatprep.subr.mxu0 0.0
          %3609 = vmatpush2.msra.mxu0 0.0
          %3610 = vmatprep.subr.mxu0 0.0
          %3611 = vmatpush2.msra.mxu0 0.0
          %3612 = vmatprep.subr.mxu0 0.0
          %3613 = vmatpush2.msra.mxu0 0.0
          %3614 = vmatprep.subr.mxu0 0.0
          %3615 = vmatpush2.msra.mxu0 0.0
          %3616 = vmatprep.subr.mxu0 0.0
          %3617 = vmatpush2.msra.mxu0 0.0
          %3618 = vmatprep.subr.mxu0 0.0
          %3619 = vmatpush2.msra.mxu0 0.0
          %3620 = vmatprep.subr.mxu0 0.0
          %3621 = vmatpush2.msra.mxu0 0.0
          %3622 = vmatprep.subr.mxu0 0.0
          %3623 = vmatpush2.msra.mxu0 0.0
          %3624 = vmatprep.subr.mxu0 0.0
          %3625 = vmatpush2.msra.mxu0 0.0
          %3626 = vmatprep.subr.mxu0 0.0
          %3627 = vmatpush2.msra.mxu0 0.0
          %3628 = vmatprep.subr.mxu0 0.0
          %3629 = vmatpush2.msra.mxu0 0.0
          %3630 = vmatprep.subr.mxu0 0.0
          %3631 = vmatpush2.msra.mxu0 0.0
          %3632 = vmatprep.subr.mxu0 0.0
          %3633 = vmatpush2.msra.mxu0 0.0
          %3634 = vmatprep.subr.mxu0 0.0
          %3635 = vmatpush2.msra.mxu0 0.0
          %3636 = vmatprep.mubr.f32.mxu0 0.0
          %3637 = vmatmul.mubr.f32.gmra.mxu0 %v3564
          %v3638 = vpop.f32.mrf.mxu0
          %v3639 = vadd.f32 0.0, %v3638
          %v3640 = vpop.f32.mrf.mxu0
          %v3641 = vadd.f32 0.0, %v3640
          %3642 = vmatprep.mubr.f32.mxu0 0.0
          %3643 = vmatmul.mubr.f32.gmra.mxu0 %v3567
          %v3644 = vpop.f32.mrf.mxu0
          %v3645 = vadd.f32 0.0, %v3644
          %v3646 = vpop.f32.mrf.mxu0
          %v3647 = vadd.f32 0.0, %v3646
          %3648 = vmatprep.mubr.f32.mxu0 0.0
          %3649 = vmatmul.mubr.f32.gmra.mxu0 %v3570
          %v3650 = vpop.f32.mrf.mxu0
          %v3651 = vadd.f32 0.0, %v3650
          %v3652 = vpop.f32.mrf.mxu0
          %v3653 = vadd.f32 0.0, %v3652
          %3654 = vdwg.mxu0
          %3655 = vrot.lane.b32.xlu0 %v3639, 111
          %v3656 = vpop.permute.xlu0 %3655
          %3657 = vrot.lane.b32.xlu0 %v3645, 111
          %v3658 = vpop.permute.xlu0 %3657
          %3659 = vrot.lane.b32.xlu0 %v3651, 111
          %v3660 = vpop.permute.xlu0 %3659
          %3661 = vrot.lane.b32.xlu0 %v3641, 111
          %v3662 = vpop.permute.xlu0 %3661
          %3663 = vrot.lane.b32.xlu0 %v3647, 111
          %v3664 = vpop.permute.xlu0 %3663
          %3665 = vrot.lane.b32.xlu0 %v3653, 111
          %v3666 = vpop.permute.xlu0 %3665
          %v3667 = vsel %vm1860, %v3656, %v3662
          %v3668 = vsel %vm1860, %v3658, %v3664
          %v3669 = vsel %vm1860, %v3660, %v3666
          %v3670 = vsel %vm1860, %v3662, %v3656
          %v3671 = vsel %vm1860, %v3664, %v3658
          %v3672 = vsel %vm1860, %v3666, %v3660
          %v3673 = vmul.f32 %v1842, %v3667
          %v3674 = vmul.f32 %v1843, %v3670
          %v3675 = vmul.f32 %v1844, %v3668
          %v3676 = vmul.f32 %v1845, %v3671
          %v3677 = vmul.f32 %v1846, %v3669
          %v3678 = vmul.f32 %v1847, %v3672
          %v3679 = vadd.f32 %v3553, %v3673
          %v3680 = vadd.f32 %v3554, %v3674
          %v3681 = vadd.f32 %v3555, %v3675
          %v3682 = vadd.f32 %v3556, %v3676
          %v3683 = vadd.f32 %v3557, %v3677
          %v3684 = vadd.f32 %v3558, %v3678
          %v3685 = vld [vmem:[%s323] sm:$0xff]
          %v3686 = vld [vmem:[%s323 + $0x8] sm:$0xff]
          %v3687 = vld [vmem:[%s323 + $0x10] sm:$0xff]
          %v3688 = vld [vmem:[%s323 + $0x18] sm:$0xff]
          %v3689 = vld [vmem:[%s323 + $0x20] sm:$0xff]
          %v3690 = vld [vmem:[%s323 + $0x28] sm:$0xff]
          %v3691 = vadd.f32 %v3685, %v3679
          %v3692 = vadd.f32 %v3686, %v3680
          %v3693 = vadd.f32 %v3687, %v3681
          %v3694 = vadd.f32 %v3688, %v3682
          %v3695 = vadd.f32 %v3689, %v3683
          %v3696 = vadd.f32 %v3690, %v3684
          %v3697 = vld [vmem:[%s5] sm:$0xff]
          %v3698 = vld [vmem:[%s5 + $0x8] sm:$0xff]
          %v3699 = vld [vmem:[%s5 + $0x10] sm:$0xff]
          %v3700 = vld [vmem:[%s6] sm:$0xff]
          %v3701 = vld [vmem:[%s6 + $0x8] sm:$0xff]
          %v3702 = vld [vmem:[%s6 + $0x10] sm:$0xff]
          %v3703 = vadd.f32 %v3691, %v3692
          %3704 = vadd.xlane.f32.xlu0 %v3703
          %v3705 = vpop.xlane.xlu0 %3704
          %v3706 = vadd.f32 %v3693, %v3694
          %3707 = vadd.xlane.f32.xlu0 %v3706
          %v3708 = vpop.xlane.xlu0 %3707
          %v3709 = vadd.f32 %v3695, %v3696
          %3710 = vadd.xlane.f32.xlu0 %v3709
          %v3711 = vpop.xlane.xlu0 %3710
          %v3713 = vsel %vm434, %v3697, 0
          %v3716 = vsel %vm434, %v3698, 0
          %v3719 = vsel %vm434, %v3699, 0
          %3721 = vmatprep.subr.mxu0 0.0
          %3722 = vmatpush1.msra.mxu0 0.0
          %3723 = vmatprep.subr.mxu0 0.0
          %3724 = vmatpush1.msra.mxu0 0.0
          %3725 = vmatprep.subr.mxu0 0.0
          %3726 = vmatpush1.msra.mxu0 0.0
          %3727 = vmatprep.subr.mxu0 0.0
          %3728 = vmatpush1.msra.mxu0 0.0
          %3729 = vmatprep.subr.mxu0 0.0
          %3730 = vmatpush1.msra.mxu0 0.0
          %3731 = vmatprep.subr.mxu0 0.0
          %3732 = vmatpush1.msra.mxu0 0.0
          %3733 = vmatprep.subr.mxu0 0.0
          %3734 = vmatpush1.msra.mxu0 0.0
          %3735 = vmatprep.subr.mxu0 0.0
          %3736 = vmatpush1.msra.mxu0 0.0
          %3737 = vmatprep.subr.mxu0 0.0
          %3738 = vmatpush1.msra.mxu0 0.0
          %3739 = vmatprep.subr.mxu0 0.0
          %3740 = vmatpush1.msra.mxu0 0.0
          %3741 = vmatprep.subr.mxu0 0.0
          %3742 = vmatpush1.msra.mxu0 0.0
          %3743 = vmatprep.subr.mxu0 0.0
          %3744 = vmatpush1.msra.mxu0 0.0
          %3745 = vmatprep.subr.mxu0 0.0
          %3746 = vmatpush1.msra.mxu0 0.0
          %3747 = vmatprep.subr.mxu0 0.0
          %3748 = vmatpush1.msra.mxu0 %v3711
          %3749 = vmatprep.subr.mxu0 0.0
          %3750 = vmatpush1.msra.mxu0 %v3708
          %3751 = vmatprep.subr.mxu0 0.0
          %3752 = vmatpush1.msra.mxu0 %v3705
          %3753 = vmatprep.subr.mxu0 0.0
          %3754 = vmatpush2.msra.mxu0 0.0
          %3755 = vmatprep.subr.mxu0 0.0
          %3756 = vmatpush2.msra.mxu0 0.0
          %3757 = vmatprep.subr.mxu0 0.0
          %3758 = vmatpush2.msra.mxu0 0.0
          %3759 = vmatprep.subr.mxu0 0.0
          %3760 = vmatpush2.msra.mxu0 0.0
          %3761 = vmatprep.subr.mxu0 0.0
          %3762 = vmatpush2.msra.mxu0 0.0
          %3763 = vmatprep.subr.mxu0 0.0
          %3764 = vmatpush2.msra.mxu0 0.0
          %3765 = vmatprep.subr.mxu0 0.0
          %3766 = vmatpush2.msra.mxu0 0.0
          %3767 = vmatprep.subr.mxu0 0.0
          %3768 = vmatpush2.msra.mxu0 0.0
          %3769 = vmatprep.subr.mxu0 0.0
          %3770 = vmatpush2.msra.mxu0 0.0
          %3771 = vmatprep.subr.mxu0 0.0
          %3772 = vmatpush2.msra.mxu0 0.0
          %3773 = vmatprep.subr.mxu0 0.0
          %3774 = vmatpush2.msra.mxu0 0.0
          %3775 = vmatprep.subr.mxu0 0.0
          %3776 = vmatpush2.msra.mxu0 0.0
          %3777 = vmatprep.subr.mxu0 0.0
          %3778 = vmatpush2.msra.mxu0 0.0
          %3779 = vmatprep.subr.mxu0 0.0
          %3780 = vmatpush2.msra.mxu0 0.0
          %3781 = vmatprep.subr.mxu0 0.0
          %3782 = vmatpush2.msra.mxu0 0.0
          %3783 = vmatprep.subr.mxu0 0.0
          %3784 = vmatpush2.msra.mxu0 0.0
          %3785 = vmatprep.mubr.f32.mxu0 0.0
          %3786 = vmatmul.mubr.f32.gmra.mxu0 %v3713
          %v3787 = vpop.f32.mrf.mxu0
          %v3788 = vadd.f32 0.0, %v3787
          %v3789 = vpop.f32.mrf.mxu0
          %3790 = vmatprep.mubr.f32.mxu0 0.0
          %3791 = vmatmul.mubr.f32.gmra.mxu0 %v3716
          %v3792 = vpop.f32.mrf.mxu0
          %v3793 = vadd.f32 0.0, %v3792
          %v3794 = vpop.f32.mrf.mxu0
          %3795 = vmatprep.mubr.f32.mxu0 0.0
          %3796 = vmatmul.mubr.f32.gmra.mxu0 %v3719
          %v3797 = vpop.f32.mrf.mxu0
          %v3798 = vadd.f32 0.0, %v3797
          %v3799 = vpop.f32.mrf.mxu0
          %3800 = vdwg.mxu0
          %v3801 = vmul.f32 %v3691, %v3691
          %v3802 = vmul.f32 %v3692, %v3692
          %v3803 = vmul.f32 %v3693, %v3693
          %v3804 = vmul.f32 %v3694, %v3694
          %v3805 = vmul.f32 %v3695, %v3695
          %v3806 = vmul.f32 %v3696, %v3696
          %v3807 = vadd.f32 %v3801, %v3802
          %3808 = vadd.xlane.f32.xlu0 %v3807
          %v3809 = vpop.xlane.xlu0 %3808
          %v3810 = vadd.f32 %v3803, %v3804
          %3811 = vadd.xlane.f32.xlu0 %v3810
          %v3812 = vpop.xlane.xlu0 %3811
          %v3813 = vadd.f32 %v3805, %v3806
          %3814 = vadd.xlane.f32.xlu0 %v3813
          %v3815 = vpop.xlane.xlu0 %3814
          %3816 = vmatprep.subr.mxu0 0.0
          %3817 = vmatpush1.msra.mxu0 0.0
          %3818 = vmatprep.subr.mxu0 0.0
          %3819 = vmatpush1.msra.mxu0 0.0
          %3820 = vmatprep.subr.mxu0 0.0
          %3821 = vmatpush1.msra.mxu0 0.0
          %3822 = vmatprep.subr.mxu0 0.0
          %3823 = vmatpush1.msra.mxu0 0.0
          %3824 = vmatprep.subr.mxu0 0.0
          %3825 = vmatpush1.msra.mxu0 0.0
          %3826 = vmatprep.subr.mxu0 0.0
          %3827 = vmatpush1.msra.mxu0 0.0
          %3828 = vmatprep.subr.mxu0 0.0
          %3829 = vmatpush1.msra.mxu0 0.0
          %3830 = vmatprep.subr.mxu0 0.0
          %3831 = vmatpush1.msra.mxu0 0.0
          %3832 = vmatprep.subr.mxu0 0.0
          %3833 = vmatpush1.msra.mxu0 0.0
          %3834 = vmatprep.subr.mxu0 0.0
          %3835 = vmatpush1.msra.mxu0 0.0
          %3836 = vmatprep.subr.mxu0 0.0
          %3837 = vmatpush1.msra.mxu0 0.0
          %3838 = vmatprep.subr.mxu0 0.0
          %3839 = vmatpush1.msra.mxu0 0.0
          %3840 = vmatprep.subr.mxu0 0.0
          %3841 = vmatpush1.msra.mxu0 0.0
          %3842 = vmatprep.subr.mxu0 0.0
          %3843 = vmatpush1.msra.mxu0 %v3815
          %3844 = vmatprep.subr.mxu0 0.0
          %3845 = vmatpush1.msra.mxu0 %v3812
          %3846 = vmatprep.subr.mxu0 0.0
          %3847 = vmatpush1.msra.mxu0 %v3809
          %3848 = vmatprep.subr.mxu0 0.0
          %3849 = vmatpush2.msra.mxu0 0.0
          %3850 = vmatprep.subr.mxu0 0.0
          %3851 = vmatpush2.msra.mxu0 0.0
          %3852 = vmatprep.subr.mxu0 0.0
          %3853 = vmatpush2.msra.mxu0 0.0
          %3854 = vmatprep.subr.mxu0 0.0
          %3855 = vmatpush2.msra.mxu0 0.0
          %3856 = vmatprep.subr.mxu0 0.0
          %3857 = vmatpush2.msra.mxu0 0.0
          %3858 = vmatprep.subr.mxu0 0.0
          %3859 = vmatpush2.msra.mxu0 0.0
          %3860 = vmatprep.subr.mxu0 0.0
          %3861 = vmatpush2.msra.mxu0 0.0
          %3862 = vmatprep.subr.mxu0 0.0
          %3863 = vmatpush2.msra.mxu0 0.0
          %3864 = vmatprep.subr.mxu0 0.0
          %3865 = vmatpush2.msra.mxu0 0.0
          %3866 = vmatprep.subr.mxu0 0.0
          %3867 = vmatpush2.msra.mxu0 0.0
          %3868 = vmatprep.subr.mxu0 0.0
          %3869 = vmatpush2.msra.mxu0 0.0
          %3870 = vmatprep.subr.mxu0 0.0
          %3871 = vmatpush2.msra.mxu0 0.0
          %3872 = vmatprep.subr.mxu0 0.0
          %3873 = vmatpush2.msra.mxu0 0.0
          %3874 = vmatprep.subr.mxu0 0.0
          %3875 = vmatpush2.msra.mxu0 0.0
          %3876 = vmatprep.subr.mxu0 0.0
          %3877 = vmatpush2.msra.mxu0 0.0
          %3878 = vmatprep.subr.mxu0 0.0
          %3879 = vmatpush2.msra.mxu0 0.0
          %3880 = vmatprep.mubr.f32.mxu0 0.0
          %3881 = vmatmul.mubr.f32.gmra.mxu0 %v3713
          %v3882 = vpop.f32.mrf.mxu0
          %v3883 = vadd.f32 0.0, %v3882
          %v3884 = vpop.f32.mrf.mxu0
          %3885 = vmatprep.mubr.f32.mxu0 0.0
          %3886 = vmatmul.mubr.f32.gmra.mxu0 %v3716
          %v3887 = vpop.f32.mrf.mxu0
          %v3888 = vadd.f32 0.0, %v3887
          %v3889 = vpop.f32.mrf.mxu0
          %3890 = vmatprep.mubr.f32.mxu0 0.0
          %3891 = vmatmul.mubr.f32.gmra.mxu0 %v3719
          %v3892 = vpop.f32.mrf.mxu0
          %v3893 = vadd.f32 0.0, %v3892
          %v3894 = vpop.f32.mrf.mxu0
          %3895 = vdwg.mxu0
          %v3896 = vmul.f32 %v3788, %v3788
          %v3897 = vmul.f32 %v3793, %v3793
          %v3898 = vmul.f32 %v3798, %v3798
          %v3899 = vsub.f32 %v3883, %v3896
          %v3900 = vsub.f32 %v3888, %v3897
          %v3901 = vsub.f32 %v3893, %v3898
          %v3902 = vmax.f32 %v3899, 0.0
          %v3903 = vmax.f32 %v3900, 0.0
          %v3904 = vmax.f32 %v3901, 0.0
          %3906 = vset.pattern.permute.xlu0 0
          %3907 = vperm.xlu0 %3906, %v3788
          %v3908 = vpop.permute.xlu0 %3907
          %3911 = vset.pattern.permute.xlu0 0
          %3912 = vperm.xlu0 %3911, %v3793
          %v3913 = vpop.permute.xlu0 %3912
          %3916 = vset.pattern.permute.xlu0 0
          %3917 = vperm.xlu0 %3916, %v3798
          %v3918 = vpop.permute.xlu0 %3917
          %v3920 = vsub.f32 %v3691, %v3908
          %v3921 = vsub.f32 %v3692, %v3908
          %v3922 = vsub.f32 %v3693, %v3913
          %v3923 = vsub.f32 %v3694, %v3913
          %v3924 = vsub.f32 %v3695, %v3918
          %v3925 = vsub.f32 %v3696, %v3918
          %v3926 = vadd.f32 %v3902, 1e-05
          %v3927 = vadd.f32 %v3903, 1e-05
          %v3928 = vadd.f32 %v3904, 1e-05
          %v3929 = vrsqrt.pop %v3926
          %v3930 = vrsqrt.pop %v3927
          %v3931 = vrsqrt.pop %v3928
          %3935 = vrot.lane.b32.xlu0 %v3700, 126
          %v3936 = vpop.permute.xlu0 %3935
          %3937 = vrot.lane.b32.xlu0 %v3701, 126
          %v3938 = vpop.permute.xlu0 %3937
          %3939 = vrot.lane.b32.xlu0 %v3702, 126
          %v3940 = vpop.permute.xlu0 %3939
          %v3944 = vmul.f32 %v3929, %v3936
          %v3945 = vmul.f32 %v3930, %v3938
          %v3946 = vmul.f32 %v3931, %v3940
          %3948 = vset.pattern.permute.xlu0 0
          %3949 = vperm.xlu0 %3948, %v3944
          %v3950 = vpop.permute.xlu0 %3949
          %3953 = vset.pattern.permute.xlu0 0
          %3954 = vperm.xlu0 %3953, %v3945
          %v3955 = vpop.permute.xlu0 %3954
          %3958 = vset.pattern.permute.xlu0 0
          %3959 = vperm.xlu0 %3958, %v3946
          %v3960 = vpop.permute.xlu0 %3959
          %v3962 = vmul.f32 %v3920, %v3950
          %v3963 = vmul.f32 %v3921, %v3950
          %v3964 = vmul.f32 %v3922, %v3955
          %v3965 = vmul.f32 %v3923, %v3955
          %v3966 = vmul.f32 %v3924, %v3960
          %v3967 = vmul.f32 %v3925, %v3960
          %3968 = vset.pattern.permute.xlu0 3
          %3969 = vperm.xlu0 %3968, %v3700
          %v3970 = vpop.permute.xlu0 %3969
          %3972 = vset.pattern.permute.xlu0 3
          %3973 = vperm.xlu0 %3972, %v3701
          %v3974 = vpop.permute.xlu0 %3973
          %3976 = vset.pattern.permute.xlu0 3
          %3977 = vperm.xlu0 %3976, %v3702
          %v3978 = vpop.permute.xlu0 %3977
          %v3980 = vadd.f32 %v3962, %v3970
          %v3981 = vadd.f32 %v3963, %v3970
          %v3982 = vadd.f32 %v3964, %v3974
          %v3983 = vadd.f32 %v3965, %v3974
          %v3984 = vadd.f32 %v3966, %v3978
          %v3985 = vadd.f32 %v3967, %v3978
          %v3986 = vadd.f32 %v346, %v3980
          %v3987 = vadd.f32 %v347, %v3981
          %v3988 = vadd.f32 %v348, %v3982
          %v3989 = vadd.f32 %v349, %v3983
          %v3990 = vadd.f32 %v350, %v3984
          %v3991 = vadd.f32 %v351, %v3985
          %v3992 = vmax.f32 %v3986, 0.0
          %v3993 = vmax.f32 %v3987, 0.0
          %v3994 = vmax.f32 %v3988, 0.0
          %v3995 = vmax.f32 %v3989, 0.0
          %v3996 = vmax.f32 %v3990, 0.0
          %v3997 = vmax.f32 %v3991, 0.0
          %v3998 = vadd.f32 %v3992, %v3993
          %3999 = vadd.xlane.f32.xlu0 %v3998
          %v4000 = vpop.xlane.xlu0 %3999
          %v4001 = vadd.f32 %v3994, %v3995
          %4002 = vadd.xlane.f32.xlu0 %v4001
          %v4003 = vpop.xlane.xlu0 %4002
          %v4004 = vadd.f32 %v3996, %v3997
          %4005 = vadd.xlane.f32.xlu0 %v4004
          %v4006 = vpop.xlane.xlu0 %4005
          %4007 = vmatprep.subr.mxu0 0.0
          %4008 = vmatpush1.msra.mxu0 0.0
          %4009 = vmatprep.subr.mxu0 0.0
          %4010 = vmatpush1.msra.mxu0 0.0
          %4011 = vmatprep.subr.mxu0 0.0
          %4012 = vmatpush1.msra.mxu0 0.0
          %4013 = vmatprep.subr.mxu0 0.0
          %4014 = vmatpush1.msra.mxu0 0.0
          %4015 = vmatprep.subr.mxu0 0.0
          %4016 = vmatpush1.msra.mxu0 0.0
          %4017 = vmatprep.subr.mxu0 0.0
          %4018 = vmatpush1.msra.mxu0 0.0
          %4019 = vmatprep.subr.mxu0 0.0
          %4020 = vmatpush1.msra.mxu0 0.0
          %4021 = vmatprep.subr.mxu0 0.0
          %4022 = vmatpush1.msra.mxu0 0.0
          %4023 = vmatprep.subr.mxu0 0.0
          %4024 = vmatpush1.msra.mxu0 0.0
          %4025 = vmatprep.subr.mxu0 0.0
          %4026 = vmatpush1.msra.mxu0 0.0
          %4027 = vmatprep.subr.mxu0 0.0
          %4028 = vmatpush1.msra.mxu0 0.0
          %4029 = vmatprep.subr.mxu0 0.0
          %4030 = vmatpush1.msra.mxu0 0.0
          %4031 = vmatprep.subr.mxu0 0.0
          %4032 = vmatpush1.msra.mxu0 0.0
          %4033 = vmatprep.subr.mxu0 0.0
          %4034 = vmatpush1.msra.mxu0 %v4006
          %4035 = vmatprep.subr.mxu0 0.0
          %4036 = vmatpush1.msra.mxu0 %v4003
          %4037 = vmatprep.subr.mxu0 0.0
          %4038 = vmatpush1.msra.mxu0 %v4000
          %4039 = vmatprep.subr.mxu0 0.0
          %4040 = vmatpush2.msra.mxu0 0.0
          %4041 = vmatprep.subr.mxu0 0.0
          %4042 = vmatpush2.msra.mxu0 0.0
          %4043 = vmatprep.subr.mxu0 0.0
          %4044 = vmatpush2.msra.mxu0 0.0
          %4045 = vmatprep.subr.mxu0 0.0
          %4046 = vmatpush2.msra.mxu0 0.0
          %4047 = vmatprep.subr.mxu0 0.0
          %4048 = vmatpush2.msra.mxu0 0.0
          %4049 = vmatprep.subr.mxu0 0.0
          %4050 = vmatpush2.msra.mxu0 0.0
          %4051 = vmatprep.subr.mxu0 0.0
          %4052 = vmatpush2.msra.mxu0 0.0
          %4053 = vmatprep.subr.mxu0 0.0
          %4054 = vmatpush2.msra.mxu0 0.0
          %4055 = vmatprep.subr.mxu0 0.0
          %4056 = vmatpush2.msra.mxu0 0.0
          %4057 = vmatprep.subr.mxu0 0.0
          %4058 = vmatpush2.msra.mxu0 0.0
          %4059 = vmatprep.subr.mxu0 0.0
          %4060 = vmatpush2.msra.mxu0 0.0
          %4061 = vmatprep.subr.mxu0 0.0
          %4062 = vmatpush2.msra.mxu0 0.0
          %4063 = vmatprep.subr.mxu0 0.0
          %4064 = vmatpush2.msra.mxu0 0.0
          %4065 = vmatprep.subr.mxu0 0.0
          %4066 = vmatpush2.msra.mxu0 0.0
          %4067 = vmatprep.subr.mxu0 0.0
          %4068 = vmatpush2.msra.mxu0 0.0
          %4069 = vmatprep.subr.mxu0 0.0
          %4070 = vmatpush2.msra.mxu0 0.0
          %4071 = vmatprep.mubr.f32.mxu0 0.0
          %4072 = vmatmul.mubr.f32.gmra.mxu0 %v3713
          %v4073 = vpop.f32.mrf.mxu0
          %v4074 = vadd.f32 0.0, %v4073
          %v4075 = vpop.f32.mrf.mxu0
          %4076 = vmatprep.mubr.f32.mxu0 0.0
          %4077 = vmatmul.mubr.f32.gmra.mxu0 %v3716
          %v4078 = vpop.f32.mrf.mxu0
          %v4079 = vadd.f32 0.0, %v4078
          %v4080 = vpop.f32.mrf.mxu0
          %4081 = vmatprep.mubr.f32.mxu0 0.0
          %4082 = vmatmul.mubr.f32.gmra.mxu0 %v3719
          %v4083 = vpop.f32.mrf.mxu0
          %v4084 = vadd.f32 0.0, %v4083
          %v4085 = vpop.f32.mrf.mxu0
          %4086 = vdwg.mxu0
          %v4087 = vmul.f32 %v3992, %v3992
          %v4088 = vmul.f32 %v3993, %v3993
          %v4089 = vmul.f32 %v3994, %v3994
          %v4090 = vmul.f32 %v3995, %v3995
          %v4091 = vmul.f32 %v3996, %v3996
          %v4092 = vmul.f32 %v3997, %v3997
          %v4093 = vadd.f32 %v4087, %v4088
          %4094 = vadd.xlane.f32.xlu0 %v4093
          %v4095 = vpop.xlane.xlu0 %4094
          %v4096 = vadd.f32 %v4089, %v4090
          %4097 = vadd.xlane.f32.xlu0 %v4096
          %v4098 = vpop.xlane.xlu0 %4097
          %v4099 = vadd.f32 %v4091, %v4092
          %4100 = vadd.xlane.f32.xlu0 %v4099
          %v4101 = vpop.xlane.xlu0 %4100
          %4102 = vmatprep.subr.mxu0 0.0
          %4103 = vmatpush1.msra.mxu0 0.0
          %4104 = vmatprep.subr.mxu0 0.0
          %4105 = vmatpush1.msra.mxu0 0.0
          %4106 = vmatprep.subr.mxu0 0.0
          %4107 = vmatpush1.msra.mxu0 0.0
          %4108 = vmatprep.subr.mxu0 0.0
          %4109 = vmatpush1.msra.mxu0 0.0
          %4110 = vmatprep.subr.mxu0 0.0
          %4111 = vmatpush1.msra.mxu0 0.0
          %4112 = vmatprep.subr.mxu0 0.0
          %4113 = vmatpush1.msra.mxu0 0.0
          %4114 = vmatprep.subr.mxu0 0.0
          %4115 = vmatpush1.msra.mxu0 0.0
          %4116 = vmatprep.subr.mxu0 0.0
          %4117 = vmatpush1.msra.mxu0 0.0
          %4118 = vmatprep.subr.mxu0 0.0
          %4119 = vmatpush1.msra.mxu0 0.0
          %4120 = vmatprep.subr.mxu0 0.0
          %4121 = vmatpush1.msra.mxu0 0.0
          %4122 = vmatprep.subr.mxu0 0.0
          %4123 = vmatpush1.msra.mxu0 0.0
          %4124 = vmatprep.subr.mxu0 0.0
          %4125 = vmatpush1.msra.mxu0 0.0
          %4126 = vmatprep.subr.mxu0 0.0
          %4127 = vmatpush1.msra.mxu0 0.0
          %4128 = vmatprep.subr.mxu0 0.0
          %4129 = vmatpush1.msra.mxu0 %v4101
          %4130 = vmatprep.subr.mxu0 0.0
          %4131 = vmatpush1.msra.mxu0 %v4098
          %4132 = vmatprep.subr.mxu0 0.0
          %4133 = vmatpush1.msra.mxu0 %v4095
          %4134 = vmatprep.subr.mxu0 0.0
          %4135 = vmatpush2.msra.mxu0 0.0
          %4136 = vmatprep.subr.mxu0 0.0
          %4137 = vmatpush2.msra.mxu0 0.0
          %4138 = vmatprep.subr.mxu0 0.0
          %4139 = vmatpush2.msra.mxu0 0.0
          %4140 = vmatprep.subr.mxu0 0.0
          %4141 = vmatpush2.msra.mxu0 0.0
          %4142 = vmatprep.subr.mxu0 0.0
          %4143 = vmatpush2.msra.mxu0 0.0
          %4144 = vmatprep.subr.mxu0 0.0
          %4145 = vmatpush2.msra.mxu0 0.0
          %4146 = vmatprep.subr.mxu0 0.0
          %4147 = vmatpush2.msra.mxu0 0.0
          %4148 = vmatprep.subr.mxu0 0.0
          %4149 = vmatpush2.msra.mxu0 0.0
          %4150 = vmatprep.subr.mxu0 0.0
          %4151 = vmatpush2.msra.mxu0 0.0
          %4152 = vmatprep.subr.mxu0 0.0
          %4153 = vmatpush2.msra.mxu0 0.0
          %4154 = vmatprep.subr.mxu0 0.0
          %4155 = vmatpush2.msra.mxu0 0.0
          %4156 = vmatprep.subr.mxu0 0.0
          %4157 = vmatpush2.msra.mxu0 0.0
          %4158 = vmatprep.subr.mxu0 0.0
          %4159 = vmatpush2.msra.mxu0 0.0
          %4160 = vmatprep.subr.mxu0 0.0
          %4161 = vmatpush2.msra.mxu0 0.0
          %4162 = vmatprep.subr.mxu0 0.0
          %4163 = vmatpush2.msra.mxu0 0.0
          %4164 = vmatprep.subr.mxu0 0.0
          %4165 = vmatpush2.msra.mxu0 0.0
          %4166 = vmatprep.mubr.f32.mxu0 0.0
          %4167 = vmatmul.mubr.f32.gmra.mxu0 %v3713
          %v4168 = vpop.f32.mrf.mxu0
          %v4169 = vadd.f32 0.0, %v4168
          %v4170 = vpop.f32.mrf.mxu0
          %4171 = vmatprep.mubr.f32.mxu0 0.0
          %4172 = vmatmul.mubr.f32.gmra.mxu0 %v3716
          %v4173 = vpop.f32.mrf.mxu0
          %v4174 = vadd.f32 0.0, %v4173
          %v4175 = vpop.f32.mrf.mxu0
          %4176 = vmatprep.mubr.f32.mxu0 0.0
          %4177 = vmatmul.mubr.f32.gmra.mxu0 %v3719
          %v4178 = vpop.f32.mrf.mxu0
          %v4179 = vadd.f32 0.0, %v4178
          %v4180 = vpop.f32.mrf.mxu0
          %4181 = vdwg.mxu0
          %v4182 = vmul.f32 %v4074, %v4074
          %v4183 = vmul.f32 %v4079, %v4079
          %v4184 = vmul.f32 %v4084, %v4084
          %v4185 = vsub.f32 %v4169, %v4182
          %v4186 = vsub.f32 %v4174, %v4183
          %v4187 = vsub.f32 %v4179, %v4184
          %v4188 = vmax.f32 %v4185, 0.0
          %v4189 = vmax.f32 %v4186, 0.0
          %v4190 = vmax.f32 %v4187, 0.0
          %4192 = vset.pattern.permute.xlu0 0
          %4193 = vperm.xlu0 %4192, %v4074
          %v4194 = vpop.permute.xlu0 %4193
          %4197 = vset.pattern.permute.xlu0 0
          %4198 = vperm.xlu0 %4197, %v4079
          %v4199 = vpop.permute.xlu0 %4198
          %4202 = vset.pattern.permute.xlu0 0
          %4203 = vperm.xlu0 %4202, %v4084
          %v4204 = vpop.permute.xlu0 %4203
          %v4206 = vsub.f32 %v3992, %v4194
          %v4207 = vsub.f32 %v3993, %v4194
          %v4208 = vsub.f32 %v3994, %v4199
          %v4209 = vsub.f32 %v3995, %v4199
          %v4210 = vsub.f32 %v3996, %v4204
          %v4211 = vsub.f32 %v3997, %v4204
          %v4212 = vadd.f32 %v4188, 1e-05
          %v4213 = vadd.f32 %v4189, 1e-05
          %v4214 = vadd.f32 %v4190, 1e-05
          %v4215 = vrsqrt.pop %v4212
          %v4216 = vrsqrt.pop %v4213
          %v4217 = vrsqrt.pop %v4214
          %4218 = vrot.lane.b32.xlu0 %v3700, 124
          %v4219 = vpop.permute.xlu0 %4218
          %4220 = vrot.lane.b32.xlu0 %v3701, 124
          %v4221 = vpop.permute.xlu0 %4220
          %4222 = vrot.lane.b32.xlu0 %v3702, 124
          %v4223 = vpop.permute.xlu0 %4222
          %v4227 = vmul.f32 %v4215, %v4219
          %v4228 = vmul.f32 %v4216, %v4221
          %v4229 = vmul.f32 %v4217, %v4223
          %4231 = vset.pattern.permute.xlu0 0
          %4232 = vperm.xlu0 %4231, %v4227
          %v4233 = vpop.permute.xlu0 %4232
          %4236 = vset.pattern.permute.xlu0 0
          %4237 = vperm.xlu0 %4236, %v4228
          %v4238 = vpop.permute.xlu0 %4237
          %4241 = vset.pattern.permute.xlu0 0
          %4242 = vperm.xlu0 %4241, %v4229
          %v4243 = vpop.permute.xlu0 %4242
          %v4245 = vmul.f32 %v4206, %v4233
          %v4246 = vmul.f32 %v4207, %v4233
          %v4247 = vmul.f32 %v4208, %v4238
          %v4248 = vmul.f32 %v4209, %v4238
          %v4249 = vmul.f32 %v4210, %v4243
          %v4250 = vmul.f32 %v4211, %v4243
          %4251 = vset.pattern.permute.xlu0 5
          %4252 = vperm.xlu0 %4251, %v3700
          %v4253 = vpop.permute.xlu0 %4252
          %4255 = vset.pattern.permute.xlu0 5
          %4256 = vperm.xlu0 %4255, %v3701
          %v4257 = vpop.permute.xlu0 %4256
          %4259 = vset.pattern.permute.xlu0 5
          %4260 = vperm.xlu0 %4259, %v3702
          %v4261 = vpop.permute.xlu0 %4260
          %v4263 = vadd.f32 %v4245, %v4253
          %v4264 = vadd.f32 %v4246, %v4253
          %v4265 = vadd.f32 %v4247, %v4257
          %v4266 = vadd.f32 %v4248, %v4257
          %v4267 = vadd.f32 %v4249, %v4261
          %v4268 = vadd.f32 %v4250, %v4261
          %4269 = vst [vmem:[#allocation2] sm:$0xff] %v4263
          %4270 = vst [vmem:[#allocation2 + $0x8] sm:$0xff] %v4264
          %4271 = vst [vmem:[#allocation2 + $0x10] sm:$0xff] %v4265
          %4272 = vst [vmem:[#allocation2 + $0x18] sm:$0xff] %v4266
          %4273 = vst [vmem:[#allocation2 + $0x20] sm:$0xff] %v4267
          %4274 = vst [vmem:[#allocation2 + $0x28] sm:$0xff] %v4268
          %s4275 = smul.u32 %s341, 6
          %s4276 = smul.addr %s4275, 8
          %s4277 = scalar_lea.vmem %s333, %s4276
          %4278 = vst [vmem:[%s4277] sm:$0xff] %v4263
          %4279 = vst [vmem:[%s4277 + $0x8] sm:$0xff] %v4264
          %4280 = vst [vmem:[%s4277 + $0x10] sm:$0xff] %v4265
          %4281 = vst [vmem:[%s4277 + $0x18] sm:$0xff] %v4266
          %4282 = vst [vmem:[%s4277 + $0x20] sm:$0xff] %v4267
          %4283 = vst [vmem:[%s4277 + $0x28] sm:$0xff] %v4268
        $region57: #{deq_fixed_point.1} parent=47 // loop_footer
          %s345 = sadd.s32 1, %s341
        $region58: #{deq_fixed_point.1} parent=47 // loop_footer_branch
          %340 = sbr.rel target = $region54
        $region59: #{deq_fixed_point.1} parent=47 // loop_exit
          _
        %v4284 = vld [vmem:[#allocation2] sm:$0xff]
        %v4285 = vld [vmem:[#allocation2 + $0x8] sm:$0xff]
        %v4286 = vld [vmem:[#allocation2 + $0x10] sm:$0xff]
        %v4287 = vld [vmem:[#allocation2 + $0x18] sm:$0xff]
        %v4288 = vld [vmem:[#allocation2 + $0x20] sm:$0xff]
        %v4289 = vld [vmem:[#allocation2 + $0x28] sm:$0xff]
        %v4290 = vld [vmem:[%s3] sm:$0xff]
        %v4291 = vld [vmem:[%s3 + $0x8] sm:$0xff]
        %v4292 = vld [vmem:[%s3 + $0x10] sm:$0xff]
        %v4293 = vld [vmem:[%s3 + $0x18] sm:$0xff]
        %v4294 = vld [vmem:[%s3 + $0x20] sm:$0xff]
        %v4295 = vld [vmem:[%s3 + $0x28] sm:$0xff]
        %4296 = vrot.lane.b32.xlu0 %v4284, 17
        %v4297 = vpop.permute.xlu0 %4296
        %4298 = vrot.lane.b32.xlu0 %v4286, 17
        %v4299 = vpop.permute.xlu0 %4298
        %4300 = vrot.lane.b32.xlu0 %v4288, 17
        %v4301 = vpop.permute.xlu0 %4300
        %4302 = vrot.lane.b32.xlu0 %v4285, 17
        %v4303 = vpop.permute.xlu0 %4302
        %4304 = vrot.lane.b32.xlu0 %v4287, 17
        %v4305 = vpop.permute.xlu0 %4304
        %4306 = vrot.lane.b32.xlu0 %v4289, 17
        %v4307 = vpop.permute.xlu0 %4306
        %v4308 = vlaneseq
        %v4309 = vand.u32 %v4308, 127
        %vm4310 = vcmp.lt.s32.totalorder %v4309, 17
        %v4311 = vsel %vm4310, %v4297, %v4303
        %v4312 = vsel %vm4310, %v4299, %v4305
        %v4313 = vsel %vm4310, %v4301, %v4307
        %v4314 = vsel %vm4310, %v4303, %v4297
        %v4315 = vsel %vm4310, %v4305, %v4299
        %v4316 = vsel %vm4310, %v4307, %v4301
        %v4317 = vmul.f32 %v4290, %v4314
        %v4318 = vmul.f32 %v4291, %v4311
        %v4319 = vmul.f32 %v4292, %v4315
        %v4320 = vmul.f32 %v4293, %v4312
        %v4321 = vmul.f32 %v4294, %v4316
        %v4322 = vmul.f32 %v4295, %v4313
        %v4323 = vld [vmem:[%s1] sm:$0xff]
        %v4324 = vld [vmem:[%s1 + $0x8] sm:$0xff]
        %v4325 = vld [vmem:[%s1 + $0x10] sm:$0xff]
        %v4326 = vld [vmem:[%s1 + $0x18] sm:$0xff]
        %v4327 = vld [vmem:[%s1 + $0x20] sm:$0xff]
        %v4328 = vld [vmem:[%s1 + $0x28] sm:$0xff]
        %v4329 = vld [vmem:[%s1 + $0x30] sm:$0xff]
        %v4330 = vld [vmem:[%s1 + $0x38] sm:$0xff]
        %s4331 = scalar_lea.vmem %s3, 48
        %v4332 = vld [vmem:[%s4331] sm:$0xff]
        %v4333 = vld [vmem:[%s4331 + $0x8] sm:$0xff]
        %v4334 = vld [vmem:[%s4331 + $0x10] sm:$0xff]
        %v4335 = vld [vmem:[%s4331 + $0x18] sm:$0xff]
        %v4336 = vld [vmem:[%s4331 + $0x20] sm:$0xff]
        %v4337 = vld [vmem:[%s4331 + $0x28] sm:$0xff]
        %4338 = vrot.lane.b32.xlu0 %v4284, 16
        %v4339 = vpop.permute.xlu0 %4338
        %4340 = vrot.lane.b32.xlu0 %v4286, 16
        %v4341 = vpop.permute.xlu0 %4340
        %4342 = vrot.lane.b32.xlu0 %v4288, 16
        %v4343 = vpop.permute.xlu0 %4342
        %4344 = vrot.lane.b32.xlu0 %v4285, 16
        %v4345 = vpop.permute.xlu0 %4344
        %4346 = vrot.lane.b32.xlu0 %v4287, 16
        %v4347 = vpop.permute.xlu0 %4346
        %4348 = vrot.lane.b32.xlu0 %v4289, 16
        %v4349 = vpop.permute.xlu0 %4348
        %vm4350 = vcmp.lt.s32.totalorder %v4309, 16
        %v4351 = vsel %vm4350, %v4339, %v4345
        %v4352 = vsel %vm4350, %v4341, %v4347
        %v4353 = vsel %vm4350, %v4343, %v4349
        %v4354 = vsel %vm4350, %v4345, %v4339
        %v4355 = vsel %vm4350, %v4347, %v4341
        %v4356 = vsel %vm4350, %v4349, %v4343
        %v4357 = vmul.f32 %v4332, %v4354
        %v4358 = vmul.f32 %v4333, %v4351
        %v4359 = vmul.f32 %v4334, %v4355
        %v4360 = vmul.f32 %v4335, %v4352
        %v4361 = vmul.f32 %v4336, %v4356
        %v4362 = vmul.f32 %v4337, %v4353
        %s4363 = scalar_lea.vmem %s1, 64
        %v4364 = vld [vmem:[%s4363] sm:$0xff]
        %v4365 = vld [vmem:[%s4363 + $0x8] sm:$0xff]
        %v4366 = vld [vmem:[%s4363 + $0x10] sm:$0xff]
        %v4367 = vld [vmem:[%s4363 + $0x18] sm:$0xff]
        %v4368 = vld [vmem:[%s4363 + $0x20] sm:$0xff]
        %v4369 = vld [vmem:[%s4363 + $0x28] sm:$0xff]
        %v4370 = vld [vmem:[%s4363 + $0x30] sm:$0xff]
        %v4371 = vld [vmem:[%s4363 + $0x38] sm:$0xff]
        %vm4372 = vcmask 195584
        %v4374 = vsel %vm4372, %v4364, 0
        %v4377 = vsel %vm4372, %v4365, 0
        %v4380 = vsel %vm4372, %v4366, 0
        %v4383 = vsel %vm4372, %v4367, 0
        %v4386 = vsel %vm4372, %v4368, 0
        %v4389 = vsel %vm4372, %v4369, 0
        %v4392 = vsel %vm4372, %v4370, 0
        %v4395 = vsel %vm4372, %v4371, 0
        %4397 = vmatprep.subr.mxu0 0.0
        %4398 = vmatpush1.msra.mxu0 0.0
        %4399 = vmatprep.subr.mxu0 0.0
        %4400 = vmatpush1.msra.mxu0 0.0
        %4401 = vmatprep.subr.mxu0 0.0
        %4402 = vmatpush1.msra.mxu0 0.0
        %4403 = vmatprep.subr.mxu0 0.0
        %4404 = vmatpush1.msra.mxu0 0.0
        %4405 = vmatprep.subr.mxu0 0.0
        %4406 = vmatpush1.msra.mxu0 0.0
        %4407 = vmatprep.subr.mxu0 0.0
        %4408 = vmatpush1.msra.mxu0 0.0
        %4409 = vmatprep.subr.mxu0 0.0
        %4410 = vmatpush1.msra.mxu0 0.0
        %4411 = vmatprep.subr.mxu0 0.0
        %4412 = vmatpush1.msra.mxu0 0.0
        %4413 = vmatprep.subr.mxu0 0.0
        %4414 = vmatpush1.msra.mxu0 0.0
        %4415 = vmatprep.subr.mxu0 0.0
        %4416 = vmatpush1.msra.mxu0 0.0
        %4417 = vmatprep.subr.mxu0 0.0
        %4418 = vmatpush1.msra.mxu0 0.0
        %4419 = vmatprep.subr.mxu0 0.0
        %4420 = vmatpush1.msra.mxu0 0.0
        %4421 = vmatprep.subr.mxu0 0.0
        %4422 = vmatpush1.msra.mxu0 0.0
        %4423 = vmatprep.subr.mxu0 %v4362
        %4424 = vmatpush1.msra.mxu0 %v4361
        %4425 = vmatprep.subr.mxu0 %v4360
        %4426 = vmatpush1.msra.mxu0 %v4359
        %4427 = vmatprep.subr.mxu0 %v4358
        %4428 = vmatpush1.msra.mxu0 %v4357
        %4429 = vmatprep.subr.mxu0 0.0
        %4430 = vmatpush2.msra.mxu0 0.0
        %4431 = vmatprep.subr.mxu0 0.0
        %4432 = vmatpush2.msra.mxu0 0.0
        %4433 = vmatprep.subr.mxu0 0.0
        %4434 = vmatpush2.msra.mxu0 0.0
        %4435 = vmatprep.subr.mxu0 0.0
        %4436 = vmatpush2.msra.mxu0 0.0
        %4437 = vmatprep.subr.mxu0 0.0
        %4438 = vmatpush2.msra.mxu0 0.0
        %4439 = vmatprep.subr.mxu0 0.0
        %4440 = vmatpush2.msra.mxu0 0.0
        %4441 = vmatprep.subr.mxu0 0.0
        %4442 = vmatpush2.msra.mxu0 0.0
        %4443 = vmatprep.subr.mxu0 0.0
        %4444 = vmatpush2.msra.mxu0 0.0
        %4445 = vmatprep.subr.mxu0 0.0
        %4446 = vmatpush2.msra.mxu0 0.0
        %4447 = vmatprep.subr.mxu0 0.0
        %4448 = vmatpush2.msra.mxu0 0.0
        %4449 = vmatprep.subr.mxu0 0.0
        %4450 = vmatpush2.msra.mxu0 0.0
        %4451 = vmatprep.subr.mxu0 0.0
        %4452 = vmatpush2.msra.mxu0 0.0
        %4453 = vmatprep.subr.mxu0 0.0
        %4454 = vmatpush2.msra.mxu0 0.0
        %4455 = vmatprep.subr.mxu0 0.0
        %4456 = vmatpush2.msra.mxu0 0.0
        %4457 = vmatprep.subr.mxu0 0.0
        %4458 = vmatpush2.msra.mxu0 0.0
        %4459 = vmatprep.subr.mxu0 0.0
        %4460 = vmatpush2.msra.mxu0 0.0
        %4461 = vmatprep.mubr.f32.mxu0 0.0
        %4462 = vmatmul.mubr.f32.gmra.mxu0 %v4374
        %v4463 = vpop.f32.mrf.mxu0
        %v4464 = vadd.f32 0.0, %v4463
        %v4465 = vpop.f32.mrf.mxu0
        %v4466 = vadd.f32 0.0, %v4465
        %4467 = vmatprep.mubr.f32.mxu0 0.0
        %4468 = vmatmul.mubr.f32.gmra.mxu0 %v4377
        %v4469 = vpop.f32.mrf.mxu0
        %v4470 = vadd.f32 0.0, %v4469
        %v4471 = vpop.f32.mrf.mxu0
        %v4472 = vadd.f32 0.0, %v4471
        %4473 = vmatprep.mubr.f32.mxu0 0.0
        %4474 = vmatmul.mubr.f32.gmra.mxu0 %v4380
        %v4475 = vpop.f32.mrf.mxu0
        %v4476 = vadd.f32 0.0, %v4475
        %v4477 = vpop.f32.mrf.mxu0
        %v4478 = vadd.f32 0.0, %v4477
        %4479 = vmatprep.mubr.f32.mxu0 0.0
        %4480 = vmatmul.mubr.f32.gmra.mxu0 %v4383
        %v4481 = vpop.f32.mrf.mxu0
        %v4482 = vadd.f32 0.0, %v4481
        %v4483 = vpop.f32.mrf.mxu0
        %v4484 = vadd.f32 0.0, %v4483
        %4485 = vmatprep.mubr.f32.mxu0 0.0
        %4486 = vmatmul.mubr.f32.gmra.mxu0 %v4386
        %v4487 = vpop.f32.mrf.mxu0
        %v4488 = vadd.f32 0.0, %v4487
        %v4489 = vpop.f32.mrf.mxu0
        %v4490 = vadd.f32 0.0, %v4489
        %4491 = vmatprep.mubr.f32.mxu0 0.0
        %4492 = vmatmul.mubr.f32.gmra.mxu0 %v4389
        %v4493 = vpop.f32.mrf.mxu0
        %v4494 = vadd.f32 0.0, %v4493
        %v4495 = vpop.f32.mrf.mxu0
        %v4496 = vadd.f32 0.0, %v4495
        %4497 = vmatprep.mubr.f32.mxu0 0.0
        %4498 = vmatmul.mubr.f32.gmra.mxu0 %v4392
        %v4499 = vpop.f32.mrf.mxu0
        %v4500 = vadd.f32 0.0, %v4499
        %v4501 = vpop.f32.mrf.mxu0
        %v4502 = vadd.f32 0.0, %v4501
        %4503 = vmatprep.mubr.f32.mxu0 0.0
        %4504 = vmatmul.mubr.f32.gmra.mxu0 %v4395
        %v4505 = vpop.f32.mrf.mxu0
        %v4506 = vadd.f32 0.0, %v4505
        %v4507 = vpop.f32.mrf.mxu0
        %v4508 = vadd.f32 0.0, %v4507
        %4509 = vdwg.mxu0
        %v4511 = vsel %vm4372, %v4323, 0
        %v4514 = vsel %vm4372, %v4324, 0
        %v4517 = vsel %vm4372, %v4325, 0
        %v4520 = vsel %vm4372, %v4326, 0
        %v4523 = vsel %vm4372, %v4327, 0
        %v4526 = vsel %vm4372, %v4328, 0
        %v4529 = vsel %vm4372, %v4329, 0
        %v4532 = vsel %vm4372, %v4330, 0
        %4534 = vmatprep.subr.mxu0 0.0
        %4535 = vmatpush1.msra.mxu0 0.0
        %4536 = vmatprep.subr.mxu0 0.0
        %4537 = vmatpush1.msra.mxu0 0.0
        %4538 = vmatprep.subr.mxu0 0.0
        %4539 = vmatpush1.msra.mxu0 0.0
        %4540 = vmatprep.subr.mxu0 0.0
        %4541 = vmatpush1.msra.mxu0 0.0
        %4542 = vmatprep.subr.mxu0 0.0
        %4543 = vmatpush1.msra.mxu0 0.0
        %4544 = vmatprep.subr.mxu0 0.0
        %4545 = vmatpush1.msra.mxu0 0.0
        %4546 = vmatprep.subr.mxu0 0.0
        %4547 = vmatpush1.msra.mxu0 0.0
        %4548 = vmatprep.subr.mxu0 0.0
        %4549 = vmatpush1.msra.mxu0 0.0
        %4550 = vmatprep.subr.mxu0 0.0
        %4551 = vmatpush1.msra.mxu0 0.0
        %4552 = vmatprep.subr.mxu0 0.0
        %4553 = vmatpush1.msra.mxu0 0.0
        %4554 = vmatprep.subr.mxu0 0.0
        %4555 = vmatpush1.msra.mxu0 0.0
        %4556 = vmatprep.subr.mxu0 0.0
        %4557 = vmatpush1.msra.mxu0 0.0
        %4558 = vmatprep.subr.mxu0 0.0
        %4559 = vmatpush1.msra.mxu0 0.0
        %4560 = vmatprep.subr.mxu0 %v4322
        %4561 = vmatpush1.msra.mxu0 %v4321
        %4562 = vmatprep.subr.mxu0 %v4320
        %4563 = vmatpush1.msra.mxu0 %v4319
        %4564 = vmatprep.subr.mxu0 %v4318
        %4565 = vmatpush1.msra.mxu0 %v4317
        %4566 = vmatprep.subr.mxu0 0.0
        %4567 = vmatpush2.msra.mxu0 0.0
        %4568 = vmatprep.subr.mxu0 0.0
        %4569 = vmatpush2.msra.mxu0 0.0
        %4570 = vmatprep.subr.mxu0 0.0
        %4571 = vmatpush2.msra.mxu0 0.0
        %4572 = vmatprep.subr.mxu0 0.0
        %4573 = vmatpush2.msra.mxu0 0.0
        %4574 = vmatprep.subr.mxu0 0.0
        %4575 = vmatpush2.msra.mxu0 0.0
        %4576 = vmatprep.subr.mxu0 0.0
        %4577 = vmatpush2.msra.mxu0 0.0
        %4578 = vmatprep.subr.mxu0 0.0
        %4579 = vmatpush2.msra.mxu0 0.0
        %4580 = vmatprep.subr.mxu0 0.0
        %4581 = vmatpush2.msra.mxu0 0.0
        %4582 = vmatprep.subr.mxu0 0.0
        %4583 = vmatpush2.msra.mxu0 0.0
        %4584 = vmatprep.subr.mxu0 0.0
        %4585 = vmatpush2.msra.mxu0 0.0
        %4586 = vmatprep.subr.mxu0 0.0
        %4587 = vmatpush2.msra.mxu0 0.0
        %4588 = vmatprep.subr.mxu0 0.0
        %4589 = vmatpush2.msra.mxu0 0.0
        %4590 = vmatprep.subr.mxu0 0.0
        %4591 = vmatpush2.msra.mxu0 0.0
        %4592 = vmatprep.subr.mxu0 0.0
        %4593 = vmatpush2.msra.mxu0 0.0
        %4594 = vmatprep.subr.mxu0 0.0
        %4595 = vmatpush2.msra.mxu0 0.0
        %4596 = vmatprep.subr.mxu0 0.0
        %4597 = vmatpush2.msra.mxu0 0.0
        %4598 = vmatprep.mubr.f32.mxu0 0.0
        %4599 = vmatmul.mubr.f32.gmra.mxu0 %v4511
        %v4600 = vpop.f32.mrf.mxu0
        %v4601 = vadd.f32 %v4464, %v4600
        %v4602 = vpop.f32.mrf.mxu0
        %v4603 = vadd.f32 %v4466, %v4602
        %4604 = vmatprep.mubr.f32.mxu0 0.0
        %4605 = vmatmul.mubr.f32.gmra.mxu0 %v4514
        %v4606 = vpop.f32.mrf.mxu0
        %v4607 = vadd.f32 %v4470, %v4606
        %v4608 = vpop.f32.mrf.mxu0
        %v4609 = vadd.f32 %v4472, %v4608
        %4610 = vmatprep.mubr.f32.mxu0 0.0
        %4611 = vmatmul.mubr.f32.gmra.mxu0 %v4517
        %v4612 = vpop.f32.mrf.mxu0
        %v4613 = vadd.f32 %v4476, %v4612
        %v4614 = vpop.f32.mrf.mxu0
        %v4615 = vadd.f32 %v4478, %v4614
        %4616 = vmatprep.mubr.f32.mxu0 0.0
        %4617 = vmatmul.mubr.f32.gmra.mxu0 %v4520
        %v4618 = vpop.f32.mrf.mxu0
        %v4619 = vadd.f32 %v4482, %v4618
        %v4620 = vpop.f32.mrf.mxu0
        %v4621 = vadd.f32 %v4484, %v4620
        %4622 = vmatprep.mubr.f32.mxu0 0.0
        %4623 = vmatmul.mubr.f32.gmra.mxu0 %v4523
        %v4624 = vpop.f32.mrf.mxu0
        %v4625 = vadd.f32 %v4488, %v4624
        %v4626 = vpop.f32.mrf.mxu0
        %v4627 = vadd.f32 %v4490, %v4626
        %4628 = vmatprep.mubr.f32.mxu0 0.0
        %4629 = vmatmul.mubr.f32.gmra.mxu0 %v4526
        %v4630 = vpop.f32.mrf.mxu0
        %v4631 = vadd.f32 %v4494, %v4630
        %v4632 = vpop.f32.mrf.mxu0
        %v4633 = vadd.f32 %v4496, %v4632
        %4634 = vmatprep.mubr.f32.mxu0 0.0
        %4635 = vmatmul.mubr.f32.gmra.mxu0 %v4529
        %v4636 = vpop.f32.mrf.mxu0
        %v4637 = vadd.f32 %v4500, %v4636
        %v4638 = vpop.f32.mrf.mxu0
        %v4639 = vadd.f32 %v4502, %v4638
        %4640 = vmatprep.mubr.f32.mxu0 0.0
        %4641 = vmatmul.mubr.f32.gmra.mxu0 %v4532
        %v4642 = vpop.f32.mrf.mxu0
        %v4643 = vadd.f32 %v4506, %v4642
        %v4644 = vpop.f32.mrf.mxu0
        %v4645 = vadd.f32 %v4508, %v4644
        %4646 = vdwg.mxu0
        %s4647 = scalar_lea.vmem %s3, 96
        %v4648 = vld [vmem:[%s4647] sm:$0xff]
        %v4649 = vld [vmem:[%s4647 + $0x8] sm:$0xff]
        %v4650 = vld [vmem:[%s4647 + $0x10] sm:$0xff]
        %v4651 = vld [vmem:[%s4647 + $0x18] sm:$0xff]
        %v4652 = vld [vmem:[%s4647 + $0x20] sm:$0xff]
        %v4653 = vld [vmem:[%s4647 + $0x28] sm:$0xff]
        %4654 = vrot.lane.b32.xlu0 %v4284, 15
        %v4655 = vpop.permute.xlu0 %4654
        %4656 = vrot.lane.b32.xlu0 %v4286, 15
        %v4657 = vpop.permute.xlu0 %4656
        %4658 = vrot.lane.b32.xlu0 %v4288, 15
        %v4659 = vpop.permute.xlu0 %4658
        %4660 = vrot.lane.b32.xlu0 %v4285, 15
        %v4661 = vpop.permute.xlu0 %4660
        %4662 = vrot.lane.b32.xlu0 %v4287, 15
        %v4663 = vpop.permute.xlu0 %4662
        %4664 = vrot.lane.b32.xlu0 %v4289, 15
        %v4665 = vpop.permute.xlu0 %4664
        %vm4666 = vcmp.lt.s32.totalorder %v4309, 15
        %v4667 = vsel %vm4666, %v4655, %v4661
        %v4668 = vsel %vm4666, %v4657, %v4663
        %v4669 = vsel %vm4666, %v4659, %v4665
        %v4670 = vsel %vm4666, %v4661, %v4655
        %v4671 = vsel %vm4666, %v4663, %v4657
        %v4672 = vsel %vm4666, %v4665, %v4659
        %v4673 = vmul.f32 %v4648, %v4670
        %v4674 = vmul.f32 %v4649, %v4667
        %v4675 = vmul.f32 %v4650, %v4671
        %v4676 = vmul.f32 %v4651, %v4668
        %v4677 = vmul.f32 %v4652, %v4672
        %v4678 = vmul.f32 %v4653, %v4669
        %s4679 = scalar_lea.vmem %s1, 128
        %v4680 = vld [vmem:[%s4679] sm:$0xff]
        %v4681 = vld [vmem:[%s4679 + $0x8] sm:$0xff]
        %v4682 = vld [vmem:[%s4679 + $0x10] sm:$0xff]
        %v4683 = vld [vmem:[%s4679 + $0x18] sm:$0xff]
        %v4684 = vld [vmem:[%s4679 + $0x20] sm:$0xff]
        %v4685 = vld [vmem:[%s4679 + $0x28] sm:$0xff]
        %v4686 = vld [vmem:[%s4679 + $0x30] sm:$0xff]
        %v4687 = vld [vmem:[%s4679 + $0x38] sm:$0xff]
        %v4689 = vsel %vm4372, %v4680, 0
        %v4692 = vsel %vm4372, %v4681, 0
        %v4695 = vsel %vm4372, %v4682, 0
        %v4698 = vsel %vm4372, %v4683, 0
        %v4701 = vsel %vm4372, %v4684, 0
        %v4704 = vsel %vm4372, %v4685, 0
        %v4707 = vsel %vm4372, %v4686, 0
        %v4710 = vsel %vm4372, %v4687, 0
        %4712 = vmatprep.subr.mxu0 0.0
        %4713 = vmatpush1.msra.mxu0 0.0
        %4714 = vmatprep.subr.mxu0 0.0
        %4715 = vmatpush1.msra.mxu0 0.0
        %4716 = vmatprep.subr.mxu0 0.0
        %4717 = vmatpush1.msra.mxu0 0.0
        %4718 = vmatprep.subr.mxu0 0.0
        %4719 = vmatpush1.msra.mxu0 0.0
        %4720 = vmatprep.subr.mxu0 0.0
        %4721 = vmatpush1.msra.mxu0 0.0
        %4722 = vmatprep.subr.mxu0 0.0
        %4723 = vmatpush1.msra.mxu0 0.0
        %4724 = vmatprep.subr.mxu0 0.0
        %4725 = vmatpush1.msra.mxu0 0.0
        %4726 = vmatprep.subr.mxu0 0.0
        %4727 = vmatpush1.msra.mxu0 0.0
        %4728 = vmatprep.subr.mxu0 0.0
        %4729 = vmatpush1.msra.mxu0 0.0
        %4730 = vmatprep.subr.mxu0 0.0
        %4731 = vmatpush1.msra.mxu0 0.0
        %4732 = vmatprep.subr.mxu0 0.0
        %4733 = vmatpush1.msra.mxu0 0.0
        %4734 = vmatprep.subr.mxu0 0.0
        %4735 = vmatpush1.msra.mxu0 0.0
        %4736 = vmatprep.subr.mxu0 0.0
        %4737 = vmatpush1.msra.mxu0 0.0
        %4738 = vmatprep.subr.mxu0 %v4678
        %4739 = vmatpush1.msra.mxu0 %v4677
        %4740 = vmatprep.subr.mxu0 %v4676
        %4741 = vmatpush1.msra.mxu0 %v4675
        %4742 = vmatprep.subr.mxu0 %v4674
        %4743 = vmatpush1.msra.mxu0 %v4673
        %4744 = vmatprep.subr.mxu0 0.0
        %4745 = vmatpush2.msra.mxu0 0.0
        %4746 = vmatprep.subr.mxu0 0.0
        %4747 = vmatpush2.msra.mxu0 0.0
        %4748 = vmatprep.subr.mxu0 0.0
        %4749 = vmatpush2.msra.mxu0 0.0
        %4750 = vmatprep.subr.mxu0 0.0
        %4751 = vmatpush2.msra.mxu0 0.0
        %4752 = vmatprep.subr.mxu0 0.0
        %4753 = vmatpush2.msra.mxu0 0.0
        %4754 = vmatprep.subr.mxu0 0.0
        %4755 = vmatpush2.msra.mxu0 0.0
        %4756 = vmatprep.subr.mxu0 0.0
        %4757 = vmatpush2.msra.mxu0 0.0
        %4758 = vmatprep.subr.mxu0 0.0
        %4759 = vmatpush2.msra.mxu0 0.0
        %4760 = vmatprep.subr.mxu0 0.0
        %4761 = vmatpush2.msra.mxu0 0.0
        %4762 = vmatprep.subr.mxu0 0.0
        %4763 = vmatpush2.msra.mxu0 0.0
        %4764 = vmatprep.subr.mxu0 0.0
        %4765 = vmatpush2.msra.mxu0 0.0
        %4766 = vmatprep.subr.mxu0 0.0
        %4767 = vmatpush2.msra.mxu0 0.0
        %4768 = vmatprep.subr.mxu0 0.0
        %4769 = vmatpush2.msra.mxu0 0.0
        %4770 = vmatprep.subr.mxu0 0.0
        %4771 = vmatpush2.msra.mxu0 0.0
        %4772 = vmatprep.subr.mxu0 0.0
        %4773 = vmatpush2.msra.mxu0 0.0
        %4774 = vmatprep.subr.mxu0 0.0
        %4775 = vmatpush2.msra.mxu0 0.0
        %4776 = vmatprep.mubr.f32.mxu0 0.0
        %4777 = vmatmul.mubr.f32.gmra.mxu0 %v4689
        %v4778 = vpop.f32.mrf.mxu0
        %v4779 = vadd.f32 0.0, %v4778
        %v4780 = vpop.f32.mrf.mxu0
        %v4781 = vadd.f32 0.0, %v4780
        %4782 = vmatprep.mubr.f32.mxu0 0.0
        %4783 = vmatmul.mubr.f32.gmra.mxu0 %v4692
        %v4784 = vpop.f32.mrf.mxu0
        %v4785 = vadd.f32 0.0, %v4784
        %v4786 = vpop.f32.mrf.mxu0
        %v4787 = vadd.f32 0.0, %v4786
        %4788 = vmatprep.mubr.f32.mxu0 0.0
        %4789 = vmatmul.mubr.f32.gmra.mxu0 %v4695
        %v4790 = vpop.f32.mrf.mxu0
        %v4791 = vadd.f32 0.0, %v4790
        %v4792 = vpop.f32.mrf.mxu0
        %v4793 = vadd.f32 0.0, %v4792
        %4794 = vmatprep.mubr.f32.mxu0 0.0
        %4795 = vmatmul.mubr.f32.gmra.mxu0 %v4698
        %v4796 = vpop.f32.mrf.mxu0
        %v4797 = vadd.f32 0.0, %v4796
        %v4798 = vpop.f32.mrf.mxu0
        %v4799 = vadd.f32 0.0, %v4798
        %4800 = vmatprep.mubr.f32.mxu0 0.0
        %4801 = vmatmul.mubr.f32.gmra.mxu0 %v4701
        %v4802 = vpop.f32.mrf.mxu0
        %v4803 = vadd.f32 0.0, %v4802
        %v4804 = vpop.f32.mrf.mxu0
        %v4805 = vadd.f32 0.0, %v4804
        %4806 = vmatprep.mubr.f32.mxu0 0.0
        %4807 = vmatmul.mubr.f32.gmra.mxu0 %v4704
        %v4808 = vpop.f32.mrf.mxu0
        %v4809 = vadd.f32 0.0, %v4808
        %v4810 = vpop.f32.mrf.mxu0
        %v4811 = vadd.f32 0.0, %v4810
        %4812 = vmatprep.mubr.f32.mxu0 0.0
        %4813 = vmatmul.mubr.f32.gmra.mxu0 %v4707
        %v4814 = vpop.f32.mrf.mxu0
        %v4815 = vadd.f32 0.0, %v4814
        %v4816 = vpop.f32.mrf.mxu0
        %v4817 = vadd.f32 0.0, %v4816
        %4818 = vmatprep.mubr.f32.mxu0 0.0
        %4819 = vmatmul.mubr.f32.gmra.mxu0 %v4710
        %v4820 = vpop.f32.mrf.mxu0
        %v4821 = vadd.f32 0.0, %v4820
        %v4822 = vpop.f32.mrf.mxu0
        %v4823 = vadd.f32 0.0, %v4822
        %4824 = vdwg.mxu0
        %v4825 = vadd.f32 %v4601, %v4779
        %v4826 = vadd.f32 %v4603, %v4781
        %v4827 = vadd.f32 %v4607, %v4785
        %v4828 = vadd.f32 %v4609, %v4787
        %v4829 = vadd.f32 %v4613, %v4791
        %v4830 = vadd.f32 %v4615, %v4793
        %v4831 = vadd.f32 %v4619, %v4797
        %v4832 = vadd.f32 %v4621, %v4799
        %v4833 = vadd.f32 %v4625, %v4803
        %v4834 = vadd.f32 %v4627, %v4805
        %v4835 = vadd.f32 %v4631, %v4809
        %v4836 = vadd.f32 %v4633, %v4811
        %v4837 = vadd.f32 %v4637, %v4815
        %v4838 = vadd.f32 %v4639, %v4817
        %v4839 = vadd.f32 %v4643, %v4821
        %v4840 = vadd.f32 %v4645, %v4823
        %s4841 = scalar_lea.vmem %s3, 144
        %v4842 = vld [vmem:[%s4841] sm:$0xff]
        %v4843 = vld [vmem:[%s4841 + $0x8] sm:$0xff]
        %v4844 = vld [vmem:[%s4841 + $0x10] sm:$0xff]
        %v4845 = vld [vmem:[%s4841 + $0x18] sm:$0xff]
        %v4846 = vld [vmem:[%s4841 + $0x20] sm:$0xff]
        %v4847 = vld [vmem:[%s4841 + $0x28] sm:$0xff]
        %4848 = vrot.lane.b32.xlu0 %v4284, 1
        %v4849 = vpop.permute.xlu0 %4848
        %4850 = vrot.lane.b32.xlu0 %v4286, 1
        %v4851 = vpop.permute.xlu0 %4850
        %4852 = vrot.lane.b32.xlu0 %v4288, 1
        %v4853 = vpop.permute.xlu0 %4852
        %4854 = vrot.lane.b32.xlu0 %v4285, 1
        %v4855 = vpop.permute.xlu0 %4854
        %4856 = vrot.lane.b32.xlu0 %v4287, 1
        %v4857 = vpop.permute.xlu0 %4856
        %4858 = vrot.lane.b32.xlu0 %v4289, 1
        %v4859 = vpop.permute.xlu0 %4858
        %vm4860 = vcmp.lt.s32.totalorder %v4309, 1
        %v4861 = vsel %vm4860, %v4849, %v4855
        %v4862 = vsel %vm4860, %v4851, %v4857
        %v4863 = vsel %vm4860, %v4853, %v4859
        %v4864 = vsel %vm4860, %v4855, %v4849
        %v4865 = vsel %vm4860, %v4857, %v4851
        %v4866 = vsel %vm4860, %v4859, %v4853
        %v4867 = vmul.f32 %v4842, %v4864
        %v4868 = vmul.f32 %v4843, %v4861
        %v4869 = vmul.f32 %v4844, %v4865
        %v4870 = vmul.f32 %v4845, %v4862
        %v4871 = vmul.f32 %v4846, %v4866
        %v4872 = vmul.f32 %v4847, %v4863
        %s4873 = scalar_lea.vmem %s1, 192
        %v4874 = vld [vmem:[%s4873] sm:$0xff]
        %v4875 = vld [vmem:[%s4873 + $0x8] sm:$0xff]
        %v4876 = vld [vmem:[%s4873 + $0x10] sm:$0xff]
        %v4877 = vld [vmem:[%s4873 + $0x18] sm:$0xff]
        %v4878 = vld [vmem:[%s4873 + $0x20] sm:$0xff]
        %v4879 = vld [vmem:[%s4873 + $0x28] sm:$0xff]
        %v4880 = vld [vmem:[%s4873 + $0x30] sm:$0xff]
        %v4881 = vld [vmem:[%s4873 + $0x38] sm:$0xff]
        %v4883 = vsel %vm4372, %v4874, 0
        %v4886 = vsel %vm4372, %v4875, 0
        %v4889 = vsel %vm4372, %v4876, 0
        %v4892 = vsel %vm4372, %v4877, 0
        %v4895 = vsel %vm4372, %v4878, 0
        %v4898 = vsel %vm4372, %v4879, 0
        %v4901 = vsel %vm4372, %v4880, 0
        %v4904 = vsel %vm4372, %v4881, 0
        %4906 = vmatprep.subr.mxu0 0.0
        %4907 = vmatpush1.msra.mxu0 0.0
        %4908 = vmatprep.subr.mxu0 0.0
        %4909 = vmatpush1.msra.mxu0 0.0
        %4910 = vmatprep.subr.mxu0 0.0
        %4911 = vmatpush1.msra.mxu0 0.0
        %4912 = vmatprep.subr.mxu0 0.0
        %4913 = vmatpush1.msra.mxu0 0.0
        %4914 = vmatprep.subr.mxu0 0.0
        %4915 = vmatpush1.msra.mxu0 0.0
        %4916 = vmatprep.subr.mxu0 0.0
        %4917 = vmatpush1.msra.mxu0 0.0
        %4918 = vmatprep.subr.mxu0 0.0
        %4919 = vmatpush1.msra.mxu0 0.0
        %4920 = vmatprep.subr.mxu0 0.0
        %4921 = vmatpush1.msra.mxu0 0.0
        %4922 = vmatprep.subr.mxu0 0.0
        %4923 = vmatpush1.msra.mxu0 0.0
        %4924 = vmatprep.subr.mxu0 0.0
        %4925 = vmatpush1.msra.mxu0 0.0
        %4926 = vmatprep.subr.mxu0 0.0
        %4927 = vmatpush1.msra.mxu0 0.0
        %4928 = vmatprep.subr.mxu0 0.0
        %4929 = vmatpush1.msra.mxu0 0.0
        %4930 = vmatprep.subr.mxu0 0.0
        %4931 = vmatpush1.msra.mxu0 0.0
        %4932 = vmatprep.subr.mxu0 %v4872
        %4933 = vmatpush1.msra.mxu0 %v4871
        %4934 = vmatprep.subr.mxu0 %v4870
        %4935 = vmatpush1.msra.mxu0 %v4869
        %4936 = vmatprep.subr.mxu0 %v4868
        %4937 = vmatpush1.msra.mxu0 %v4867
        %4938 = vmatprep.subr.mxu0 0.0
        %4939 = vmatpush2.msra.mxu0 0.0
        %4940 = vmatprep.subr.mxu0 0.0
        %4941 = vmatpush2.msra.mxu0 0.0
        %4942 = vmatprep.subr.mxu0 0.0
        %4943 = vmatpush2.msra.mxu0 0.0
        %4944 = vmatprep.subr.mxu0 0.0
        %4945 = vmatpush2.msra.mxu0 0.0
        %4946 = vmatprep.subr.mxu0 0.0
        %4947 = vmatpush2.msra.mxu0 0.0
        %4948 = vmatprep.subr.mxu0 0.0
        %4949 = vmatpush2.msra.mxu0 0.0
        %4950 = vmatprep.subr.mxu0 0.0
        %4951 = vmatpush2.msra.mxu0 0.0
        %4952 = vmatprep.subr.mxu0 0.0
        %4953 = vmatpush2.msra.mxu0 0.0
        %4954 = vmatprep.subr.mxu0 0.0
        %4955 = vmatpush2.msra.mxu0 0.0
        %4956 = vmatprep.subr.mxu0 0.0
        %4957 = vmatpush2.msra.mxu0 0.0
        %4958 = vmatprep.subr.mxu0 0.0
        %4959 = vmatpush2.msra.mxu0 0.0
        %4960 = vmatprep.subr.mxu0 0.0
        %4961 = vmatpush2.msra.mxu0 0.0
        %4962 = vmatprep.subr.mxu0 0.0
        %4963 = vmatpush2.msra.mxu0 0.0
        %4964 = vmatprep.subr.mxu0 0.0
        %4965 = vmatpush2.msra.mxu0 0.0
        %4966 = vmatprep.subr.mxu0 0.0
        %4967 = vmatpush2.msra.mxu0 0.0
        %4968 = vmatprep.subr.mxu0 0.0
        %4969 = vmatpush2.msra.mxu0 0.0
        %4970 = vmatprep.mubr.f32.mxu0 0.0
        %4971 = vmatmul.mubr.f32.gmra.mxu0 %v4883
        %v4972 = vpop.f32.mrf.mxu0
        %v4973 = vadd.f32 0.0, %v4972
        %v4974 = vpop.f32.mrf.mxu0
        %v4975 = vadd.f32 0.0, %v4974
        %4976 = vmatprep.mubr.f32.mxu0 0.0
        %4977 = vmatmul.mubr.f32.gmra.mxu0 %v4886
        %v4978 = vpop.f32.mrf.mxu0
        %v4979 = vadd.f32 0.0, %v4978
        %v4980 = vpop.f32.mrf.mxu0
        %v4981 = vadd.f32 0.0, %v4980
        %4982 = vmatprep.mubr.f32.mxu0 0.0
        %4983 = vmatmul.mubr.f32.gmra.mxu0 %v4889
        %v4984 = vpop.f32.mrf.mxu0
        %v4985 = vadd.f32 0.0, %v4984
        %v4986 = vpop.f32.mrf.mxu0
        %v4987 = vadd.f32 0.0, %v4986
        %4988 = vmatprep.mubr.f32.mxu0 0.0
        %4989 = vmatmul.mubr.f32.gmra.mxu0 %v4892
        %v4990 = vpop.f32.mrf.mxu0
        %v4991 = vadd.f32 0.0, %v4990
        %v4992 = vpop.f32.mrf.mxu0
        %v4993 = vadd.f32 0.0, %v4992
        %4994 = vmatprep.mubr.f32.mxu0 0.0
        %4995 = vmatmul.mubr.f32.gmra.mxu0 %v4895
        %v4996 = vpop.f32.mrf.mxu0
        %v4997 = vadd.f32 0.0, %v4996
        %v4998 = vpop.f32.mrf.mxu0
        %v4999 = vadd.f32 0.0, %v4998
        %5000 = vmatprep.mubr.f32.mxu0 0.0
        %5001 = vmatmul.mubr.f32.gmra.mxu0 %v4898
        %v5002 = vpop.f32.mrf.mxu0
        %v5003 = vadd.f32 0.0, %v5002
        %v5004 = vpop.f32.mrf.mxu0
        %v5005 = vadd.f32 0.0, %v5004
        %5006 = vmatprep.mubr.f32.mxu0 0.0
        %5007 = vmatmul.mubr.f32.gmra.mxu0 %v4901
        %v5008 = vpop.f32.mrf.mxu0
        %v5009 = vadd.f32 0.0, %v5008
        %v5010 = vpop.f32.mrf.mxu0
        %v5011 = vadd.f32 0.0, %v5010
        %5012 = vmatprep.mubr.f32.mxu0 0.0
        %5013 = vmatmul.mubr.f32.gmra.mxu0 %v4904
        %v5014 = vpop.f32.mrf.mxu0
        %v5015 = vadd.f32 0.0, %v5014
        %v5016 = vpop.f32.mrf.mxu0
        %v5017 = vadd.f32 0.0, %v5016
        %5018 = vdwg.mxu0
        %v5019 = vadd.f32 %v4825, %v4973
        %v5020 = vadd.f32 %v4826, %v4975
        %v5021 = vadd.f32 %v4827, %v4979
        %v5022 = vadd.f32 %v4828, %v4981
        %v5023 = vadd.f32 %v4829, %v4985
        %v5024 = vadd.f32 %v4830, %v4987
        %v5025 = vadd.f32 %v4831, %v4991
        %v5026 = vadd.f32 %v4832, %v4993
        %v5027 = vadd.f32 %v4833, %v4997
        %v5028 = vadd.f32 %v4834, %v4999
        %v5029 = vadd.f32 %v4835, %v5003
        %v5030 = vadd.f32 %v4836, %v5005
        %v5031 = vadd.f32 %v4837, %v5009
        %v5032 = vadd.f32 %v4838, %v5011
        %v5033 = vadd.f32 %v4839, %v5015
        %v5034 = vadd.f32 %v4840, %v5017
        %s5035 = scalar_lea.vmem %s1, 256
        %v5036 = vld [vmem:[%s5035] sm:$0xff]
        %v5037 = vld [vmem:[%s5035 + $0x8] sm:$0xff]
        %v5038 = vld [vmem:[%s5035 + $0x10] sm:$0xff]
        %v5039 = vld [vmem:[%s5035 + $0x18] sm:$0xff]
        %v5040 = vld [vmem:[%s5035 + $0x20] sm:$0xff]
        %v5041 = vld [vmem:[%s5035 + $0x28] sm:$0xff]
        %v5042 = vld [vmem:[%s5035 + $0x30] sm:$0xff]
        %v5043 = vld [vmem:[%s5035 + $0x38] sm:$0xff]
        %v5045 = vsel %vm4372, %v5036, 0
        %v5048 = vsel %vm4372, %v5037, 0
        %v5051 = vsel %vm4372, %v5038, 0
        %v5054 = vsel %vm4372, %v5039, 0
        %v5057 = vsel %vm4372, %v5040, 0
        %v5060 = vsel %vm4372, %v5041, 0
        %v5063 = vsel %vm4372, %v5042, 0
        %v5066 = vsel %vm4372, %v5043, 0
        %5068 = vmatprep.subr.mxu0 0.0
        %5069 = vmatpush1.msra.mxu0 0.0
        %5070 = vmatprep.subr.mxu0 0.0
        %5071 = vmatpush1.msra.mxu0 0.0
        %5072 = vmatprep.subr.mxu0 0.0
        %5073 = vmatpush1.msra.mxu0 0.0
        %5074 = vmatprep.subr.mxu0 0.0
        %5075 = vmatpush1.msra.mxu0 0.0
        %5076 = vmatprep.subr.mxu0 0.0
        %5077 = vmatpush1.msra.mxu0 0.0
        %5078 = vmatprep.subr.mxu0 0.0
        %5079 = vmatpush1.msra.mxu0 0.0
        %5080 = vmatprep.subr.mxu0 0.0
        %5081 = vmatpush1.msra.mxu0 0.0
        %5082 = vmatprep.subr.mxu0 0.0
        %5083 = vmatpush1.msra.mxu0 0.0
        %5084 = vmatprep.subr.mxu0 0.0
        %5085 = vmatpush1.msra.mxu0 0.0
        %5086 = vmatprep.subr.mxu0 0.0
        %5087 = vmatpush1.msra.mxu0 0.0
        %5088 = vmatprep.subr.mxu0 0.0
        %5089 = vmatpush1.msra.mxu0 0.0
        %5090 = vmatprep.subr.mxu0 0.0
        %5091 = vmatpush1.msra.mxu0 0.0
        %5092 = vmatprep.subr.mxu0 0.0
        %5093 = vmatpush1.msra.mxu0 0.0
        %5094 = vmatprep.subr.mxu0 %v4289
        %5095 = vmatpush1.msra.mxu0 %v4288
        %5096 = vmatprep.subr.mxu0 %v4287
        %5097 = vmatpush1.msra.mxu0 %v4286
        %5098 = vmatprep.subr.mxu0 %v4285
        %5099 = vmatpush1.msra.mxu0 %v4284
        %5100 = vmatprep.subr.mxu0 0.0
        %5101 = vmatpush2.msra.mxu0 0.0
        %5102 = vmatprep.subr.mxu0 0.0
        %5103 = vmatpush2.msra.mxu0 0.0
        %5104 = vmatprep.subr.mxu0 0.0
        %5105 = vmatpush2.msra.mxu0 0.0
        %5106 = vmatprep.subr.mxu0 0.0
        %5107 = vmatpush2.msra.mxu0 0.0
        %5108 = vmatprep.subr.mxu0 0.0
        %5109 = vmatpush2.msra.mxu0 0.0
        %5110 = vmatprep.subr.mxu0 0.0
        %5111 = vmatpush2.msra.mxu0 0.0
        %5112 = vmatprep.subr.mxu0 0.0
        %5113 = vmatpush2.msra.mxu0 0.0
        %5114 = vmatprep.subr.mxu0 0.0
        %5115 = vmatpush2.msra.mxu0 0.0
        %5116 = vmatprep.subr.mxu0 0.0
        %5117 = vmatpush2.msra.mxu0 0.0
        %5118 = vmatprep.subr.mxu0 0.0
        %5119 = vmatpush2.msra.mxu0 0.0
        %5120 = vmatprep.subr.mxu0 0.0
        %5121 = vmatpush2.msra.mxu0 0.0
        %5122 = vmatprep.subr.mxu0 0.0
        %5123 = vmatpush2.msra.mxu0 0.0
        %5124 = vmatprep.subr.mxu0 0.0
        %5125 = vmatpush2.msra.mxu0 0.0
        %5126 = vmatprep.subr.mxu0 0.0
        %5127 = vmatpush2.msra.mxu0 0.0
        %5128 = vmatprep.subr.mxu0 0.0
        %5129 = vmatpush2.msra.mxu0 0.0
        %5130 = vmatprep.subr.mxu0 0.0
        %5131 = vmatpush2.msra.mxu0 0.0
        %5132 = vmatprep.mubr.f32.mxu0 0.0
        %5133 = vmatmul.mubr.f32.gmra.mxu0 %v5045
        %v5134 = vpop.f32.mrf.mxu0
        %v5135 = vadd.f32 0.0, %v5134
        %v5136 = vpop.f32.mrf.mxu0
        %v5137 = vadd.f32 0.0, %v5136
        %5138 = vmatprep.mubr.f32.mxu0 0.0
        %5139 = vmatmul.mubr.f32.gmra.mxu0 %v5048
        %v5140 = vpop.f32.mrf.mxu0
        %v5141 = vadd.f32 0.0, %v5140
        %v5142 = vpop.f32.mrf.mxu0
        %v5143 = vadd.f32 0.0, %v5142
        %5144 = vmatprep.mubr.f32.mxu0 0.0
        %5145 = vmatmul.mubr.f32.gmra.mxu0 %v5051
        %v5146 = vpop.f32.mrf.mxu0
        %v5147 = vadd.f32 0.0, %v5146
        %v5148 = vpop.f32.mrf.mxu0
        %v5149 = vadd.f32 0.0, %v5148
        %5150 = vmatprep.mubr.f32.mxu0 0.0
        %5151 = vmatmul.mubr.f32.gmra.mxu0 %v5054
        %v5152 = vpop.f32.mrf.mxu0
        %v5153 = vadd.f32 0.0, %v5152
        %v5154 = vpop.f32.mrf.mxu0
        %v5155 = vadd.f32 0.0, %v5154
        %5156 = vmatprep.mubr.f32.mxu0 0.0
        %5157 = vmatmul.mubr.f32.gmra.mxu0 %v5057
        %v5158 = vpop.f32.mrf.mxu0
        %v5159 = vadd.f32 0.0, %v5158
        %v5160 = vpop.f32.mrf.mxu0
        %v5161 = vadd.f32 0.0, %v5160
        %5162 = vmatprep.mubr.f32.mxu0 0.0
        %5163 = vmatmul.mubr.f32.gmra.mxu0 %v5060
        %v5164 = vpop.f32.mrf.mxu0
        %v5165 = vadd.f32 0.0, %v5164
        %v5166 = vpop.f32.mrf.mxu0
        %v5167 = vadd.f32 0.0, %v5166
        %5168 = vmatprep.mubr.f32.mxu0 0.0
        %5169 = vmatmul.mubr.f32.gmra.mxu0 %v5063
        %v5170 = vpop.f32.mrf.mxu0
        %v5171 = vadd.f32 0.0, %v5170
        %v5172 = vpop.f32.mrf.mxu0
        %v5173 = vadd.f32 0.0, %v5172
        %5174 = vmatprep.mubr.f32.mxu0 0.0
        %5175 = vmatmul.mubr.f32.gmra.mxu0 %v5066
        %v5176 = vpop.f32.mrf.mxu0
        %v5177 = vadd.f32 0.0, %v5176
        %v5178 = vpop.f32.mrf.mxu0
        %v5179 = vadd.f32 0.0, %v5178
        %5180 = vdwg.mxu0
        %v5181 = vadd.f32 %v5019, %v5135
        %v5182 = vadd.f32 %v5020, %v5137
        %v5183 = vadd.f32 %v5021, %v5141
        %v5184 = vadd.f32 %v5022, %v5143
        %v5185 = vadd.f32 %v5023, %v5147
        %v5186 = vadd.f32 %v5024, %v5149
        %v5187 = vadd.f32 %v5025, %v5153
        %v5188 = vadd.f32 %v5026, %v5155
        %v5189 = vadd.f32 %v5027, %v5159
        %v5190 = vadd.f32 %v5028, %v5161
        %v5191 = vadd.f32 %v5029, %v5165
        %v5192 = vadd.f32 %v5030, %v5167
        %v5193 = vadd.f32 %v5031, %v5171
        %v5194 = vadd.f32 %v5032, %v5173
        %v5195 = vadd.f32 %v5033, %v5177
        %v5196 = vadd.f32 %v5034, %v5179
        %s5197 = scalar_lea.vmem %s3, 240
        %v5198 = vld [vmem:[%s5197] sm:$0xff]
        %v5199 = vld [vmem:[%s5197 + $0x8] sm:$0xff]
        %v5200 = vld [vmem:[%s5197 + $0x10] sm:$0xff]
        %v5201 = vld [vmem:[%s5197 + $0x18] sm:$0xff]
        %v5202 = vld [vmem:[%s5197 + $0x20] sm:$0xff]
        %v5203 = vld [vmem:[%s5197 + $0x28] sm:$0xff]
        %5204 = vrot.lane.b32.xlu0 %v4284, 127
        %v5205 = vpop.permute.xlu0 %5204
        %5206 = vrot.lane.b32.xlu0 %v4286, 127
        %v5207 = vpop.permute.xlu0 %5206
        %5208 = vrot.lane.b32.xlu0 %v4288, 127
        %v5209 = vpop.permute.xlu0 %5208
        %5210 = vrot.lane.b32.xlu0 %v4285, 127
        %v5211 = vpop.permute.xlu0 %5210
        %5212 = vrot.lane.b32.xlu0 %v4287, 127
        %v5213 = vpop.permute.xlu0 %5212
        %5214 = vrot.lane.b32.xlu0 %v4289, 127
        %v5215 = vpop.permute.xlu0 %5214
        %vm5216 = vcmp.lt.s32.totalorder %v4309, 127
        %v5217 = vsel %vm5216, %v5205, %v5211
        %v5218 = vsel %vm5216, %v5207, %v5213
        %v5219 = vsel %vm5216, %v5209, %v5215
        %v5220 = vsel %vm5216, %v5211, %v5205
        %v5221 = vsel %vm5216, %v5213, %v5207
        %v5222 = vsel %vm5216, %v5215, %v5209
        %v5223 = vmul.f32 %v5198, %v5217
        %v5224 = vmul.f32 %v5199, %v5220
        %v5225 = vmul.f32 %v5200, %v5218
        %v5226 = vmul.f32 %v5201, %v5221
        %v5227 = vmul.f32 %v5202, %v5219
        %v5228 = vmul.f32 %v5203, %v5222
        %s5229 = scalar_lea.vmem %s1, 320
        %v5230 = vld [vmem:[%s5229] sm:$0xff]
        %v5231 = vld [vmem:[%s5229 + $0x8] sm:$0xff]
        %v5232 = vld [vmem:[%s5229 + $0x10] sm:$0xff]
        %v5233 = vld [vmem:[%s5229 + $0x18] sm:$0xff]
        %v5234 = vld [vmem:[%s5229 + $0x20] sm:$0xff]
        %v5235 = vld [vmem:[%s5229 + $0x28] sm:$0xff]
        %v5236 = vld [vmem:[%s5229 + $0x30] sm:$0xff]
        %v5237 = vld [vmem:[%s5229 + $0x38] sm:$0xff]
        %v5239 = vsel %vm4372, %v5230, 0
        %v5242 = vsel %vm4372, %v5231, 0
        %v5245 = vsel %vm4372, %v5232, 0
        %v5248 = vsel %vm4372, %v5233, 0
        %v5251 = vsel %vm4372, %v5234, 0
        %v5254 = vsel %vm4372, %v5235, 0
        %v5257 = vsel %vm4372, %v5236, 0
        %v5260 = vsel %vm4372, %v5237, 0
        %5262 = vmatprep.subr.mxu0 0.0
        %5263 = vmatpush1.msra.mxu0 0.0
        %5264 = vmatprep.subr.mxu0 0.0
        %5265 = vmatpush1.msra.mxu0 0.0
        %5266 = vmatprep.subr.mxu0 0.0
        %5267 = vmatpush1.msra.mxu0 0.0
        %5268 = vmatprep.subr.mxu0 0.0
        %5269 = vmatpush1.msra.mxu0 0.0
        %5270 = vmatprep.subr.mxu0 0.0
        %5271 = vmatpush1.msra.mxu0 0.0
        %5272 = vmatprep.subr.mxu0 0.0
        %5273 = vmatpush1.msra.mxu0 0.0
        %5274 = vmatprep.subr.mxu0 0.0
        %5275 = vmatpush1.msra.mxu0 0.0
        %5276 = vmatprep.subr.mxu0 0.0
        %5277 = vmatpush1.msra.mxu0 0.0
        %5278 = vmatprep.subr.mxu0 0.0
        %5279 = vmatpush1.msra.mxu0 0.0
        %5280 = vmatprep.subr.mxu0 0.0
        %5281 = vmatpush1.msra.mxu0 0.0
        %5282 = vmatprep.subr.mxu0 0.0
        %5283 = vmatpush1.msra.mxu0 0.0
        %5284 = vmatprep.subr.mxu0 0.0
        %5285 = vmatpush1.msra.mxu0 0.0
        %5286 = vmatprep.subr.mxu0 0.0
        %5287 = vmatpush1.msra.mxu0 0.0
        %5288 = vmatprep.subr.mxu0 %v5228
        %5289 = vmatpush1.msra.mxu0 %v5227
        %5290 = vmatprep.subr.mxu0 %v5226
        %5291 = vmatpush1.msra.mxu0 %v5225
        %5292 = vmatprep.subr.mxu0 %v5224
        %5293 = vmatpush1.msra.mxu0 %v5223
        %5294 = vmatprep.subr.mxu0 0.0
        %5295 = vmatpush2.msra.mxu0 0.0
        %5296 = vmatprep.subr.mxu0 0.0
        %5297 = vmatpush2.msra.mxu0 0.0
        %5298 = vmatprep.subr.mxu0 0.0
        %5299 = vmatpush2.msra.mxu0 0.0
        %5300 = vmatprep.subr.mxu0 0.0
        %5301 = vmatpush2.msra.mxu0 0.0
        %5302 = vmatprep.subr.mxu0 0.0
        %5303 = vmatpush2.msra.mxu0 0.0
        %5304 = vmatprep.subr.mxu0 0.0
        %5305 = vmatpush2.msra.mxu0 0.0
        %5306 = vmatprep.subr.mxu0 0.0
        %5307 = vmatpush2.msra.mxu0 0.0
        %5308 = vmatprep.subr.mxu0 0.0
        %5309 = vmatpush2.msra.mxu0 0.0
        %5310 = vmatprep.subr.mxu0 0.0
        %5311 = vmatpush2.msra.mxu0 0.0
        %5312 = vmatprep.subr.mxu0 0.0
        %5313 = vmatpush2.msra.mxu0 0.0
        %5314 = vmatprep.subr.mxu0 0.0
        %5315 = vmatpush2.msra.mxu0 0.0
        %5316 = vmatprep.subr.mxu0 0.0
        %5317 = vmatpush2.msra.mxu0 0.0
        %5318 = vmatprep.subr.mxu0 0.0
        %5319 = vmatpush2.msra.mxu0 0.0
        %5320 = vmatprep.subr.mxu0 0.0
        %5321 = vmatpush2.msra.mxu0 0.0
        %5322 = vmatprep.subr.mxu0 0.0
        %5323 = vmatpush2.msra.mxu0 0.0
        %5324 = vmatprep.subr.mxu0 0.0
        %5325 = vmatpush2.msra.mxu0 0.0
        %5326 = vmatprep.mubr.f32.mxu0 0.0
        %5327 = vmatmul.mubr.f32.gmra.mxu0 %v5239
        %v5328 = vpop.f32.mrf.mxu0
        %v5329 = vadd.f32 0.0, %v5328
        %v5330 = vpop.f32.mrf.mxu0
        %v5331 = vadd.f32 0.0, %v5330
        %5332 = vmatprep.mubr.f32.mxu0 0.0
        %5333 = vmatmul.mubr.f32.gmra.mxu0 %v5242
        %v5334 = vpop.f32.mrf.mxu0
        %v5335 = vadd.f32 0.0, %v5334
        %v5336 = vpop.f32.mrf.mxu0
        %v5337 = vadd.f32 0.0, %v5336
        %5338 = vmatprep.mubr.f32.mxu0 0.0
        %5339 = vmatmul.mubr.f32.gmra.mxu0 %v5245
        %v5340 = vpop.f32.mrf.mxu0
        %v5341 = vadd.f32 0.0, %v5340
        %v5342 = vpop.f32.mrf.mxu0
        %v5343 = vadd.f32 0.0, %v5342
        %5344 = vmatprep.mubr.f32.mxu0 0.0
        %5345 = vmatmul.mubr.f32.gmra.mxu0 %v5248
        %v5346 = vpop.f32.mrf.mxu0
        %v5347 = vadd.f32 0.0, %v5346
        %v5348 = vpop.f32.mrf.mxu0
        %v5349 = vadd.f32 0.0, %v5348
        %5350 = vmatprep.mubr.f32.mxu0 0.0
        %5351 = vmatmul.mubr.f32.gmra.mxu0 %v5251
        %v5352 = vpop.f32.mrf.mxu0
        %v5353 = vadd.f32 0.0, %v5352
        %v5354 = vpop.f32.mrf.mxu0
        %v5355 = vadd.f32 0.0, %v5354
        %5356 = vmatprep.mubr.f32.mxu0 0.0
        %5357 = vmatmul.mubr.f32.gmra.mxu0 %v5254
        %v5358 = vpop.f32.mrf.mxu0
        %v5359 = vadd.f32 0.0, %v5358
        %v5360 = vpop.f32.mrf.mxu0
        %v5361 = vadd.f32 0.0, %v5360
        %5362 = vmatprep.mubr.f32.mxu0 0.0
        %5363 = vmatmul.mubr.f32.gmra.mxu0 %v5257
        %v5364 = vpop.f32.mrf.mxu0
        %v5365 = vadd.f32 0.0, %v5364
        %v5366 = vpop.f32.mrf.mxu0
        %v5367 = vadd.f32 0.0, %v5366
        %5368 = vmatprep.mubr.f32.mxu0 0.0
        %5369 = vmatmul.mubr.f32.gmra.mxu0 %v5260
        %v5370 = vpop.f32.mrf.mxu0
        %v5371 = vadd.f32 0.0, %v5370
        %v5372 = vpop.f32.mrf.mxu0
        %v5373 = vadd.f32 0.0, %v5372
        %5374 = vdwg.mxu0
        %v5375 = vadd.f32 %v5181, %v5329
        %v5376 = vadd.f32 %v5182, %v5331
        %v5377 = vadd.f32 %v5183, %v5335
        %v5378 = vadd.f32 %v5184, %v5337
        %v5379 = vadd.f32 %v5185, %v5341
        %v5380 = vadd.f32 %v5186, %v5343
        %v5381 = vadd.f32 %v5187, %v5347
        %v5382 = vadd.f32 %v5188, %v5349
        %v5383 = vadd.f32 %v5189, %v5353
        %v5384 = vadd.f32 %v5190, %v5355
        %v5385 = vadd.f32 %v5191, %v5359
        %v5386 = vadd.f32 %v5192, %v5361
        %v5387 = vadd.f32 %v5193, %v5365
        %v5388 = vadd.f32 %v5194, %v5367
        %v5389 = vadd.f32 %v5195, %v5371
        %v5390 = vadd.f32 %v5196, %v5373
        %s5391 = scalar_lea.vmem %s3, 288
        %v5392 = vld [vmem:[%s5391] sm:$0xff]
        %v5393 = vld [vmem:[%s5391 + $0x8] sm:$0xff]
        %v5394 = vld [vmem:[%s5391 + $0x10] sm:$0xff]
        %v5395 = vld [vmem:[%s5391 + $0x18] sm:$0xff]
        %v5396 = vld [vmem:[%s5391 + $0x20] sm:$0xff]
        %v5397 = vld [vmem:[%s5391 + $0x28] sm:$0xff]
        %5398 = vrot.lane.b32.xlu0 %v4284, 113
        %v5399 = vpop.permute.xlu0 %5398
        %5400 = vrot.lane.b32.xlu0 %v4286, 113
        %v5401 = vpop.permute.xlu0 %5400
        %5402 = vrot.lane.b32.xlu0 %v4288, 113
        %v5403 = vpop.permute.xlu0 %5402
        %5404 = vrot.lane.b32.xlu0 %v4285, 113
        %v5405 = vpop.permute.xlu0 %5404
        %5406 = vrot.lane.b32.xlu0 %v4287, 113
        %v5407 = vpop.permute.xlu0 %5406
        %5408 = vrot.lane.b32.xlu0 %v4289, 113
        %v5409 = vpop.permute.xlu0 %5408
        %vm5410 = vcmp.lt.s32.totalorder %v4309, 113
        %v5411 = vsel %vm5410, %v5399, %v5405
        %v5412 = vsel %vm5410, %v5401, %v5407
        %v5413 = vsel %vm5410, %v5403, %v5409
        %v5414 = vsel %vm5410, %v5405, %v5399
        %v5415 = vsel %vm5410, %v5407, %v5401
        %v5416 = vsel %vm5410, %v5409, %v5403
        %v5417 = vmul.f32 %v5392, %v5411
        %v5418 = vmul.f32 %v5393, %v5414
        %v5419 = vmul.f32 %v5394, %v5412
        %v5420 = vmul.f32 %v5395, %v5415
        %v5421 = vmul.f32 %v5396, %v5413
        %v5422 = vmul.f32 %v5397, %v5416
        %s5423 = scalar_lea.vmem %s1, 384
        %v5424 = vld [vmem:[%s5423] sm:$0xff]
        %v5425 = vld [vmem:[%s5423 + $0x8] sm:$0xff]
        %v5426 = vld [vmem:[%s5423 + $0x10] sm:$0xff]
        %v5427 = vld [vmem:[%s5423 + $0x18] sm:$0xff]
        %v5428 = vld [vmem:[%s5423 + $0x20] sm:$0xff]
        %v5429 = vld [vmem:[%s5423 + $0x28] sm:$0xff]
        %v5430 = vld [vmem:[%s5423 + $0x30] sm:$0xff]
        %v5431 = vld [vmem:[%s5423 + $0x38] sm:$0xff]
        %v5433 = vsel %vm4372, %v5424, 0
        %v5436 = vsel %vm4372, %v5425, 0
        %v5439 = vsel %vm4372, %v5426, 0
        %v5442 = vsel %vm4372, %v5427, 0
        %v5445 = vsel %vm4372, %v5428, 0
        %v5448 = vsel %vm4372, %v5429, 0
        %v5451 = vsel %vm4372, %v5430, 0
        %v5454 = vsel %vm4372, %v5431, 0
        %5456 = vmatprep.subr.mxu0 0.0
        %5457 = vmatpush1.msra.mxu0 0.0
        %5458 = vmatprep.subr.mxu0 0.0
        %5459 = vmatpush1.msra.mxu0 0.0
        %5460 = vmatprep.subr.mxu0 0.0
        %5461 = vmatpush1.msra.mxu0 0.0
        %5462 = vmatprep.subr.mxu0 0.0
        %5463 = vmatpush1.msra.mxu0 0.0
        %5464 = vmatprep.subr.mxu0 0.0
        %5465 = vmatpush1.msra.mxu0 0.0
        %5466 = vmatprep.subr.mxu0 0.0
        %5467 = vmatpush1.msra.mxu0 0.0
        %5468 = vmatprep.subr.mxu0 0.0
        %5469 = vmatpush1.msra.mxu0 0.0
        %5470 = vmatprep.subr.mxu0 0.0
        %5471 = vmatpush1.msra.mxu0 0.0
        %5472 = vmatprep.subr.mxu0 0.0
        %5473 = vmatpush1.msra.mxu0 0.0
        %5474 = vmatprep.subr.mxu0 0.0
        %5475 = vmatpush1.msra.mxu0 0.0
        %5476 = vmatprep.subr.mxu0 0.0
        %5477 = vmatpush1.msra.mxu0 0.0
        %5478 = vmatprep.subr.mxu0 0.0
        %5479 = vmatpush1.msra.mxu0 0.0
        %5480 = vmatprep.subr.mxu0 0.0
        %5481 = vmatpush1.msra.mxu0 0.0
        %5482 = vmatprep.subr.mxu0 %v5422
        %5483 = vmatpush1.msra.mxu0 %v5421
        %5484 = vmatprep.subr.mxu0 %v5420
        %5485 = vmatpush1.msra.mxu0 %v5419
        %5486 = vmatprep.subr.mxu0 %v5418
        %5487 = vmatpush1.msra.mxu0 %v5417
        %5488 = vmatprep.subr.mxu0 0.0
        %5489 = vmatpush2.msra.mxu0 0.0
        %5490 = vmatprep.subr.mxu0 0.0
        %5491 = vmatpush2.msra.mxu0 0.0
        %5492 = vmatprep.subr.mxu0 0.0
        %5493 = vmatpush2.msra.mxu0 0.0
        %5494 = vmatprep.subr.mxu0 0.0
        %5495 = vmatpush2.msra.mxu0 0.0
        %5496 = vmatprep.subr.mxu0 0.0
        %5497 = vmatpush2.msra.mxu0 0.0
        %5498 = vmatprep.subr.mxu0 0.0
        %5499 = vmatpush2.msra.mxu0 0.0
        %5500 = vmatprep.subr.mxu0 0.0
        %5501 = vmatpush2.msra.mxu0 0.0
        %5502 = vmatprep.subr.mxu0 0.0
        %5503 = vmatpush2.msra.mxu0 0.0
        %5504 = vmatprep.subr.mxu0 0.0
        %5505 = vmatpush2.msra.mxu0 0.0
        %5506 = vmatprep.subr.mxu0 0.0
        %5507 = vmatpush2.msra.mxu0 0.0
        %5508 = vmatprep.subr.mxu0 0.0
        %5509 = vmatpush2.msra.mxu0 0.0
        %5510 = vmatprep.subr.mxu0 0.0
        %5511 = vmatpush2.msra.mxu0 0.0
        %5512 = vmatprep.subr.mxu0 0.0
        %5513 = vmatpush2.msra.mxu0 0.0
        %5514 = vmatprep.subr.mxu0 0.0
        %5515 = vmatpush2.msra.mxu0 0.0
        %5516 = vmatprep.subr.mxu0 0.0
        %5517 = vmatpush2.msra.mxu0 0.0
        %5518 = vmatprep.subr.mxu0 0.0
        %5519 = vmatpush2.msra.mxu0 0.0
        %5520 = vmatprep.mubr.f32.mxu0 0.0
        %5521 = vmatmul.mubr.f32.gmra.mxu0 %v5433
        %v5522 = vpop.f32.mrf.mxu0
        %v5523 = vadd.f32 0.0, %v5522
        %v5524 = vpop.f32.mrf.mxu0
        %v5525 = vadd.f32 0.0, %v5524
        %5526 = vmatprep.mubr.f32.mxu0 0.0
        %5527 = vmatmul.mubr.f32.gmra.mxu0 %v5436
        %v5528 = vpop.f32.mrf.mxu0
        %v5529 = vadd.f32 0.0, %v5528
        %v5530 = vpop.f32.mrf.mxu0
        %v5531 = vadd.f32 0.0, %v5530
        %5532 = vmatprep.mubr.f32.mxu0 0.0
        %5533 = vmatmul.mubr.f32.gmra.mxu0 %v5439
        %v5534 = vpop.f32.mrf.mxu0
        %v5535 = vadd.f32 0.0, %v5534
        %v5536 = vpop.f32.mrf.mxu0
        %v5537 = vadd.f32 0.0, %v5536
        %5538 = vmatprep.mubr.f32.mxu0 0.0
        %5539 = vmatmul.mubr.f32.gmra.mxu0 %v5442
        %v5540 = vpop.f32.mrf.mxu0
        %v5541 = vadd.f32 0.0, %v5540
        %v5542 = vpop.f32.mrf.mxu0
        %v5543 = vadd.f32 0.0, %v5542
        %5544 = vmatprep.mubr.f32.mxu0 0.0
        %5545 = vmatmul.mubr.f32.gmra.mxu0 %v5445
        %v5546 = vpop.f32.mrf.mxu0
        %v5547 = vadd.f32 0.0, %v5546
        %v5548 = vpop.f32.mrf.mxu0
        %v5549 = vadd.f32 0.0, %v5548
        %5550 = vmatprep.mubr.f32.mxu0 0.0
        %5551 = vmatmul.mubr.f32.gmra.mxu0 %v5448
        %v5552 = vpop.f32.mrf.mxu0
        %v5553 = vadd.f32 0.0, %v5552
        %v5554 = vpop.f32.mrf.mxu0
        %v5555 = vadd.f32 0.0, %v5554
        %5556 = vmatprep.mubr.f32.mxu0 0.0
        %5557 = vmatmul.mubr.f32.gmra.mxu0 %v5451
        %v5558 = vpop.f32.mrf.mxu0
        %v5559 = vadd.f32 0.0, %v5558
        %v5560 = vpop.f32.mrf.mxu0
        %v5561 = vadd.f32 0.0, %v5560
        %5562 = vmatprep.mubr.f32.mxu0 0.0
        %5563 = vmatmul.mubr.f32.gmra.mxu0 %v5454
        %v5564 = vpop.f32.mrf.mxu0
        %v5565 = vadd.f32 0.0, %v5564
        %v5566 = vpop.f32.mrf.mxu0
        %v5567 = vadd.f32 0.0, %v5566
        %5568 = vdwg.mxu0
        %v5569 = vadd.f32 %v5375, %v5523
        %v5570 = vadd.f32 %v5376, %v5525
        %v5571 = vadd.f32 %v5377, %v5529
        %v5572 = vadd.f32 %v5378, %v5531
        %v5573 = vadd.f32 %v5379, %v5535
        %v5574 = vadd.f32 %v5380, %v5537
        %v5575 = vadd.f32 %v5381, %v5541
        %v5576 = vadd.f32 %v5382, %v5543
        %v5577 = vadd.f32 %v5383, %v5547
        %v5578 = vadd.f32 %v5384, %v5549
        %v5579 = vadd.f32 %v5385, %v5553
        %v5580 = vadd.f32 %v5386, %v5555
        %v5581 = vadd.f32 %v5387, %v5559
        %v5582 = vadd.f32 %v5388, %v5561
        %v5583 = vadd.f32 %v5389, %v5565
        %v5584 = vadd.f32 %v5390, %v5567
        %s5585 = scalar_lea.vmem %s3, 336
        %v5586 = vld [vmem:[%s5585] sm:$0xff]
        %v5587 = vld [vmem:[%s5585 + $0x8] sm:$0xff]
        %v5588 = vld [vmem:[%s5585 + $0x10] sm:$0xff]
        %v5589 = vld [vmem:[%s5585 + $0x18] sm:$0xff]
        %v5590 = vld [vmem:[%s5585 + $0x20] sm:$0xff]
        %v5591 = vld [vmem:[%s5585 + $0x28] sm:$0xff]
        %5592 = vrot.lane.b32.xlu0 %v4284, 112
        %v5593 = vpop.permute.xlu0 %5592
        %5594 = vrot.lane.b32.xlu0 %v4286, 112
        %v5595 = vpop.permute.xlu0 %5594
        %5596 = vrot.lane.b32.xlu0 %v4288, 112
        %v5597 = vpop.permute.xlu0 %5596
        %5598 = vrot.lane.b32.xlu0 %v4285, 112
        %v5599 = vpop.permute.xlu0 %5598
        %5600 = vrot.lane.b32.xlu0 %v4287, 112
        %v5601 = vpop.permute.xlu0 %5600
        %5602 = vrot.lane.b32.xlu0 %v4289, 112
        %v5603 = vpop.permute.xlu0 %5602
        %vm5604 = vcmp.lt.s32.totalorder %v4309, 112
        %v5605 = vsel %vm5604, %v5593, %v5599
        %v5606 = vsel %vm5604, %v5595, %v5601
        %v5607 = vsel %vm5604, %v5597, %v5603
        %v5608 = vsel %vm5604, %v5599, %v5593
        %v5609 = vsel %vm5604, %v5601, %v5595
        %v5610 = vsel %vm5604, %v5603, %v5597
        %v5611 = vmul.f32 %v5586, %v5605
        %v5612 = vmul.f32 %v5587, %v5608
        %v5613 = vmul.f32 %v5588, %v5606
        %v5614 = vmul.f32 %v5589, %v5609
        %v5615 = vmul.f32 %v5590, %v5607
        %v5616 = vmul.f32 %v5591, %v5610
        %s5617 = scalar_lea.vmem %s1, 448
        %v5618 = vld [vmem:[%s5617] sm:$0xff]
        %v5619 = vld [vmem:[%s5617 + $0x8] sm:$0xff]
        %v5620 = vld [vmem:[%s5617 + $0x10] sm:$0xff]
        %v5621 = vld [vmem:[%s5617 + $0x18] sm:$0xff]
        %v5622 = vld [vmem:[%s5617 + $0x20] sm:$0xff]
        %v5623 = vld [vmem:[%s5617 + $0x28] sm:$0xff]
        %v5624 = vld [vmem:[%s5617 + $0x30] sm:$0xff]
        %v5625 = vld [vmem:[%s5617 + $0x38] sm:$0xff]
        %v5627 = vsel %vm4372, %v5618, 0
        %v5630 = vsel %vm4372, %v5619, 0
        %v5633 = vsel %vm4372, %v5620, 0
        %v5636 = vsel %vm4372, %v5621, 0
        %v5639 = vsel %vm4372, %v5622, 0
        %v5642 = vsel %vm4372, %v5623, 0
        %v5645 = vsel %vm4372, %v5624, 0
        %v5648 = vsel %vm4372, %v5625, 0
        %5650 = vmatprep.subr.mxu0 0.0
        %5651 = vmatpush1.msra.mxu0 0.0
        %5652 = vmatprep.subr.mxu0 0.0
        %5653 = vmatpush1.msra.mxu0 0.0
        %5654 = vmatprep.subr.mxu0 0.0
        %5655 = vmatpush1.msra.mxu0 0.0
        %5656 = vmatprep.subr.mxu0 0.0
        %5657 = vmatpush1.msra.mxu0 0.0
        %5658 = vmatprep.subr.mxu0 0.0
        %5659 = vmatpush1.msra.mxu0 0.0
        %5660 = vmatprep.subr.mxu0 0.0
        %5661 = vmatpush1.msra.mxu0 0.0
        %5662 = vmatprep.subr.mxu0 0.0
        %5663 = vmatpush1.msra.mxu0 0.0
        %5664 = vmatprep.subr.mxu0 0.0
        %5665 = vmatpush1.msra.mxu0 0.0
        %5666 = vmatprep.subr.mxu0 0.0
        %5667 = vmatpush1.msra.mxu0 0.0
        %5668 = vmatprep.subr.mxu0 0.0
        %5669 = vmatpush1.msra.mxu0 0.0
        %5670 = vmatprep.subr.mxu0 0.0
        %5671 = vmatpush1.msra.mxu0 0.0
        %5672 = vmatprep.subr.mxu0 0.0
        %5673 = vmatpush1.msra.mxu0 0.0
        %5674 = vmatprep.subr.mxu0 0.0
        %5675 = vmatpush1.msra.mxu0 0.0
        %5676 = vmatprep.subr.mxu0 %v5616
        %5677 = vmatpush1.msra.mxu0 %v5615
        %5678 = vmatprep.subr.mxu0 %v5614
        %5679 = vmatpush1.msra.mxu0 %v5613
        %5680 = vmatprep.subr.mxu0 %v5612
        %5681 = vmatpush1.msra.mxu0 %v5611
        %5682 = vmatprep.subr.mxu0 0.0
        %5683 = vmatpush2.msra.mxu0 0.0
        %5684 = vmatprep.subr.mxu0 0.0
        %5685 = vmatpush2.msra.mxu0 0.0
        %5686 = vmatprep.subr.mxu0 0.0
        %5687 = vmatpush2.msra.mxu0 0.0
        %5688 = vmatprep.subr.mxu0 0.0
        %5689 = vmatpush2.msra.mxu0 0.0
        %5690 = vmatprep.subr.mxu0 0.0
        %5691 = vmatpush2.msra.mxu0 0.0
        %5692 = vmatprep.subr.mxu0 0.0
        %5693 = vmatpush2.msra.mxu0 0.0
        %5694 = vmatprep.subr.mxu0 0.0
        %5695 = vmatpush2.msra.mxu0 0.0
        %5696 = vmatprep.subr.mxu0 0.0
        %5697 = vmatpush2.msra.mxu0 0.0
        %5698 = vmatprep.subr.mxu0 0.0
        %5699 = vmatpush2.msra.mxu0 0.0
        %5700 = vmatprep.subr.mxu0 0.0
        %5701 = vmatpush2.msra.mxu0 0.0
        %5702 = vmatprep.subr.mxu0 0.0
        %5703 = vmatpush2.msra.mxu0 0.0
        %5704 = vmatprep.subr.mxu0 0.0
        %5705 = vmatpush2.msra.mxu0 0.0
        %5706 = vmatprep.subr.mxu0 0.0
        %5707 = vmatpush2.msra.mxu0 0.0
        %5708 = vmatprep.subr.mxu0 0.0
        %5709 = vmatpush2.msra.mxu0 0.0
        %5710 = vmatprep.subr.mxu0 0.0
        %5711 = vmatpush2.msra.mxu0 0.0
        %5712 = vmatprep.subr.mxu0 0.0
        %5713 = vmatpush2.msra.mxu0 0.0
        %5714 = vmatprep.mubr.f32.mxu0 0.0
        %5715 = vmatmul.mubr.f32.gmra.mxu0 %v5627
        %v5716 = vpop.f32.mrf.mxu0
        %v5717 = vadd.f32 0.0, %v5716
        %v5718 = vpop.f32.mrf.mxu0
        %v5719 = vadd.f32 0.0, %v5718
        %5720 = vmatprep.mubr.f32.mxu0 0.0
        %5721 = vmatmul.mubr.f32.gmra.mxu0 %v5630
        %v5722 = vpop.f32.mrf.mxu0
        %v5723 = vadd.f32 0.0, %v5722
        %v5724 = vpop.f32.mrf.mxu0
        %v5725 = vadd.f32 0.0, %v5724
        %5726 = vmatprep.mubr.f32.mxu0 0.0
        %5727 = vmatmul.mubr.f32.gmra.mxu0 %v5633
        %v5728 = vpop.f32.mrf.mxu0
        %v5729 = vadd.f32 0.0, %v5728
        %v5730 = vpop.f32.mrf.mxu0
        %v5731 = vadd.f32 0.0, %v5730
        %5732 = vmatprep.mubr.f32.mxu0 0.0
        %5733 = vmatmul.mubr.f32.gmra.mxu0 %v5636
        %v5734 = vpop.f32.mrf.mxu0
        %v5735 = vadd.f32 0.0, %v5734
        %v5736 = vpop.f32.mrf.mxu0
        %v5737 = vadd.f32 0.0, %v5736
        %5738 = vmatprep.mubr.f32.mxu0 0.0
        %5739 = vmatmul.mubr.f32.gmra.mxu0 %v5639
        %v5740 = vpop.f32.mrf.mxu0
        %v5741 = vadd.f32 0.0, %v5740
        %v5742 = vpop.f32.mrf.mxu0
        %v5743 = vadd.f32 0.0, %v5742
        %5744 = vmatprep.mubr.f32.mxu0 0.0
        %5745 = vmatmul.mubr.f32.gmra.mxu0 %v5642
        %v5746 = vpop.f32.mrf.mxu0
        %v5747 = vadd.f32 0.0, %v5746
        %v5748 = vpop.f32.mrf.mxu0
        %v5749 = vadd.f32 0.0, %v5748
        %5750 = vmatprep.mubr.f32.mxu0 0.0
        %5751 = vmatmul.mubr.f32.gmra.mxu0 %v5645
        %v5752 = vpop.f32.mrf.mxu0
        %v5753 = vadd.f32 0.0, %v5752
        %v5754 = vpop.f32.mrf.mxu0
        %v5755 = vadd.f32 0.0, %v5754
        %5756 = vmatprep.mubr.f32.mxu0 0.0
        %5757 = vmatmul.mubr.f32.gmra.mxu0 %v5648
        %v5758 = vpop.f32.mrf.mxu0
        %v5759 = vadd.f32 0.0, %v5758
        %v5760 = vpop.f32.mrf.mxu0
        %v5761 = vadd.f32 0.0, %v5760
        %5762 = vdwg.mxu0
        %v5763 = vadd.f32 %v5569, %v5717
        %v5764 = vadd.f32 %v5570, %v5719
        %v5765 = vadd.f32 %v5571, %v5723
        %v5766 = vadd.f32 %v5572, %v5725
        %v5767 = vadd.f32 %v5573, %v5729
        %v5768 = vadd.f32 %v5574, %v5731
        %v5769 = vadd.f32 %v5575, %v5735
        %v5770 = vadd.f32 %v5576, %v5737
        %v5771 = vadd.f32 %v5577, %v5741
        %v5772 = vadd.f32 %v5578, %v5743
        %v5773 = vadd.f32 %v5579, %v5747
        %v5774 = vadd.f32 %v5580, %v5749
        %v5775 = vadd.f32 %v5581, %v5753
        %v5776 = vadd.f32 %v5582, %v5755
        %v5777 = vadd.f32 %v5583, %v5759
        %v5778 = vadd.f32 %v5584, %v5761
        %s5779 = scalar_lea.vmem %s3, 384
        %v5780 = vld [vmem:[%s5779] sm:$0xff]
        %v5781 = vld [vmem:[%s5779 + $0x8] sm:$0xff]
        %v5782 = vld [vmem:[%s5779 + $0x10] sm:$0xff]
        %v5783 = vld [vmem:[%s5779 + $0x18] sm:$0xff]
        %v5784 = vld [vmem:[%s5779 + $0x20] sm:$0xff]
        %v5785 = vld [vmem:[%s5779 + $0x28] sm:$0xff]
        %5786 = vrot.lane.b32.xlu0 %v4284, 111
        %v5787 = vpop.permute.xlu0 %5786
        %5788 = vrot.lane.b32.xlu0 %v4286, 111
        %v5789 = vpop.permute.xlu0 %5788
        %5790 = vrot.lane.b32.xlu0 %v4288, 111
        %v5791 = vpop.permute.xlu0 %5790
        %5792 = vrot.lane.b32.xlu0 %v4285, 111
        %v5793 = vpop.permute.xlu0 %5792
        %5794 = vrot.lane.b32.xlu0 %v4287, 111
        %v5795 = vpop.permute.xlu0 %5794
        %5796 = vrot.lane.b32.xlu0 %v4289, 111
        %v5797 = vpop.permute.xlu0 %5796
        %vm5798 = vcmp.lt.s32.totalorder %v4309, 111
        %v5799 = vsel %vm5798, %v5787, %v5793
        %v5800 = vsel %vm5798, %v5789, %v5795
        %v5801 = vsel %vm5798, %v5791, %v5797
        %v5802 = vsel %vm5798, %v5793, %v5787
        %v5803 = vsel %vm5798, %v5795, %v5789
        %v5804 = vsel %vm5798, %v5797, %v5791
        %v5805 = vmul.f32 %v5780, %v5799
        %v5806 = vmul.f32 %v5781, %v5802
        %v5807 = vmul.f32 %v5782, %v5800
        %v5808 = vmul.f32 %v5783, %v5803
        %v5809 = vmul.f32 %v5784, %v5801
        %v5810 = vmul.f32 %v5785, %v5804
        %s5811 = scalar_lea.vmem %s1, 512
        %v5812 = vld [vmem:[%s5811] sm:$0xff]
        %v5813 = vld [vmem:[%s5811 + $0x8] sm:$0xff]
        %v5814 = vld [vmem:[%s5811 + $0x10] sm:$0xff]
        %v5815 = vld [vmem:[%s5811 + $0x18] sm:$0xff]
        %v5816 = vld [vmem:[%s5811 + $0x20] sm:$0xff]
        %v5817 = vld [vmem:[%s5811 + $0x28] sm:$0xff]
        %v5818 = vld [vmem:[%s5811 + $0x30] sm:$0xff]
        %v5819 = vld [vmem:[%s5811 + $0x38] sm:$0xff]
        %v5821 = vsel %vm4372, %v5812, 0
        %v5824 = vsel %vm4372, %v5813, 0
        %v5827 = vsel %vm4372, %v5814, 0
        %v5830 = vsel %vm4372, %v5815, 0
        %v5833 = vsel %vm4372, %v5816, 0
        %v5836 = vsel %vm4372, %v5817, 0
        %v5839 = vsel %vm4372, %v5818, 0
        %v5842 = vsel %vm4372, %v5819, 0
        %5844 = vmatprep.subr.mxu0 0.0
        %5845 = vmatpush1.msra.mxu0 0.0
        %5846 = vmatprep.subr.mxu0 0.0
        %5847 = vmatpush1.msra.mxu0 0.0
        %5848 = vmatprep.subr.mxu0 0.0
        %5849 = vmatpush1.msra.mxu0 0.0
        %5850 = vmatprep.subr.mxu0 0.0
        %5851 = vmatpush1.msra.mxu0 0.0
        %5852 = vmatprep.subr.mxu0 0.0
        %5853 = vmatpush1.msra.mxu0 0.0
        %5854 = vmatprep.subr.mxu0 0.0
        %5855 = vmatpush1.msra.mxu0 0.0
        %5856 = vmatprep.subr.mxu0 0.0
        %5857 = vmatpush1.msra.mxu0 0.0
        %5858 = vmatprep.subr.mxu0 0.0
        %5859 = vmatpush1.msra.mxu0 0.0
        %5860 = vmatprep.subr.mxu0 0.0
        %5861 = vmatpush1.msra.mxu0 0.0
        %5862 = vmatprep.subr.mxu0 0.0
        %5863 = vmatpush1.msra.mxu0 0.0
        %5864 = vmatprep.subr.mxu0 0.0
        %5865 = vmatpush1.msra.mxu0 0.0
        %5866 = vmatprep.subr.mxu0 0.0
        %5867 = vmatpush1.msra.mxu0 0.0
        %5868 = vmatprep.subr.mxu0 0.0
        %5869 = vmatpush1.msra.mxu0 0.0
        %5870 = vmatprep.subr.mxu0 %v5810
        %5871 = vmatpush1.msra.mxu0 %v5809
        %5872 = vmatprep.subr.mxu0 %v5808
        %5873 = vmatpush1.msra.mxu0 %v5807
        %5874 = vmatprep.subr.mxu0 %v5806
        %5875 = vmatpush1.msra.mxu0 %v5805
        %5876 = vmatprep.subr.mxu0 0.0
        %5877 = vmatpush2.msra.mxu0 0.0
        %5878 = vmatprep.subr.mxu0 0.0
        %5879 = vmatpush2.msra.mxu0 0.0
        %5880 = vmatprep.subr.mxu0 0.0
        %5881 = vmatpush2.msra.mxu0 0.0
        %5882 = vmatprep.subr.mxu0 0.0
        %5883 = vmatpush2.msra.mxu0 0.0
        %5884 = vmatprep.subr.mxu0 0.0
        %5885 = vmatpush2.msra.mxu0 0.0
        %5886 = vmatprep.subr.mxu0 0.0
        %5887 = vmatpush2.msra.mxu0 0.0
        %5888 = vmatprep.subr.mxu0 0.0
        %5889 = vmatpush2.msra.mxu0 0.0
        %5890 = vmatprep.subr.mxu0 0.0
        %5891 = vmatpush2.msra.mxu0 0.0
        %5892 = vmatprep.subr.mxu0 0.0
        %5893 = vmatpush2.msra.mxu0 0.0
        %5894 = vmatprep.subr.mxu0 0.0
        %5895 = vmatpush2.msra.mxu0 0.0
        %5896 = vmatprep.subr.mxu0 0.0
        %5897 = vmatpush2.msra.mxu0 0.0
        %5898 = vmatprep.subr.mxu0 0.0
        %5899 = vmatpush2.msra.mxu0 0.0
        %5900 = vmatprep.subr.mxu0 0.0
        %5901 = vmatpush2.msra.mxu0 0.0
        %5902 = vmatprep.subr.mxu0 0.0
        %5903 = vmatpush2.msra.mxu0 0.0
        %5904 = vmatprep.subr.mxu0 0.0
        %5905 = vmatpush2.msra.mxu0 0.0
        %5906 = vmatprep.subr.mxu0 0.0
        %5907 = vmatpush2.msra.mxu0 0.0
        %5908 = vmatprep.mubr.f32.mxu0 0.0
        %5909 = vmatmul.mubr.f32.gmra.mxu0 %v5821
        %v5910 = vpop.f32.mrf.mxu0
        %v5911 = vadd.f32 0.0, %v5910
        %v5912 = vpop.f32.mrf.mxu0
        %v5913 = vadd.f32 0.0, %v5912
        %5914 = vmatprep.mubr.f32.mxu0 0.0
        %5915 = vmatmul.mubr.f32.gmra.mxu0 %v5824
        %v5916 = vpop.f32.mrf.mxu0
        %v5917 = vadd.f32 0.0, %v5916
        %v5918 = vpop.f32.mrf.mxu0
        %v5919 = vadd.f32 0.0, %v5918
        %5920 = vmatprep.mubr.f32.mxu0 0.0
        %5921 = vmatmul.mubr.f32.gmra.mxu0 %v5827
        %v5922 = vpop.f32.mrf.mxu0
        %v5923 = vadd.f32 0.0, %v5922
        %v5924 = vpop.f32.mrf.mxu0
        %v5925 = vadd.f32 0.0, %v5924
        %5926 = vmatprep.mubr.f32.mxu0 0.0
        %5927 = vmatmul.mubr.f32.gmra.mxu0 %v5830
        %v5928 = vpop.f32.mrf.mxu0
        %v5929 = vadd.f32 0.0, %v5928
        %v5930 = vpop.f32.mrf.mxu0
        %v5931 = vadd.f32 0.0, %v5930
        %5932 = vmatprep.mubr.f32.mxu0 0.0
        %5933 = vmatmul.mubr.f32.gmra.mxu0 %v5833
        %v5934 = vpop.f32.mrf.mxu0
        %v5935 = vadd.f32 0.0, %v5934
        %v5936 = vpop.f32.mrf.mxu0
        %v5937 = vadd.f32 0.0, %v5936
        %5938 = vmatprep.mubr.f32.mxu0 0.0
        %5939 = vmatmul.mubr.f32.gmra.mxu0 %v5836
        %v5940 = vpop.f32.mrf.mxu0
        %v5941 = vadd.f32 0.0, %v5940
        %v5942 = vpop.f32.mrf.mxu0
        %v5943 = vadd.f32 0.0, %v5942
        %5944 = vmatprep.mubr.f32.mxu0 0.0
        %5945 = vmatmul.mubr.f32.gmra.mxu0 %v5839
        %v5946 = vpop.f32.mrf.mxu0
        %v5947 = vadd.f32 0.0, %v5946
        %v5948 = vpop.f32.mrf.mxu0
        %v5949 = vadd.f32 0.0, %v5948
        %5950 = vmatprep.mubr.f32.mxu0 0.0
        %5951 = vmatmul.mubr.f32.gmra.mxu0 %v5842
        %v5952 = vpop.f32.mrf.mxu0
        %v5953 = vadd.f32 0.0, %v5952
        %v5954 = vpop.f32.mrf.mxu0
        %v5955 = vadd.f32 0.0, %v5954
        %5956 = vdwg.mxu0
        %v5957 = vadd.f32 %v5763, %v5911
        %v5958 = vadd.f32 %v5764, %v5913
        %v5959 = vadd.f32 %v5765, %v5917
        %v5960 = vadd.f32 %v5766, %v5919
        %v5961 = vadd.f32 %v5767, %v5923
        %v5962 = vadd.f32 %v5768, %v5925
        %v5963 = vadd.f32 %v5769, %v5929
        %v5964 = vadd.f32 %v5770, %v5931
        %v5965 = vadd.f32 %v5771, %v5935
        %v5966 = vadd.f32 %v5772, %v5937
        %v5967 = vadd.f32 %v5773, %v5941
        %v5968 = vadd.f32 %v5774, %v5943
        %v5969 = vadd.f32 %v5775, %v5947
        %v5970 = vadd.f32 %v5776, %v5949
        %v5971 = vadd.f32 %v5777, %v5953
        %v5972 = vadd.f32 %v5778, %v5955
        %v5973 = vmax.f32 %v5957, 0.0
        %v5974 = vmax.f32 %v5958, 0.0
        %v5975 = vmax.f32 %v5959, 0.0
        %v5976 = vmax.f32 %v5960, 0.0
        %v5977 = vmax.f32 %v5961, 0.0
        %v5978 = vmax.f32 %v5962, 0.0
        %v5979 = vmax.f32 %v5963, 0.0
        %v5980 = vmax.f32 %v5964, 0.0
        %v5981 = vmax.f32 %v5965, 0.0
        %v5982 = vmax.f32 %v5966, 0.0
        %v5983 = vmax.f32 %v5967, 0.0
        %v5984 = vmax.f32 %v5968, 0.0
        %v5985 = vmax.f32 %v5969, 0.0
        %v5986 = vmax.f32 %v5970, 0.0
        %v5987 = vmax.f32 %v5971, 0.0
        %v5988 = vmax.f32 %v5972, 0.0
        %v5989 = vld [vmem:[%s4] sm:$0xff]
        %v5990 = vld [vmem:[%s4 + $0x8] sm:$0xff]
        %v5991 = vld [vmem:[%s4 + $0x10] sm:$0xff]
        %v5992 = vld [vmem:[%s4 + $0x18] sm:$0xff]
        %v5993 = vld [vmem:[%s4 + $0x20] sm:$0xff]
        %v5994 = vld [vmem:[%s4 + $0x28] sm:$0xff]
        %v5995 = vld [vmem:[%s4 + $0x30] sm:$0xff]
        %v5996 = vld [vmem:[%s4 + $0x38] sm:$0xff]
        %v5997 = vld [vmem:[%s6] sm:$0xff]
        %v5998 = vld [vmem:[%s6 + $0x8] sm:$0xff]
        %v5999 = vld [vmem:[%s6 + $0x10] sm:$0xff]
        %v6000 = vld [vmem:[%s6 + $0x18] sm:$0xff]
        %v6001 = vld [vmem:[%s6 + $0x20] sm:$0xff]
        %v6002 = vld [vmem:[%s6 + $0x28] sm:$0xff]
        %v6003 = vld [vmem:[%s6 + $0x30] sm:$0xff]
        %v6004 = vld [vmem:[%s6 + $0x38] sm:$0xff]
        %v6005 = vadd.f32 %v5973, %v5974
        %6006 = vadd.xlane.f32.xlu0 %v6005
        %v6007 = vpop.xlane.xlu0 %6006
        %v6008 = vadd.f32 %v5975, %v5976
        %6009 = vadd.xlane.f32.xlu0 %v6008
        %v6010 = vpop.xlane.xlu0 %6009
        %v6011 = vadd.f32 %v5977, %v5978
        %6012 = vadd.xlane.f32.xlu0 %v6011
        %v6013 = vpop.xlane.xlu0 %6012
        %v6014 = vadd.f32 %v5979, %v5980
        %6015 = vadd.xlane.f32.xlu0 %v6014
        %v6016 = vpop.xlane.xlu0 %6015
        %v6017 = vadd.f32 %v5981, %v5982
        %6018 = vadd.xlane.f32.xlu0 %v6017
        %v6019 = vpop.xlane.xlu0 %6018
        %v6020 = vadd.f32 %v5983, %v5984
        %6021 = vadd.xlane.f32.xlu0 %v6020
        %v6022 = vpop.xlane.xlu0 %6021
        %v6023 = vadd.f32 %v5985, %v5986
        %6024 = vadd.xlane.f32.xlu0 %v6023
        %v6025 = vpop.xlane.xlu0 %6024
        %v6026 = vadd.f32 %v5987, %v5988
        %6027 = vadd.xlane.f32.xlu0 %v6026
        %v6028 = vpop.xlane.xlu0 %6027
        %vm6029 = vcmask 523264
        %v6031 = vsel %vm6029, %v5989, 0
        %v6034 = vsel %vm6029, %v5990, 0
        %v6037 = vsel %vm6029, %v5991, 0
        %v6040 = vsel %vm6029, %v5992, 0
        %v6043 = vsel %vm6029, %v5993, 0
        %v6046 = vsel %vm6029, %v5994, 0
        %v6049 = vsel %vm6029, %v5995, 0
        %v6052 = vsel %vm6029, %v5996, 0
        %6054 = vmatprep.subr.mxu0 0.0
        %6055 = vmatpush1.msra.mxu0 0.0
        %6056 = vmatprep.subr.mxu0 0.0
        %6057 = vmatpush1.msra.mxu0 0.0
        %6058 = vmatprep.subr.mxu0 0.0
        %6059 = vmatpush1.msra.mxu0 0.0
        %6060 = vmatprep.subr.mxu0 0.0
        %6061 = vmatpush1.msra.mxu0 0.0
        %6062 = vmatprep.subr.mxu0 0.0
        %6063 = vmatpush1.msra.mxu0 0.0
        %6064 = vmatprep.subr.mxu0 0.0
        %6065 = vmatpush1.msra.mxu0 0.0
        %6066 = vmatprep.subr.mxu0 0.0
        %6067 = vmatpush1.msra.mxu0 0.0
        %6068 = vmatprep.subr.mxu0 0.0
        %6069 = vmatpush1.msra.mxu0 0.0
        %6070 = vmatprep.subr.mxu0 0.0
        %6071 = vmatpush1.msra.mxu0 %v6028
        %6072 = vmatprep.subr.mxu0 0.0
        %6073 = vmatpush1.msra.mxu0 %v6025
        %6074 = vmatprep.subr.mxu0 0.0
        %6075 = vmatpush1.msra.mxu0 %v6022
        %6076 = vmatprep.subr.mxu0 0.0
        %6077 = vmatpush1.msra.mxu0 %v6019
        %6078 = vmatprep.subr.mxu0 0.0
        %6079 = vmatpush1.msra.mxu0 %v6016
        %6080 = vmatprep.subr.mxu0 0.0
        %6081 = vmatpush1.msra.mxu0 %v6013
        %6082 = vmatprep.subr.mxu0 0.0
        %6083 = vmatpush1.msra.mxu0 %v6010
        %6084 = vmatprep.subr.mxu0 0.0
        %6085 = vmatpush1.msra.mxu0 %v6007
        %6086 = vmatprep.subr.mxu0 0.0
        %6087 = vmatpush2.msra.mxu0 0.0
        %6088 = vmatprep.subr.mxu0 0.0
        %6089 = vmatpush2.msra.mxu0 0.0
        %6090 = vmatprep.subr.mxu0 0.0
        %6091 = vmatpush2.msra.mxu0 0.0
        %6092 = vmatprep.subr.mxu0 0.0
        %6093 = vmatpush2.msra.mxu0 0.0
        %6094 = vmatprep.subr.mxu0 0.0
        %6095 = vmatpush2.msra.mxu0 0.0
        %6096 = vmatprep.subr.mxu0 0.0
        %6097 = vmatpush2.msra.mxu0 0.0
        %6098 = vmatprep.subr.mxu0 0.0
        %6099 = vmatpush2.msra.mxu0 0.0
        %6100 = vmatprep.subr.mxu0 0.0
        %6101 = vmatpush2.msra.mxu0 0.0
        %6102 = vmatprep.subr.mxu0 0.0
        %6103 = vmatpush2.msra.mxu0 0.0
        %6104 = vmatprep.subr.mxu0 0.0
        %6105 = vmatpush2.msra.mxu0 0.0
        %6106 = vmatprep.subr.mxu0 0.0
        %6107 = vmatpush2.msra.mxu0 0.0
        %6108 = vmatprep.subr.mxu0 0.0
        %6109 = vmatpush2.msra.mxu0 0.0
        %6110 = vmatprep.subr.mxu0 0.0
        %6111 = vmatpush2.msra.mxu0 0.0
        %6112 = vmatprep.subr.mxu0 0.0
        %6113 = vmatpush2.msra.mxu0 0.0
        %6114 = vmatprep.subr.mxu0 0.0
        %6115 = vmatpush2.msra.mxu0 0.0
        %6116 = vmatprep.subr.mxu0 0.0
        %6117 = vmatpush2.msra.mxu0 0.0
        %6118 = vmatprep.mubr.f32.mxu0 0.0
        %6119 = vmatmul.mubr.f32.gmra.mxu0 %v6031
        %v6120 = vpop.f32.mrf.mxu0
        %v6121 = vadd.f32 0.0, %v6120
        %v6122 = vpop.f32.mrf.mxu0
        %6123 = vmatprep.mubr.f32.mxu0 0.0
        %6124 = vmatmul.mubr.f32.gmra.mxu0 %v6034
        %v6125 = vpop.f32.mrf.mxu0
        %v6126 = vadd.f32 0.0, %v6125
        %v6127 = vpop.f32.mrf.mxu0
        %6128 = vmatprep.mubr.f32.mxu0 0.0
        %6129 = vmatmul.mubr.f32.gmra.mxu0 %v6037
        %v6130 = vpop.f32.mrf.mxu0
        %v6131 = vadd.f32 0.0, %v6130
        %v6132 = vpop.f32.mrf.mxu0
        %6133 = vmatprep.mubr.f32.mxu0 0.0
        %6134 = vmatmul.mubr.f32.gmra.mxu0 %v6040
        %v6135 = vpop.f32.mrf.mxu0
        %v6136 = vadd.f32 0.0, %v6135
        %v6137 = vpop.f32.mrf.mxu0
        %6138 = vmatprep.mubr.f32.mxu0 0.0
        %6139 = vmatmul.mubr.f32.gmra.mxu0 %v6043
        %v6140 = vpop.f32.mrf.mxu0
        %v6141 = vadd.f32 0.0, %v6140
        %v6142 = vpop.f32.mrf.mxu0
        %6143 = vmatprep.mubr.f32.mxu0 0.0
        %6144 = vmatmul.mubr.f32.gmra.mxu0 %v6046
        %v6145 = vpop.f32.mrf.mxu0
        %v6146 = vadd.f32 0.0, %v6145
        %v6147 = vpop.f32.mrf.mxu0
        %6148 = vmatprep.mubr.f32.mxu0 0.0
        %6149 = vmatmul.mubr.f32.gmra.mxu0 %v6049
        %v6150 = vpop.f32.mrf.mxu0
        %v6151 = vadd.f32 0.0, %v6150
        %v6152 = vpop.f32.mrf.mxu0
        %6153 = vmatprep.mubr.f32.mxu0 0.0
        %6154 = vmatmul.mubr.f32.gmra.mxu0 %v6052
        %v6155 = vpop.f32.mrf.mxu0
        %v6156 = vadd.f32 0.0, %v6155
        %v6157 = vpop.f32.mrf.mxu0
        %6158 = vdwg.mxu0
        %v6159 = vmul.f32 %v5973, %v5973
        %v6160 = vmul.f32 %v5974, %v5974
        %v6161 = vmul.f32 %v5975, %v5975
        %v6162 = vmul.f32 %v5976, %v5976
        %v6163 = vmul.f32 %v5977, %v5977
        %v6164 = vmul.f32 %v5978, %v5978
        %v6165 = vmul.f32 %v5979, %v5979
        %v6166 = vmul.f32 %v5980, %v5980
        %v6167 = vmul.f32 %v5981, %v5981
        %v6168 = vmul.f32 %v5982, %v5982
        %v6169 = vmul.f32 %v5983, %v5983
        %v6170 = vmul.f32 %v5984, %v5984
        %v6171 = vmul.f32 %v5985, %v5985
        %v6172 = vmul.f32 %v5986, %v5986
        %v6173 = vmul.f32 %v5987, %v5987
        %v6174 = vmul.f32 %v5988, %v5988
        %v6175 = vadd.f32 %v6159, %v6160
        %6176 = vadd.xlane.f32.xlu0 %v6175
        %v6177 = vpop.xlane.xlu0 %6176
        %v6178 = vadd.f32 %v6161, %v6162
        %6179 = vadd.xlane.f32.xlu0 %v6178
        %v6180 = vpop.xlane.xlu0 %6179
        %v6181 = vadd.f32 %v6163, %v6164
        %6182 = vadd.xlane.f32.xlu0 %v6181
        %v6183 = vpop.xlane.xlu0 %6182
        %v6184 = vadd.f32 %v6165, %v6166
        %6185 = vadd.xlane.f32.xlu0 %v6184
        %v6186 = vpop.xlane.xlu0 %6185
        %v6187 = vadd.f32 %v6167, %v6168
        %6188 = vadd.xlane.f32.xlu0 %v6187
        %v6189 = vpop.xlane.xlu0 %6188
        %v6190 = vadd.f32 %v6169, %v6170
        %6191 = vadd.xlane.f32.xlu0 %v6190
        %v6192 = vpop.xlane.xlu0 %6191
        %v6193 = vadd.f32 %v6171, %v6172
        %6194 = vadd.xlane.f32.xlu0 %v6193
        %v6195 = vpop.xlane.xlu0 %6194
        %v6196 = vadd.f32 %v6173, %v6174
        %6197 = vadd.xlane.f32.xlu0 %v6196
        %v6198 = vpop.xlane.xlu0 %6197
        %6199 = vmatprep.subr.mxu0 0.0
        %6200 = vmatpush1.msra.mxu0 0.0
        %6201 = vmatprep.subr.mxu0 0.0
        %6202 = vmatpush1.msra.mxu0 0.0
        %6203 = vmatprep.subr.mxu0 0.0
        %6204 = vmatpush1.msra.mxu0 0.0
        %6205 = vmatprep.subr.mxu0 0.0
        %6206 = vmatpush1.msra.mxu0 0.0
        %6207 = vmatprep.subr.mxu0 0.0
        %6208 = vmatpush1.msra.mxu0 0.0
        %6209 = vmatprep.subr.mxu0 0.0
        %6210 = vmatpush1.msra.mxu0 0.0
        %6211 = vmatprep.subr.mxu0 0.0
        %6212 = vmatpush1.msra.mxu0 0.0
        %6213 = vmatprep.subr.mxu0 0.0
        %6214 = vmatpush1.msra.mxu0 0.0
        %6215 = vmatprep.subr.mxu0 0.0
        %6216 = vmatpush1.msra.mxu0 %v6198
        %6217 = vmatprep.subr.mxu0 0.0
        %6218 = vmatpush1.msra.mxu0 %v6195
        %6219 = vmatprep.subr.mxu0 0.0
        %6220 = vmatpush1.msra.mxu0 %v6192
        %6221 = vmatprep.subr.mxu0 0.0
        %6222 = vmatpush1.msra.mxu0 %v6189
        %6223 = vmatprep.subr.mxu0 0.0
        %6224 = vmatpush1.msra.mxu0 %v6186
        %6225 = vmatprep.subr.mxu0 0.0
        %6226 = vmatpush1.msra.mxu0 %v6183
        %6227 = vmatprep.subr.mxu0 0.0
        %6228 = vmatpush1.msra.mxu0 %v6180
        %6229 = vmatprep.subr.mxu0 0.0
        %6230 = vmatpush1.msra.mxu0 %v6177
        %6231 = vmatprep.subr.mxu0 0.0
        %6232 = vmatpush2.msra.mxu0 0.0
        %6233 = vmatprep.subr.mxu0 0.0
        %6234 = vmatpush2.msra.mxu0 0.0
        %6235 = vmatprep.subr.mxu0 0.0
        %6236 = vmatpush2.msra.mxu0 0.0
        %6237 = vmatprep.subr.mxu0 0.0
        %6238 = vmatpush2.msra.mxu0 0.0
        %6239 = vmatprep.subr.mxu0 0.0
        %6240 = vmatpush2.msra.mxu0 0.0
        %6241 = vmatprep.subr.mxu0 0.0
        %6242 = vmatpush2.msra.mxu0 0.0
        %6243 = vmatprep.subr.mxu0 0.0
        %6244 = vmatpush2.msra.mxu0 0.0
        %6245 = vmatprep.subr.mxu0 0.0
        %6246 = vmatpush2.msra.mxu0 0.0
        %6247 = vmatprep.subr.mxu0 0.0
        %6248 = vmatpush2.msra.mxu0 0.0
        %6249 = vmatprep.subr.mxu0 0.0
        %6250 = vmatpush2.msra.mxu0 0.0
        %6251 = vmatprep.subr.mxu0 0.0
        %6252 = vmatpush2.msra.mxu0 0.0
        %6253 = vmatprep.subr.mxu0 0.0
        %6254 = vmatpush2.msra.mxu0 0.0
        %6255 = vmatprep.subr.mxu0 0.0
        %6256 = vmatpush2.msra.mxu0 0.0
        %6257 = vmatprep.subr.mxu0 0.0
        %6258 = vmatpush2.msra.mxu0 0.0
        %6259 = vmatprep.subr.mxu0 0.0
        %6260 = vmatpush2.msra.mxu0 0.0
        %6261 = vmatprep.subr.mxu0 0.0
        %6262 = vmatpush2.msra.mxu0 0.0
        %6263 = vmatprep.mubr.f32.mxu0 0.0
        %6264 = vmatmul.mubr.f32.gmra.mxu0 %v6031
        %v6265 = vpop.f32.mrf.mxu0
        %v6266 = vadd.f32 0.0, %v6265
        %v6267 = vpop.f32.mrf.mxu0
        %6268 = vmatprep.mubr.f32.mxu0 0.0
        %6269 = vmatmul.mubr.f32.gmra.mxu0 %v6034
        %v6270 = vpop.f32.mrf.mxu0
        %v6271 = vadd.f32 0.0, %v6270
        %v6272 = vpop.f32.mrf.mxu0
        %6273 = vmatprep.mubr.f32.mxu0 0.0
        %6274 = vmatmul.mubr.f32.gmra.mxu0 %v6037
        %v6275 = vpop.f32.mrf.mxu0
        %v6276 = vadd.f32 0.0, %v6275
        %v6277 = vpop.f32.mrf.mxu0
        %6278 = vmatprep.mubr.f32.mxu0 0.0
        %6279 = vmatmul.mubr.f32.gmra.mxu0 %v6040
        %v6280 = vpop.f32.mrf.mxu0
        %v6281 = vadd.f32 0.0, %v6280
        %v6282 = vpop.f32.mrf.mxu0
        %6283 = vmatprep.mubr.f32.mxu0 0.0
        %6284 = vmatmul.mubr.f32.gmra.mxu0 %v6043
        %v6285 = vpop.f32.mrf.mxu0
        %v6286 = vadd.f32 0.0, %v6285
        %v6287 = vpop.f32.mrf.mxu0
        %6288 = vmatprep.mubr.f32.mxu0 0.0
        %6289 = vmatmul.mubr.f32.gmra.mxu0 %v6046
        %v6290 = vpop.f32.mrf.mxu0
        %v6291 = vadd.f32 0.0, %v6290
        %v6292 = vpop.f32.mrf.mxu0
        %6293 = vmatprep.mubr.f32.mxu0 0.0
        %6294 = vmatmul.mubr.f32.gmra.mxu0 %v6049
        %v6295 = vpop.f32.mrf.mxu0
        %v6296 = vadd.f32 0.0, %v6295
        %v6297 = vpop.f32.mrf.mxu0
        %6298 = vmatprep.mubr.f32.mxu0 0.0
        %6299 = vmatmul.mubr.f32.gmra.mxu0 %v6052
        %v6300 = vpop.f32.mrf.mxu0
        %v6301 = vadd.f32 0.0, %v6300
        %v6302 = vpop.f32.mrf.mxu0
        %6303 = vdwg.mxu0
        %v6304 = vmul.f32 %v6121, %v6121
        %v6305 = vmul.f32 %v6126, %v6126
        %v6306 = vmul.f32 %v6131, %v6131
        %v6307 = vmul.f32 %v6136, %v6136
        %v6308 = vmul.f32 %v6141, %v6141
        %v6309 = vmul.f32 %v6146, %v6146
        %v6310 = vmul.f32 %v6151, %v6151
        %v6311 = vmul.f32 %v6156, %v6156
        %v6312 = vsub.f32 %v6266, %v6304
        %v6313 = vsub.f32 %v6271, %v6305
        %v6314 = vsub.f32 %v6276, %v6306
        %v6315 = vsub.f32 %v6281, %v6307
        %v6316 = vsub.f32 %v6286, %v6308
        %v6317 = vsub.f32 %v6291, %v6309
        %v6318 = vsub.f32 %v6296, %v6310
        %v6319 = vsub.f32 %v6301, %v6311
        %v6320 = vmax.f32 %v6312, 0.0
        %v6321 = vmax.f32 %v6313, 0.0
        %v6322 = vmax.f32 %v6314, 0.0
        %v6323 = vmax.f32 %v6315, 0.0
        %v6324 = vmax.f32 %v6316, 0.0
        %v6325 = vmax.f32 %v6317, 0.0
        %v6326 = vmax.f32 %v6318, 0.0
        %v6327 = vmax.f32 %v6319, 0.0
        %6329 = vset.pattern.permute.xlu0 0
        %6330 = vperm.xlu0 %6329, %v6121
        %v6331 = vpop.permute.xlu0 %6330
        %6334 = vset.pattern.permute.xlu0 0
        %6335 = vperm.xlu0 %6334, %v6126
        %v6336 = vpop.permute.xlu0 %6335
        %6339 = vset.pattern.permute.xlu0 0
        %6340 = vperm.xlu0 %6339, %v6131
        %v6341 = vpop.permute.xlu0 %6340
        %6344 = vset.pattern.permute.xlu0 0
        %6345 = vperm.xlu0 %6344, %v6136
        %v6346 = vpop.permute.xlu0 %6345
        %6349 = vset.pattern.permute.xlu0 0
        %6350 = vperm.xlu0 %6349, %v6141
        %v6351 = vpop.permute.xlu0 %6350
        %6354 = vset.pattern.permute.xlu0 0
        %6355 = vperm.xlu0 %6354, %v6146
        %v6356 = vpop.permute.xlu0 %6355
        %6359 = vset.pattern.permute.xlu0 0
        %6360 = vperm.xlu0 %6359, %v6151
        %v6361 = vpop.permute.xlu0 %6360
        %6364 = vset.pattern.permute.xlu0 0
        %6365 = vperm.xlu0 %6364, %v6156
        %v6366 = vpop.permute.xlu0 %6365
        %v6368 = vsub.f32 %v5973, %v6331
        %v6369 = vsub.f32 %v5974, %v6331
        %v6370 = vsub.f32 %v5975, %v6336
        %v6371 = vsub.f32 %v5976, %v6336
        %v6372 = vsub.f32 %v5977, %v6341
        %v6373 = vsub.f32 %v5978, %v6341
        %v6374 = vsub.f32 %v5979, %v6346
        %v6375 = vsub.f32 %v5980, %v6346
        %v6376 = vsub.f32 %v5981, %v6351
        %v6377 = vsub.f32 %v5982, %v6351
        %v6378 = vsub.f32 %v5983, %v6356
        %v6379 = vsub.f32 %v5984, %v6356
        %v6380 = vsub.f32 %v5985, %v6361
        %v6381 = vsub.f32 %v5986, %v6361
        %v6382 = vsub.f32 %v5987, %v6366
        %v6383 = vsub.f32 %v5988, %v6366
        %v6384 = vadd.f32 %v6320, 1e-05
        %v6385 = vadd.f32 %v6321, 1e-05
        %v6386 = vadd.f32 %v6322, 1e-05
        %v6387 = vadd.f32 %v6323, 1e-05
        %v6388 = vadd.f32 %v6324, 1e-05
        %v6389 = vadd.f32 %v6325, 1e-05
        %v6390 = vadd.f32 %v6326, 1e-05
        %v6391 = vadd.f32 %v6327, 1e-05
        %v6392 = vrsqrt.pop %v6384
        %v6393 = vrsqrt.pop %v6385
        %v6394 = vrsqrt.pop %v6386
        %v6395 = vrsqrt.pop %v6387
        %v6396 = vrsqrt.pop %v6388
        %v6397 = vrsqrt.pop %v6389
        %v6398 = vrsqrt.pop %v6390
        %v6399 = vrsqrt.pop %v6391
        %v6400 = vmul.f32 %v6392, %v5997
        %v6401 = vmul.f32 %v6393, %v5998
        %v6402 = vmul.f32 %v6394, %v5999
        %v6403 = vmul.f32 %v6395, %v6000
        %v6404 = vmul.f32 %v6396, %v6001
        %v6405 = vmul.f32 %v6397, %v6002
        %v6406 = vmul.f32 %v6398, %v6003
        %v6407 = vmul.f32 %v6399, %v6004
        %6409 = vset.pattern.permute.xlu0 0
        %6410 = vperm.xlu0 %6409, %v6400
        %v6411 = vpop.permute.xlu0 %6410
        %6414 = vset.pattern.permute.xlu0 0
        %6415 = vperm.xlu0 %6414, %v6401
        %v6416 = vpop.permute.xlu0 %6415
        %6419 = vset.pattern.permute.xlu0 0
        %6420 = vperm.xlu0 %6419, %v6402
        %v6421 = vpop.permute.xlu0 %6420
        %6424 = vset.pattern.permute.xlu0 0
        %6425 = vperm.xlu0 %6424, %v6403
        %v6426 = vpop.permute.xlu0 %6425
        %6429 = vset.pattern.permute.xlu0 0
        %6430 = vperm.xlu0 %6429, %v6404
        %v6431 = vpop.permute.xlu0 %6430
        %6434 = vset.pattern.permute.xlu0 0
        %6435 = vperm.xlu0 %6434, %v6405
        %v6436 = vpop.permute.xlu0 %6435
        %6439 = vset.pattern.permute.xlu0 0
        %6440 = vperm.xlu0 %6439, %v6406
        %v6441 = vpop.permute.xlu0 %6440
        %6444 = vset.pattern.permute.xlu0 0
        %6445 = vperm.xlu0 %6444, %v6407
        %v6446 = vpop.permute.xlu0 %6445
        %v6448 = vmul.f32 %v6368, %v6411
        %v6449 = vmul.f32 %v6369, %v6411
        %v6450 = vmul.f32 %v6370, %v6416
        %v6451 = vmul.f32 %v6371, %v6416
        %v6452 = vmul.f32 %v6372, %v6421
        %v6453 = vmul.f32 %v6373, %v6421
        %v6454 = vmul.f32 %v6374, %v6426
        %v6455 = vmul.f32 %v6375, %v6426
        %v6456 = vmul.f32 %v6376, %v6431
        %v6457 = vmul.f32 %v6377, %v6431
        %v6458 = vmul.f32 %v6378, %v6436
        %v6459 = vmul.f32 %v6379, %v6436
        %v6460 = vmul.f32 %v6380, %v6441
        %v6461 = vmul.f32 %v6381, %v6441
        %v6462 = vmul.f32 %v6382, %v6446
        %v6463 = vmul.f32 %v6383, %v6446
        %6465 = vset.pattern.permute.xlu0 1
        %6466 = vperm.xlu0 %6465, %v5997
        %v6467 = vpop.permute.xlu0 %6466
        %6470 = vset.pattern.permute.xlu0 1
        %6471 = vperm.xlu0 %6470, %v5998
        %v6472 = vpop.permute.xlu0 %6471
        %6475 = vset.pattern.permute.xlu0 1
        %6476 = vperm.xlu0 %6475, %v5999
        %v6477 = vpop.permute.xlu0 %6476
        %6480 = vset.pattern.permute.xlu0 1
        %6481 = vperm.xlu0 %6480, %v6000
        %v6482 = vpop.permute.xlu0 %6481
        %6485 = vset.pattern.permute.xlu0 1
        %6486 = vperm.xlu0 %6485, %v6001
        %v6487 = vpop.permute.xlu0 %6486
        %6490 = vset.pattern.permute.xlu0 1
        %6491 = vperm.xlu0 %6490, %v6002
        %v6492 = vpop.permute.xlu0 %6491
        %6495 = vset.pattern.permute.xlu0 1
        %6496 = vperm.xlu0 %6495, %v6003
        %v6497 = vpop.permute.xlu0 %6496
        %6500 = vset.pattern.permute.xlu0 1
        %6501 = vperm.xlu0 %6500, %v6004
        %v6502 = vpop.permute.xlu0 %6501
        %v6504 = vadd.f32 %v6448, %v6467
        %v6505 = vadd.f32 %v6449, %v6467
        %v6506 = vadd.f32 %v6450, %v6472
        %v6507 = vadd.f32 %v6451, %v6472
        %v6508 = vadd.f32 %v6452, %v6477
        %v6509 = vadd.f32 %v6453, %v6477
        %v6510 = vadd.f32 %v6454, %v6482
        %v6511 = vadd.f32 %v6455, %v6482
        %v6512 = vadd.f32 %v6456, %v6487
        %v6513 = vadd.f32 %v6457, %v6487
        %v6514 = vadd.f32 %v6458, %v6492
        %v6515 = vadd.f32 %v6459, %v6492
        %v6516 = vadd.f32 %v6460, %v6497
        %v6517 = vadd.f32 %v6461, %v6497
        %v6518 = vadd.f32 %v6462, %v6502
        %v6519 = vadd.f32 %v6463, %v6502
        %v6520 = vld [vmem:[#allocation3] sm:$0xff]
        %v6521 = vld [vmem:[#allocation3 + $0x8] sm:$0xff]
        %v6522 = vld [vmem:[#allocation3 + $0x10] sm:$0xff]
        %v6524 = vsel %vm6029, %v6520, 0
        %v6527 = vsel %vm6029, %v6521, 0
        %v6530 = vsel %vm6029, %v6522, 0
        %6532 = vmatprep.subr.mxu0 0.0
        %6533 = vmatpush1.msra.mxu0 0.0
        %6534 = vmatprep.subr.mxu0 0.0
        %6535 = vmatpush1.msra.mxu0 0.0
        %6536 = vmatprep.subr.mxu0 0.0
        %6537 = vmatpush1.msra.mxu0 0.0
        %6538 = vmatprep.subr.mxu0 0.0
        %6539 = vmatpush1.msra.mxu0 0.0
        %6540 = vmatprep.subr.mxu0 0.0
        %6541 = vmatpush1.msra.mxu0 0.0
        %6542 = vmatprep.subr.mxu0 0.0
        %6543 = vmatpush1.msra.mxu0 0.0
        %6544 = vmatprep.subr.mxu0 0.0
        %6545 = vmatpush1.msra.mxu0 0.0
        %6546 = vmatprep.subr.mxu0 0.0
        %6547 = vmatpush1.msra.mxu0 0.0
        %6548 = vmatprep.subr.mxu0 %v6519
        %6549 = vmatpush1.msra.mxu0 %v6518
        %6550 = vmatprep.subr.mxu0 %v6517
        %6551 = vmatpush1.msra.mxu0 %v6516
        %6552 = vmatprep.subr.mxu0 %v6515
        %6553 = vmatpush1.msra.mxu0 %v6514
        %6554 = vmatprep.subr.mxu0 %v6513
        %6555 = vmatpush1.msra.mxu0 %v6512
        %6556 = vmatprep.subr.mxu0 %v6511
        %6557 = vmatpush1.msra.mxu0 %v6510
        %6558 = vmatprep.subr.mxu0 %v6509
        %6559 = vmatpush1.msra.mxu0 %v6508
        %6560 = vmatprep.subr.mxu0 %v6507
        %6561 = vmatpush1.msra.mxu0 %v6506
        %6562 = vmatprep.subr.mxu0 %v6505
        %6563 = vmatpush1.msra.mxu0 %v6504
        %6564 = vmatprep.subr.mxu0 0.0
        %6565 = vmatpush2.msra.mxu0 0.0
        %6566 = vmatprep.subr.mxu0 0.0
        %6567 = vmatpush2.msra.mxu0 0.0
        %6568 = vmatprep.subr.mxu0 0.0
        %6569 = vmatpush2.msra.mxu0 0.0
        %6570 = vmatprep.subr.mxu0 0.0
        %6571 = vmatpush2.msra.mxu0 0.0
        %6572 = vmatprep.subr.mxu0 0.0
        %6573 = vmatpush2.msra.mxu0 0.0
        %6574 = vmatprep.subr.mxu0 0.0
        %6575 = vmatpush2.msra.mxu0 0.0
        %6576 = vmatprep.subr.mxu0 0.0
        %6577 = vmatpush2.msra.mxu0 0.0
        %6578 = vmatprep.subr.mxu0 0.0
        %6579 = vmatpush2.msra.mxu0 0.0
        %6580 = vmatprep.subr.mxu0 0.0
        %6581 = vmatpush2.msra.mxu0 0.0
        %6582 = vmatprep.subr.mxu0 0.0
        %6583 = vmatpush2.msra.mxu0 0.0
        %6584 = vmatprep.subr.mxu0 0.0
        %6585 = vmatpush2.msra.mxu0 0.0
        %6586 = vmatprep.subr.mxu0 0.0
        %6587 = vmatpush2.msra.mxu0 0.0
        %6588 = vmatprep.subr.mxu0 0.0
        %6589 = vmatpush2.msra.mxu0 0.0
        %6590 = vmatprep.subr.mxu0 0.0
        %6591 = vmatpush2.msra.mxu0 0.0
        %6592 = vmatprep.subr.mxu0 0.0
        %6593 = vmatpush2.msra.mxu0 0.0
        %6594 = vmatprep.subr.mxu0 0.0
        %6595 = vmatpush2.msra.mxu0 0.0
        %6596 = vmatprep.mubr.f32.mxu0 0.0
        %6597 = vmatmul.mubr.f32.gmra.mxu0 %v6524
        %v6598 = vpop.f32.mrf.mxu0
        %v6599 = vadd.f32 0.0, %v6598
        %v6600 = vpop.f32.mrf.mxu0
        %v6601 = vadd.f32 0.0, %v6600
        %6602 = vmatprep.mubr.f32.mxu0 0.0
        %6603 = vmatmul.mubr.f32.gmra.mxu0 %v6527
        %v6604 = vpop.f32.mrf.mxu0
        %v6605 = vadd.f32 0.0, %v6604
        %v6606 = vpop.f32.mrf.mxu0
        %v6607 = vadd.f32 0.0, %v6606
        %6608 = vmatprep.mubr.f32.mxu0 0.0
        %6609 = vmatmul.mubr.f32.gmra.mxu0 %v6530
        %v6610 = vpop.f32.mrf.mxu0
        %v6611 = vadd.f32 0.0, %v6610
        %v6612 = vpop.f32.mrf.mxu0
        %v6613 = vadd.f32 0.0, %v6612
        %6614 = vdwg.mxu0
        %6615 = vrot.lane.b32.xlu0 %v6599, 17
        %v6616 = vpop.permute.xlu0 %6615
        %6617 = vrot.lane.b32.xlu0 %v6605, 17
        %v6618 = vpop.permute.xlu0 %6617
        %6619 = vrot.lane.b32.xlu0 %v6611, 17
        %v6620 = vpop.permute.xlu0 %6619
        %6621 = vrot.lane.b32.xlu0 %v6601, 17
        %v6622 = vpop.permute.xlu0 %6621
        %6623 = vrot.lane.b32.xlu0 %v6607, 17
        %v6624 = vpop.permute.xlu0 %6623
        %6625 = vrot.lane.b32.xlu0 %v6613, 17
        %v6626 = vpop.permute.xlu0 %6625
        %v6627 = vsel %vm4310, %v6616, %v6622
        %v6628 = vsel %vm4310, %v6618, %v6624
        %v6629 = vsel %vm4310, %v6620, %v6626
        %v6630 = vsel %vm4310, %v6622, %v6616
        %v6631 = vsel %vm4310, %v6624, %v6618
        %v6632 = vsel %vm4310, %v6626, %v6620
        %v6633 = vmul.f32 %v4290, %v6630
        %v6634 = vmul.f32 %v4291, %v6627
        %v6635 = vmul.f32 %v4292, %v6631
        %v6636 = vmul.f32 %v4293, %v6628
        %v6637 = vmul.f32 %v4294, %v6632
        %v6638 = vmul.f32 %v4295, %v6629
        %s6639 = scalar_lea.vmem [#allocation3], 24
        %v6640 = vld [vmem:[%s6639] sm:$0xff]
        %v6641 = vld [vmem:[%s6639 + $0x8] sm:$0xff]
        %v6642 = vld [vmem:[%s6639 + $0x10] sm:$0xff]
        %v6644 = vsel %vm6029, %v6640, 0
        %v6647 = vsel %vm6029, %v6641, 0
        %v6650 = vsel %vm6029, %v6642, 0
        %6652 = vmatprep.subr.mxu0 0.0
        %6653 = vmatpush1.msra.mxu0 0.0
        %6654 = vmatprep.subr.mxu0 0.0
        %6655 = vmatpush1.msra.mxu0 0.0
        %6656 = vmatprep.subr.mxu0 0.0
        %6657 = vmatpush1.msra.mxu0 0.0
        %6658 = vmatprep.subr.mxu0 0.0
        %6659 = vmatpush1.msra.mxu0 0.0
        %6660 = vmatprep.subr.mxu0 0.0
        %6661 = vmatpush1.msra.mxu0 0.0
        %6662 = vmatprep.subr.mxu0 0.0
        %6663 = vmatpush1.msra.mxu0 0.0
        %6664 = vmatprep.subr.mxu0 0.0
        %6665 = vmatpush1.msra.mxu0 0.0
        %6666 = vmatprep.subr.mxu0 0.0
        %6667 = vmatpush1.msra.mxu0 0.0
        %6668 = vmatprep.subr.mxu0 %v6519
        %6669 = vmatpush1.msra.mxu0 %v6518
        %6670 = vmatprep.subr.mxu0 %v6517
        %6671 = vmatpush1.msra.mxu0 %v6516
        %6672 = vmatprep.subr.mxu0 %v6515
        %6673 = vmatpush1.msra.mxu0 %v6514
        %6674 = vmatprep.subr.mxu0 %v6513
        %6675 = vmatpush1.msra.mxu0 %v6512
        %6676 = vmatprep.subr.mxu0 %v6511
        %6677 = vmatpush1.msra.mxu0 %v6510
        %6678 = vmatprep.subr.mxu0 %v6509
        %6679 = vmatpush1.msra.mxu0 %v6508
        %6680 = vmatprep.subr.mxu0 %v6507
        %6681 = vmatpush1.msra.mxu0 %v6506
        %6682 = vmatprep.subr.mxu0 %v6505
        %6683 = vmatpush1.msra.mxu0 %v6504
        %6684 = vmatprep.subr.mxu0 0.0
        %6685 = vmatpush2.msra.mxu0 0.0
        %6686 = vmatprep.subr.mxu0 0.0
        %6687 = vmatpush2.msra.mxu0 0.0
        %6688 = vmatprep.subr.mxu0 0.0
        %6689 = vmatpush2.msra.mxu0 0.0
        %6690 = vmatprep.subr.mxu0 0.0
        %6691 = vmatpush2.msra.mxu0 0.0
        %6692 = vmatprep.subr.mxu0 0.0
        %6693 = vmatpush2.msra.mxu0 0.0
        %6694 = vmatprep.subr.mxu0 0.0
        %6695 = vmatpush2.msra.mxu0 0.0
        %6696 = vmatprep.subr.mxu0 0.0
        %6697 = vmatpush2.msra.mxu0 0.0
        %6698 = vmatprep.subr.mxu0 0.0
        %6699 = vmatpush2.msra.mxu0 0.0
        %6700 = vmatprep.subr.mxu0 0.0
        %6701 = vmatpush2.msra.mxu0 0.0
        %6702 = vmatprep.subr.mxu0 0.0
        %6703 = vmatpush2.msra.mxu0 0.0
        %6704 = vmatprep.subr.mxu0 0.0
        %6705 = vmatpush2.msra.mxu0 0.0
        %6706 = vmatprep.subr.mxu0 0.0
        %6707 = vmatpush2.msra.mxu0 0.0
        %6708 = vmatprep.subr.mxu0 0.0
        %6709 = vmatpush2.msra.mxu0 0.0
        %6710 = vmatprep.subr.mxu0 0.0
        %6711 = vmatpush2.msra.mxu0 0.0
        %6712 = vmatprep.subr.mxu0 0.0
        %6713 = vmatpush2.msra.mxu0 0.0
        %6714 = vmatprep.subr.mxu0 0.0
        %6715 = vmatpush2.msra.mxu0 0.0
        %6716 = vmatprep.mubr.f32.mxu0 0.0
        %6717 = vmatmul.mubr.f32.gmra.mxu0 %v6644
        %v6718 = vpop.f32.mrf.mxu0
        %v6719 = vadd.f32 0.0, %v6718
        %v6720 = vpop.f32.mrf.mxu0
        %v6721 = vadd.f32 0.0, %v6720
        %6722 = vmatprep.mubr.f32.mxu0 0.0
        %6723 = vmatmul.mubr.f32.gmra.mxu0 %v6647
        %v6724 = vpop.f32.mrf.mxu0
        %v6725 = vadd.f32 0.0, %v6724
        %v6726 = vpop.f32.mrf.mxu0
        %v6727 = vadd.f32 0.0, %v6726
        %6728 = vmatprep.mubr.f32.mxu0 0.0
        %6729 = vmatmul.mubr.f32.gmra.mxu0 %v6650
        %v6730 = vpop.f32.mrf.mxu0
        %v6731 = vadd.f32 0.0, %v6730
        %v6732 = vpop.f32.mrf.mxu0
        %v6733 = vadd.f32 0.0, %v6732
        %6734 = vdwg.mxu0
        %6735 = vrot.lane.b32.xlu0 %v6719, 16
        %v6736 = vpop.permute.xlu0 %6735
        %6737 = vrot.lane.b32.xlu0 %v6725, 16
        %v6738 = vpop.permute.xlu0 %6737
        %6739 = vrot.lane.b32.xlu0 %v6731, 16
        %v6740 = vpop.permute.xlu0 %6739
        %6741 = vrot.lane.b32.xlu0 %v6721, 16
        %v6742 = vpop.permute.xlu0 %6741
        %6743 = vrot.lane.b32.xlu0 %v6727, 16
        %v6744 = vpop.permute.xlu0 %6743
        %6745 = vrot.lane.b32.xlu0 %v6733, 16
        %v6746 = vpop.permute.xlu0 %6745
        %v6747 = vsel %vm4350, %v6736, %v6742
        %v6748 = vsel %vm4350, %v6738, %v6744
        %v6749 = vsel %vm4350, %v6740, %v6746
        %v6750 = vsel %vm4350, %v6742, %v6736
        %v6751 = vsel %vm4350, %v6744, %v6738
        %v6752 = vsel %vm4350, %v6746, %v6740
        %v6753 = vmul.f32 %v4332, %v6750
        %v6754 = vmul.f32 %v4333, %v6747
        %v6755 = vmul.f32 %v4334, %v6751
        %v6756 = vmul.f32 %v4335, %v6748
        %v6757 = vmul.f32 %v4336, %v6752
        %v6758 = vmul.f32 %v4337, %v6749
        %v6759 = vadd.f32 %v6633, %v6753
        %v6760 = vadd.f32 %v6634, %v6754
        %v6761 = vadd.f32 %v6635, %v6755
        %v6762 = vadd.f32 %v6636, %v6756
        %v6763 = vadd.f32 %v6637, %v6757
        %v6764 = vadd.f32 %v6638, %v6758
        %s6765 = scalar_lea.vmem [#allocation3], 48
        %v6766 = vld [vmem:[%s6765] sm:$0xff]
        %v6767 = vld [vmem:[%s6765 + $0x8] sm:$0xff]
        %v6768 = vld [vmem:[%s6765 + $0x10] sm:$0xff]
        %v6770 = vsel %vm6029, %v6766, 0
        %v6773 = vsel %vm6029, %v6767, 0
        %v6776 = vsel %vm6029, %v6768, 0
        %6778 = vmatprep.subr.mxu0 0.0
        %6779 = vmatpush1.msra.mxu0 0.0
        %6780 = vmatprep.subr.mxu0 0.0
        %6781 = vmatpush1.msra.mxu0 0.0
        %6782 = vmatprep.subr.mxu0 0.0
        %6783 = vmatpush1.msra.mxu0 0.0
        %6784 = vmatprep.subr.mxu0 0.0
        %6785 = vmatpush1.msra.mxu0 0.0
        %6786 = vmatprep.subr.mxu0 0.0
        %6787 = vmatpush1.msra.mxu0 0.0
        %6788 = vmatprep.subr.mxu0 0.0
        %6789 = vmatpush1.msra.mxu0 0.0
        %6790 = vmatprep.subr.mxu0 0.0
        %6791 = vmatpush1.msra.mxu0 0.0
        %6792 = vmatprep.subr.mxu0 0.0
        %6793 = vmatpush1.msra.mxu0 0.0
        %6794 = vmatprep.subr.mxu0 %v6519
        %6795 = vmatpush1.msra.mxu0 %v6518
        %6796 = vmatprep.subr.mxu0 %v6517
        %6797 = vmatpush1.msra.mxu0 %v6516
        %6798 = vmatprep.subr.mxu0 %v6515
        %6799 = vmatpush1.msra.mxu0 %v6514
        %6800 = vmatprep.subr.mxu0 %v6513
        %6801 = vmatpush1.msra.mxu0 %v6512
        %6802 = vmatprep.subr.mxu0 %v6511
        %6803 = vmatpush1.msra.mxu0 %v6510
        %6804 = vmatprep.subr.mxu0 %v6509
        %6805 = vmatpush1.msra.mxu0 %v6508
        %6806 = vmatprep.subr.mxu0 %v6507
        %6807 = vmatpush1.msra.mxu0 %v6506
        %6808 = vmatprep.subr.mxu0 %v6505
        %6809 = vmatpush1.msra.mxu0 %v6504
        %6810 = vmatprep.subr.mxu0 0.0
        %6811 = vmatpush2.msra.mxu0 0.0
        %6812 = vmatprep.subr.mxu0 0.0
        %6813 = vmatpush2.msra.mxu0 0.0
        %6814 = vmatprep.subr.mxu0 0.0
        %6815 = vmatpush2.msra.mxu0 0.0
        %6816 = vmatprep.subr.mxu0 0.0
        %6817 = vmatpush2.msra.mxu0 0.0
        %6818 = vmatprep.subr.mxu0 0.0
        %6819 = vmatpush2.msra.mxu0 0.0
        %6820 = vmatprep.subr.mxu0 0.0
        %6821 = vmatpush2.msra.mxu0 0.0
        %6822 = vmatprep.subr.mxu0 0.0
        %6823 = vmatpush2.msra.mxu0 0.0
        %6824 = vmatprep.subr.mxu0 0.0
        %6825 = vmatpush2.msra.mxu0 0.0
        %6826 = vmatprep.subr.mxu0 0.0
        %6827 = vmatpush2.msra.mxu0 0.0
        %6828 = vmatprep.subr.mxu0 0.0
        %6829 = vmatpush2.msra.mxu0 0.0
        %6830 = vmatprep.subr.mxu0 0.0
        %6831 = vmatpush2.msra.mxu0 0.0
        %6832 = vmatprep.subr.mxu0 0.0
        %6833 = vmatpush2.msra.mxu0 0.0
        %6834 = vmatprep.subr.mxu0 0.0
        %6835 = vmatpush2.msra.mxu0 0.0
        %6836 = vmatprep.subr.mxu0 0.0
        %6837 = vmatpush2.msra.mxu0 0.0
        %6838 = vmatprep.subr.mxu0 0.0
        %6839 = vmatpush2.msra.mxu0 0.0
        %6840 = vmatprep.subr.mxu0 0.0
        %6841 = vmatpush2.msra.mxu0 0.0
        %6842 = vmatprep.mubr.f32.mxu0 0.0
        %6843 = vmatmul.mubr.f32.gmra.mxu0 %v6770
        %v6844 = vpop.f32.mrf.mxu0
        %v6845 = vadd.f32 0.0, %v6844
        %v6846 = vpop.f32.mrf.mxu0
        %v6847 = vadd.f32 0.0, %v6846
        %6848 = vmatprep.mubr.f32.mxu0 0.0
        %6849 = vmatmul.mubr.f32.gmra.mxu0 %v6773
        %v6850 = vpop.f32.mrf.mxu0
        %v6851 = vadd.f32 0.0, %v6850
        %v6852 = vpop.f32.mrf.mxu0
        %v6853 = vadd.f32 0.0, %v6852
        %6854 = vmatprep.mubr.f32.mxu0 0.0
        %6855 = vmatmul.mubr.f32.gmra.mxu0 %v6776
        %v6856 = vpop.f32.mrf.mxu0
        %v6857 = vadd.f32 0.0, %v6856
        %v6858 = vpop.f32.mrf.mxu0
        %v6859 = vadd.f32 0.0, %v6858
        %6860 = vdwg.mxu0
        %6861 = vrot.lane.b32.xlu0 %v6845, 15
        %v6862 = vpop.permute.xlu0 %6861
        %6863 = vrot.lane.b32.xlu0 %v6851, 15
        %v6864 = vpop.permute.xlu0 %6863
        %6865 = vrot.lane.b32.xlu0 %v6857, 15
        %v6866 = vpop.permute.xlu0 %6865
        %6867 = vrot.lane.b32.xlu0 %v6847, 15
        %v6868 = vpop.permute.xlu0 %6867
        %6869 = vrot.lane.b32.xlu0 %v6853, 15
        %v6870 = vpop.permute.xlu0 %6869
        %6871 = vrot.lane.b32.xlu0 %v6859, 15
        %v6872 = vpop.permute.xlu0 %6871
        %v6873 = vsel %vm4666, %v6862, %v6868
        %v6874 = vsel %vm4666, %v6864, %v6870
        %v6875 = vsel %vm4666, %v6866, %v6872
        %v6876 = vsel %vm4666, %v6868, %v6862
        %v6877 = vsel %vm4666, %v6870, %v6864
        %v6878 = vsel %vm4666, %v6872, %v6866
        %v6879 = vmul.f32 %v4648, %v6876
        %v6880 = vmul.f32 %v4649, %v6873
        %v6881 = vmul.f32 %v4650, %v6877
        %v6882 = vmul.f32 %v4651, %v6874
        %v6883 = vmul.f32 %v4652, %v6878
        %v6884 = vmul.f32 %v4653, %v6875
        %v6885 = vadd.f32 %v6759, %v6879
        %v6886 = vadd.f32 %v6760, %v6880
        %v6887 = vadd.f32 %v6761, %v6881
        %v6888 = vadd.f32 %v6762, %v6882
        %v6889 = vadd.f32 %v6763, %v6883
        %v6890 = vadd.f32 %v6764, %v6884
        %s6891 = scalar_lea.vmem [#allocation3], 72
        %v6892 = vld [vmem:[%s6891] sm:$0xff]
        %v6893 = vld [vmem:[%s6891 + $0x8] sm:$0xff]
        %v6894 = vld [vmem:[%s6891 + $0x10] sm:$0xff]
        %v6896 = vsel %vm6029, %v6892, 0
        %v6899 = vsel %vm6029, %v6893, 0
        %v6902 = vsel %vm6029, %v6894, 0
        %6904 = vmatprep.subr.mxu0 0.0
        %6905 = vmatpush1.msra.mxu0 0.0
        %6906 = vmatprep.subr.mxu0 0.0
        %6907 = vmatpush1.msra.mxu0 0.0
        %6908 = vmatprep.subr.mxu0 0.0
        %6909 = vmatpush1.msra.mxu0 0.0
        %6910 = vmatprep.subr.mxu0 0.0
        %6911 = vmatpush1.msra.mxu0 0.0
        %6912 = vmatprep.subr.mxu0 0.0
        %6913 = vmatpush1.msra.mxu0 0.0
        %6914 = vmatprep.subr.mxu0 0.0
        %6915 = vmatpush1.msra.mxu0 0.0
        %6916 = vmatprep.subr.mxu0 0.0
        %6917 = vmatpush1.msra.mxu0 0.0
        %6918 = vmatprep.subr.mxu0 0.0
        %6919 = vmatpush1.msra.mxu0 0.0
        %6920 = vmatprep.subr.mxu0 %v6519
        %6921 = vmatpush1.msra.mxu0 %v6518
        %6922 = vmatprep.subr.mxu0 %v6517
        %6923 = vmatpush1.msra.mxu0 %v6516
        %6924 = vmatprep.subr.mxu0 %v6515
        %6925 = vmatpush1.msra.mxu0 %v6514
        %6926 = vmatprep.subr.mxu0 %v6513
        %6927 = vmatpush1.msra.mxu0 %v6512
        %6928 = vmatprep.subr.mxu0 %v6511
        %6929 = vmatpush1.msra.mxu0 %v6510
        %6930 = vmatprep.subr.mxu0 %v6509
        %6931 = vmatpush1.msra.mxu0 %v6508
        %6932 = vmatprep.subr.mxu0 %v6507
        %6933 = vmatpush1.msra.mxu0 %v6506
        %6934 = vmatprep.subr.mxu0 %v6505
        %6935 = vmatpush1.msra.mxu0 %v6504
        %6936 = vmatprep.subr.mxu0 0.0
        %6937 = vmatpush2.msra.mxu0 0.0
        %6938 = vmatprep.subr.mxu0 0.0
        %6939 = vmatpush2.msra.mxu0 0.0
        %6940 = vmatprep.subr.mxu0 0.0
        %6941 = vmatpush2.msra.mxu0 0.0
        %6942 = vmatprep.subr.mxu0 0.0
        %6943 = vmatpush2.msra.mxu0 0.0
        %6944 = vmatprep.subr.mxu0 0.0
        %6945 = vmatpush2.msra.mxu0 0.0
        %6946 = vmatprep.subr.mxu0 0.0
        %6947 = vmatpush2.msra.mxu0 0.0
        %6948 = vmatprep.subr.mxu0 0.0
        %6949 = vmatpush2.msra.mxu0 0.0
        %6950 = vmatprep.subr.mxu0 0.0
        %6951 = vmatpush2.msra.mxu0 0.0
        %6952 = vmatprep.subr.mxu0 0.0
        %6953 = vmatpush2.msra.mxu0 0.0
        %6954 = vmatprep.subr.mxu0 0.0
        %6955 = vmatpush2.msra.mxu0 0.0
        %6956 = vmatprep.subr.mxu0 0.0
        %6957 = vmatpush2.msra.mxu0 0.0
        %6958 = vmatprep.subr.mxu0 0.0
        %6959 = vmatpush2.msra.mxu0 0.0
        %6960 = vmatprep.subr.mxu0 0.0
        %6961 = vmatpush2.msra.mxu0 0.0
        %6962 = vmatprep.subr.mxu0 0.0
        %6963 = vmatpush2.msra.mxu0 0.0
        %6964 = vmatprep.subr.mxu0 0.0
        %6965 = vmatpush2.msra.mxu0 0.0
        %6966 = vmatprep.subr.mxu0 0.0
        %6967 = vmatpush2.msra.mxu0 0.0
        %6968 = vmatprep.mubr.f32.mxu0 0.0
        %6969 = vmatmul.mubr.f32.gmra.mxu0 %v6896
        %v6970 = vpop.f32.mrf.mxu0
        %v6971 = vadd.f32 0.0, %v6970
        %v6972 = vpop.f32.mrf.mxu0
        %v6973 = vadd.f32 0.0, %v6972
        %6974 = vmatprep.mubr.f32.mxu0 0.0
        %6975 = vmatmul.mubr.f32.gmra.mxu0 %v6899
        %v6976 = vpop.f32.mrf.mxu0
        %v6977 = vadd.f32 0.0, %v6976
        %v6978 = vpop.f32.mrf.mxu0
        %v6979 = vadd.f32 0.0, %v6978
        %6980 = vmatprep.mubr.f32.mxu0 0.0
        %6981 = vmatmul.mubr.f32.gmra.mxu0 %v6902
        %v6982 = vpop.f32.mrf.mxu0
        %v6983 = vadd.f32 0.0, %v6982
        %v6984 = vpop.f32.mrf.mxu0
        %v6985 = vadd.f32 0.0, %v6984
        %6986 = vdwg.mxu0
        %6987 = vrot.lane.b32.xlu0 %v6971, 1
        %v6988 = vpop.permute.xlu0 %6987
        %6989 = vrot.lane.b32.xlu0 %v6977, 1
        %v6990 = vpop.permute.xlu0 %6989
        %6991 = vrot.lane.b32.xlu0 %v6983, 1
        %v6992 = vpop.permute.xlu0 %6991
        %6993 = vrot.lane.b32.xlu0 %v6973, 1
        %v6994 = vpop.permute.xlu0 %6993
        %6995 = vrot.lane.b32.xlu0 %v6979, 1
        %v6996 = vpop.permute.xlu0 %6995
        %6997 = vrot.lane.b32.xlu0 %v6985, 1
        %v6998 = vpop.permute.xlu0 %6997
        %v6999 = vsel %vm4860, %v6988, %v6994
        %v7000 = vsel %vm4860, %v6990, %v6996
        %v7001 = vsel %vm4860, %v6992, %v6998
        %v7002 = vsel %vm4860, %v6994, %v6988
        %v7003 = vsel %vm4860, %v6996, %v6990
        %v7004 = vsel %vm4860, %v6998, %v6992
        %v7005 = vmul.f32 %v4842, %v7002
        %v7006 = vmul.f32 %v4843, %v6999
        %v7007 = vmul.f32 %v4844, %v7003
        %v7008 = vmul.f32 %v4845, %v7000
        %v7009 = vmul.f32 %v4846, %v7004
        %v7010 = vmul.f32 %v4847, %v7001
        %v7011 = vadd.f32 %v6885, %v7005
        %v7012 = vadd.f32 %v6886, %v7006
        %v7013 = vadd.f32 %v6887, %v7007
        %v7014 = vadd.f32 %v6888, %v7008
        %v7015 = vadd.f32 %v6889, %v7009
        %v7016 = vadd.f32 %v6890, %v7010
        %s7017 = scalar_lea.vmem [#allocation3], 96
        %v7018 = vld [vmem:[%s7017] sm:$0xff]
        %v7019 = vld [vmem:[%s7017 + $0x8] sm:$0xff]
        %v7020 = vld [vmem:[%s7017 + $0x10] sm:$0xff]
        %v7022 = vsel %vm6029, %v7018, 0
        %v7025 = vsel %vm6029, %v7019, 0
        %v7028 = vsel %vm6029, %v7020, 0
        %7030 = vmatprep.subr.mxu0 0.0
        %7031 = vmatpush1.msra.mxu0 0.0
        %7032 = vmatprep.subr.mxu0 0.0
        %7033 = vmatpush1.msra.mxu0 0.0
        %7034 = vmatprep.subr.mxu0 0.0
        %7035 = vmatpush1.msra.mxu0 0.0
        %7036 = vmatprep.subr.mxu0 0.0
        %7037 = vmatpush1.msra.mxu0 0.0
        %7038 = vmatprep.subr.mxu0 0.0
        %7039 = vmatpush1.msra.mxu0 0.0
        %7040 = vmatprep.subr.mxu0 0.0
        %7041 = vmatpush1.msra.mxu0 0.0
        %7042 = vmatprep.subr.mxu0 0.0
        %7043 = vmatpush1.msra.mxu0 0.0
        %7044 = vmatprep.subr.mxu0 0.0
        %7045 = vmatpush1.msra.mxu0 0.0
        %7046 = vmatprep.subr.mxu0 %v6519
        %7047 = vmatpush1.msra.mxu0 %v6518
        %7048 = vmatprep.subr.mxu0 %v6517
        %7049 = vmatpush1.msra.mxu0 %v6516
        %7050 = vmatprep.subr.mxu0 %v6515
        %7051 = vmatpush1.msra.mxu0 %v6514
        %7052 = vmatprep.subr.mxu0 %v6513
        %7053 = vmatpush1.msra.mxu0 %v6512
        %7054 = vmatprep.subr.mxu0 %v6511
        %7055 = vmatpush1.msra.mxu0 %v6510
        %7056 = vmatprep.subr.mxu0 %v6509
        %7057 = vmatpush1.msra.mxu0 %v6508
        %7058 = vmatprep.subr.mxu0 %v6507
        %7059 = vmatpush1.msra.mxu0 %v6506
        %7060 = vmatprep.subr.mxu0 %v6505
        %7061 = vmatpush1.msra.mxu0 %v6504
        %7062 = vmatprep.subr.mxu0 0.0
        %7063 = vmatpush2.msra.mxu0 0.0
        %7064 = vmatprep.subr.mxu0 0.0
        %7065 = vmatpush2.msra.mxu0 0.0
        %7066 = vmatprep.subr.mxu0 0.0
        %7067 = vmatpush2.msra.mxu0 0.0
        %7068 = vmatprep.subr.mxu0 0.0
        %7069 = vmatpush2.msra.mxu0 0.0
        %7070 = vmatprep.subr.mxu0 0.0
        %7071 = vmatpush2.msra.mxu0 0.0
        %7072 = vmatprep.subr.mxu0 0.0
        %7073 = vmatpush2.msra.mxu0 0.0
        %7074 = vmatprep.subr.mxu0 0.0
        %7075 = vmatpush2.msra.mxu0 0.0
        %7076 = vmatprep.subr.mxu0 0.0
        %7077 = vmatpush2.msra.mxu0 0.0
        %7078 = vmatprep.subr.mxu0 0.0
        %7079 = vmatpush2.msra.mxu0 0.0
        %7080 = vmatprep.subr.mxu0 0.0
        %7081 = vmatpush2.msra.mxu0 0.0
        %7082 = vmatprep.subr.mxu0 0.0
        %7083 = vmatpush2.msra.mxu0 0.0
        %7084 = vmatprep.subr.mxu0 0.0
        %7085 = vmatpush2.msra.mxu0 0.0
        %7086 = vmatprep.subr.mxu0 0.0
        %7087 = vmatpush2.msra.mxu0 0.0
        %7088 = vmatprep.subr.mxu0 0.0
        %7089 = vmatpush2.msra.mxu0 0.0
        %7090 = vmatprep.subr.mxu0 0.0
        %7091 = vmatpush2.msra.mxu0 0.0
        %7092 = vmatprep.subr.mxu0 0.0
        %7093 = vmatpush2.msra.mxu0 0.0
        %7094 = vmatprep.mubr.f32.mxu0 0.0
        %7095 = vmatmul.mubr.f32.gmra.mxu0 %v7022
        %v7096 = vpop.f32.mrf.mxu0
        %v7097 = vadd.f32 0.0, %v7096
        %v7098 = vpop.f32.mrf.mxu0
        %v7099 = vadd.f32 0.0, %v7098
        %7100 = vmatprep.mubr.f32.mxu0 0.0
        %7101 = vmatmul.mubr.f32.gmra.mxu0 %v7025
        %v7102 = vpop.f32.mrf.mxu0
        %v7103 = vadd.f32 0.0, %v7102
        %v7104 = vpop.f32.mrf.mxu0
        %v7105 = vadd.f32 0.0, %v7104
        %7106 = vmatprep.mubr.f32.mxu0 0.0
        %7107 = vmatmul.mubr.f32.gmra.mxu0 %v7028
        %v7108 = vpop.f32.mrf.mxu0
        %v7109 = vadd.f32 0.0, %v7108
        %v7110 = vpop.f32.mrf.mxu0
        %v7111 = vadd.f32 0.0, %v7110
        %7112 = vdwg.mxu0
        %v7113 = vadd.f32 %v7011, %v7097
        %v7114 = vadd.f32 %v7012, %v7099
        %v7115 = vadd.f32 %v7013, %v7103
        %v7116 = vadd.f32 %v7014, %v7105
        %v7117 = vadd.f32 %v7015, %v7109
        %v7118 = vadd.f32 %v7016, %v7111
        %s7119 = scalar_lea.vmem [#allocation3], 120
        %v7120 = vld [vmem:[%s7119] sm:$0xff]
        %v7121 = vld [vmem:[%s7119 + $0x8] sm:$0xff]
        %v7122 = vld [vmem:[%s7119 + $0x10] sm:$0xff]
        %v7124 = vsel %vm6029, %v7120, 0
        %v7127 = vsel %vm6029, %v7121, 0
        %v7130 = vsel %vm6029, %v7122, 0
        %7132 = vmatprep.subr.mxu0 0.0
        %7133 = vmatpush1.msra.mxu0 0.0
        %7134 = vmatprep.subr.mxu0 0.0
        %7135 = vmatpush1.msra.mxu0 0.0
        %7136 = vmatprep.subr.mxu0 0.0
        %7137 = vmatpush1.msra.mxu0 0.0
        %7138 = vmatprep.subr.mxu0 0.0
        %7139 = vmatpush1.msra.mxu0 0.0
        %7140 = vmatprep.subr.mxu0 0.0
        %7141 = vmatpush1.msra.mxu0 0.0
        %7142 = vmatprep.subr.mxu0 0.0
        %7143 = vmatpush1.msra.mxu0 0.0
        %7144 = vmatprep.subr.mxu0 0.0
        %7145 = vmatpush1.msra.mxu0 0.0
        %7146 = vmatprep.subr.mxu0 0.0
        %7147 = vmatpush1.msra.mxu0 0.0
        %7148 = vmatprep.subr.mxu0 %v6519
        %7149 = vmatpush1.msra.mxu0 %v6518
        %7150 = vmatprep.subr.mxu0 %v6517
        %7151 = vmatpush1.msra.mxu0 %v6516
        %7152 = vmatprep.subr.mxu0 %v6515
        %7153 = vmatpush1.msra.mxu0 %v6514
        %7154 = vmatprep.subr.mxu0 %v6513
        %7155 = vmatpush1.msra.mxu0 %v6512
        %7156 = vmatprep.subr.mxu0 %v6511
        %7157 = vmatpush1.msra.mxu0 %v6510
        %7158 = vmatprep.subr.mxu0 %v6509
        %7159 = vmatpush1.msra.mxu0 %v6508
        %7160 = vmatprep.subr.mxu0 %v6507
        %7161 = vmatpush1.msra.mxu0 %v6506
        %7162 = vmatprep.subr.mxu0 %v6505
        %7163 = vmatpush1.msra.mxu0 %v6504
        %7164 = vmatprep.subr.mxu0 0.0
        %7165 = vmatpush2.msra.mxu0 0.0
        %7166 = vmatprep.subr.mxu0 0.0
        %7167 = vmatpush2.msra.mxu0 0.0
        %7168 = vmatprep.subr.mxu0 0.0
        %7169 = vmatpush2.msra.mxu0 0.0
        %7170 = vmatprep.subr.mxu0 0.0
        %7171 = vmatpush2.msra.mxu0 0.0
        %7172 = vmatprep.subr.mxu0 0.0
        %7173 = vmatpush2.msra.mxu0 0.0
        %7174 = vmatprep.subr.mxu0 0.0
        %7175 = vmatpush2.msra.mxu0 0.0
        %7176 = vmatprep.subr.mxu0 0.0
        %7177 = vmatpush2.msra.mxu0 0.0
        %7178 = vmatprep.subr.mxu0 0.0
        %7179 = vmatpush2.msra.mxu0 0.0
        %7180 = vmatprep.subr.mxu0 0.0
        %7181 = vmatpush2.msra.mxu0 0.0
        %7182 = vmatprep.subr.mxu0 0.0
        %7183 = vmatpush2.msra.mxu0 0.0
        %7184 = vmatprep.subr.mxu0 0.0
        %7185 = vmatpush2.msra.mxu0 0.0
        %7186 = vmatprep.subr.mxu0 0.0
        %7187 = vmatpush2.msra.mxu0 0.0
        %7188 = vmatprep.subr.mxu0 0.0
        %7189 = vmatpush2.msra.mxu0 0.0
        %7190 = vmatprep.subr.mxu0 0.0
        %7191 = vmatpush2.msra.mxu0 0.0
        %7192 = vmatprep.subr.mxu0 0.0
        %7193 = vmatpush2.msra.mxu0 0.0
        %7194 = vmatprep.subr.mxu0 0.0
        %7195 = vmatpush2.msra.mxu0 0.0
        %7196 = vmatprep.mubr.f32.mxu0 0.0
        %7197 = vmatmul.mubr.f32.gmra.mxu0 %v7124
        %v7198 = vpop.f32.mrf.mxu0
        %v7199 = vadd.f32 0.0, %v7198
        %v7200 = vpop.f32.mrf.mxu0
        %v7201 = vadd.f32 0.0, %v7200
        %7202 = vmatprep.mubr.f32.mxu0 0.0
        %7203 = vmatmul.mubr.f32.gmra.mxu0 %v7127
        %v7204 = vpop.f32.mrf.mxu0
        %v7205 = vadd.f32 0.0, %v7204
        %v7206 = vpop.f32.mrf.mxu0
        %v7207 = vadd.f32 0.0, %v7206
        %7208 = vmatprep.mubr.f32.mxu0 0.0
        %7209 = vmatmul.mubr.f32.gmra.mxu0 %v7130
        %v7210 = vpop.f32.mrf.mxu0
        %v7211 = vadd.f32 0.0, %v7210
        %v7212 = vpop.f32.mrf.mxu0
        %v7213 = vadd.f32 0.0, %v7212
        %7214 = vdwg.mxu0
        %7215 = vrot.lane.b32.xlu0 %v7199, 127
        %v7216 = vpop.permute.xlu0 %7215
        %7217 = vrot.lane.b32.xlu0 %v7205, 127
        %v7218 = vpop.permute.xlu0 %7217
        %7219 = vrot.lane.b32.xlu0 %v7211, 127
        %v7220 = vpop.permute.xlu0 %7219
        %7221 = vrot.lane.b32.xlu0 %v7201, 127
        %v7222 = vpop.permute.xlu0 %7221
        %7223 = vrot.lane.b32.xlu0 %v7207, 127
        %v7224 = vpop.permute.xlu0 %7223
        %7225 = vrot.lane.b32.xlu0 %v7213, 127
        %v7226 = vpop.permute.xlu0 %7225
        %v7227 = vsel %vm5216, %v7216, %v7222
        %v7228 = vsel %vm5216, %v7218, %v7224
        %v7229 = vsel %vm5216, %v7220, %v7226
        %v7230 = vsel %vm5216, %v7222, %v7216
        %v7231 = vsel %vm5216, %v7224, %v7218
        %v7232 = vsel %vm5216, %v7226, %v7220
        %v7233 = vmul.f32 %v5198, %v7227
        %v7234 = vmul.f32 %v5199, %v7230
        %v7235 = vmul.f32 %v5200, %v7228
        %v7236 = vmul.f32 %v5201, %v7231
        %v7237 = vmul.f32 %v5202, %v7229
        %v7238 = vmul.f32 %v5203, %v7232
        %v7239 = vadd.f32 %v7113, %v7233
        %v7240 = vadd.f32 %v7114, %v7234
        %v7241 = vadd.f32 %v7115, %v7235
        %v7242 = vadd.f32 %v7116, %v7236
        %v7243 = vadd.f32 %v7117, %v7237
        %v7244 = vadd.f32 %v7118, %v7238
        %s7245 = scalar_lea.vmem [#allocation3], 144
        %v7246 = vld [vmem:[%s7245] sm:$0xff]
        %v7247 = vld [vmem:[%s7245 + $0x8] sm:$0xff]
        %v7248 = vld [vmem:[%s7245 + $0x10] sm:$0xff]
        %v7250 = vsel %vm6029, %v7246, 0
        %v7253 = vsel %vm6029, %v7247, 0
        %v7256 = vsel %vm6029, %v7248, 0
        %7258 = vmatprep.subr.mxu0 0.0
        %7259 = vmatpush1.msra.mxu0 0.0
        %7260 = vmatprep.subr.mxu0 0.0
        %7261 = vmatpush1.msra.mxu0 0.0
        %7262 = vmatprep.subr.mxu0 0.0
        %7263 = vmatpush1.msra.mxu0 0.0
        %7264 = vmatprep.subr.mxu0 0.0
        %7265 = vmatpush1.msra.mxu0 0.0
        %7266 = vmatprep.subr.mxu0 0.0
        %7267 = vmatpush1.msra.mxu0 0.0
        %7268 = vmatprep.subr.mxu0 0.0
        %7269 = vmatpush1.msra.mxu0 0.0
        %7270 = vmatprep.subr.mxu0 0.0
        %7271 = vmatpush1.msra.mxu0 0.0
        %7272 = vmatprep.subr.mxu0 0.0
        %7273 = vmatpush1.msra.mxu0 0.0
        %7274 = vmatprep.subr.mxu0 %v6519
        %7275 = vmatpush1.msra.mxu0 %v6518
        %7276 = vmatprep.subr.mxu0 %v6517
        %7277 = vmatpush1.msra.mxu0 %v6516
        %7278 = vmatprep.subr.mxu0 %v6515
        %7279 = vmatpush1.msra.mxu0 %v6514
        %7280 = vmatprep.subr.mxu0 %v6513
        %7281 = vmatpush1.msra.mxu0 %v6512
        %7282 = vmatprep.subr.mxu0 %v6511
        %7283 = vmatpush1.msra.mxu0 %v6510
        %7284 = vmatprep.subr.mxu0 %v6509
        %7285 = vmatpush1.msra.mxu0 %v6508
        %7286 = vmatprep.subr.mxu0 %v6507
        %7287 = vmatpush1.msra.mxu0 %v6506
        %7288 = vmatprep.subr.mxu0 %v6505
        %7289 = vmatpush1.msra.mxu0 %v6504
        %7290 = vmatprep.subr.mxu0 0.0
        %7291 = vmatpush2.msra.mxu0 0.0
        %7292 = vmatprep.subr.mxu0 0.0
        %7293 = vmatpush2.msra.mxu0 0.0
        %7294 = vmatprep.subr.mxu0 0.0
        %7295 = vmatpush2.msra.mxu0 0.0
        %7296 = vmatprep.subr.mxu0 0.0
        %7297 = vmatpush2.msra.mxu0 0.0
        %7298 = vmatprep.subr.mxu0 0.0
        %7299 = vmatpush2.msra.mxu0 0.0
        %7300 = vmatprep.subr.mxu0 0.0
        %7301 = vmatpush2.msra.mxu0 0.0
        %7302 = vmatprep.subr.mxu0 0.0
        %7303 = vmatpush2.msra.mxu0 0.0
        %7304 = vmatprep.subr.mxu0 0.0
        %7305 = vmatpush2.msra.mxu0 0.0
        %7306 = vmatprep.subr.mxu0 0.0
        %7307 = vmatpush2.msra.mxu0 0.0
        %7308 = vmatprep.subr.mxu0 0.0
        %7309 = vmatpush2.msra.mxu0 0.0
        %7310 = vmatprep.subr.mxu0 0.0
        %7311 = vmatpush2.msra.mxu0 0.0
        %7312 = vmatprep.subr.mxu0 0.0
        %7313 = vmatpush2.msra.mxu0 0.0
        %7314 = vmatprep.subr.mxu0 0.0
        %7315 = vmatpush2.msra.mxu0 0.0
        %7316 = vmatprep.subr.mxu0 0.0
        %7317 = vmatpush2.msra.mxu0 0.0
        %7318 = vmatprep.subr.mxu0 0.0
        %7319 = vmatpush2.msra.mxu0 0.0
        %7320 = vmatprep.subr.mxu0 0.0
        %7321 = vmatpush2.msra.mxu0 0.0
        %7322 = vmatprep.mubr.f32.mxu0 0.0
        %7323 = vmatmul.mubr.f32.gmra.mxu0 %v7250
        %v7324 = vpop.f32.mrf.mxu0
        %v7325 = vadd.f32 0.0, %v7324
        %v7326 = vpop.f32.mrf.mxu0
        %v7327 = vadd.f32 0.0, %v7326
        %7328 = vmatprep.mubr.f32.mxu0 0.0
        %7329 = vmatmul.mubr.f32.gmra.mxu0 %v7253
        %v7330 = vpop.f32.mrf.mxu0
        %v7331 = vadd.f32 0.0, %v7330
        %v7332 = vpop.f32.mrf.mxu0
        %v7333 = vadd.f32 0.0, %v7332
        %7334 = vmatprep.mubr.f32.mxu0 0.0
        %7335 = vmatmul.mubr.f32.gmra.mxu0 %v7256
        %v7336 = vpop.f32.mrf.mxu0
        %v7337 = vadd.f32 0.0, %v7336
        %v7338 = vpop.f32.mrf.mxu0
        %v7339 = vadd.f32 0.0, %v7338
        %7340 = vdwg.mxu0
        %7341 = vrot.lane.b32.xlu0 %v7325, 113
        %v7342 = vpop.permute.xlu0 %7341
        %7343 = vrot.lane.b32.xlu0 %v7331, 113
        %v7344 = vpop.permute.xlu0 %7343
        %7345 = vrot.lane.b32.xlu0 %v7337, 113
        %v7346 = vpop.permute.xlu0 %7345
        %7347 = vrot.lane.b32.xlu0 %v7327, 113
        %v7348 = vpop.permute.xlu0 %7347
        %7349 = vrot.lane.b32.xlu0 %v7333, 113
        %v7350 = vpop.permute.xlu0 %7349
        %7351 = vrot.lane.b32.xlu0 %v7339, 113
        %v7352 = vpop.permute.xlu0 %7351
        %v7353 = vsel %vm5410, %v7342, %v7348
        %v7354 = vsel %vm5410, %v7344, %v7350
        %v7355 = vsel %vm5410, %v7346, %v7352
        %v7356 = vsel %vm5410, %v7348, %v7342
        %v7357 = vsel %vm5410, %v7350, %v7344
        %v7358 = vsel %vm5410, %v7352, %v7346
        %v7359 = vmul.f32 %v5392, %v7353
        %v7360 = vmul.f32 %v5393, %v7356
        %v7361 = vmul.f32 %v5394, %v7354
        %v7362 = vmul.f32 %v5395, %v7357
        %v7363 = vmul.f32 %v5396, %v7355
        %v7364 = vmul.f32 %v5397, %v7358
        %v7365 = vadd.f32 %v7239, %v7359
        %v7366 = vadd.f32 %v7240, %v7360
        %v7367 = vadd.f32 %v7241, %v7361
        %v7368 = vadd.f32 %v7242, %v7362
        %v7369 = vadd.f32 %v7243, %v7363
        %v7370 = vadd.f32 %v7244, %v7364
        %s7371 = scalar_lea.vmem [#allocation3], 168
        %v7372 = vld [vmem:[%s7371] sm:$0xff]
        %v7373 = vld [vmem:[%s7371 + $0x8] sm:$0xff]
        %v7374 = vld [vmem:[%s7371 + $0x10] sm:$0xff]
        %v7376 = vsel %vm6029, %v7372, 0
        %v7379 = vsel %vm6029, %v7373, 0
        %v7382 = vsel %vm6029, %v7374, 0
        %7384 = vmatprep.subr.mxu0 0.0
        %7385 = vmatpush1.msra.mxu0 0.0
        %7386 = vmatprep.subr.mxu0 0.0
        %7387 = vmatpush1.msra.mxu0 0.0
        %7388 = vmatprep.subr.mxu0 0.0
        %7389 = vmatpush1.msra.mxu0 0.0
        %7390 = vmatprep.subr.mxu0 0.0
        %7391 = vmatpush1.msra.mxu0 0.0
        %7392 = vmatprep.subr.mxu0 0.0
        %7393 = vmatpush1.msra.mxu0 0.0
        %7394 = vmatprep.subr.mxu0 0.0
        %7395 = vmatpush1.msra.mxu0 0.0
        %7396 = vmatprep.subr.mxu0 0.0
        %7397 = vmatpush1.msra.mxu0 0.0
        %7398 = vmatprep.subr.mxu0 0.0
        %7399 = vmatpush1.msra.mxu0 0.0
        %7400 = vmatprep.subr.mxu0 %v6519
        %7401 = vmatpush1.msra.mxu0 %v6518
        %7402 = vmatprep.subr.mxu0 %v6517
        %7403 = vmatpush1.msra.mxu0 %v6516
        %7404 = vmatprep.subr.mxu0 %v6515
        %7405 = vmatpush1.msra.mxu0 %v6514
        %7406 = vmatprep.subr.mxu0 %v6513
        %7407 = vmatpush1.msra.mxu0 %v6512
        %7408 = vmatprep.subr.mxu0 %v6511
        %7409 = vmatpush1.msra.mxu0 %v6510
        %7410 = vmatprep.subr.mxu0 %v6509
        %7411 = vmatpush1.msra.mxu0 %v6508
        %7412 = vmatprep.subr.mxu0 %v6507
        %7413 = vmatpush1.msra.mxu0 %v6506
        %7414 = vmatprep.subr.mxu0 %v6505
        %7415 = vmatpush1.msra.mxu0 %v6504
        %7416 = vmatprep.subr.mxu0 0.0
        %7417 = vmatpush2.msra.mxu0 0.0
        %7418 = vmatprep.subr.mxu0 0.0
        %7419 = vmatpush2.msra.mxu0 0.0
        %7420 = vmatprep.subr.mxu0 0.0
        %7421 = vmatpush2.msra.mxu0 0.0
        %7422 = vmatprep.subr.mxu0 0.0
        %7423 = vmatpush2.msra.mxu0 0.0
        %7424 = vmatprep.subr.mxu0 0.0
        %7425 = vmatpush2.msra.mxu0 0.0
        %7426 = vmatprep.subr.mxu0 0.0
        %7427 = vmatpush2.msra.mxu0 0.0
        %7428 = vmatprep.subr.mxu0 0.0
        %7429 = vmatpush2.msra.mxu0 0.0
        %7430 = vmatprep.subr.mxu0 0.0
        %7431 = vmatpush2.msra.mxu0 0.0
        %7432 = vmatprep.subr.mxu0 0.0
        %7433 = vmatpush2.msra.mxu0 0.0
        %7434 = vmatprep.subr.mxu0 0.0
        %7435 = vmatpush2.msra.mxu0 0.0
        %7436 = vmatprep.subr.mxu0 0.0
        %7437 = vmatpush2.msra.mxu0 0.0
        %7438 = vmatprep.subr.mxu0 0.0
        %7439 = vmatpush2.msra.mxu0 0.0
        %7440 = vmatprep.subr.mxu0 0.0
        %7441 = vmatpush2.msra.mxu0 0.0
        %7442 = vmatprep.subr.mxu0 0.0
        %7443 = vmatpush2.msra.mxu0 0.0
        %7444 = vmatprep.subr.mxu0 0.0
        %7445 = vmatpush2.msra.mxu0 0.0
        %7446 = vmatprep.subr.mxu0 0.0
        %7447 = vmatpush2.msra.mxu0 0.0
        %7448 = vmatprep.mubr.f32.mxu0 0.0
        %7449 = vmatmul.mubr.f32.gmra.mxu0 %v7376
        %v7450 = vpop.f32.mrf.mxu0
        %v7451 = vadd.f32 0.0, %v7450
        %v7452 = vpop.f32.mrf.mxu0
        %v7453 = vadd.f32 0.0, %v7452
        %7454 = vmatprep.mubr.f32.mxu0 0.0
        %7455 = vmatmul.mubr.f32.gmra.mxu0 %v7379
        %v7456 = vpop.f32.mrf.mxu0
        %v7457 = vadd.f32 0.0, %v7456
        %v7458 = vpop.f32.mrf.mxu0
        %v7459 = vadd.f32 0.0, %v7458
        %7460 = vmatprep.mubr.f32.mxu0 0.0
        %7461 = vmatmul.mubr.f32.gmra.mxu0 %v7382
        %v7462 = vpop.f32.mrf.mxu0
        %v7463 = vadd.f32 0.0, %v7462
        %v7464 = vpop.f32.mrf.mxu0
        %v7465 = vadd.f32 0.0, %v7464
        %7466 = vdwg.mxu0
        %7467 = vrot.lane.b32.xlu0 %v7451, 112
        %v7468 = vpop.permute.xlu0 %7467
        %7469 = vrot.lane.b32.xlu0 %v7457, 112
        %v7470 = vpop.permute.xlu0 %7469
        %7471 = vrot.lane.b32.xlu0 %v7463, 112
        %v7472 = vpop.permute.xlu0 %7471
        %7473 = vrot.lane.b32.xlu0 %v7453, 112
        %v7474 = vpop.permute.xlu0 %7473
        %7475 = vrot.lane.b32.xlu0 %v7459, 112
        %v7476 = vpop.permute.xlu0 %7475
        %7477 = vrot.lane.b32.xlu0 %v7465, 112
        %v7478 = vpop.permute.xlu0 %7477
        %v7479 = vsel %vm5604, %v7468, %v7474
        %v7480 = vsel %vm5604, %v7470, %v7476
        %v7481 = vsel %vm5604, %v7472, %v7478
        %v7482 = vsel %vm5604, %v7474, %v7468
        %v7483 = vsel %vm5604, %v7476, %v7470
        %v7484 = vsel %vm5604, %v7478, %v7472
        %v7485 = vmul.f32 %v5586, %v7479
        %v7486 = vmul.f32 %v5587, %v7482
        %v7487 = vmul.f32 %v5588, %v7480
        %v7488 = vmul.f32 %v5589, %v7483
        %v7489 = vmul.f32 %v5590, %v7481
        %v7490 = vmul.f32 %v5591, %v7484
        %v7491 = vadd.f32 %v7365, %v7485
        %v7492 = vadd.f32 %v7366, %v7486
        %v7493 = vadd.f32 %v7367, %v7487
        %v7494 = vadd.f32 %v7368, %v7488
        %v7495 = vadd.f32 %v7369, %v7489
        %v7496 = vadd.f32 %v7370, %v7490
        %s7497 = scalar_lea.vmem [#allocation3], 192
        %v7498 = vld [vmem:[%s7497] sm:$0xff]
        %v7499 = vld [vmem:[%s7497 + $0x8] sm:$0xff]
        %v7500 = vld [vmem:[%s7497 + $0x10] sm:$0xff]
        %v7502 = vsel %vm6029, %v7498, 0
        %v7505 = vsel %vm6029, %v7499, 0
        %v7508 = vsel %vm6029, %v7500, 0
        %7510 = vmatprep.subr.mxu0 0.0
        %7511 = vmatpush1.msra.mxu0 0.0
        %7512 = vmatprep.subr.mxu0 0.0
        %7513 = vmatpush1.msra.mxu0 0.0
        %7514 = vmatprep.subr.mxu0 0.0
        %7515 = vmatpush1.msra.mxu0 0.0
        %7516 = vmatprep.subr.mxu0 0.0
        %7517 = vmatpush1.msra.mxu0 0.0
        %7518 = vmatprep.subr.mxu0 0.0
        %7519 = vmatpush1.msra.mxu0 0.0
        %7520 = vmatprep.subr.mxu0 0.0
        %7521 = vmatpush1.msra.mxu0 0.0
        %7522 = vmatprep.subr.mxu0 0.0
        %7523 = vmatpush1.msra.mxu0 0.0
        %7524 = vmatprep.subr.mxu0 0.0
        %7525 = vmatpush1.msra.mxu0 0.0
        %7526 = vmatprep.subr.mxu0 %v6519
        %7527 = vmatpush1.msra.mxu0 %v6518
        %7528 = vmatprep.subr.mxu0 %v6517
        %7529 = vmatpush1.msra.mxu0 %v6516
        %7530 = vmatprep.subr.mxu0 %v6515
        %7531 = vmatpush1.msra.mxu0 %v6514
        %7532 = vmatprep.subr.mxu0 %v6513
        %7533 = vmatpush1.msra.mxu0 %v6512
        %7534 = vmatprep.subr.mxu0 %v6511
        %7535 = vmatpush1.msra.mxu0 %v6510
        %7536 = vmatprep.subr.mxu0 %v6509
        %7537 = vmatpush1.msra.mxu0 %v6508
        %7538 = vmatprep.subr.mxu0 %v6507
        %7539 = vmatpush1.msra.mxu0 %v6506
        %7540 = vmatprep.subr.mxu0 %v6505
        %7541 = vmatpush1.msra.mxu0 %v6504
        %7542 = vmatprep.subr.mxu0 0.0
        %7543 = vmatpush2.msra.mxu0 0.0
        %7544 = vmatprep.subr.mxu0 0.0
        %7545 = vmatpush2.msra.mxu0 0.0
        %7546 = vmatprep.subr.mxu0 0.0
        %7547 = vmatpush2.msra.mxu0 0.0
        %7548 = vmatprep.subr.mxu0 0.0
        %7549 = vmatpush2.msra.mxu0 0.0
        %7550 = vmatprep.subr.mxu0 0.0
        %7551 = vmatpush2.msra.mxu0 0.0
        %7552 = vmatprep.subr.mxu0 0.0
        %7553 = vmatpush2.msra.mxu0 0.0
        %7554 = vmatprep.subr.mxu0 0.0
        %7555 = vmatpush2.msra.mxu0 0.0
        %7556 = vmatprep.subr.mxu0 0.0
        %7557 = vmatpush2.msra.mxu0 0.0
        %7558 = vmatprep.subr.mxu0 0.0
        %7559 = vmatpush2.msra.mxu0 0.0
        %7560 = vmatprep.subr.mxu0 0.0
        %7561 = vmatpush2.msra.mxu0 0.0
        %7562 = vmatprep.subr.mxu0 0.0
        %7563 = vmatpush2.msra.mxu0 0.0
        %7564 = vmatprep.subr.mxu0 0.0
        %7565 = vmatpush2.msra.mxu0 0.0
        %7566 = vmatprep.subr.mxu0 0.0
        %7567 = vmatpush2.msra.mxu0 0.0
        %7568 = vmatprep.subr.mxu0 0.0
        %7569 = vmatpush2.msra.mxu0 0.0
        %7570 = vmatprep.subr.mxu0 0.0
        %7571 = vmatpush2.msra.mxu0 0.0
        %7572 = vmatprep.subr.mxu0 0.0
        %7573 = vmatpush2.msra.mxu0 0.0
        %7574 = vmatprep.mubr.f32.mxu0 0.0
        %7575 = vmatmul.mubr.f32.gmra.mxu0 %v7502
        %v7576 = vpop.f32.mrf.mxu0
        %v7577 = vadd.f32 0.0, %v7576
        %v7578 = vpop.f32.mrf.mxu0
        %v7579 = vadd.f32 0.0, %v7578
        %7580 = vmatprep.mubr.f32.mxu0 0.0
        %7581 = vmatmul.mubr.f32.gmra.mxu0 %v7505
        %v7582 = vpop.f32.mrf.mxu0
        %v7583 = vadd.f32 0.0, %v7582
        %v7584 = vpop.f32.mrf.mxu0
        %v7585 = vadd.f32 0.0, %v7584
        %7586 = vmatprep.mubr.f32.mxu0 0.0
        %7587 = vmatmul.mubr.f32.gmra.mxu0 %v7508
        %v7588 = vpop.f32.mrf.mxu0
        %v7589 = vadd.f32 0.0, %v7588
        %v7590 = vpop.f32.mrf.mxu0
        %v7591 = vadd.f32 0.0, %v7590
        %7592 = vdwg.mxu0
        %7593 = vrot.lane.b32.xlu0 %v7577, 111
        %v7594 = vpop.permute.xlu0 %7593
        %7595 = vrot.lane.b32.xlu0 %v7583, 111
        %v7596 = vpop.permute.xlu0 %7595
        %7597 = vrot.lane.b32.xlu0 %v7589, 111
        %v7598 = vpop.permute.xlu0 %7597
        %7599 = vrot.lane.b32.xlu0 %v7579, 111
        %v7600 = vpop.permute.xlu0 %7599
        %7601 = vrot.lane.b32.xlu0 %v7585, 111
        %v7602 = vpop.permute.xlu0 %7601
        %7603 = vrot.lane.b32.xlu0 %v7591, 111
        %v7604 = vpop.permute.xlu0 %7603
        %v7605 = vsel %vm5798, %v7594, %v7600
        %v7606 = vsel %vm5798, %v7596, %v7602
        %v7607 = vsel %vm5798, %v7598, %v7604
        %v7608 = vsel %vm5798, %v7600, %v7594
        %v7609 = vsel %vm5798, %v7602, %v7596
        %v7610 = vsel %vm5798, %v7604, %v7598
        %v7611 = vmul.f32 %v5780, %v7605
        %v7612 = vmul.f32 %v5781, %v7608
        %v7613 = vmul.f32 %v5782, %v7606
        %v7614 = vmul.f32 %v5783, %v7609
        %v7615 = vmul.f32 %v5784, %v7607
        %v7616 = vmul.f32 %v5785, %v7610
        %v7617 = vadd.f32 %v7491, %v7611
        %v7618 = vadd.f32 %v7492, %v7612
        %v7619 = vadd.f32 %v7493, %v7613
        %v7620 = vadd.f32 %v7494, %v7614
        %v7621 = vadd.f32 %v7495, %v7615
        %v7622 = vadd.f32 %v7496, %v7616
        %v7623 = vld [vmem:[%s323] sm:$0xff]
        %v7624 = vld [vmem:[%s323 + $0x8] sm:$0xff]
        %v7625 = vld [vmem:[%s323 + $0x10] sm:$0xff]
        %v7626 = vld [vmem:[%s323 + $0x18] sm:$0xff]
        %v7627 = vld [vmem:[%s323 + $0x20] sm:$0xff]
        %v7628 = vld [vmem:[%s323 + $0x28] sm:$0xff]
        %v7629 = vadd.f32 %v7623, %v7617
        %v7630 = vadd.f32 %v7624, %v7618
        %v7631 = vadd.f32 %v7625, %v7619
        %v7632 = vadd.f32 %v7626, %v7620
        %v7633 = vadd.f32 %v7627, %v7621
        %v7634 = vadd.f32 %v7628, %v7622
        %v7635 = vld [vmem:[%s5] sm:$0xff]
        %v7636 = vld [vmem:[%s5 + $0x8] sm:$0xff]
        %v7637 = vld [vmem:[%s5 + $0x10] sm:$0xff]
        %v7638 = vld [vmem:[%s6] sm:$0xff]
        %v7639 = vld [vmem:[%s6 + $0x8] sm:$0xff]
        %v7640 = vld [vmem:[%s6 + $0x10] sm:$0xff]
        %v7641 = vadd.f32 %v7629, %v7630
        %7642 = vadd.xlane.f32.xlu0 %v7641
        %v7643 = vpop.xlane.xlu0 %7642
        %v7644 = vadd.f32 %v7631, %v7632
        %7645 = vadd.xlane.f32.xlu0 %v7644
        %v7646 = vpop.xlane.xlu0 %7645
        %v7647 = vadd.f32 %v7633, %v7634
        %7648 = vadd.xlane.f32.xlu0 %v7647
        %v7649 = vpop.xlane.xlu0 %7648
        %v7651 = vsel %vm4372, %v7635, 0
        %v7654 = vsel %vm4372, %v7636, 0
        %v7657 = vsel %vm4372, %v7637, 0
        %7659 = vmatprep.subr.mxu0 0.0
        %7660 = vmatpush1.msra.mxu0 0.0
        %7661 = vmatprep.subr.mxu0 0.0
        %7662 = vmatpush1.msra.mxu0 0.0
        %7663 = vmatprep.subr.mxu0 0.0
        %7664 = vmatpush1.msra.mxu0 0.0
        %7665 = vmatprep.subr.mxu0 0.0
        %7666 = vmatpush1.msra.mxu0 0.0
        %7667 = vmatprep.subr.mxu0 0.0
        %7668 = vmatpush1.msra.mxu0 0.0
        %7669 = vmatprep.subr.mxu0 0.0
        %7670 = vmatpush1.msra.mxu0 0.0
        %7671 = vmatprep.subr.mxu0 0.0
        %7672 = vmatpush1.msra.mxu0 0.0
        %7673 = vmatprep.subr.mxu0 0.0
        %7674 = vmatpush1.msra.mxu0 0.0
        %7675 = vmatprep.subr.mxu0 0.0
        %7676 = vmatpush1.msra.mxu0 0.0
        %7677 = vmatprep.subr.mxu0 0.0
        %7678 = vmatpush1.msra.mxu0 0.0
        %7679 = vmatprep.subr.mxu0 0.0
        %7680 = vmatpush1.msra.mxu0 0.0
        %7681 = vmatprep.subr.mxu0 0.0
        %7682 = vmatpush1.msra.mxu0 0.0
        %7683 = vmatprep.subr.mxu0 0.0
        %7684 = vmatpush1.msra.mxu0 0.0
        %7685 = vmatprep.subr.mxu0 0.0
        %7686 = vmatpush1.msra.mxu0 %v7649
        %7687 = vmatprep.subr.mxu0 0.0
        %7688 = vmatpush1.msra.mxu0 %v7646
        %7689 = vmatprep.subr.mxu0 0.0
        %7690 = vmatpush1.msra.mxu0 %v7643
        %7691 = vmatprep.subr.mxu0 0.0
        %7692 = vmatpush2.msra.mxu0 0.0
        %7693 = vmatprep.subr.mxu0 0.0
        %7694 = vmatpush2.msra.mxu0 0.0
        %7695 = vmatprep.subr.mxu0 0.0
        %7696 = vmatpush2.msra.mxu0 0.0
        %7697 = vmatprep.subr.mxu0 0.0
        %7698 = vmatpush2.msra.mxu0 0.0
        %7699 = vmatprep.subr.mxu0 0.0
        %7700 = vmatpush2.msra.mxu0 0.0
        %7701 = vmatprep.subr.mxu0 0.0
        %7702 = vmatpush2.msra.mxu0 0.0
        %7703 = vmatprep.subr.mxu0 0.0
        %7704 = vmatpush2.msra.mxu0 0.0
        %7705 = vmatprep.subr.mxu0 0.0
        %7706 = vmatpush2.msra.mxu0 0.0
        %7707 = vmatprep.subr.mxu0 0.0
        %7708 = vmatpush2.msra.mxu0 0.0
        %7709 = vmatprep.subr.mxu0 0.0
        %7710 = vmatpush2.msra.mxu0 0.0
        %7711 = vmatprep.subr.mxu0 0.0
        %7712 = vmatpush2.msra.mxu0 0.0
        %7713 = vmatprep.subr.mxu0 0.0
        %7714 = vmatpush2.msra.mxu0 0.0
        %7715 = vmatprep.subr.mxu0 0.0
        %7716 = vmatpush2.msra.mxu0 0.0
        %7717 = vmatprep.subr.mxu0 0.0
        %7718 = vmatpush2.msra.mxu0 0.0
        %7719 = vmatprep.subr.mxu0 0.0
        %7720 = vmatpush2.msra.mxu0 0.0
        %7721 = vmatprep.subr.mxu0 0.0
        %7722 = vmatpush2.msra.mxu0 0.0
        %7723 = vmatprep.mubr.f32.mxu0 0.0
        %7724 = vmatmul.mubr.f32.gmra.mxu0 %v7651
        %v7725 = vpop.f32.mrf.mxu0
        %v7726 = vadd.f32 0.0, %v7725
        %v7727 = vpop.f32.mrf.mxu0
        %7728 = vmatprep.mubr.f32.mxu0 0.0
        %7729 = vmatmul.mubr.f32.gmra.mxu0 %v7654
        %v7730 = vpop.f32.mrf.mxu0
        %v7731 = vadd.f32 0.0, %v7730
        %v7732 = vpop.f32.mrf.mxu0
        %7733 = vmatprep.mubr.f32.mxu0 0.0
        %7734 = vmatmul.mubr.f32.gmra.mxu0 %v7657
        %v7735 = vpop.f32.mrf.mxu0
        %v7736 = vadd.f32 0.0, %v7735
        %v7737 = vpop.f32.mrf.mxu0
        %7738 = vdwg.mxu0
        %v7739 = vmul.f32 %v7629, %v7629
        %v7740 = vmul.f32 %v7630, %v7630
        %v7741 = vmul.f32 %v7631, %v7631
        %v7742 = vmul.f32 %v7632, %v7632
        %v7743 = vmul.f32 %v7633, %v7633
        %v7744 = vmul.f32 %v7634, %v7634
        %v7745 = vadd.f32 %v7739, %v7740
        %7746 = vadd.xlane.f32.xlu0 %v7745
        %v7747 = vpop.xlane.xlu0 %7746
        %v7748 = vadd.f32 %v7741, %v7742
        %7749 = vadd.xlane.f32.xlu0 %v7748
        %v7750 = vpop.xlane.xlu0 %7749
        %v7751 = vadd.f32 %v7743, %v7744
        %7752 = vadd.xlane.f32.xlu0 %v7751
        %v7753 = vpop.xlane.xlu0 %7752
        %7754 = vmatprep.subr.mxu0 0.0
        %7755 = vmatpush1.msra.mxu0 0.0
        %7756 = vmatprep.subr.mxu0 0.0
        %7757 = vmatpush1.msra.mxu0 0.0
        %7758 = vmatprep.subr.mxu0 0.0
        %7759 = vmatpush1.msra.mxu0 0.0
        %7760 = vmatprep.subr.mxu0 0.0
        %7761 = vmatpush1.msra.mxu0 0.0
        %7762 = vmatprep.subr.mxu0 0.0
        %7763 = vmatpush1.msra.mxu0 0.0
        %7764 = vmatprep.subr.mxu0 0.0
        %7765 = vmatpush1.msra.mxu0 0.0
        %7766 = vmatprep.subr.mxu0 0.0
        %7767 = vmatpush1.msra.mxu0 0.0
        %7768 = vmatprep.subr.mxu0 0.0
        %7769 = vmatpush1.msra.mxu0 0.0
        %7770 = vmatprep.subr.mxu0 0.0
        %7771 = vmatpush1.msra.mxu0 0.0
        %7772 = vmatprep.subr.mxu0 0.0
        %7773 = vmatpush1.msra.mxu0 0.0
        %7774 = vmatprep.subr.mxu0 0.0
        %7775 = vmatpush1.msra.mxu0 0.0
        %7776 = vmatprep.subr.mxu0 0.0
        %7777 = vmatpush1.msra.mxu0 0.0
        %7778 = vmatprep.subr.mxu0 0.0
        %7779 = vmatpush1.msra.mxu0 0.0
        %7780 = vmatprep.subr.mxu0 0.0
        %7781 = vmatpush1.msra.mxu0 %v7753
        %7782 = vmatprep.subr.mxu0 0.0
        %7783 = vmatpush1.msra.mxu0 %v7750
        %7784 = vmatprep.subr.mxu0 0.0
        %7785 = vmatpush1.msra.mxu0 %v7747
        %7786 = vmatprep.subr.mxu0 0.0
        %7787 = vmatpush2.msra.mxu0 0.0
        %7788 = vmatprep.subr.mxu0 0.0
        %7789 = vmatpush2.msra.mxu0 0.0
        %7790 = vmatprep.subr.mxu0 0.0
        %7791 = vmatpush2.msra.mxu0 0.0
        %7792 = vmatprep.subr.mxu0 0.0
        %7793 = vmatpush2.msra.mxu0 0.0
        %7794 = vmatprep.subr.mxu0 0.0
        %7795 = vmatpush2.msra.mxu0 0.0
        %7796 = vmatprep.subr.mxu0 0.0
        %7797 = vmatpush2.msra.mxu0 0.0
        %7798 = vmatprep.subr.mxu0 0.0
        %7799 = vmatpush2.msra.mxu0 0.0
        %7800 = vmatprep.subr.mxu0 0.0
        %7801 = vmatpush2.msra.mxu0 0.0
        %7802 = vmatprep.subr.mxu0 0.0
        %7803 = vmatpush2.msra.mxu0 0.0
        %7804 = vmatprep.subr.mxu0 0.0
        %7805 = vmatpush2.msra.mxu0 0.0
        %7806 = vmatprep.subr.mxu0 0.0
        %7807 = vmatpush2.msra.mxu0 0.0
        %7808 = vmatprep.subr.mxu0 0.0
        %7809 = vmatpush2.msra.mxu0 0.0
        %7810 = vmatprep.subr.mxu0 0.0
        %7811 = vmatpush2.msra.mxu0 0.0
        %7812 = vmatprep.subr.mxu0 0.0
        %7813 = vmatpush2.msra.mxu0 0.0
        %7814 = vmatprep.subr.mxu0 0.0
        %7815 = vmatpush2.msra.mxu0 0.0
        %7816 = vmatprep.subr.mxu0 0.0
        %7817 = vmatpush2.msra.mxu0 0.0
        %7818 = vmatprep.mubr.f32.mxu0 0.0
        %7819 = vmatmul.mubr.f32.gmra.mxu0 %v7651
        %v7820 = vpop.f32.mrf.mxu0
        %v7821 = vadd.f32 0.0, %v7820
        %v7822 = vpop.f32.mrf.mxu0
        %7823 = vmatprep.mubr.f32.mxu0 0.0
        %7824 = vmatmul.mubr.f32.gmra.mxu0 %v7654
        %v7825 = vpop.f32.mrf.mxu0
        %v7826 = vadd.f32 0.0, %v7825
        %v7827 = vpop.f32.mrf.mxu0
        %7828 = vmatprep.mubr.f32.mxu0 0.0
        %7829 = vmatmul.mubr.f32.gmra.mxu0 %v7657
        %v7830 = vpop.f32.mrf.mxu0
        %v7831 = vadd.f32 0.0, %v7830
        %v7832 = vpop.f32.mrf.mxu0
        %7833 = vdwg.mxu0
        %v7834 = vmul.f32 %v7726, %v7726
        %v7835 = vmul.f32 %v7731, %v7731
        %v7836 = vmul.f32 %v7736, %v7736
        %v7837 = vsub.f32 %v7821, %v7834
        %v7838 = vsub.f32 %v7826, %v7835
        %v7839 = vsub.f32 %v7831, %v7836
        %v7840 = vmax.f32 %v7837, 0.0
        %v7841 = vmax.f32 %v7838, 0.0
        %v7842 = vmax.f32 %v7839, 0.0
        %7844 = vset.pattern.permute.xlu0 0
        %7845 = vperm.xlu0 %7844, %v7726
        %v7846 = vpop.permute.xlu0 %7845
        %7849 = vset.pattern.permute.xlu0 0
        %7850 = vperm.xlu0 %7849, %v7731
        %v7851 = vpop.permute.xlu0 %7850
        %7854 = vset.pattern.permute.xlu0 0
        %7855 = vperm.xlu0 %7854, %v7736
        %v7856 = vpop.permute.xlu0 %7855
        %v7858 = vsub.f32 %v7629, %v7846
        %v7859 = vsub.f32 %v7630, %v7846
        %v7860 = vsub.f32 %v7631, %v7851
        %v7861 = vsub.f32 %v7632, %v7851
        %v7862 = vsub.f32 %v7633, %v7856
        %v7863 = vsub.f32 %v7634, %v7856
        %v7864 = vadd.f32 %v7840, 1e-05
        %v7865 = vadd.f32 %v7841, 1e-05
        %v7866 = vadd.f32 %v7842, 1e-05
        %v7867 = vrsqrt.pop %v7864
        %v7868 = vrsqrt.pop %v7865
        %v7869 = vrsqrt.pop %v7866
        %7873 = vrot.lane.b32.xlu0 %v7638, 126
        %v7874 = vpop.permute.xlu0 %7873
        %7875 = vrot.lane.b32.xlu0 %v7639, 126
        %v7876 = vpop.permute.xlu0 %7875
        %7877 = vrot.lane.b32.xlu0 %v7640, 126
        %v7878 = vpop.permute.xlu0 %7877
        %v7882 = vmul.f32 %v7867, %v7874
        %v7883 = vmul.f32 %v7868, %v7876
        %v7884 = vmul.f32 %v7869, %v7878
        %7886 = vset.pattern.permute.xlu0 0
        %7887 = vperm.xlu0 %7886, %v7882
        %v7888 = vpop.permute.xlu0 %7887
        %7891 = vset.pattern.permute.xlu0 0
        %7892 = vperm.xlu0 %7891, %v7883
        %v7893 = vpop.permute.xlu0 %7892
        %7896 = vset.pattern.permute.xlu0 0
        %7897 = vperm.xlu0 %7896, %v7884
        %v7898 = vpop.permute.xlu0 %7897
        %v7900 = vmul.f32 %v7858, %v7888
        %v7901 = vmul.f32 %v7859, %v7888
        %v7902 = vmul.f32 %v7860, %v7893
        %v7903 = vmul.f32 %v7861, %v7893
        %v7904 = vmul.f32 %v7862, %v7898
        %v7905 = vmul.f32 %v7863, %v7898
        %7906 = vset.pattern.permute.xlu0 3
        %7907 = vperm.xlu0 %7906, %v7638
        %v7908 = vpop.permute.xlu0 %7907
        %7910 = vset.pattern.permute.xlu0 3
        %7911 = vperm.xlu0 %7910, %v7639
        %v7912 = vpop.permute.xlu0 %7911
        %7914 = vset.pattern.permute.xlu0 3
        %7915 = vperm.xlu0 %7914, %v7640
        %v7916 = vpop.permute.xlu0 %7915
        %v7918 = vadd.f32 %v7900, %v7908
        %v7919 = vadd.f32 %v7901, %v7908
        %v7920 = vadd.f32 %v7902, %v7912
        %v7921 = vadd.f32 %v7903, %v7912
        %v7922 = vadd.f32 %v7904, %v7916
        %v7923 = vadd.f32 %v7905, %v7916
        %v7924 = vadd.f32 %v4284, %v7918
        %v7925 = vadd.f32 %v4285, %v7919
        %v7926 = vadd.f32 %v4286, %v7920
        %v7927 = vadd.f32 %v4287, %v7921
        %v7928 = vadd.f32 %v4288, %v7922
        %v7929 = vadd.f32 %v4289, %v7923
        %v7930 = vmax.f32 %v7924, 0.0
        %v7931 = vmax.f32 %v7925, 0.0
        %v7932 = vmax.f32 %v7926, 0.0
        %v7933 = vmax.f32 %v7927, 0.0
        %v7934 = vmax.f32 %v7928, 0.0
        %v7935 = vmax.f32 %v7929, 0.0
        %v7936 = vadd.f32 %v7930, %v7931
        %7937 = vadd.xlane.f32.xlu0 %v7936
        %v7938 = vpop.xlane.xlu0 %7937
        %v7939 = vadd.f32 %v7932, %v7933
        %7940 = vadd.xlane.f32.xlu0 %v7939
        %v7941 = vpop.xlane.xlu0 %7940
        %v7942 = vadd.f32 %v7934, %v7935
        %7943 = vadd.xlane.f32.xlu0 %v7942
        %v7944 = vpop.xlane.xlu0 %7943
        %7945 = vmatprep.subr.mxu0 0.0
        %7946 = vmatpush1.msra.mxu0 0.0
        %7947 = vmatprep.subr.mxu0 0.0
        %7948 = vmatpush1.msra.mxu0 0.0
        %7949 = vmatprep.subr.mxu0 0.0
        %7950 = vmatpush1.msra.mxu0 0.0
        %7951 = vmatprep.subr.mxu0 0.0
        %7952 = vmatpush1.msra.mxu0 0.0
        %7953 = vmatprep.subr.mxu0 0.0
        %7954 = vmatpush1.msra.mxu0 0.0
        %7955 = vmatprep.subr.mxu0 0.0
        %7956 = vmatpush1.msra.mxu0 0.0
        %7957 = vmatprep.subr.mxu0 0.0
        %7958 = vmatpush1.msra.mxu0 0.0
        %7959 = vmatprep.subr.mxu0 0.0
        %7960 = vmatpush1.msra.mxu0 0.0
        %7961 = vmatprep.subr.mxu0 0.0
        %7962 = vmatpush1.msra.mxu0 0.0
        %7963 = vmatprep.subr.mxu0 0.0
        %7964 = vmatpush1.msra.mxu0 0.0
        %7965 = vmatprep.subr.mxu0 0.0
        %7966 = vmatpush1.msra.mxu0 0.0
        %7967 = vmatprep.subr.mxu0 0.0
        %7968 = vmatpush1.msra.mxu0 0.0
        %7969 = vmatprep.subr.mxu0 0.0
        %7970 = vmatpush1.msra.mxu0 0.0
        %7971 = vmatprep.subr.mxu0 0.0
        %7972 = vmatpush1.msra.mxu0 %v7944
        %7973 = vmatprep.subr.mxu0 0.0
        %7974 = vmatpush1.msra.mxu0 %v7941
        %7975 = vmatprep.subr.mxu0 0.0
        %7976 = vmatpush1.msra.mxu0 %v7938
        %7977 = vmatprep.subr.mxu0 0.0
        %7978 = vmatpush2.msra.mxu0 0.0
        %7979 = vmatprep.subr.mxu0 0.0
        %7980 = vmatpush2.msra.mxu0 0.0
        %7981 = vmatprep.subr.mxu0 0.0
        %7982 = vmatpush2.msra.mxu0 0.0
        %7983 = vmatprep.subr.mxu0 0.0
        %7984 = vmatpush2.msra.mxu0 0.0
        %7985 = vmatprep.subr.mxu0 0.0
        %7986 = vmatpush2.msra.mxu0 0.0
        %7987 = vmatprep.subr.mxu0 0.0
        %7988 = vmatpush2.msra.mxu0 0.0
        %7989 = vmatprep.subr.mxu0 0.0
        %7990 = vmatpush2.msra.mxu0 0.0
        %7991 = vmatprep.subr.mxu0 0.0
        %7992 = vmatpush2.msra.mxu0 0.0
        %7993 = vmatprep.subr.mxu0 0.0
        %7994 = vmatpush2.msra.mxu0 0.0
        %7995 = vmatprep.subr.mxu0 0.0
        %7996 = vmatpush2.msra.mxu0 0.0
        %7997 = vmatprep.subr.mxu0 0.0
        %7998 = vmatpush2.msra.mxu0 0.0
        %7999 = vmatprep.subr.mxu0 0.0
        %8000 = vmatpush2.msra.mxu0 0.0
        %8001 = vmatprep.subr.mxu0 0.0
        %8002 = vmatpush2.msra.mxu0 0.0
        %8003 = vmatprep.subr.mxu0 0.0
        %8004 = vmatpush2.msra.mxu0 0.0
        %8005 = vmatprep.subr.mxu0 0.0
        %8006 = vmatpush2.msra.mxu0 0.0
        %8007 = vmatprep.subr.mxu0 0.0
        %8008 = vmatpush2.msra.mxu0 0.0
        %8009 = vmatprep.mubr.f32.mxu0 0.0
        %8010 = vmatmul.mubr.f32.gmra.mxu0 %v7651
        %v8011 = vpop.f32.mrf.mxu0
        %v8012 = vadd.f32 0.0, %v8011
        %v8013 = vpop.f32.mrf.mxu0
        %8014 = vmatprep.mubr.f32.mxu0 0.0
        %8015 = vmatmul.mubr.f32.gmra.mxu0 %v7654
        %v8016 = vpop.f32.mrf.mxu0
        %v8017 = vadd.f32 0.0, %v8016
        %v8018 = vpop.f32.mrf.mxu0
        %8019 = vmatprep.mubr.f32.mxu0 0.0
        %8020 = vmatmul.mubr.f32.gmra.mxu0 %v7657
        %v8021 = vpop.f32.mrf.mxu0
        %v8022 = vadd.f32 0.0, %v8021
        %v8023 = vpop.f32.mrf.mxu0
        %8024 = vdwg.mxu0
        %v8025 = vmul.f32 %v7930, %v7930
        %v8026 = vmul.f32 %v7931, %v7931
        %v8027 = vmul.f32 %v7932, %v7932
        %v8028 = vmul.f32 %v7933, %v7933
        %v8029 = vmul.f32 %v7934, %v7934
        %v8030 = vmul.f32 %v7935, %v7935
        %v8031 = vadd.f32 %v8025, %v8026
        %8032 = vadd.xlane.f32.xlu0 %v8031
        %v8033 = vpop.xlane.xlu0 %8032
        %v8034 = vadd.f32 %v8027, %v8028
        %8035 = vadd.xlane.f32.xlu0 %v8034
        %v8036 = vpop.xlane.xlu0 %8035
        %v8037 = vadd.f32 %v8029, %v8030
        %8038 = vadd.xlane.f32.xlu0 %v8037
        %v8039 = vpop.xlane.xlu0 %8038
        %8040 = vmatprep.subr.mxu0 0.0
        %8041 = vmatpush1.msra.mxu0 0.0
        %8042 = vmatprep.subr.mxu0 0.0
        %8043 = vmatpush1.msra.mxu0 0.0
        %8044 = vmatprep.subr.mxu0 0.0
        %8045 = vmatpush1.msra.mxu0 0.0
        %8046 = vmatprep.subr.mxu0 0.0
        %8047 = vmatpush1.msra.mxu0 0.0
        %8048 = vmatprep.subr.mxu0 0.0
        %8049 = vmatpush1.msra.mxu0 0.0
        %8050 = vmatprep.subr.mxu0 0.0
        %8051 = vmatpush1.msra.mxu0 0.0
        %8052 = vmatprep.subr.mxu0 0.0
        %8053 = vmatpush1.msra.mxu0 0.0
        %8054 = vmatprep.subr.mxu0 0.0
        %8055 = vmatpush1.msra.mxu0 0.0
        %8056 = vmatprep.subr.mxu0 0.0
        %8057 = vmatpush1.msra.mxu0 0.0
        %8058 = vmatprep.subr.mxu0 0.0
        %8059 = vmatpush1.msra.mxu0 0.0
        %8060 = vmatprep.subr.mxu0 0.0
        %8061 = vmatpush1.msra.mxu0 0.0
        %8062 = vmatprep.subr.mxu0 0.0
        %8063 = vmatpush1.msra.mxu0 0.0
        %8064 = vmatprep.subr.mxu0 0.0
        %8065 = vmatpush1.msra.mxu0 0.0
        %8066 = vmatprep.subr.mxu0 0.0
        %8067 = vmatpush1.msra.mxu0 %v8039
        %8068 = vmatprep.subr.mxu0 0.0
        %8069 = vmatpush1.msra.mxu0 %v8036
        %8070 = vmatprep.subr.mxu0 0.0
        %8071 = vmatpush1.msra.mxu0 %v8033
        %8072 = vmatprep.subr.mxu0 0.0
        %8073 = vmatpush2.msra.mxu0 0.0
        %8074 = vmatprep.subr.mxu0 0.0
        %8075 = vmatpush2.msra.mxu0 0.0
        %8076 = vmatprep.subr.mxu0 0.0
        %8077 = vmatpush2.msra.mxu0 0.0
        %8078 = vmatprep.subr.mxu0 0.0
        %8079 = vmatpush2.msra.mxu0 0.0
        %8080 = vmatprep.subr.mxu0 0.0
        %8081 = vmatpush2.msra.mxu0 0.0
        %8082 = vmatprep.subr.mxu0 0.0
        %8083 = vmatpush2.msra.mxu0 0.0
        %8084 = vmatprep.subr.mxu0 0.0
        %8085 = vmatpush2.msra.mxu0 0.0
        %8086 = vmatprep.subr.mxu0 0.0
        %8087 = vmatpush2.msra.mxu0 0.0
        %8088 = vmatprep.subr.mxu0 0.0
        %8089 = vmatpush2.msra.mxu0 0.0
        %8090 = vmatprep.subr.mxu0 0.0
        %8091 = vmatpush2.msra.mxu0 0.0
        %8092 = vmatprep.subr.mxu0 0.0
        %8093 = vmatpush2.msra.mxu0 0.0
        %8094 = vmatprep.subr.mxu0 0.0
        %8095 = vmatpush2.msra.mxu0 0.0
        %8096 = vmatprep.subr.mxu0 0.0
        %8097 = vmatpush2.msra.mxu0 0.0
        %8098 = vmatprep.subr.mxu0 0.0
        %8099 = vmatpush2.msra.mxu0 0.0
        %8100 = vmatprep.subr.mxu0 0.0
        %8101 = vmatpush2.msra.mxu0 0.0
        %8102 = vmatprep.subr.mxu0 0.0
        %8103 = vmatpush2.msra.mxu0 0.0
        %8104 = vmatprep.mubr.f32.mxu0 0.0
        %8105 = vmatmul.mubr.f32.gmra.mxu0 %v7651
        %v8106 = vpop.f32.mrf.mxu0
        %v8107 = vadd.f32 0.0, %v8106
        %v8108 = vpop.f32.mrf.mxu0
        %8109 = vmatprep.mubr.f32.mxu0 0.0
        %8110 = vmatmul.mubr.f32.gmra.mxu0 %v7654
        %v8111 = vpop.f32.mrf.mxu0
        %v8112 = vadd.f32 0.0, %v8111
        %v8113 = vpop.f32.mrf.mxu0
        %8114 = vmatprep.mubr.f32.mxu0 0.0
        %8115 = vmatmul.mubr.f32.gmra.mxu0 %v7657
        %v8116 = vpop.f32.mrf.mxu0
        %v8117 = vadd.f32 0.0, %v8116
        %v8118 = vpop.f32.mrf.mxu0
        %8119 = vdwg.mxu0
        %v8120 = vmul.f32 %v8012, %v8012
        %v8121 = vmul.f32 %v8017, %v8017
        %v8122 = vmul.f32 %v8022, %v8022
        %v8123 = vsub.f32 %v8107, %v8120
        %v8124 = vsub.f32 %v8112, %v8121
        %v8125 = vsub.f32 %v8117, %v8122
        %v8126 = vmax.f32 %v8123, 0.0
        %v8127 = vmax.f32 %v8124, 0.0
        %v8128 = vmax.f32 %v8125, 0.0
        %8130 = vset.pattern.permute.xlu0 0
        %8131 = vperm.xlu0 %8130, %v8012
        %v8132 = vpop.permute.xlu0 %8131
        %8135 = vset.pattern.permute.xlu0 0
        %8136 = vperm.xlu0 %8135, %v8017
        %v8137 = vpop.permute.xlu0 %8136
        %8140 = vset.pattern.permute.xlu0 0
        %8141 = vperm.xlu0 %8140, %v8022
        %v8142 = vpop.permute.xlu0 %8141
        %v8144 = vsub.f32 %v7930, %v8132
        %v8145 = vsub.f32 %v7931, %v8132
        %v8146 = vsub.f32 %v7932, %v8137
        %v8147 = vsub.f32 %v7933, %v8137
        %v8148 = vsub.f32 %v7934, %v8142
        %v8149 = vsub.f32 %v7935, %v8142
        %v8150 = vadd.f32 %v8126, 1e-05
        %v8151 = vadd.f32 %v8127, 1e-05
        %v8152 = vadd.f32 %v8128, 1e-05
        %v8153 = vrsqrt.pop %v8150
        %v8154 = vrsqrt.pop %v8151
        %v8155 = vrsqrt.pop %v8152
        %8156 = vrot.lane.b32.xlu0 %v7638, 124
        %v8157 = vpop.permute.xlu0 %8156
        %8158 = vrot.lane.b32.xlu0 %v7639, 124
        %v8159 = vpop.permute.xlu0 %8158
        %8160 = vrot.lane.b32.xlu0 %v7640, 124
        %v8161 = vpop.permute.xlu0 %8160
        %v8165 = vmul.f32 %v8153, %v8157
        %v8166 = vmul.f32 %v8154, %v8159
        %v8167 = vmul.f32 %v8155, %v8161
        %8169 = vset.pattern.permute.xlu0 0
        %8170 = vperm.xlu0 %8169, %v8165
        %v8171 = vpop.permute.xlu0 %8170
        %8174 = vset.pattern.permute.xlu0 0
        %8175 = vperm.xlu0 %8174, %v8166
        %v8176 = vpop.permute.xlu0 %8175
        %8179 = vset.pattern.permute.xlu0 0
        %8180 = vperm.xlu0 %8179, %v8167
        %v8181 = vpop.permute.xlu0 %8180
        %v8183 = vmul.f32 %v8144, %v8171
        %v8184 = vmul.f32 %v8145, %v8171
        %v8185 = vmul.f32 %v8146, %v8176
        %v8186 = vmul.f32 %v8147, %v8176
        %v8187 = vmul.f32 %v8148, %v8181
        %v8188 = vmul.f32 %v8149, %v8181
        %8189 = vset.pattern.permute.xlu0 5
        %8190 = vperm.xlu0 %8189, %v7638
        %v8191 = vpop.permute.xlu0 %8190
        %8193 = vset.pattern.permute.xlu0 5
        %8194 = vperm.xlu0 %8193, %v7639
        %v8195 = vpop.permute.xlu0 %8194
        %8197 = vset.pattern.permute.xlu0 5
        %8198 = vperm.xlu0 %8197, %v7640
        %v8199 = vpop.permute.xlu0 %8198
        %v8201 = vadd.f32 %v8183, %v8191
        %v8202 = vadd.f32 %v8184, %v8191
        %v8203 = vadd.f32 %v8185, %v8195
        %v8204 = vadd.f32 %v8186, %v8195
        %v8205 = vadd.f32 %v8187, %v8199
        %v8206 = vadd.f32 %v8188, %v8199
        %8207 = vst [vmem:[%s328] sm:$0xff] %v8201
        %8208 = vst [vmem:[%s328 + $0x8] sm:$0xff] %v8202
        %8209 = vst [vmem:[%s328 + $0x10] sm:$0xff] %v8203
        %8210 = vst [vmem:[%s328 + $0x18] sm:$0xff] %v8204
        %8211 = vst [vmem:[%s328 + $0x20] sm:$0xff] %v8205
        %8212 = vst [vmem:[%s328 + $0x28] sm:$0xff] %v8206
        %p8213 = scmp.lt.s32.totalorder %s21, 1
        %s8214 = scalar_select %p8213, %s21, 1
        %s8215 = smul.addr %s8214, 6
        %s8216 = smul.addr %s8215, 8
        %s8217 = scalar_lea.vmem %s7, %s8216
        %p8218 = scmp.lt.s32.totalorder %s21, 1
        %s8219 = scalar_select %p8218, %s21, 1
        %s8220 = smul.addr %s8219, 36
        %s8221 = smul.addr %s8220, 8
        %s8222 = scalar_lea.vmem %s8, %s8221
        // Predicated region
        $region60: #{deq_fixed_point.1} parent=47 // pred_check
          %p8223 = pneg %p191
        $region61: #{deq_fixed_point.1} parent=47 // pred_check_branch
          %8225 = sbr.rel (%p8223) target = $region63
        $region62: #{deq_fixed_point.1} parent=47 // pred_region
          _
        $region63: #{deq_fixed_point.1} parent=47 // pred_fallthru
          _
        // Predicated region
        $region64: #{deq_fixed_point.1} parent=47 // pred_check
          %p8226 = pneg %p217
        $region65: #{deq_fixed_point.1} parent=47 // pred_check_branch
          %8228 = sbr.rel (%p8226) target = $region67
        $region66: #{deq_fixed_point.1} parent=47 // pred_region
          _
        $region67: #{deq_fixed_point.1} parent=47 // pred_fallthru
          _
      $region48: #{deq_fixed_point.1} parent=5 // pred_fallthru
        _
      %p8229 = scmp.le.s32.totalorder 2, %s16
      // Predicated region
      $region68: #{deq_fixed_point.1} parent=5 // pred_check
        %p8230 = pneg %p8229
      $region69: #{deq_fixed_point.1} parent=5 // pred_check_branch
        %8232 = sbr.rel (%p8230) target = $region71
      $region70: #{deq_fixed_point.1} parent=5 // pred_region
        %s8233 = ssub.s32 %s16, 2
        // Predicated region
        $region72: #{deq_fixed_point.1} parent=70 // pred_check
          %p8234 = pneg %p197
        $region73: #{deq_fixed_point.1} parent=70 // pred_check_branch
          %8236 = sbr.rel (%p8234) target = $region75
        $region74: #{deq_fixed_point.1} parent=70 // pred_region
          %p8237 = scmp.lt.s32.totalorder %s22, 1
          %s8238 = scalar_select %p8237, %s22, 1
          %s8239 = smul.addr %s8238, 6
          %s8240 = smul.addr %s8239, 8
          %s8241 = scalar_lea.vmem %s7, %s8240
        $region75: #{deq_fixed_point.1} parent=70 // pred_fallthru
          _
        // Predicated region
        $region76: #{deq_fixed_point.1} parent=70 // pred_check
          %p8242 = pneg %p223
        $region77: #{deq_fixed_point.1} parent=70 // pred_check_branch
          %8244 = sbr.rel (%p8242) target = $region79
        $region78: #{deq_fixed_point.1} parent=70 // pred_region
          %p8245 = scmp.lt.s32.totalorder %s22, 1
          %s8246 = scalar_select %p8245, %s22, 1
          %s8247 = smul.addr %s8246, 36
          %s8248 = smul.addr %s8247, 8
          %s8249 = scalar_lea.vmem %s8, %s8248
        $region79: #{deq_fixed_point.1} parent=70 // pred_fallthru
          _
      $region71: #{deq_fixed_point.1} parent=5 // pred_fallthru
        _
    $region6: #{deq_fixed_point.1} parent=1 // loop_footer
      %s20 = sadd.s32 1, %s16
    $region7: #{deq_fixed_point.1} parent=1 // loop_footer_branch
      %15 = sbr.rel target = $region3
    $region8: #{deq_fixed_point.1} parent=1 // loop_exit
      _
    %8250 = vsyncpa [#allocation4], 1
    %s8251 = scalar_lea.sflag [#allocation4], 1
    %8252 = vsyncpa %s8251, 1

</llo_original>
